<compile_context>
chip_gen: v6e
topology: v6e:2x2x1
jax: 0.10.0
libtpu: 0.0.40
codegen_flags: <defaults>
</compile_context>

<pallas_src>
import math

import jax
import jax.numpy as jnp
from jax import lax
from jax.experimental import pallas as pl
from jax.experimental.pallas import tpu as pltpu

# ---------------- configuration (small, deterministic) ----------------
TEXT_WIDTH = 32          # stands in for METER's input_text_embed_size (768)
VISION_WIDTH = 32        # stands in for METER's input_image_embed_size
IMG_C, IMG_H, IMG_W = 3, 64, 64
GRID = 16                # coords_2d(16, 16) is hard-coded in the module
PATCH = IMG_H // GRID
PATCH_DIM = IMG_C * PATCH * PATCH
SEQ_LEN = 9              # text length (CLS + 8 tokens)
VOCAB = 100
LN_EPS = 1e-5

N_SMALL_HEADS = 4        # order: 0=itm, 1=bbox, 2=cls_img, 3=cls_text
SMALL_DH = 2 * TEXT_WIDTH            # hidden width of each small head (64)
SMALL_DOUT_PAD = 4                   # every small head's output padded to 4 cols

# packed output slab of the fused-heads kernel (lane-dense, 128 lanes wide)
HEAD_SLAB = 128
_ITM_OFF = TEXT_WIDTH + 0 * SMALL_DOUT_PAD   # cols [32, 34)
_BBOX_OFF = TEXT_WIDTH + 1 * SMALL_DOUT_PAD  # cols [36, 40)
_CLSI_OFF = TEXT_WIDTH + 2 * SMALL_DOUT_PAD  # cols [40, 42)
_CLST_OFF = TEXT_WIDTH + 3 * SMALL_DOUT_PAD  # cols [44, 46)
_SMALL_PACKED = N_SMALL_HEADS * SMALL_DOUT_PAD   # 16 packed small-head lanes


def _round_up(x, m):
    return ((x + m - 1) // m) * m


# ---------------- in-kernel math helpers ----------------
def _ln(x, g, b):
    m = jnp.mean(x, axis=-1, keepdims=True)
    v = jnp.mean((x - m) ** 2, axis=-1, keepdims=True)
    return (x - m) * lax.rsqrt(v + LN_EPS) * g + b


def _seg_ln(x, avg, g, b):
    """Per-64-lane-segment LayerNorm via a constant block-diag averaging matmul.

    `avg` is block_diag(ones(64,64)/64) so x@avg broadcasts each segment's mean
    back across its own lanes.  Statistics stay in f32 (exact per-head LN).
    """
    mean = jnp.dot(x, avg, preferred_element_type=jnp.float32)
    d = x - mean
    var = jnp.dot(d * d, avg, preferred_element_type=jnp.float32)
    return d * lax.rsqrt(var + LN_EPS) * g + b


def _gelu(x):
    # exact (erf-based) GELU, matching torch.nn.GELU()
    return 0.5 * x * (1.0 + lax.erf(x * 0.7071067811865476))


def _dot_bf16(x, w):
    # bf16 operands on the MXU (single pass), f32 accumulation.
    return jnp.dot(x.astype(jnp.bfloat16), w.astype(jnp.bfloat16),
                   preferred_element_type=jnp.float32)


def _mlp3(x, w1, b1, g1, be1, w2, b2, g2, be2, w3, b3):
    """Linear -> LN -> GELU -> Linear -> LN -> GELU -> Linear (f32 LN/GELU)."""
    h = _dot_bf16(x, w1) + b1
    h = _gelu(_ln(h, g1, be1))
    h = _dot_bf16(h, w2) + b2
    h = _gelu(_ln(h, g2, be2))
    return _dot_bf16(h, w3) + b3


# ---------------- Pallas kernels ----------------
def _pos_emb_kernel(coords_ref, tpos_ref, invdim_ref,
                    iw_ref, ib_ref, ig_ref, ibe_ref,
                    tw_ref, tb_ref, tg_ref, tbe_ref,
                    img_o_ref, txt_o_ref):
    """Batch-invariant positional embeddings for BOTH modalities (run ONCE).

    Fuses pos2posemb2d / score2posemb1d with Linear -> LayerNorm
    (emb_img_pos / emb_text_pos).  The torch interleave
    stack([sin(a[0::2]), cos(a[1::2])]).flatten(-2) equals
    sin(a + (lane&1)*pi/2) because dim_t repeats each frequency twice.
    """
    inv = invdim_ref[...]                               # (1, F) = 1 / dim_t
    feat = inv.shape[-1]
    two_pi = 2.0 * math.pi
    lane = lax.broadcasted_iota(jnp.int32, (1, feat), 1)
    phase = jnp.bitwise_and(lane, 1).astype(jnp.float32) * (0.5 * math.pi)

    def posemb(p):                                      # (rows, 1) -> (rows, F)
        return jnp.sin((p * two_pi) * inv + phase)      # one EUP push per elem

    # image path: pos_xy = concat([emb_y, emb_x]) -> single (rows,2F)@(2F,F) dot.
    emb_x = posemb(coords_ref[:, 0:1])                  # (256, F)
    emb_y = posemb(coords_ref[:, 1:2])
    pos_xy = jnp.concatenate([emb_y, emb_x], axis=-1)   # (256, 2F), one vreg wide
    h = jnp.dot(pos_xy, iw_ref[...], preferred_element_type=jnp.float32) + ib_ref[...]
    img_o_ref[...] = _ln(h, ig_ref[...], ibe_ref[...])

    # text path
    emb_t = posemb(tpos_ref[...])                       # (L-1, F)
    ht = jnp.dot(emb_t, tw_ref[...], preferred_element_type=jnp.float32) + tb_ref[...]
    txt_o_ref[...] = _ln(ht, tg_ref[...], tbe_ref[...])


def _heads_kernel(cls_ref, rest_ref,
                  fw1_ref, fb1_ref, fg1_ref, fbe1_ref,
                  fw2_ref, fb2_ref, fg2_ref, fbe2_ref,
                  fw3_ref, fb3_ref,
                  sw1_ref, sb1_ref, sg1_ref, sbe1_ref,
                  sw2_ref, sb2_ref, sg2_ref, sbe2_ref,
                  sw3_ref, sb3_ref, sega_ref,
                  o_ref):
    """All five MLP heads fused into one launch.

    fusion head runs standalone; the four small heads (itm/bbox/cls_img/cls_text)
    are packed block-diagonally so each of their three Linear layers is ONE wide
    matmul, with per-head LayerNorm done as 64-lane segment stats.  itm consumes
    the in-kernel fusion token (chained).  Results are written straight into a
    lane-dense (rows, 128) slab at static column offsets.
    """
    fusion = _mlp3(cls_ref[...],
                   fw1_ref[...], fb1_ref[...], fg1_ref[...], fbe1_ref[...],
                   fw2_ref[...], fb2_ref[...], fg2_ref[...], fbe2_ref[...],
                   fw3_ref[...], fb3_ref[...])                  # (rows, 32) f32

    # packed small-head input: [fusion | aimg | aimg | atext]  -> (rows, 128)
    x = jnp.concatenate([fusion, rest_ref[...]], axis=-1)
    avg = sega_ref[...]                                         # (256, 256)

    h = _dot_bf16(x, sw1_ref[...]) + sb1_ref[...]               # (rows, 256)
    h = _gelu(_seg_ln(h, avg, sg1_ref[...], sbe1_ref[...]))
    h = _dot_bf16(h, sw2_ref[...]) + sb2_ref[...]               # (rows, 256)
    h = _gelu(_seg_ln(h, avg, sg2_ref[...], sbe2_ref[...]))
    small = _dot_bf16(h, sw3_ref[...]) + sb3_ref[...]           # (rows, 16)

    o_ref[...] = jnp.zeros_like(o_ref)                          # dense 128-lane store
    o_ref[:, 0:TEXT_WIDTH] = fusion
    o_ref[:, TEXT_WIDTH:TEXT_WIDTH + _SMALL_PACKED] = small


# ---------------- Pallas wrappers ----------------
def pos_emb_apply(p_img, p_txt, coords, tpos, inv_dim_t):
    """coords: (N_img, 2), tpos: (N_txt, 1) -> ((N_img, D), (N_txt, D)).

    Batch-invariant; called ONCE at init (hoisted out of the forward).
    """
    n_img, n_txt = coords.shape[0], tpos.shape[0]
    d = p_img["w"].shape[1]
    vm_spec = pl.BlockSpec(memory_space=pltpu.MemorySpace.VMEM)
    return pl.pallas_call(
        _pos_emb_kernel,
        out_shape=(jax.ShapeDtypeStruct((n_img, d), jnp.float32),
                   jax.ShapeDtypeStruct((n_txt, d), jnp.float32)),
        in_specs=[vm_spec] * 11,
        out_specs=(vm_spec, vm_spec),
    )(coords, tpos, inv_dim_t,
      p_img["w"], p_img["b"], p_img["g"], p_img["be"],
      p_txt["w"], p_txt["b"], p_txt["g"], p_txt["be"])


def heads_apply(params, cls_feats, agger_img, agger_text):
    """Run all five heads in one pallas_call; slice the packed (B, 128) slab."""
    bsz = cls_feats.shape[0]
    rest = jnp.concatenate([agger_img, agger_img, agger_text], axis=-1)   # (B, 96)

    # sublane-full row blocks; batch grid is "parallel" (2nd TC on v7x when B grows)
    row_block = 256 if bsz >= 256 else _round_up(bsz, 8)
    b_pad = _round_up(bsz, row_block)
    if b_pad != bsz:
        cls_feats = jnp.pad(cls_feats, ((0, b_pad - bsz), (0, 0)))
        rest = jnp.pad(rest, ((0, b_pad - bsz), (0, 0)))

    vm = pltpu.MemorySpace.VMEM

    def _rows_spec(width):
        return pl.BlockSpec((row_block, width), lambda i: (i, 0), memory_space=vm)

    def _const_spec(arr):
        nd = arr.ndim
        return pl.BlockSpec(arr.shape, lambda i: (0,) * nd, memory_space=vm)

    f = params["fusion_head"]
    s = params["small_heads_packed"]
    weights = (f["w1"], f["b1"], f["g1"], f["be1"],
               f["w2"], f["b2"], f["g2"], f["be2"],
               f["w3"], f["b3"],
               s["w1"], s["b1"], s["g1"], s["be1"],
               s["w2"], s["b2"], s["g2"], s["be2"],
               s["w3"], s["b3"], s["seg_avg"])

    packed = pl.pallas_call(
        _heads_kernel,
        out_shape=jax.ShapeDtypeStruct((b_pad, HEAD_SLAB), jnp.float32),
        grid=(b_pad // row_block,),
        in_specs=([_rows_spec(cls_feats.shape[1]), _rows_spec(rest.shape[1])]
                  + [_const_spec(w) for w in weights]),   # constant maps: weights stay VMEM-resident
        out_specs=_rows_spec(HEAD_SLAB),
        compiler_params=pltpu.CompilerParams(dimension_semantics=("parallel",)),
    )(cls_feats, rest, *weights)

    packed = packed[:bsz]
    logits_real_fake = packed[:, _ITM_OFF:_ITM_OFF + 2]
    bbox_raw = packed[:, _BBOX_OFF:_BBOX_OFF + 4]
    logits_cls_img = packed[:, _CLSI_OFF:_CLSI_OFF + 2]
    logits_cls_text = packed[:, _CLST_OFF:_CLST_OFF + 2]
    return logits_real_fake, bbox_raw, logits_cls_img, logits_cls_text


# ---------------- positional-encoding glue (plain JAX, batch-invariant) ----------------
def coords_2d(x_size, y_size):
    a = jnp.linspace(0.0, x_size - 1, x_size)
    b = jnp.linspace(0.0, y_size - 1, y_size)
    batch_y, batch_x = jnp.meshgrid(a, b, indexing="ij")
    batch_x = (batch_x + 0.5) / x_size
    batch_y = (batch_y + 0.5) / y_size
    coord = jnp.concatenate([batch_x[None], batch_y[None]], axis=0)
    return coord.reshape(2, -1).T  # (x_size*y_size, 2); col 0 = x, col 1 = y


def _inv_dim_t(num_pos_feats=TEXT_WIDTH, temperature=10000.0):
    dim_t = jnp.arange(num_pos_feats, dtype=jnp.float32)
    dim_t = jnp.power(temperature, 2.0 * jnp.floor(dim_t / 2.0) / num_pos_feats)
    return (1.0 / dim_t)[None, :]                       # (1, F)


def precompute_pos_cache(params):
    """Batch-invariant pos-emb computed ONCE (removes a launch from every forward)."""
    coords = coords_2d(GRID, GRID)                                  # (256, 2)
    tpos = jnp.arange(SEQ_LEN - 1, dtype=jnp.float32)[:, None]      # (L-1, 1)
    patch_pos_1, token_pos_1 = pos_emb_apply(
        params["emb_img_pos"], params["emb_text_pos"], coords, tpos, _inv_dim_t())
    return {"patch": patch_pos_1, "token": token_pos_1}


# ---------------- stubs for undefined sub-modules ----------------
def meter_infer_stub(p, image, text_ids, text_masks):
    # TODO(synk): METERTransformerSS is external/pretrained; deterministic patch/token embedding stub.
    del text_masks
    B = image.shape[0]
    patches = image.reshape(B, IMG_C, GRID, PATCH, GRID, PATCH)
    patches = patches.transpose(0, 2, 4, 1, 3, 5).reshape(B, GRID * GRID, PATCH_DIM)
    img_tok = patches @ p["patch_proj"]                               # (B,256,D)
    img_cls = jnp.broadcast_to(p["img_cls"], (B, 1, VISION_WIDTH))
    image_feats = jnp.concatenate([img_cls, img_tok], axis=1)          # (B,257,D)
    text_feats = p["tok_emb"][text_ids]                                # (B,L,D)
    cls_feats = jnp.concatenate([text_feats[:, 0], image_feats[:, 0]], axis=-1)  # (B,2D)
    return text_feats, image_feats, cls_feats


def intra_modal_stub(feat, pad_mask, pos_emb, sim_mask=None):
    # TODO(synk): Intra_Modal_Modeling definition not provided; pass-through + positional embedding.
    del pad_mask, sim_mask
    return feat + pos_emb, None, None


def extra_modal_stub(feat_a, cls_a, feat_b, mask_a, mask_b):
    # TODO(synk): Extra_Modal_Modeling definition not provided; masked pooling + cosine-sim stub.
    del mask_a
    valid_b = (~mask_b).astype(jnp.float32)[..., None]
    pooled_b = (feat_b * valid_b).sum(axis=1) / jnp.maximum(valid_b.sum(axis=1), 1.0)
    agger = cls_a + pooled_b[:, None, :]                               # (B,1,D)
    fa = feat_a / (jnp.linalg.norm(feat_a, axis=-1, keepdims=True) + 1e-6)
    pb = pooled_b / (jnp.linalg.norm(pooled_b, axis=-1, keepdims=True) + 1e-6)
    sim = jnp.einsum("bld,bd->bl", fa, pb)                             # (B, L_a)
    return agger, sim, None


# ---------------- parameter init (deterministic, synthetic) ----------------
def _trunc_normal(key, shape, std=0.02):
    return std * jax.random.truncated_normal(key, -2.0, 2.0, shape, jnp.float32)


def init_mlp_head(key, din, dout):
    dh = din * 2
    k1, k2, k3 = jax.random.split(key, 3)
    return {
        "w1": _trunc_normal(k1, (din, dh)), "b1": jnp.zeros((1, dh)),
        "g1": jnp.ones((1, dh)), "be1": jnp.zeros((1, dh)),
        "w2": _trunc_normal(k2, (dh, dh)), "b2": jnp.zeros((1, dh)),
        "g2": jnp.ones((1, dh)), "be2": jnp.zeros((1, dh)),
        "w3": _trunc_normal(k3, (dh, dout)), "b3": jnp.zeros((1, dout)),
    }


def init_linear_ln(key, din, dout):
    return {"w": _trunc_normal(key, (din, dout)), "b": jnp.zeros((1, dout)),
            "g": jnp.ones((1, dout)), "be": jnp.zeros((1, dout))}


def _block_diag(mats):
    r = sum(m.shape[0] for m in mats)
    c = sum(m.shape[1] for m in mats)
    out = jnp.zeros((r, c), mats[0].dtype)
    ro = co = 0
    for m in mats:
        out = out.at[ro:ro + m.shape[0], co:co + m.shape[1]].set(m)
        ro += m.shape[0]
        co += m.shape[1]
    return out


def init_params(key):
    ks = jax.random.split(key, 10)

    # small heads, packed block-diagonally so each layer is one wide matmul.
    # order: 0=itm, 1=bbox, 2=cls_img, 3=cls_text
    small_raw = [
        init_mlp_head(ks[1], TEXT_WIDTH, 2),
        init_mlp_head(ks[2], TEXT_WIDTH, 4),
        init_mlp_head(ks[3], TEXT_WIDTH, 2),
        init_mlp_head(ks[4], TEXT_WIDTH, 2),
    ]

    def _pad_cols(x, n):
        return jnp.pad(x, ((0, 0), (0, n - x.shape[1])))

    packed = {
        "w1": _block_diag([h["w1"] for h in small_raw]),                       # (128, 256)
        "w2": _block_diag([h["w2"] for h in small_raw]),                       # (256, 256)
        "w3": _block_diag([_pad_cols(h["w3"], SMALL_DOUT_PAD) for h in small_raw]),  # (256, 16)
        "b3": jnp.concatenate([_pad_cols(h["b3"], SMALL_DOUT_PAD) for h in small_raw], axis=-1),
    }
    for k in ("b1", "g1", "be1", "b2", "g2", "be2"):
        packed[k] = jnp.concatenate([h[k] for h in small_raw], axis=-1)        # (1, 256)
    # constant block-diag averaging matrix for 64-lane segment LayerNorm stats
    packed["seg_avg"] = jnp.kron(jnp.eye(N_SMALL_HEADS, dtype=jnp.float32),
                                 jnp.full((SMALL_DH, SMALL_DH), 1.0 / SMALL_DH, jnp.float32))

    return {
        "fusion_head": init_mlp_head(ks[0], 2 * TEXT_WIDTH, TEXT_WIDTH),
        "small_heads_packed": packed,
        "emb_img_pos": init_linear_ln(ks[5], 2 * TEXT_WIDTH, TEXT_WIDTH),
        "emb_text_pos": init_linear_ln(ks[6], TEXT_WIDTH, TEXT_WIDTH),
        "meter": {
            "patch_proj": _trunc_normal(ks[7], (PATCH_DIM, VISION_WIDTH)),
            "img_cls": _trunc_normal(ks[8], (1, 1, VISION_WIDTH)),
            "tok_emb": _trunc_normal(ks[9], (VOCAB, TEXT_WIDTH)),
        },
    }


# ---------------- CSCL forward (is_train=False branch) ----------------
def cscl_forward(params, image, text_input_ids, text_attention_mask):
    B = image.shape[0]
    text_atts_mask_bool = text_attention_mask == 0
    a = text_atts_mask_bool[:, 1:]
    sim_matrix_text_mask = jnp.logical_not(a[:, :, None] | a[:, None, :])

    text_embeds, image_embeds, cls_feats = meter_infer_stub(
        params["meter"], image, text_input_ids, text_attention_mask)

    image_atts_mask_bool = jnp.zeros(image_embeds.shape[:-1], dtype=bool)

    # Batch-invariant positional embeddings: precomputed once at init, broadcast here.
    patch_pos_1 = params["pos_cache"]["patch"]                         # (256, D)
    token_pos_1 = params["pos_cache"]["token"]                         # (L-1, D)
    patch_pos_emb = jnp.broadcast_to(patch_pos_1[None], (B,) + patch_pos_1.shape)
    token_pos_emb = jnp.broadcast_to(token_pos_1[None], (B,) + token_pos_1.shape)

    img_patch_feat = image_embeds[:, 1:, :]
    img_patch_feat, _, _ = intra_modal_stub(
        img_patch_feat, image_atts_mask_bool[:, 1:], patch_pos_emb)

    text_token_feat = text_embeds[:, 1:, :]
    text_token_feat, _, _ = intra_modal_stub(
        text_token_feat, a, token_pos_emb, sim_matrix_text_mask)

    agger_feat_img, _, _ = extra_modal_stub(
        img_patch_feat, image_embeds[:, 0:1, :], text_token_feat,
        image_atts_mask_bool[:, 1:], a)
    agger_feat_text, sim_score_text, _ = extra_modal_stub(
        text_token_feat, text_embeds[:, 0:1, :], img_patch_feat,
        a, image_atts_mask_bool[:, 1:])

    # All five heads (fusion->itm chain, bbox, cls_img, cls_text) in ONE launch.
    logits_real_fake, bbox_raw, logits_multicls_img, logits_multicls_text = heads_apply(
        params, cls_feats, agger_feat_img[:, 0], agger_feat_text[:, 0])

    output_coord = jax.nn.sigmoid(bbox_raw)

    # NOTE: thresholds below mirror the original torch code literally
    # (raw logits compared against 0.5, sim score clamped then thresholded).
    it_sim_score = jnp.clip(sim_score_text, 0.0, 1.0)[..., None]
    it_sim_score = (it_sim_score > 0.5).astype(jnp.float32)
    logits_tok = jnp.concatenate([it_sim_score, 1.0 - it_sim_score], axis=-1)

    logits_multicls = jnp.concatenate([logits_multicls_img, logits_multicls_text], axis=-1)
    logits_multicls_mask = (logits_multicls[:, 0] < 0.5) & (logits_multicls[:, 1] < 0.5)
    output_coord = jnp.where(logits_multicls_mask[:, None], 0.0, output_coord)

    return logits_real_fake, logits_multicls, output_coord, logits_tok


# ---------------- main ----------------
if __name__ == "__main__":
    key = jax.random.PRNGKey(0)
    k_params, k_img, k_ids = jax.random.split(key, 3)

    params = init_params(k_params)
    # hoisted: one-time positional-embedding kernel launch, cached in params
    params["pos_cache"] = precompute_pos_cache(params)

    image = jax.random.normal(k_img, (2, IMG_C, IMG_H, IMG_W), jnp.float32)
    text_input_ids = jax.random.randint(k_ids, (2, SEQ_LEN), 0, VOCAB)
    text_attention_mask = jnp.array(
        [[1] * SEQ_LEN, [1] * (SEQ_LEN - 2) + [0] * 2], dtype=jnp.int32)

    fwd = jax.jit(cscl_forward)
    outs = fwd(params, image, text_input_ids, text_attention_mask)
    outs = jax.block_until_ready(outs)

    logits_real_fake, logits_multicls, output_coord, logits_tok = outs
    assert logits_real_fake.shape == (2, 2)
    assert logits_multicls.shape == (2, 4)
    assert output_coord.shape == (2, 4)
    assert logits_tok.shape == (2, SEQ_LEN - 1, 2)
    assert all(bool(jnp.all(jnp.isfinite(o))) for o in
               (logits_real_fake, logits_multicls, output_coord, logits_tok))
    print("KERNEL_OK")
</pallas_src>

<mosaic_0001>
module attributes {stable_mosaic.version = 11 : i64} {
  func.func @_pos_emb_kernel(%arg0: memref<256x2xf32, #tpu.memory_space<vmem>>, %arg1: memref<8x1xf32, #tpu.memory_space<vmem>>, %arg2: memref<1x32xf32, #tpu.memory_space<vmem>>, %arg3: memref<64x32xf32, #tpu.memory_space<vmem>>, %arg4: memref<1x32xf32, #tpu.memory_space<vmem>>, %arg5: memref<1x32xf32, #tpu.memory_space<vmem>>, %arg6: memref<1x32xf32, #tpu.memory_space<vmem>>, %arg7: memref<32x32xf32, #tpu.memory_space<vmem>>, %arg8: memref<1x32xf32, #tpu.memory_space<vmem>>, %arg9: memref<1x32xf32, #tpu.memory_space<vmem>>, %arg10: memref<1x32xf32, #tpu.memory_space<vmem>>, %arg11: memref<256x32xf32, #tpu.memory_space<vmem>>, %arg12: memref<8x32xf32, #tpu.memory_space<vmem>>) attributes {dimension_semantics = [], scalar_prefetch = 0 : i64, scratch_operands = 0 : i64, tpu.core_type = #tpu.core_type<tc>} {
    %c0 = arith.constant 0 : index
    %c0_0 = arith.constant 0 : index
    %0 = vector.load %arg2[%c0, %c0_0] : memref<1x32xf32, #tpu.memory_space<vmem>>, vector<1x32xf32>
    %1 = tpu.iota {dimensions = array<i32: 1>} : vector<1x32xi32>
    %c1_i32 = arith.constant 1 : i32
    %2 = vector.broadcast %c1_i32 : i32 to vector<1x32xi32>
    %3 = arith.andi %1, %2 : vector<1x32xi32>
    %4 = arith.sitofp %3 : vector<1x32xi32> to vector<1x32xf32>
    %cst = arith.constant 1.57079637 : f32
    %5 = vector.broadcast %cst : f32 to vector<1x32xf32>
    %6 = arith.mulf %4, %5 : vector<1x32xf32>
    %c0_1 = arith.constant 0 : index
    %c0_2 = arith.constant 0 : index
    %7 = vector.load %arg0[%c0_1, %c0_2] : memref<256x2xf32, #tpu.memory_space<vmem>>, vector<256x1xf32>
    %cst_3 = arith.constant 6.28318548 : f32
    %8 = vector.broadcast %cst_3 : f32 to vector<256x1xf32>
    %9 = arith.mulf %7, %8 : vector<256x1xf32>
    %10 = vector.broadcast %9 : vector<256x1xf32> to vector<256x32xf32>
    %11 = vector.broadcast %0 : vector<1x32xf32> to vector<256x32xf32>
    %12 = arith.mulf %10, %11 : vector<256x32xf32>
    %13 = vector.broadcast %6 : vector<1x32xf32> to vector<256x32xf32>
    %14 = arith.addf %12, %13 : vector<256x32xf32>
    %15 = math.sin %14 : vector<256x32xf32>
    %c0_4 = arith.constant 0 : index
    %c1 = arith.constant 1 : index
    %16 = vector.load %arg0[%c0_4, %c1] : memref<256x2xf32, #tpu.memory_space<vmem>>, vector<256x1xf32>
    %cst_5 = arith.constant 6.28318548 : f32
    %17 = vector.broadcast %cst_5 : f32 to vector<256x1xf32>
    %18 = arith.mulf %16, %17 : vector<256x1xf32>
    %19 = vector.broadcast %18 : vector<256x1xf32> to vector<256x32xf32>
    %20 = vector.broadcast %0 : vector<1x32xf32> to vector<256x32xf32>
    %21 = arith.mulf %19, %20 : vector<256x32xf32>
    %22 = vector.broadcast %6 : vector<1x32xf32> to vector<256x32xf32>
    %23 = arith.addf %21, %22 : vector<256x32xf32>
    %24 = math.sin %23 : vector<256x32xf32>
    %25 = tpu.concatenate %24, %15 in 1 : vector<256x32xf32>, vector<256x32xf32> -> vector<256x64xf32>
    %c0_6 = arith.constant 0 : index
    %c0_7 = arith.constant 0 : index
    %26 = vector.load %arg3[%c0_6, %c0_7] : memref<64x32xf32, #tpu.memory_space<vmem>>, vector<64x32xf32>
    %cst_8 = arith.constant dense<0.000000e+00> : vector<256x32xf32>
    %27 = tpu.matmul %25, %26, %cst_8 {dimension_numbers = #tpu.dot_dimension_numbers<[1], [0], [0], [1], [0, 0, 1, 1], [], []>} : vector<256x64xf32>, vector<64x32xf32>, vector<256x32xf32> -> vector<256x32xf32>
    %c0_9 = arith.constant 0 : index
    %c0_10 = arith.constant 0 : index
    %28 = vector.load %arg4[%c0_9, %c0_10] : memref<1x32xf32, #tpu.memory_space<vmem>>, vector<1x32xf32>
    %29 = vector.broadcast %28 : vector<1x32xf32> to vector<256x32xf32>
    %30 = arith.addf %27, %29 : vector<256x32xf32>
    %c0_11 = arith.constant 0 : index
    %c0_12 = arith.constant 0 : index
    %31 = vector.load %arg5[%c0_11, %c0_12] : memref<1x32xf32, #tpu.memory_space<vmem>>, vector<1x32xf32>
    %c0_13 = arith.constant 0 : index
    %c0_14 = arith.constant 0 : index
    %32 = vector.load %arg6[%c0_13, %c0_14] : memref<1x32xf32, #tpu.memory_space<vmem>>, vector<1x32xf32>
    %cst_15 = arith.constant dense<0.000000e+00> : vector<256xf32>
    %33 = vector.multi_reduction <add>, %30, %cst_15 [1] : vector<256x32xf32> to vector<256xf32>
    %34 = vector.shape_cast %33 : vector<256xf32> to vector<256x1xf32>
    %cst_16 = arith.constant 3.200000e+01 : f32
    %35 = vector.broadcast %cst_16 : f32 to vector<256x1xf32>
    %36 = arith.divf %34, %35 : vector<256x1xf32>
    %37 = vector.broadcast %36 : vector<256x1xf32> to vector<256x32xf32>
    %38 = arith.subf %30, %37 : vector<256x32xf32>
    %39 = arith.mulf %38, %38 : vector<256x32xf32>
    %cst_17 = arith.constant dense<0.000000e+00> : vector<256xf32>
    %40 = vector.multi_reduction <add>, %39, %cst_17 [1] : vector<256x32xf32> to vector<256xf32>
    %41 = vector.shape_cast %40 : vector<256xf32> to vector<256x1xf32>
    %cst_18 = arith.constant 3.200000e+01 : f32
    %42 = vector.broadcast %cst_18 : f32 to vector<256x1xf32>
    %43 = arith.divf %41, %42 : vector<256x1xf32>
    %44 = vector.broadcast %36 : vector<256x1xf32> to vector<256x32xf32>
    %45 = arith.subf %30, %44 : vector<256x32xf32>
    %cst_19 = arith.constant 9.99999974E-6 : f32
    %46 = vector.broadcast %cst_19 : f32 to vector<256x1xf32>
    %47 = arith.addf %43, %46 : vector<256x1xf32>
    %48 = math.rsqrt %47 : vector<256x1xf32>
    %49 = vector.broadcast %48 : vector<256x1xf32> to vector<256x32xf32>
    %50 = arith.mulf %45, %49 : vector<256x32xf32>
    %51 = vector.broadcast %31 : vector<1x32xf32> to vector<256x32xf32>
    %52 = arith.mulf %50, %51 : vector<256x32xf32>
    %53 = vector.broadcast %32 : vector<1x32xf32> to vector<256x32xf32>
    %54 = arith.addf %52, %53 : vector<256x32xf32>
    %c0_20 = arith.constant 0 : index
    %c0_21 = arith.constant 0 : index
    %55 = vector.load %arg11[%c0_20, %c0_21] : memref<256x32xf32, #tpu.memory_space<vmem>>, vector<256x32xf32>
    tpu.vector_store %arg11[%c0_20, %c0_21], %54 {strides = array<i32>} : memref<256x32xf32, #tpu.memory_space<vmem>>, vector<256x32xf32>,
    %c0_22 = arith.constant 0 : index
    %c0_23 = arith.constant 0 : index
    %56 = vector.load %arg1[%c0_22, %c0_23] : memref<8x1xf32, #tpu.memory_space<vmem>>, vector<8x1xf32>
    %cst_24 = arith.constant 6.28318548 : f32
    %57 = vector.broadcast %cst_24 : f32 to vector<8x1xf32>
    %58 = arith.mulf %56, %57 : vector<8x1xf32>
    %59 = vector.broadcast %58 : vector<8x1xf32> to vector<8x32xf32>
    %60 = vector.broadcast %0 : vector<1x32xf32> to vector<8x32xf32>
    %61 = arith.mulf %59, %60 : vector<8x32xf32>
    %62 = vector.broadcast %6 : vector<1x32xf32> to vector<8x32xf32>
    %63 = arith.addf %61, %62 : vector<8x32xf32>
    %64 = math.sin %63 : vector<8x32xf32>
    %c0_25 = arith.constant 0 : index
    %c0_26 = arith.constant 0 : index
    %65 = vector.load %arg7[%c0_25, %c0_26] : memref<32x32xf32, #tpu.memory_space<vmem>>, vector<32x32xf32>
    %cst_27 = arith.constant dense<0.000000e+00> : vector<8x32xf32>
    %66 = tpu.matmul %64, %65, %cst_27 {dimension_numbers = #tpu.dot_dimension_numbers<[1], [0], [0], [1], [0, 0, 1, 1], [], []>} : vector<8x32xf32>, vector<32x32xf32>, vector<8x32xf32> -> vector<8x32xf32>
    %c0_28 = arith.constant 0 : index
    %c0_29 = arith.constant 0 : index
    %67 = vector.load %arg8[%c0_28, %c0_29] : memref<1x32xf32, #tpu.memory_space<vmem>>, vector<1x32xf32>
    %68 = vector.broadcast %67 : vector<1x32xf32> to vector<8x32xf32>
    %69 = arith.addf %66, %68 : vector<8x32xf32>
    %c0_30 = arith.constant 0 : index
    %c0_31 = arith.constant 0 : index
    %70 = vector.load %arg9[%c0_30, %c0_31] : memref<1x32xf32, #tpu.memory_space<vmem>>, vector<1x32xf32>
    %c0_32 = arith.constant 0 : index
    %c0_33 = arith.constant 0 : index
    %71 = vector.load %arg10[%c0_32, %c0_33] : memref<1x32xf32, #tpu.memory_space<vmem>>, vector<1x32xf32>
    %cst_34 = arith.constant dense<0.000000e+00> : vector<8xf32>
    %72 = vector.multi_reduction <add>, %69, %cst_34 [1] : vector<8x32xf32> to vector<8xf32>
    %73 = vector.shape_cast %72 : vector<8xf32> to vector<8x1xf32>
    %cst_35 = arith.constant 3.200000e+01 : f32
    %74 = vector.broadcast %cst_35 : f32 to vector<8x1xf32>
    %75 = arith.divf %73, %74 : vector<8x1xf32>
    %76 = vector.broadcast %75 : vector<8x1xf32> to vector<8x32xf32>
    %77 = arith.subf %69, %76 : vector<8x32xf32>
    %78 = arith.mulf %77, %77 : vector<8x32xf32>
    %cst_36 = arith.constant dense<0.000000e+00> : vector<8xf32>
    %79 = vector.multi_reduction <add>, %78, %cst_36 [1] : vector<8x32xf32> to vector<8xf32>
    %80 = vector.shape_cast %79 : vector<8xf32> to vector<8x1xf32>
    %cst_37 = arith.constant 3.200000e+01 : f32
    %81 = vector.broadcast %cst_37 : f32 to vector<8x1xf32>
    %82 = arith.divf %80, %81 : vector<8x1xf32>
    %83 = vector.broadcast %75 : vector<8x1xf32> to vector<8x32xf32>
    %84 = arith.subf %69, %83 : vector<8x32xf32>
    %cst_38 = arith.constant 9.99999974E-6 : f32
    %85 = vector.broadcast %cst_38 : f32 to vector<8x1xf32>
    %86 = arith.addf %82, %85 : vector<8x1xf32>
    %87 = math.rsqrt %86 : vector<8x1xf32>
    %88 = vector.broadcast %87 : vector<8x1xf32> to vector<8x32xf32>
    %89 = arith.mulf %84, %88 : vector<8x32xf32>
    %90 = vector.broadcast %70 : vector<1x32xf32> to vector<8x32xf32>
    %91 = arith.mulf %89, %90 : vector<8x32xf32>
    %92 = vector.broadcast %71 : vector<1x32xf32> to vector<8x32xf32>
    %93 = arith.addf %91, %92 : vector<8x32xf32>
    %c0_39 = arith.constant 0 : index
    %c0_40 = arith.constant 0 : index
    %94 = vector.load %arg12[%c0_39, %c0_40] : memref<8x32xf32, #tpu.memory_space<vmem>>, vector<8x32xf32>
    tpu.vector_store %arg12[%c0_39, %c0_40], %93 {strides = array<i32>} : memref<8x32xf32, #tpu.memory_space<vmem>>, vector<8x32xf32>,
    return
  }
}

</mosaic_0001>

<llo_original>
// kernel: tpu_custom_call.1
$region0: #{tpu_custom_call.1}
  #allocation0 [shape = 'u32[]', space=smem, size = 0x4, offset = 0x4, fixed_abs, tag = 'smem constant byte address 0x4 - core index']
  #allocation1 [shape = 'u32[144,128]{1,0:T(1,128)}', space=vmem, size = 0x12000, scoped, tag = 'internal scratch']
  %s0 = inlined_call_operand.vmem [shape: f32[256,2], index: 0, kind: input, shape index: {}]
  %s1 = inlined_call_operand.vmem [shape: f32[8,1], index: 1, kind: input, shape index: {}]
  %s2 = inlined_call_operand.vmem [shape: f32[1,32], index: 2, kind: input, shape index: {}]
  %s3 = inlined_call_operand.vmem [shape: f32[64,32], index: 3, kind: input, shape index: {}]
  %s4 = inlined_call_operand.vmem [shape: f32[1,32], index: 4, kind: input, shape index: {}]
  %s5 = inlined_call_operand.vmem [shape: f32[1,32], index: 5, kind: input, shape index: {}]
  %s6 = inlined_call_operand.vmem [shape: f32[1,32], index: 6, kind: input, shape index: {}]
  %s7 = inlined_call_operand.vmem [shape: f32[32,32], index: 7, kind: input, shape index: {}]
  %s8 = inlined_call_operand.vmem [shape: f32[1,32], index: 8, kind: input, shape index: {}]
  %s9 = inlined_call_operand.vmem [shape: f32[1,32], index: 9, kind: input, shape index: {}]
  %s10 = inlined_call_operand.vmem [shape: f32[1,32], index: 10, kind: input, shape index: {}]
  %s11 = inlined_call_operand.vmem [shape: f32[256,32], index: 11, kind: output, shape index: {0}]
  %s12 = inlined_call_operand.hbm [shape: f32[8,32], index: 12, kind: output, shape index: {1}]
  %13 = xla_tuple %s11, %s12
  %s14 = sld [smem:[#allocation0]]
  $region62: #{tpu_custom_call.1} parent=0
    _
  %s16 = ssub.s32 1, %s14
  %s17 = scalar_select 0, %s16, %s14
  $region1: #{tpu_custom_call.1} parent=0
    #allocation2 [shape = 'u8[4096]{0}', space=vmem, size = 0x1000, scoped, tag = 'output window, operand 1, single buffered']
    #allocation3 [shape = 's32[1]{0}', space=sflag, size = 0x4, scoped, tag = 'scoped memory for tpu_custom_call.1']
    %18 = vsyncpa [#allocation3], 0
    // Predicated region
    $region2: #{tpu_custom_call.1} parent=1 // pred_check
      _
    $region3: #{tpu_custom_call.1} parent=1 // pred_check_branch
      %20 = sbr.rel (0) target = $region5
    $region4: #{tpu_custom_call.1} parent=1 // pred_region
      _
    $region5: #{tpu_custom_call.1} parent=1 // pred_fallthru
      _
    // Predicated region
    $region6: #{tpu_custom_call.1} parent=1 // pred_check
      _
    $region7: #{tpu_custom_call.1} parent=1 // pred_check_branch
      %22 = sbr.rel (0) target = $region9
    $region8: #{tpu_custom_call.1} parent=1 // pred_region
      _
    $region9: #{tpu_custom_call.1} parent=1 // pred_fallthru
      _
    // Predicated region
    $region10: #{tpu_custom_call.1} parent=1 // pred_check
      _
    $region11: #{tpu_custom_call.1} parent=1 // pred_check_branch
      %24 = sbr.rel (0) target = $region13
    $region12: #{tpu_custom_call.1} parent=1 // pred_region
      _
    $region13: #{tpu_custom_call.1} parent=1 // pred_fallthru
      _
    // Predicated region
    $region14: #{tpu_custom_call.1} parent=1 // pred_check
      _
    $region15: #{tpu_custom_call.1} parent=1 // pred_check_branch
      %26 = sbr.rel (0) target = $region17
    $region16: #{tpu_custom_call.1} parent=1 // pred_region
      _
    $region17: #{tpu_custom_call.1} parent=1 // pred_fallthru
      _
    // Predicated region
    $region18: #{tpu_custom_call.1} parent=1 // pred_check
      _
    $region19: #{tpu_custom_call.1} parent=1 // pred_check_branch
      %28 = sbr.rel (0) target = $region21
    $region20: #{tpu_custom_call.1} parent=1 // pred_region
      _
    $region21: #{tpu_custom_call.1} parent=1 // pred_fallthru
      _
    // Predicated region
    $region22: #{tpu_custom_call.1} parent=1 // pred_check
      _
    $region23: #{tpu_custom_call.1} parent=1 // pred_check_branch
      %30 = sbr.rel (0) target = $region25
    $region24: #{tpu_custom_call.1} parent=1 // pred_region
      _
    $region25: #{tpu_custom_call.1} parent=1 // pred_fallthru
      _
    // Predicated region
    $region26: #{tpu_custom_call.1} parent=1 // pred_check
      _
    $region27: #{tpu_custom_call.1} parent=1 // pred_check_branch
      %32 = sbr.rel (0) target = $region29
    $region28: #{tpu_custom_call.1} parent=1 // pred_region
      _
    $region29: #{tpu_custom_call.1} parent=1 // pred_fallthru
      _
    // Predicated region
    $region30: #{tpu_custom_call.1} parent=1 // pred_check
      _
    $region31: #{tpu_custom_call.1} parent=1 // pred_check_branch
      %34 = sbr.rel (0) target = $region33
    $region32: #{tpu_custom_call.1} parent=1 // pred_region
      _
    $region33: #{tpu_custom_call.1} parent=1 // pred_fallthru
      _
    // Predicated region
    $region34: #{tpu_custom_call.1} parent=1 // pred_check
      _
    $region35: #{tpu_custom_call.1} parent=1 // pred_check_branch
      %36 = sbr.rel (0) target = $region37
    $region36: #{tpu_custom_call.1} parent=1 // pred_region
      _
    $region37: #{tpu_custom_call.1} parent=1 // pred_fallthru
      _
    // Predicated region
    $region38: #{tpu_custom_call.1} parent=1 // pred_check
      _
    $region39: #{tpu_custom_call.1} parent=1 // pred_check_branch
      %38 = sbr.rel (0) target = $region41
    $region40: #{tpu_custom_call.1} parent=1 // pred_region
      _
    $region41: #{tpu_custom_call.1} parent=1 // pred_fallthru
      _
    // Predicated region
    $region42: #{tpu_custom_call.1} parent=1 // pred_check
      _
    $region43: #{tpu_custom_call.1} parent=1 // pred_check_branch
      %40 = sbr.rel (0) target = $region45
    $region44: #{tpu_custom_call.1} parent=1 // pred_region
      _
    $region45: #{tpu_custom_call.1} parent=1 // pred_fallthru
      _
    %v41 = vld [vmem:[%s2] sm:$0x1]
    %v42 = vlaneseq
    %v43 = vand.u32 %v42, 127
    %v44 = vand.u32 %v43, 1
    %v45 = vcvt.s32.f32 %v44
    %v46 = vmul.f32 %v45, 1.5707964
    %v47 = vld [vmem:[%s0] sm:$0xff]
    %v48 = vld [vmem:[%s0 + $0x8] sm:$0xff]
    %v49 = vld [vmem:[%s0 + $0x10] sm:$0xff]
    %v50 = vld [vmem:[%s0 + $0x18] sm:$0xff]
    %v51 = vld [vmem:[%s0 + $0x20] sm:$0xff]
    %v52 = vld [vmem:[%s0 + $0x28] sm:$0xff]
    %v53 = vld [vmem:[%s0 + $0x30] sm:$0xff]
    %v54 = vld [vmem:[%s0 + $0x38] sm:$0xff]
    %v55 = vld [vmem:[%s0 + $0x40] sm:$0xff]
    %v56 = vld [vmem:[%s0 + $0x48] sm:$0xff]
    %v57 = vld [vmem:[%s0 + $0x50] sm:$0xff]
    %v58 = vld [vmem:[%s0 + $0x58] sm:$0xff]
    %v59 = vld [vmem:[%s0 + $0x60] sm:$0xff]
    %v60 = vld [vmem:[%s0 + $0x68] sm:$0xff]
    %v61 = vld [vmem:[%s0 + $0x70] sm:$0xff]
    %v62 = vld [vmem:[%s0 + $0x78] sm:$0xff]
    %v63 = vld [vmem:[%s0 + $0x80] sm:$0xff]
    %v64 = vld [vmem:[%s0 + $0x88] sm:$0xff]
    %v65 = vld [vmem:[%s0 + $0x90] sm:$0xff]
    %v66 = vld [vmem:[%s0 + $0x98] sm:$0xff]
    %v67 = vld [vmem:[%s0 + $0xa0] sm:$0xff]
    %v68 = vld [vmem:[%s0 + $0xa8] sm:$0xff]
    %v69 = vld [vmem:[%s0 + $0xb0] sm:$0xff]
    %v70 = vld [vmem:[%s0 + $0xb8] sm:$0xff]
    %v71 = vld [vmem:[%s0 + $0xc0] sm:$0xff]
    %v72 = vld [vmem:[%s0 + $0xc8] sm:$0xff]
    %v73 = vld [vmem:[%s0 + $0xd0] sm:$0xff]
    %v74 = vld [vmem:[%s0 + $0xd8] sm:$0xff]
    %v75 = vld [vmem:[%s0 + $0xe0] sm:$0xff]
    %v76 = vld [vmem:[%s0 + $0xe8] sm:$0xff]
    %v77 = vld [vmem:[%s0 + $0xf0] sm:$0xff]
    %v78 = vld [vmem:[%s0 + $0xf8] sm:$0xff]
    %v79 = vmul.f32 %v47, 6.2831855
    %v80 = vmul.f32 %v48, 6.2831855
    %v81 = vmul.f32 %v49, 6.2831855
    %v82 = vmul.f32 %v50, 6.2831855
    %v83 = vmul.f32 %v51, 6.2831855
    %v84 = vmul.f32 %v52, 6.2831855
    %v85 = vmul.f32 %v53, 6.2831855
    %v86 = vmul.f32 %v54, 6.2831855
    %v87 = vmul.f32 %v55, 6.2831855
    %v88 = vmul.f32 %v56, 6.2831855
    %v89 = vmul.f32 %v57, 6.2831855
    %v90 = vmul.f32 %v58, 6.2831855
    %v91 = vmul.f32 %v59, 6.2831855
    %v92 = vmul.f32 %v60, 6.2831855
    %v93 = vmul.f32 %v61, 6.2831855
    %v94 = vmul.f32 %v62, 6.2831855
    %v95 = vmul.f32 %v63, 6.2831855
    %v96 = vmul.f32 %v64, 6.2831855
    %v97 = vmul.f32 %v65, 6.2831855
    %v98 = vmul.f32 %v66, 6.2831855
    %v99 = vmul.f32 %v67, 6.2831855
    %v100 = vmul.f32 %v68, 6.2831855
    %v101 = vmul.f32 %v69, 6.2831855
    %v102 = vmul.f32 %v70, 6.2831855
    %v103 = vmul.f32 %v71, 6.2831855
    %v104 = vmul.f32 %v72, 6.2831855
    %v105 = vmul.f32 %v73, 6.2831855
    %v106 = vmul.f32 %v74, 6.2831855
    %v107 = vmul.f32 %v75, 6.2831855
    %v108 = vmul.f32 %v76, 6.2831855
    %v109 = vmul.f32 %v77, 6.2831855
    %v110 = vmul.f32 %v78, 6.2831855
    %112 = vset.pattern.permute.xlu0 0
    %113 = vperm.xlu0 %112, %v79
    %v114 = vpop.permute.xlu0 %113
    %117 = vset.pattern.permute.xlu0 0
    %118 = vperm.xlu0 %117, %v80
    %v119 = vpop.permute.xlu0 %118
    %122 = vset.pattern.permute.xlu0 0
    %123 = vperm.xlu0 %122, %v81
    %v124 = vpop.permute.xlu0 %123
    %127 = vset.pattern.permute.xlu0 0
    %128 = vperm.xlu0 %127, %v82
    %v129 = vpop.permute.xlu0 %128
    %132 = vset.pattern.permute.xlu0 0
    %133 = vperm.xlu0 %132, %v83
    %v134 = vpop.permute.xlu0 %133
    %137 = vset.pattern.permute.xlu0 0
    %138 = vperm.xlu0 %137, %v84
    %v139 = vpop.permute.xlu0 %138
    %142 = vset.pattern.permute.xlu0 0
    %143 = vperm.xlu0 %142, %v85
    %v144 = vpop.permute.xlu0 %143
    %147 = vset.pattern.permute.xlu0 0
    %148 = vperm.xlu0 %147, %v86
    %v149 = vpop.permute.xlu0 %148
    %152 = vset.pattern.permute.xlu0 0
    %153 = vperm.xlu0 %152, %v87
    %v154 = vpop.permute.xlu0 %153
    %157 = vset.pattern.permute.xlu0 0
    %158 = vperm.xlu0 %157, %v88
    %v159 = vpop.permute.xlu0 %158
    %162 = vset.pattern.permute.xlu0 0
    %163 = vperm.xlu0 %162, %v89
    %v164 = vpop.permute.xlu0 %163
    %167 = vset.pattern.permute.xlu0 0
    %168 = vperm.xlu0 %167, %v90
    %v169 = vpop.permute.xlu0 %168
    %172 = vset.pattern.permute.xlu0 0
    %173 = vperm.xlu0 %172, %v91
    %v174 = vpop.permute.xlu0 %173
    %177 = vset.pattern.permute.xlu0 0
    %178 = vperm.xlu0 %177, %v92
    %v179 = vpop.permute.xlu0 %178
    %182 = vset.pattern.permute.xlu0 0
    %183 = vperm.xlu0 %182, %v93
    %v184 = vpop.permute.xlu0 %183
    %187 = vset.pattern.permute.xlu0 0
    %188 = vperm.xlu0 %187, %v94
    %v189 = vpop.permute.xlu0 %188
    %192 = vset.pattern.permute.xlu0 0
    %193 = vperm.xlu0 %192, %v95
    %v194 = vpop.permute.xlu0 %193
    %197 = vset.pattern.permute.xlu0 0
    %198 = vperm.xlu0 %197, %v96
    %v199 = vpop.permute.xlu0 %198
    %202 = vset.pattern.permute.xlu0 0
    %203 = vperm.xlu0 %202, %v97
    %v204 = vpop.permute.xlu0 %203
    %207 = vset.pattern.permute.xlu0 0
    %208 = vperm.xlu0 %207, %v98
    %v209 = vpop.permute.xlu0 %208
    %212 = vset.pattern.permute.xlu0 0
    %213 = vperm.xlu0 %212, %v99
    %v214 = vpop.permute.xlu0 %213
    %217 = vset.pattern.permute.xlu0 0
    %218 = vperm.xlu0 %217, %v100
    %v219 = vpop.permute.xlu0 %218
    %222 = vset.pattern.permute.xlu0 0
    %223 = vperm.xlu0 %222, %v101
    %v224 = vpop.permute.xlu0 %223
    %227 = vset.pattern.permute.xlu0 0
    %228 = vperm.xlu0 %227, %v102
    %v229 = vpop.permute.xlu0 %228
    %232 = vset.pattern.permute.xlu0 0
    %233 = vperm.xlu0 %232, %v103
    %v234 = vpop.permute.xlu0 %233
    %237 = vset.pattern.permute.xlu0 0
    %238 = vperm.xlu0 %237, %v104
    %v239 = vpop.permute.xlu0 %238
    %242 = vset.pattern.permute.xlu0 0
    %243 = vperm.xlu0 %242, %v105
    %v244 = vpop.permute.xlu0 %243
    %247 = vset.pattern.permute.xlu0 0
    %248 = vperm.xlu0 %247, %v106
    %v249 = vpop.permute.xlu0 %248
    %252 = vset.pattern.permute.xlu0 0
    %253 = vperm.xlu0 %252, %v107
    %v254 = vpop.permute.xlu0 %253
    %257 = vset.pattern.permute.xlu0 0
    %258 = vperm.xlu0 %257, %v108
    %v259 = vpop.permute.xlu0 %258
    %262 = vset.pattern.permute.xlu0 0
    %263 = vperm.xlu0 %262, %v109
    %v264 = vpop.permute.xlu0 %263
    %267 = vset.pattern.permute.xlu0 0
    %268 = vperm.xlu0 %267, %v110
    %v269 = vpop.permute.xlu0 %268
    %v272 = vlaneseq
    %v273 = vshrl.u32 %v272, 7
    %v274 = vsub.s32 0, %v273
    %v275 = vrot.slane %v41, %v274
    %v277 = vmul.f32 %v114, %v275
    %v278 = vmul.f32 %v119, %v275
    %v279 = vmul.f32 %v124, %v275
    %v280 = vmul.f32 %v129, %v275
    %v281 = vmul.f32 %v134, %v275
    %v282 = vmul.f32 %v139, %v275
    %v283 = vmul.f32 %v144, %v275
    %v284 = vmul.f32 %v149, %v275
    %v285 = vmul.f32 %v154, %v275
    %v286 = vmul.f32 %v159, %v275
    %v287 = vmul.f32 %v164, %v275
    %v288 = vmul.f32 %v169, %v275
    %v289 = vmul.f32 %v174, %v275
    %v290 = vmul.f32 %v179, %v275
    %v291 = vmul.f32 %v184, %v275
    %v292 = vmul.f32 %v189, %v275
    %v293 = vmul.f32 %v194, %v275
    %v294 = vmul.f32 %v199, %v275
    %v295 = vmul.f32 %v204, %v275
    %v296 = vmul.f32 %v209, %v275
    %v297 = vmul.f32 %v214, %v275
    %v298 = vmul.f32 %v219, %v275
    %v299 = vmul.f32 %v224, %v275
    %v300 = vmul.f32 %v229, %v275
    %v301 = vmul.f32 %v234, %v275
    %v302 = vmul.f32 %v239, %v275
    %v303 = vmul.f32 %v244, %v275
    %v304 = vmul.f32 %v249, %v275
    %v305 = vmul.f32 %v254, %v275
    %v306 = vmul.f32 %v259, %v275
    %v307 = vmul.f32 %v264, %v275
    %v308 = vmul.f32 %v269, %v275
    %v309 = vadd.f32 %v277, %v46
    %v310 = vadd.f32 %v278, %v46
    %v311 = vadd.f32 %v279, %v46
    %v312 = vadd.f32 %v280, %v46
    %v313 = vadd.f32 %v281, %v46
    %v314 = vadd.f32 %v282, %v46
    %v315 = vadd.f32 %v283, %v46
    %v316 = vadd.f32 %v284, %v46
    %v317 = vadd.f32 %v285, %v46
    %v318 = vadd.f32 %v286, %v46
    %v319 = vadd.f32 %v287, %v46
    %v320 = vadd.f32 %v288, %v46
    %v321 = vadd.f32 %v289, %v46
    %v322 = vadd.f32 %v290, %v46
    %v323 = vadd.f32 %v291, %v46
    %v324 = vadd.f32 %v292, %v46
    %v325 = vadd.f32 %v293, %v46
    %v326 = vadd.f32 %v294, %v46
    %v327 = vadd.f32 %v295, %v46
    %v328 = vadd.f32 %v296, %v46
    %v329 = vadd.f32 %v297, %v46
    %v330 = vadd.f32 %v298, %v46
    %v331 = vadd.f32 %v299, %v46
    %v332 = vadd.f32 %v300, %v46
    %v333 = vadd.f32 %v301, %v46
    %v334 = vadd.f32 %v302, %v46
    %v335 = vadd.f32 %v303, %v46
    %v336 = vadd.f32 %v304, %v46
    %v337 = vadd.f32 %v305, %v46
    %v338 = vadd.f32 %v306, %v46
    %v339 = vadd.f32 %v307, %v46
    %v340 = vadd.f32 %v308, %v46
    %v341 = vand.u32 2147483647, %v309
    %vm342 = vcmp.le.f32.partialorder %v341, 0.7853982
    %vm343 = vcmp.lt.s32.totalorder %v309, 0
    %v344 = vand.u32 %v309, 2139095040
    %v345 = vshrl.u32 %v344, 23
    %v346 = vsub.s32 %v345, 127
    %v347 = vand.u32 2147483647, %v309
    %v348 = vand.u32 %v347, 8388607
    %v349 = vor.u32 %v348, 8388608
    %v350 = vsub.s32 0, %v349
    %v351 = vadd.s32 %v346, 1
    %vm352 = vcmp.gt.s32.totalorder %v351, 0
    %v353 = vsel %vm352, %v351, 0
    %v354 = vshrl.u32 %v353, 5
    %v355 = vand.u32 %v353, 31
    %v356 = vsub.s32 32, %v355
    %v357 = vshrl.u32 683565275, %v356
    %v358 = vshll.u32 683565275, %v355
    %v359 = vshrl.u32 2475754826, %v356
    %v360 = vor.u32 %v358, %v359
    %v361 = vshll.u32 2475754826, %v355
    %v362 = vshrl.u32 2131351028, %v356
    %v363 = vor.u32 %v361, %v362
    %v364 = vshll.u32 2131351028, %v355
    %v365 = vshrl.u32 2102212464, %v356
    %v366 = vor.u32 %v364, %v365
    %v367 = vshll.u32 2102212464, %v355
    %v368 = vshrl.u32 920167782, %v356
    %v369 = vor.u32 %v367, %v368
    %v370 = vshll.u32 920167782, %v355
    %v371 = vshrl.u32 1326507024, %v356
    %v372 = vor.u32 %v370, %v371
    %vm373 = vcmp.lt.s32.totalorder %v354, 1
    %vm374 = vcmp.lt.s32.totalorder %v354, 2
    %vm375 = vcmp.lt.s32.totalorder %v354, 3
    %vm376 = vcmp.lt.s32.totalorder %v354, 4
    %v377 = vsel %vm373, %v357, %v360
    %v378 = vsel %vm376, %v366, 2102212464
    %v379 = vsel %vm375, %v363, %v378
    %v380 = vsel %vm374, %v377, %v379
    %v381 = vsel %vm373, %v360, %v363
    %v382 = vsel %vm376, %v369, 920167782
    %v383 = vsel %vm375, %v366, %v382
    %v384 = vsel %vm374, %v381, %v383
    %v385 = vsel %vm373, %v363, %v366
    %v386 = vsel %vm376, %v372, 1326507024
    %v387 = vsel %vm375, %v369, %v386
    %v388 = vsel %vm374, %v385, %v387
    %v389 = vshll.u32 %v349, 8
    %v390 = vmul.u32.u64.compose %v389, %v388
    %v391 = vextract.low.u32 %v390
    %v392 = vextract.high.u32 %v390
    %v393 = vmul.u32.u64.compose %v389, %v384
    %v394 = vextract.low.u32 %v393
    %v395 = vextract.high.u32 %v393
    %v396 = vmul.u32 %v389, %v380
    %v397 = vadd.s32 %v392, %v394
    %vm398 = vc.u32 %v392, %v394
    %v399 = vadd.s32 %v395, 1
    %v400 = vsel %vm398, %v399, %v395
    %v401 = vadd.s32 %v396, %v400
    %v402 = vadd.s32 %v401, 536870912
    %v403 = vshrl.u32 %v402, 30
    %v404 = vshll.u32 %v403, 30
    %v405 = vsub.s32 %v401, %v404
    %vm406 = vcmp.lt.s32.totalorder %v405, 0
    %v407 = vsub.s32 0, %v405
    %v408 = vsel %vm406, %v407, %v405
    %v409 = vclz %v408
    %v410 = vsub.s32 %v409, 2
    %vm411 = vcmp.gt.s32.totalorder 0, %v410
    %v412 = vsel %vm411, 0, %v410
    %v413 = vsub.s32 32, %v412
    %v414 = vshll.u32 %v405, %v412
    %v415 = vshrl.u32 %v397, %v413
    %v416 = vor.u32 %v414, %v415
    %v417 = vsub.s32 4294967266, %v412
    %v418 = vadd.s32 %v417, 127
    %v419 = vshll.u32 %v418, 23
    %v420 = vor.u32 4788187, %v419
    %v421 = vand.u32 2147483647, %v420
    %v423 = vcvt.s32.f32 %v416
    %v424 = vmul.f32 %v423, %v421
    %v425 = vxor.u32 %v424, 2147483648
    %v426 = vsel %vm343, %v425, %v424
    %v427 = vsub.s32 4, %v403
    %v428 = vsel %vm343, %v427, %v403
    %v429 = vsel %vm342, %v309, %v426
    %v430 = vsel %vm342, 0, %v428
    %v431 = vcosq.f32.pop %v429
    %v432 = vsinq.f32.pop %v429
    %vm433 = vweird.f32 %v309
    %v434 = vadd.s32 %v430, 3
    %v435 = vand.u32 %v434, 3
    %vm436 = vcmp.lt.s32.totalorder %v435, 2
    %vm437 = vcmp.eq.s32.totalorder %v435, 0
    %v438 = vxor.u32 %v432, 2147483648
    %v439 = vsel %vm437, %v431, %v438
    %vm440 = vcmp.eq.s32.totalorder %v435, 2
    %v441 = vxor.u32 %v431, 2147483648
    %v442 = vsel %vm440, %v441, %v432
    %v443 = vsel %vm436, %v439, %v442
    %v444 = vsel %vm433, nan, %v443
    %v445 = vand.u32 2147483647, %v310
    %vm446 = vcmp.le.f32.partialorder %v445, 0.7853982
    %vm447 = vcmp.lt.s32.totalorder %v310, 0
    %v448 = vand.u32 %v310, 2139095040
    %v449 = vshrl.u32 %v448, 23
    %v450 = vsub.s32 %v449, 127
    %v451 = vand.u32 2147483647, %v310
    %v452 = vand.u32 %v451, 8388607
    %v453 = vor.u32 %v452, 8388608
    %v454 = vsub.s32 0, %v453
    %v455 = vadd.s32 %v450, 1
    %vm456 = vcmp.gt.s32.totalorder %v455, 0
    %v457 = vsel %vm456, %v455, 0
    %v458 = vshrl.u32 %v457, 5
    %v459 = vand.u32 %v457, 31
    %v460 = vsub.s32 32, %v459
    %v461 = vshrl.u32 683565275, %v460
    %v462 = vshll.u32 683565275, %v459
    %v463 = vshrl.u32 2475754826, %v460
    %v464 = vor.u32 %v462, %v463
    %v465 = vshll.u32 2475754826, %v459
    %v466 = vshrl.u32 2131351028, %v460
    %v467 = vor.u32 %v465, %v466
    %v468 = vshll.u32 2131351028, %v459
    %v469 = vshrl.u32 2102212464, %v460
    %v470 = vor.u32 %v468, %v469
    %v471 = vshll.u32 2102212464, %v459
    %v472 = vshrl.u32 920167782, %v460
    %v473 = vor.u32 %v471, %v472
    %v474 = vshll.u32 920167782, %v459
    %v475 = vshrl.u32 1326507024, %v460
    %v476 = vor.u32 %v474, %v475
    %vm477 = vcmp.lt.s32.totalorder %v458, 1
    %vm478 = vcmp.lt.s32.totalorder %v458, 2
    %vm479 = vcmp.lt.s32.totalorder %v458, 3
    %vm480 = vcmp.lt.s32.totalorder %v458, 4
    %v481 = vsel %vm477, %v461, %v464
    %v482 = vsel %vm480, %v470, 2102212464
    %v483 = vsel %vm479, %v467, %v482
    %v484 = vsel %vm478, %v481, %v483
    %v485 = vsel %vm477, %v464, %v467
    %v486 = vsel %vm480, %v473, 920167782
    %v487 = vsel %vm479, %v470, %v486
    %v488 = vsel %vm478, %v485, %v487
    %v489 = vsel %vm477, %v467, %v470
    %v490 = vsel %vm480, %v476, 1326507024
    %v491 = vsel %vm479, %v473, %v490
    %v492 = vsel %vm478, %v489, %v491
    %v493 = vshll.u32 %v453, 8
    %v494 = vmul.u32.u64.compose %v493, %v492
    %v495 = vextract.low.u32 %v494
    %v496 = vextract.high.u32 %v494
    %v497 = vmul.u32.u64.compose %v493, %v488
    %v498 = vextract.low.u32 %v497
    %v499 = vextract.high.u32 %v497
    %v500 = vmul.u32 %v493, %v484
    %v501 = vadd.s32 %v496, %v498
    %vm502 = vc.u32 %v496, %v498
    %v503 = vadd.s32 %v499, 1
    %v504 = vsel %vm502, %v503, %v499
    %v505 = vadd.s32 %v500, %v504
    %v506 = vadd.s32 %v505, 536870912
    %v507 = vshrl.u32 %v506, 30
    %v508 = vshll.u32 %v507, 30
    %v509 = vsub.s32 %v505, %v508
    %vm510 = vcmp.lt.s32.totalorder %v509, 0
    %v511 = vsub.s32 0, %v509
    %v512 = vsel %vm510, %v511, %v509
    %v513 = vclz %v512
    %v514 = vsub.s32 %v513, 2
    %vm515 = vcmp.gt.s32.totalorder 0, %v514
    %v516 = vsel %vm515, 0, %v514
    %v517 = vsub.s32 32, %v516
    %v518 = vshll.u32 %v509, %v516
    %v519 = vshrl.u32 %v501, %v517
    %v520 = vor.u32 %v518, %v519
    %v521 = vsub.s32 4294967266, %v516
    %v522 = vadd.s32 %v521, 127
    %v523 = vshll.u32 %v522, 23
    %v524 = vor.u32 4788187, %v523
    %v525 = vand.u32 2147483647, %v524
    %v527 = vcvt.s32.f32 %v520
    %v528 = vmul.f32 %v527, %v525
    %v529 = vxor.u32 %v528, 2147483648
    %v530 = vsel %vm447, %v529, %v528
    %v531 = vsub.s32 4, %v507
    %v532 = vsel %vm447, %v531, %v507
    %v533 = vsel %vm446, %v310, %v530
    %v534 = vsel %vm446, 0, %v532
    %v535 = vcosq.f32.pop %v533
    %v536 = vsinq.f32.pop %v533
    %vm537 = vweird.f32 %v310
    %v538 = vadd.s32 %v534, 3
    %v539 = vand.u32 %v538, 3
    %vm540 = vcmp.lt.s32.totalorder %v539, 2
    %vm541 = vcmp.eq.s32.totalorder %v539, 0
    %v542 = vxor.u32 %v536, 2147483648
    %v543 = vsel %vm541, %v535, %v542
    %vm544 = vcmp.eq.s32.totalorder %v539, 2
    %v545 = vxor.u32 %v535, 2147483648
    %v546 = vsel %vm544, %v545, %v536
    %v547 = vsel %vm540, %v543, %v546
    %v548 = vsel %vm537, nan, %v547
    %v549 = vand.u32 2147483647, %v311
    %vm550 = vcmp.le.f32.partialorder %v549, 0.7853982
    %vm551 = vcmp.lt.s32.totalorder %v311, 0
    %v552 = vand.u32 %v311, 2139095040
    %v553 = vshrl.u32 %v552, 23
    %v554 = vsub.s32 %v553, 127
    %v555 = vand.u32 2147483647, %v311
    %v556 = vand.u32 %v555, 8388607
    %v557 = vor.u32 %v556, 8388608
    %v558 = vsub.s32 0, %v557
    %v559 = vadd.s32 %v554, 1
    %vm560 = vcmp.gt.s32.totalorder %v559, 0
    %v561 = vsel %vm560, %v559, 0
    %v562 = vshrl.u32 %v561, 5
    %v563 = vand.u32 %v561, 31
    %v564 = vsub.s32 32, %v563
    %v565 = vshrl.u32 683565275, %v564
    %v566 = vshll.u32 683565275, %v563
    %v567 = vshrl.u32 2475754826, %v564
    %v568 = vor.u32 %v566, %v567
    %v569 = vshll.u32 2475754826, %v563
    %v570 = vshrl.u32 2131351028, %v564
    %v571 = vor.u32 %v569, %v570
    %v572 = vshll.u32 2131351028, %v563
    %v573 = vshrl.u32 2102212464, %v564
    %v574 = vor.u32 %v572, %v573
    %v575 = vshll.u32 2102212464, %v563
    %v576 = vshrl.u32 920167782, %v564
    %v577 = vor.u32 %v575, %v576
    %v578 = vshll.u32 920167782, %v563
    %v579 = vshrl.u32 1326507024, %v564
    %v580 = vor.u32 %v578, %v579
    %vm581 = vcmp.lt.s32.totalorder %v562, 1
    %vm582 = vcmp.lt.s32.totalorder %v562, 2
    %vm583 = vcmp.lt.s32.totalorder %v562, 3
    %vm584 = vcmp.lt.s32.totalorder %v562, 4
    %v585 = vsel %vm581, %v565, %v568
    %v586 = vsel %vm584, %v574, 2102212464
    %v587 = vsel %vm583, %v571, %v586
    %v588 = vsel %vm582, %v585, %v587
    %v589 = vsel %vm581, %v568, %v571
    %v590 = vsel %vm584, %v577, 920167782
    %v591 = vsel %vm583, %v574, %v590
    %v592 = vsel %vm582, %v589, %v591
    %v593 = vsel %vm581, %v571, %v574
    %v594 = vsel %vm584, %v580, 1326507024
    %v595 = vsel %vm583, %v577, %v594
    %v596 = vsel %vm582, %v593, %v595
    %v597 = vshll.u32 %v557, 8
    %v598 = vmul.u32.u64.compose %v597, %v596
    %v599 = vextract.low.u32 %v598
    %v600 = vextract.high.u32 %v598
    %v601 = vmul.u32.u64.compose %v597, %v592
    %v602 = vextract.low.u32 %v601
    %v603 = vextract.high.u32 %v601
    %v604 = vmul.u32 %v597, %v588
    %v605 = vadd.s32 %v600, %v602
    %vm606 = vc.u32 %v600, %v602
    %v607 = vadd.s32 %v603, 1
    %v608 = vsel %vm606, %v607, %v603
    %v609 = vadd.s32 %v604, %v608
    %v610 = vadd.s32 %v609, 536870912
    %v611 = vshrl.u32 %v610, 30
    %v612 = vshll.u32 %v611, 30
    %v613 = vsub.s32 %v609, %v612
    %vm614 = vcmp.lt.s32.totalorder %v613, 0
    %v615 = vsub.s32 0, %v613
    %v616 = vsel %vm614, %v615, %v613
    %v617 = vclz %v616
    %v618 = vsub.s32 %v617, 2
    %vm619 = vcmp.gt.s32.totalorder 0, %v618
    %v620 = vsel %vm619, 0, %v618
    %v621 = vsub.s32 32, %v620
    %v622 = vshll.u32 %v613, %v620
    %v623 = vshrl.u32 %v605, %v621
    %v624 = vor.u32 %v622, %v623
    %v625 = vsub.s32 4294967266, %v620
    %v626 = vadd.s32 %v625, 127
    %v627 = vshll.u32 %v626, 23
    %v628 = vor.u32 4788187, %v627
    %v629 = vand.u32 2147483647, %v628
    %v631 = vcvt.s32.f32 %v624
    %v632 = vmul.f32 %v631, %v629
    %v633 = vxor.u32 %v632, 2147483648
    %v634 = vsel %vm551, %v633, %v632
    %v635 = vsub.s32 4, %v611
    %v636 = vsel %vm551, %v635, %v611
    %v637 = vsel %vm550, %v311, %v634
    %v638 = vsel %vm550, 0, %v636
    %v639 = vcosq.f32.pop %v637
    %v640 = vsinq.f32.pop %v637
    %vm641 = vweird.f32 %v311
    %v642 = vadd.s32 %v638, 3
    %v643 = vand.u32 %v642, 3
    %vm644 = vcmp.lt.s32.totalorder %v643, 2
    %vm645 = vcmp.eq.s32.totalorder %v643, 0
    %v646 = vxor.u32 %v640, 2147483648
    %v647 = vsel %vm645, %v639, %v646
    %vm648 = vcmp.eq.s32.totalorder %v643, 2
    %v649 = vxor.u32 %v639, 2147483648
    %v650 = vsel %vm648, %v649, %v640
    %v651 = vsel %vm644, %v647, %v650
    %v652 = vsel %vm641, nan, %v651
    %v653 = vand.u32 2147483647, %v312
    %vm654 = vcmp.le.f32.partialorder %v653, 0.7853982
    %vm655 = vcmp.lt.s32.totalorder %v312, 0
    %v656 = vand.u32 %v312, 2139095040
    %v657 = vshrl.u32 %v656, 23
    %v658 = vsub.s32 %v657, 127
    %v659 = vand.u32 2147483647, %v312
    %v660 = vand.u32 %v659, 8388607
    %v661 = vor.u32 %v660, 8388608
    %v662 = vsub.s32 0, %v661
    %v663 = vadd.s32 %v658, 1
    %vm664 = vcmp.gt.s32.totalorder %v663, 0
    %v665 = vsel %vm664, %v663, 0
    %v666 = vshrl.u32 %v665, 5
    %v667 = vand.u32 %v665, 31
    %v668 = vsub.s32 32, %v667
    %v669 = vshrl.u32 683565275, %v668
    %v670 = vshll.u32 683565275, %v667
    %v671 = vshrl.u32 2475754826, %v668
    %v672 = vor.u32 %v670, %v671
    %v673 = vshll.u32 2475754826, %v667
    %v674 = vshrl.u32 2131351028, %v668
    %v675 = vor.u32 %v673, %v674
    %v676 = vshll.u32 2131351028, %v667
    %v677 = vshrl.u32 2102212464, %v668
    %v678 = vor.u32 %v676, %v677
    %v679 = vshll.u32 2102212464, %v667
    %v680 = vshrl.u32 920167782, %v668
    %v681 = vor.u32 %v679, %v680
    %v682 = vshll.u32 920167782, %v667
    %v683 = vshrl.u32 1326507024, %v668
    %v684 = vor.u32 %v682, %v683
    %vm685 = vcmp.lt.s32.totalorder %v666, 1
    %vm686 = vcmp.lt.s32.totalorder %v666, 2
    %vm687 = vcmp.lt.s32.totalorder %v666, 3
    %vm688 = vcmp.lt.s32.totalorder %v666, 4
    %v689 = vsel %vm685, %v669, %v672
    %v690 = vsel %vm688, %v678, 2102212464
    %v691 = vsel %vm687, %v675, %v690
    %v692 = vsel %vm686, %v689, %v691
    %v693 = vsel %vm685, %v672, %v675
    %v694 = vsel %vm688, %v681, 920167782
    %v695 = vsel %vm687, %v678, %v694
    %v696 = vsel %vm686, %v693, %v695
    %v697 = vsel %vm685, %v675, %v678
    %v698 = vsel %vm688, %v684, 1326507024
    %v699 = vsel %vm687, %v681, %v698
    %v700 = vsel %vm686, %v697, %v699
    %v701 = vshll.u32 %v661, 8
    %v702 = vmul.u32.u64.compose %v701, %v700
    %v703 = vextract.low.u32 %v702
    %v704 = vextract.high.u32 %v702
    %v705 = vmul.u32.u64.compose %v701, %v696
    %v706 = vextract.low.u32 %v705
    %v707 = vextract.high.u32 %v705
    %v708 = vmul.u32 %v701, %v692
    %v709 = vadd.s32 %v704, %v706
    %vm710 = vc.u32 %v704, %v706
    %v711 = vadd.s32 %v707, 1
    %v712 = vsel %vm710, %v711, %v707
    %v713 = vadd.s32 %v708, %v712
    %v714 = vadd.s32 %v713, 536870912
    %v715 = vshrl.u32 %v714, 30
    %v716 = vshll.u32 %v715, 30
    %v717 = vsub.s32 %v713, %v716
    %vm718 = vcmp.lt.s32.totalorder %v717, 0
    %v719 = vsub.s32 0, %v717
    %v720 = vsel %vm718, %v719, %v717
    %v721 = vclz %v720
    %v722 = vsub.s32 %v721, 2
    %vm723 = vcmp.gt.s32.totalorder 0, %v722
    %v724 = vsel %vm723, 0, %v722
    %v725 = vsub.s32 32, %v724
    %v726 = vshll.u32 %v717, %v724
    %v727 = vshrl.u32 %v709, %v725
    %v728 = vor.u32 %v726, %v727
    %v729 = vsub.s32 4294967266, %v724
    %v730 = vadd.s32 %v729, 127
    %v731 = vshll.u32 %v730, 23
    %v732 = vor.u32 4788187, %v731
    %v733 = vand.u32 2147483647, %v732
    %v735 = vcvt.s32.f32 %v728
    %v736 = vmul.f32 %v735, %v733
    %v737 = vxor.u32 %v736, 2147483648
    %v738 = vsel %vm655, %v737, %v736
    %v739 = vsub.s32 4, %v715
    %v740 = vsel %vm655, %v739, %v715
    %v741 = vsel %vm654, %v312, %v738
    %v742 = vsel %vm654, 0, %v740
    %v743 = vcosq.f32.pop %v741
    %v744 = vsinq.f32.pop %v741
    %vm745 = vweird.f32 %v312
    %v746 = vadd.s32 %v742, 3
    %v747 = vand.u32 %v746, 3
    %vm748 = vcmp.lt.s32.totalorder %v747, 2
    %vm749 = vcmp.eq.s32.totalorder %v747, 0
    %v750 = vxor.u32 %v744, 2147483648
    %v751 = vsel %vm749, %v743, %v750
    %vm752 = vcmp.eq.s32.totalorder %v747, 2
    %v753 = vxor.u32 %v743, 2147483648
    %v754 = vsel %vm752, %v753, %v744
    %v755 = vsel %vm748, %v751, %v754
    %v756 = vsel %vm745, nan, %v755
    %v757 = vand.u32 2147483647, %v313
    %vm758 = vcmp.le.f32.partialorder %v757, 0.7853982
    %vm759 = vcmp.lt.s32.totalorder %v313, 0
    %v760 = vand.u32 %v313, 2139095040
    %v761 = vshrl.u32 %v760, 23
    %v762 = vsub.s32 %v761, 127
    %v763 = vand.u32 2147483647, %v313
    %v764 = vand.u32 %v763, 8388607
    %v765 = vor.u32 %v764, 8388608
    %v766 = vsub.s32 0, %v765
    %v767 = vadd.s32 %v762, 1
    %vm768 = vcmp.gt.s32.totalorder %v767, 0
    %v769 = vsel %vm768, %v767, 0
    %v770 = vshrl.u32 %v769, 5
    %v771 = vand.u32 %v769, 31
    %v772 = vsub.s32 32, %v771
    %v773 = vshrl.u32 683565275, %v772
    %v774 = vshll.u32 683565275, %v771
    %v775 = vshrl.u32 2475754826, %v772
    %v776 = vor.u32 %v774, %v775
    %v777 = vshll.u32 2475754826, %v771
    %v778 = vshrl.u32 2131351028, %v772
    %v779 = vor.u32 %v777, %v778
    %v780 = vshll.u32 2131351028, %v771
    %v781 = vshrl.u32 2102212464, %v772
    %v782 = vor.u32 %v780, %v781
    %v783 = vshll.u32 2102212464, %v771
    %v784 = vshrl.u32 920167782, %v772
    %v785 = vor.u32 %v783, %v784
    %v786 = vshll.u32 920167782, %v771
    %v787 = vshrl.u32 1326507024, %v772
    %v788 = vor.u32 %v786, %v787
    %vm789 = vcmp.lt.s32.totalorder %v770, 1
    %vm790 = vcmp.lt.s32.totalorder %v770, 2
    %vm791 = vcmp.lt.s32.totalorder %v770, 3
    %vm792 = vcmp.lt.s32.totalorder %v770, 4
    %v793 = vsel %vm789, %v773, %v776
    %v794 = vsel %vm792, %v782, 2102212464
    %v795 = vsel %vm791, %v779, %v794
    %v796 = vsel %vm790, %v793, %v795
    %v797 = vsel %vm789, %v776, %v779
    %v798 = vsel %vm792, %v785, 920167782
    %v799 = vsel %vm791, %v782, %v798
    %v800 = vsel %vm790, %v797, %v799
    %v801 = vsel %vm789, %v779, %v782
    %v802 = vsel %vm792, %v788, 1326507024
    %v803 = vsel %vm791, %v785, %v802
    %v804 = vsel %vm790, %v801, %v803
    %v805 = vshll.u32 %v765, 8
    %v806 = vmul.u32.u64.compose %v805, %v804
    %v807 = vextract.low.u32 %v806
    %v808 = vextract.high.u32 %v806
    %v809 = vmul.u32.u64.compose %v805, %v800
    %v810 = vextract.low.u32 %v809
    %v811 = vextract.high.u32 %v809
    %v812 = vmul.u32 %v805, %v796
    %v813 = vadd.s32 %v808, %v810
    %vm814 = vc.u32 %v808, %v810
    %v815 = vadd.s32 %v811, 1
    %v816 = vsel %vm814, %v815, %v811
    %v817 = vadd.s32 %v812, %v816
    %v818 = vadd.s32 %v817, 536870912
    %v819 = vshrl.u32 %v818, 30
    %v820 = vshll.u32 %v819, 30
    %v821 = vsub.s32 %v817, %v820
    %vm822 = vcmp.lt.s32.totalorder %v821, 0
    %v823 = vsub.s32 0, %v821
    %v824 = vsel %vm822, %v823, %v821
    %v825 = vclz %v824
    %v826 = vsub.s32 %v825, 2
    %vm827 = vcmp.gt.s32.totalorder 0, %v826
    %v828 = vsel %vm827, 0, %v826
    %v829 = vsub.s32 32, %v828
    %v830 = vshll.u32 %v821, %v828
    %v831 = vshrl.u32 %v813, %v829
    %v832 = vor.u32 %v830, %v831
    %v833 = vsub.s32 4294967266, %v828
    %v834 = vadd.s32 %v833, 127
    %v835 = vshll.u32 %v834, 23
    %v836 = vor.u32 4788187, %v835
    %v837 = vand.u32 2147483647, %v836
    %v839 = vcvt.s32.f32 %v832
    %v840 = vmul.f32 %v839, %v837
    %v841 = vxor.u32 %v840, 2147483648
    %v842 = vsel %vm759, %v841, %v840
    %v843 = vsub.s32 4, %v819
    %v844 = vsel %vm759, %v843, %v819
    %v845 = vsel %vm758, %v313, %v842
    %v846 = vsel %vm758, 0, %v844
    %v847 = vcosq.f32.pop %v845
    %v848 = vsinq.f32.pop %v845
    %vm849 = vweird.f32 %v313
    %v850 = vadd.s32 %v846, 3
    %v851 = vand.u32 %v850, 3
    %vm852 = vcmp.lt.s32.totalorder %v851, 2
    %vm853 = vcmp.eq.s32.totalorder %v851, 0
    %v854 = vxor.u32 %v848, 2147483648
    %v855 = vsel %vm853, %v847, %v854
    %vm856 = vcmp.eq.s32.totalorder %v851, 2
    %v857 = vxor.u32 %v847, 2147483648
    %v858 = vsel %vm856, %v857, %v848
    %v859 = vsel %vm852, %v855, %v858
    %v860 = vsel %vm849, nan, %v859
    %v861 = vand.u32 2147483647, %v314
    %vm862 = vcmp.le.f32.partialorder %v861, 0.7853982
    %vm863 = vcmp.lt.s32.totalorder %v314, 0
    %v864 = vand.u32 %v314, 2139095040
    %v865 = vshrl.u32 %v864, 23
    %v866 = vsub.s32 %v865, 127
    %v867 = vand.u32 2147483647, %v314
    %v868 = vand.u32 %v867, 8388607
    %v869 = vor.u32 %v868, 8388608
    %v870 = vsub.s32 0, %v869
    %v871 = vadd.s32 %v866, 1
    %vm872 = vcmp.gt.s32.totalorder %v871, 0
    %v873 = vsel %vm872, %v871, 0
    %v874 = vshrl.u32 %v873, 5
    %v875 = vand.u32 %v873, 31
    %v876 = vsub.s32 32, %v875
    %v877 = vshrl.u32 683565275, %v876
    %v878 = vshll.u32 683565275, %v875
    %v879 = vshrl.u32 2475754826, %v876
    %v880 = vor.u32 %v878, %v879
    %v881 = vshll.u32 2475754826, %v875
    %v882 = vshrl.u32 2131351028, %v876
    %v883 = vor.u32 %v881, %v882
    %v884 = vshll.u32 2131351028, %v875
    %v885 = vshrl.u32 2102212464, %v876
    %v886 = vor.u32 %v884, %v885
    %v887 = vshll.u32 2102212464, %v875
    %v888 = vshrl.u32 920167782, %v876
    %v889 = vor.u32 %v887, %v888
    %v890 = vshll.u32 920167782, %v875
    %v891 = vshrl.u32 1326507024, %v876
    %v892 = vor.u32 %v890, %v891
    %vm893 = vcmp.lt.s32.totalorder %v874, 1
    %vm894 = vcmp.lt.s32.totalorder %v874, 2
    %vm895 = vcmp.lt.s32.totalorder %v874, 3
    %vm896 = vcmp.lt.s32.totalorder %v874, 4
    %v897 = vsel %vm893, %v877, %v880
    %v898 = vsel %vm896, %v886, 2102212464
    %v899 = vsel %vm895, %v883, %v898
    %v900 = vsel %vm894, %v897, %v899
    %v901 = vsel %vm893, %v880, %v883
    %v902 = vsel %vm896, %v889, 920167782
    %v903 = vsel %vm895, %v886, %v902
    %v904 = vsel %vm894, %v901, %v903
    %v905 = vsel %vm893, %v883, %v886
    %v906 = vsel %vm896, %v892, 1326507024
    %v907 = vsel %vm895, %v889, %v906
    %v908 = vsel %vm894, %v905, %v907
    %v909 = vshll.u32 %v869, 8
    %v910 = vmul.u32.u64.compose %v909, %v908
    %v911 = vextract.low.u32 %v910
    %v912 = vextract.high.u32 %v910
    %v913 = vmul.u32.u64.compose %v909, %v904
    %v914 = vextract.low.u32 %v913
    %v915 = vextract.high.u32 %v913
    %v916 = vmul.u32 %v909, %v900
    %v917 = vadd.s32 %v912, %v914
    %vm918 = vc.u32 %v912, %v914
    %v919 = vadd.s32 %v915, 1
    %v920 = vsel %vm918, %v919, %v915
    %v921 = vadd.s32 %v916, %v920
    %v922 = vadd.s32 %v921, 536870912
    %v923 = vshrl.u32 %v922, 30
    %v924 = vshll.u32 %v923, 30
    %v925 = vsub.s32 %v921, %v924
    %vm926 = vcmp.lt.s32.totalorder %v925, 0
    %v927 = vsub.s32 0, %v925
    %v928 = vsel %vm926, %v927, %v925
    %v929 = vclz %v928
    %v930 = vsub.s32 %v929, 2
    %vm931 = vcmp.gt.s32.totalorder 0, %v930
    %v932 = vsel %vm931, 0, %v930
    %v933 = vsub.s32 32, %v932
    %v934 = vshll.u32 %v925, %v932
    %v935 = vshrl.u32 %v917, %v933
    %v936 = vor.u32 %v934, %v935
    %v937 = vsub.s32 4294967266, %v932
    %v938 = vadd.s32 %v937, 127
    %v939 = vshll.u32 %v938, 23
    %v940 = vor.u32 4788187, %v939
    %v941 = vand.u32 2147483647, %v940
    %v943 = vcvt.s32.f32 %v936
    %v944 = vmul.f32 %v943, %v941
    %v945 = vxor.u32 %v944, 2147483648
    %v946 = vsel %vm863, %v945, %v944
    %v947 = vsub.s32 4, %v923
    %v948 = vsel %vm863, %v947, %v923
    %v949 = vsel %vm862, %v314, %v946
    %v950 = vsel %vm862, 0, %v948
    %v951 = vcosq.f32.pop %v949
    %v952 = vsinq.f32.pop %v949
    %vm953 = vweird.f32 %v314
    %v954 = vadd.s32 %v950, 3
    %v955 = vand.u32 %v954, 3
    %vm956 = vcmp.lt.s32.totalorder %v955, 2
    %vm957 = vcmp.eq.s32.totalorder %v955, 0
    %v958 = vxor.u32 %v952, 2147483648
    %v959 = vsel %vm957, %v951, %v958
    %vm960 = vcmp.eq.s32.totalorder %v955, 2
    %v961 = vxor.u32 %v951, 2147483648
    %v962 = vsel %vm960, %v961, %v952
    %v963 = vsel %vm956, %v959, %v962
    %v964 = vsel %vm953, nan, %v963
    %v965 = vand.u32 2147483647, %v315
    %vm966 = vcmp.le.f32.partialorder %v965, 0.7853982
    %vm967 = vcmp.lt.s32.totalorder %v315, 0
    %v968 = vand.u32 %v315, 2139095040
    %v969 = vshrl.u32 %v968, 23
    %v970 = vsub.s32 %v969, 127
    %v971 = vand.u32 2147483647, %v315
    %v972 = vand.u32 %v971, 8388607
    %v973 = vor.u32 %v972, 8388608
    %v974 = vsub.s32 0, %v973
    %v975 = vadd.s32 %v970, 1
    %vm976 = vcmp.gt.s32.totalorder %v975, 0
    %v977 = vsel %vm976, %v975, 0
    %v978 = vshrl.u32 %v977, 5
    %v979 = vand.u32 %v977, 31
    %v980 = vsub.s32 32, %v979
    %v981 = vshrl.u32 683565275, %v980
    %v982 = vshll.u32 683565275, %v979
    %v983 = vshrl.u32 2475754826, %v980
    %v984 = vor.u32 %v982, %v983
    %v985 = vshll.u32 2475754826, %v979
    %v986 = vshrl.u32 2131351028, %v980
    %v987 = vor.u32 %v985, %v986
    %v988 = vshll.u32 2131351028, %v979
    %v989 = vshrl.u32 2102212464, %v980
    %v990 = vor.u32 %v988, %v989
    %v991 = vshll.u32 2102212464, %v979
    %v992 = vshrl.u32 920167782, %v980
    %v993 = vor.u32 %v991, %v992
    %v994 = vshll.u32 920167782, %v979
    %v995 = vshrl.u32 1326507024, %v980
    %v996 = vor.u32 %v994, %v995
    %vm997 = vcmp.lt.s32.totalorder %v978, 1
    %vm998 = vcmp.lt.s32.totalorder %v978, 2
    %vm999 = vcmp.lt.s32.totalorder %v978, 3
    %vm1000 = vcmp.lt.s32.totalorder %v978, 4
    %v1001 = vsel %vm997, %v981, %v984
    %v1002 = vsel %vm1000, %v990, 2102212464
    %v1003 = vsel %vm999, %v987, %v1002
    %v1004 = vsel %vm998, %v1001, %v1003
    %v1005 = vsel %vm997, %v984, %v987
    %v1006 = vsel %vm1000, %v993, 920167782
    %v1007 = vsel %vm999, %v990, %v1006
    %v1008 = vsel %vm998, %v1005, %v1007
    %v1009 = vsel %vm997, %v987, %v990
    %v1010 = vsel %vm1000, %v996, 1326507024
    %v1011 = vsel %vm999, %v993, %v1010
    %v1012 = vsel %vm998, %v1009, %v1011
    %v1013 = vshll.u32 %v973, 8
    %v1014 = vmul.u32.u64.compose %v1013, %v1012
    %v1015 = vextract.low.u32 %v1014
    %v1016 = vextract.high.u32 %v1014
    %v1017 = vmul.u32.u64.compose %v1013, %v1008
    %v1018 = vextract.low.u32 %v1017
    %v1019 = vextract.high.u32 %v1017
    %v1020 = vmul.u32 %v1013, %v1004
    %v1021 = vadd.s32 %v1016, %v1018
    %vm1022 = vc.u32 %v1016, %v1018
    %v1023 = vadd.s32 %v1019, 1
    %v1024 = vsel %vm1022, %v1023, %v1019
    %v1025 = vadd.s32 %v1020, %v1024
    %v1026 = vadd.s32 %v1025, 536870912
    %v1027 = vshrl.u32 %v1026, 30
    %v1028 = vshll.u32 %v1027, 30
    %v1029 = vsub.s32 %v1025, %v1028
    %vm1030 = vcmp.lt.s32.totalorder %v1029, 0
    %v1031 = vsub.s32 0, %v1029
    %v1032 = vsel %vm1030, %v1031, %v1029
    %v1033 = vclz %v1032
    %v1034 = vsub.s32 %v1033, 2
    %vm1035 = vcmp.gt.s32.totalorder 0, %v1034
    %v1036 = vsel %vm1035, 0, %v1034
    %v1037 = vsub.s32 32, %v1036
    %v1038 = vshll.u32 %v1029, %v1036
    %v1039 = vshrl.u32 %v1021, %v1037
    %v1040 = vor.u32 %v1038, %v1039
    %v1041 = vsub.s32 4294967266, %v1036
    %v1042 = vadd.s32 %v1041, 127
    %v1043 = vshll.u32 %v1042, 23
    %v1044 = vor.u32 4788187, %v1043
    %v1045 = vand.u32 2147483647, %v1044
    %v1047 = vcvt.s32.f32 %v1040
    %v1048 = vmul.f32 %v1047, %v1045
    %v1049 = vxor.u32 %v1048, 2147483648
    %v1050 = vsel %vm967, %v1049, %v1048
    %v1051 = vsub.s32 4, %v1027
    %v1052 = vsel %vm967, %v1051, %v1027
    %v1053 = vsel %vm966, %v315, %v1050
    %v1054 = vsel %vm966, 0, %v1052
    %v1055 = vcosq.f32.pop %v1053
    %v1056 = vsinq.f32.pop %v1053
    %vm1057 = vweird.f32 %v315
    %v1058 = vadd.s32 %v1054, 3
    %v1059 = vand.u32 %v1058, 3
    %vm1060 = vcmp.lt.s32.totalorder %v1059, 2
    %vm1061 = vcmp.eq.s32.totalorder %v1059, 0
    %v1062 = vxor.u32 %v1056, 2147483648
    %v1063 = vsel %vm1061, %v1055, %v1062
    %vm1064 = vcmp.eq.s32.totalorder %v1059, 2
    %v1065 = vxor.u32 %v1055, 2147483648
    %v1066 = vsel %vm1064, %v1065, %v1056
    %v1067 = vsel %vm1060, %v1063, %v1066
    %v1068 = vsel %vm1057, nan, %v1067
    %v1069 = vand.u32 2147483647, %v316
    %vm1070 = vcmp.le.f32.partialorder %v1069, 0.7853982
    %vm1071 = vcmp.lt.s32.totalorder %v316, 0
    %v1072 = vand.u32 %v316, 2139095040
    %v1073 = vshrl.u32 %v1072, 23
    %v1074 = vsub.s32 %v1073, 127
    %v1075 = vand.u32 2147483647, %v316
    %v1076 = vand.u32 %v1075, 8388607
    %v1077 = vor.u32 %v1076, 8388608
    %v1078 = vsub.s32 0, %v1077
    %v1079 = vadd.s32 %v1074, 1
    %vm1080 = vcmp.gt.s32.totalorder %v1079, 0
    %v1081 = vsel %vm1080, %v1079, 0
    %v1082 = vshrl.u32 %v1081, 5
    %v1083 = vand.u32 %v1081, 31
    %v1084 = vsub.s32 32, %v1083
    %v1085 = vshrl.u32 683565275, %v1084
    %v1086 = vshll.u32 683565275, %v1083
    %v1087 = vshrl.u32 2475754826, %v1084
    %v1088 = vor.u32 %v1086, %v1087
    %v1089 = vshll.u32 2475754826, %v1083
    %v1090 = vshrl.u32 2131351028, %v1084
    %v1091 = vor.u32 %v1089, %v1090
    %v1092 = vshll.u32 2131351028, %v1083
    %v1093 = vshrl.u32 2102212464, %v1084
    %v1094 = vor.u32 %v1092, %v1093
    %v1095 = vshll.u32 2102212464, %v1083
    %v1096 = vshrl.u32 920167782, %v1084
    %v1097 = vor.u32 %v1095, %v1096
    %v1098 = vshll.u32 920167782, %v1083
    %v1099 = vshrl.u32 1326507024, %v1084
    %v1100 = vor.u32 %v1098, %v1099
    %vm1101 = vcmp.lt.s32.totalorder %v1082, 1
    %vm1102 = vcmp.lt.s32.totalorder %v1082, 2
    %vm1103 = vcmp.lt.s32.totalorder %v1082, 3
    %vm1104 = vcmp.lt.s32.totalorder %v1082, 4
    %v1105 = vsel %vm1101, %v1085, %v1088
    %v1106 = vsel %vm1104, %v1094, 2102212464
    %v1107 = vsel %vm1103, %v1091, %v1106
    %v1108 = vsel %vm1102, %v1105, %v1107
    %v1109 = vsel %vm1101, %v1088, %v1091
    %v1110 = vsel %vm1104, %v1097, 920167782
    %v1111 = vsel %vm1103, %v1094, %v1110
    %v1112 = vsel %vm1102, %v1109, %v1111
    %v1113 = vsel %vm1101, %v1091, %v1094
    %v1114 = vsel %vm1104, %v1100, 1326507024
    %v1115 = vsel %vm1103, %v1097, %v1114
    %v1116 = vsel %vm1102, %v1113, %v1115
    %v1117 = vshll.u32 %v1077, 8
    %v1118 = vmul.u32.u64.compose %v1117, %v1116
    %v1119 = vextract.low.u32 %v1118
    %v1120 = vextract.high.u32 %v1118
    %v1121 = vmul.u32.u64.compose %v1117, %v1112
    %v1122 = vextract.low.u32 %v1121
    %v1123 = vextract.high.u32 %v1121
    %v1124 = vmul.u32 %v1117, %v1108
    %v1125 = vadd.s32 %v1120, %v1122
    %vm1126 = vc.u32 %v1120, %v1122
    %v1127 = vadd.s32 %v1123, 1
    %v1128 = vsel %vm1126, %v1127, %v1123
    %v1129 = vadd.s32 %v1124, %v1128
    %v1130 = vadd.s32 %v1129, 536870912
    %v1131 = vshrl.u32 %v1130, 30
    %v1132 = vshll.u32 %v1131, 30
    %v1133 = vsub.s32 %v1129, %v1132
    %vm1134 = vcmp.lt.s32.totalorder %v1133, 0
    %v1135 = vsub.s32 0, %v1133
    %v1136 = vsel %vm1134, %v1135, %v1133
    %v1137 = vclz %v1136
    %v1138 = vsub.s32 %v1137, 2
    %vm1139 = vcmp.gt.s32.totalorder 0, %v1138
    %v1140 = vsel %vm1139, 0, %v1138
    %v1141 = vsub.s32 32, %v1140
    %v1142 = vshll.u32 %v1133, %v1140
    %v1143 = vshrl.u32 %v1125, %v1141
    %v1144 = vor.u32 %v1142, %v1143
    %v1145 = vsub.s32 4294967266, %v1140
    %v1146 = vadd.s32 %v1145, 127
    %v1147 = vshll.u32 %v1146, 23
    %v1148 = vor.u32 4788187, %v1147
    %v1149 = vand.u32 2147483647, %v1148
    %v1151 = vcvt.s32.f32 %v1144
    %v1152 = vmul.f32 %v1151, %v1149
    %v1153 = vxor.u32 %v1152, 2147483648
    %v1154 = vsel %vm1071, %v1153, %v1152
    %v1155 = vsub.s32 4, %v1131
    %v1156 = vsel %vm1071, %v1155, %v1131
    %v1157 = vsel %vm1070, %v316, %v1154
    %v1158 = vsel %vm1070, 0, %v1156
    %v1159 = vcosq.f32.pop %v1157
    %v1160 = vsinq.f32.pop %v1157
    %vm1161 = vweird.f32 %v316
    %v1162 = vadd.s32 %v1158, 3
    %v1163 = vand.u32 %v1162, 3
    %vm1164 = vcmp.lt.s32.totalorder %v1163, 2
    %vm1165 = vcmp.eq.s32.totalorder %v1163, 0
    %v1166 = vxor.u32 %v1160, 2147483648
    %v1167 = vsel %vm1165, %v1159, %v1166
    %vm1168 = vcmp.eq.s32.totalorder %v1163, 2
    %v1169 = vxor.u32 %v1159, 2147483648
    %v1170 = vsel %vm1168, %v1169, %v1160
    %v1171 = vsel %vm1164, %v1167, %v1170
    %v1172 = vsel %vm1161, nan, %v1171
    %v1173 = vand.u32 2147483647, %v317
    %vm1174 = vcmp.le.f32.partialorder %v1173, 0.7853982
    %vm1175 = vcmp.lt.s32.totalorder %v317, 0
    %v1176 = vand.u32 %v317, 2139095040
    %v1177 = vshrl.u32 %v1176, 23
    %v1178 = vsub.s32 %v1177, 127
    %v1179 = vand.u32 2147483647, %v317
    %v1180 = vand.u32 %v1179, 8388607
    %v1181 = vor.u32 %v1180, 8388608
    %v1182 = vsub.s32 0, %v1181
    %v1183 = vadd.s32 %v1178, 1
    %vm1184 = vcmp.gt.s32.totalorder %v1183, 0
    %v1185 = vsel %vm1184, %v1183, 0
    %v1186 = vshrl.u32 %v1185, 5
    %v1187 = vand.u32 %v1185, 31
    %v1188 = vsub.s32 32, %v1187
    %v1189 = vshrl.u32 683565275, %v1188
    %v1190 = vshll.u32 683565275, %v1187
    %v1191 = vshrl.u32 2475754826, %v1188
    %v1192 = vor.u32 %v1190, %v1191
    %v1193 = vshll.u32 2475754826, %v1187
    %v1194 = vshrl.u32 2131351028, %v1188
    %v1195 = vor.u32 %v1193, %v1194
    %v1196 = vshll.u32 2131351028, %v1187
    %v1197 = vshrl.u32 2102212464, %v1188
    %v1198 = vor.u32 %v1196, %v1197
    %v1199 = vshll.u32 2102212464, %v1187
    %v1200 = vshrl.u32 920167782, %v1188
    %v1201 = vor.u32 %v1199, %v1200
    %v1202 = vshll.u32 920167782, %v1187
    %v1203 = vshrl.u32 1326507024, %v1188
    %v1204 = vor.u32 %v1202, %v1203
    %vm1205 = vcmp.lt.s32.totalorder %v1186, 1
    %vm1206 = vcmp.lt.s32.totalorder %v1186, 2
    %vm1207 = vcmp.lt.s32.totalorder %v1186, 3
    %vm1208 = vcmp.lt.s32.totalorder %v1186, 4
    %v1209 = vsel %vm1205, %v1189, %v1192
    %v1210 = vsel %vm1208, %v1198, 2102212464
    %v1211 = vsel %vm1207, %v1195, %v1210
    %v1212 = vsel %vm1206, %v1209, %v1211
    %v1213 = vsel %vm1205, %v1192, %v1195
    %v1214 = vsel %vm1208, %v1201, 920167782
    %v1215 = vsel %vm1207, %v1198, %v1214
    %v1216 = vsel %vm1206, %v1213, %v1215
    %v1217 = vsel %vm1205, %v1195, %v1198
    %v1218 = vsel %vm1208, %v1204, 1326507024
    %v1219 = vsel %vm1207, %v1201, %v1218
    %v1220 = vsel %vm1206, %v1217, %v1219
    %v1221 = vshll.u32 %v1181, 8
    %v1222 = vmul.u32.u64.compose %v1221, %v1220
    %v1223 = vextract.low.u32 %v1222
    %v1224 = vextract.high.u32 %v1222
    %v1225 = vmul.u32.u64.compose %v1221, %v1216
    %v1226 = vextract.low.u32 %v1225
    %v1227 = vextract.high.u32 %v1225
    %v1228 = vmul.u32 %v1221, %v1212
    %v1229 = vadd.s32 %v1224, %v1226
    %vm1230 = vc.u32 %v1224, %v1226
    %v1231 = vadd.s32 %v1227, 1
    %v1232 = vsel %vm1230, %v1231, %v1227
    %v1233 = vadd.s32 %v1228, %v1232
    %v1234 = vadd.s32 %v1233, 536870912
    %v1235 = vshrl.u32 %v1234, 30
    %v1236 = vshll.u32 %v1235, 30
    %v1237 = vsub.s32 %v1233, %v1236
    %vm1238 = vcmp.lt.s32.totalorder %v1237, 0
    %v1239 = vsub.s32 0, %v1237
    %v1240 = vsel %vm1238, %v1239, %v1237
    %v1241 = vclz %v1240
    %v1242 = vsub.s32 %v1241, 2
    %vm1243 = vcmp.gt.s32.totalorder 0, %v1242
    %v1244 = vsel %vm1243, 0, %v1242
    %v1245 = vsub.s32 32, %v1244
    %v1246 = vshll.u32 %v1237, %v1244
    %v1247 = vshrl.u32 %v1229, %v1245
    %v1248 = vor.u32 %v1246, %v1247
    %v1249 = vsub.s32 4294967266, %v1244
    %v1250 = vadd.s32 %v1249, 127
    %v1251 = vshll.u32 %v1250, 23
    %v1252 = vor.u32 4788187, %v1251
    %v1253 = vand.u32 2147483647, %v1252
    %v1255 = vcvt.s32.f32 %v1248
    %v1256 = vmul.f32 %v1255, %v1253
    %v1257 = vxor.u32 %v1256, 2147483648
    %v1258 = vsel %vm1175, %v1257, %v1256
    %v1259 = vsub.s32 4, %v1235
    %v1260 = vsel %vm1175, %v1259, %v1235
    %v1261 = vsel %vm1174, %v317, %v1258
    %v1262 = vsel %vm1174, 0, %v1260
    %v1263 = vcosq.f32.pop %v1261
    %v1264 = vsinq.f32.pop %v1261
    %vm1265 = vweird.f32 %v317
    %v1266 = vadd.s32 %v1262, 3
    %v1267 = vand.u32 %v1266, 3
    %vm1268 = vcmp.lt.s32.totalorder %v1267, 2
    %vm1269 = vcmp.eq.s32.totalorder %v1267, 0
    %v1270 = vxor.u32 %v1264, 2147483648
    %v1271 = vsel %vm1269, %v1263, %v1270
    %vm1272 = vcmp.eq.s32.totalorder %v1267, 2
    %v1273 = vxor.u32 %v1263, 2147483648
    %v1274 = vsel %vm1272, %v1273, %v1264
    %v1275 = vsel %vm1268, %v1271, %v1274
    %v1276 = vsel %vm1265, nan, %v1275
    %v1277 = vand.u32 2147483647, %v318
    %vm1278 = vcmp.le.f32.partialorder %v1277, 0.7853982
    %vm1279 = vcmp.lt.s32.totalorder %v318, 0
    %v1280 = vand.u32 %v318, 2139095040
    %v1281 = vshrl.u32 %v1280, 23
    %v1282 = vsub.s32 %v1281, 127
    %v1283 = vand.u32 2147483647, %v318
    %v1284 = vand.u32 %v1283, 8388607
    %v1285 = vor.u32 %v1284, 8388608
    %v1286 = vsub.s32 0, %v1285
    %v1287 = vadd.s32 %v1282, 1
    %vm1288 = vcmp.gt.s32.totalorder %v1287, 0
    %v1289 = vsel %vm1288, %v1287, 0
    %v1290 = vshrl.u32 %v1289, 5
    %v1291 = vand.u32 %v1289, 31
    %v1292 = vsub.s32 32, %v1291
    %v1293 = vshrl.u32 683565275, %v1292
    %v1294 = vshll.u32 683565275, %v1291
    %v1295 = vshrl.u32 2475754826, %v1292
    %v1296 = vor.u32 %v1294, %v1295
    %v1297 = vshll.u32 2475754826, %v1291
    %v1298 = vshrl.u32 2131351028, %v1292
    %v1299 = vor.u32 %v1297, %v1298
    %v1300 = vshll.u32 2131351028, %v1291
    %v1301 = vshrl.u32 2102212464, %v1292
    %v1302 = vor.u32 %v1300, %v1301
    %v1303 = vshll.u32 2102212464, %v1291
    %v1304 = vshrl.u32 920167782, %v1292
    %v1305 = vor.u32 %v1303, %v1304
    %v1306 = vshll.u32 920167782, %v1291
    %v1307 = vshrl.u32 1326507024, %v1292
    %v1308 = vor.u32 %v1306, %v1307
    %vm1309 = vcmp.lt.s32.totalorder %v1290, 1
    %vm1310 = vcmp.lt.s32.totalorder %v1290, 2
    %vm1311 = vcmp.lt.s32.totalorder %v1290, 3
    %vm1312 = vcmp.lt.s32.totalorder %v1290, 4
    %v1313 = vsel %vm1309, %v1293, %v1296
    %v1314 = vsel %vm1312, %v1302, 2102212464
    %v1315 = vsel %vm1311, %v1299, %v1314
    %v1316 = vsel %vm1310, %v1313, %v1315
    %v1317 = vsel %vm1309, %v1296, %v1299
    %v1318 = vsel %vm1312, %v1305, 920167782
    %v1319 = vsel %vm1311, %v1302, %v1318
    %v1320 = vsel %vm1310, %v1317, %v1319
    %v1321 = vsel %vm1309, %v1299, %v1302
    %v1322 = vsel %vm1312, %v1308, 1326507024
    %v1323 = vsel %vm1311, %v1305, %v1322
    %v1324 = vsel %vm1310, %v1321, %v1323
    %v1325 = vshll.u32 %v1285, 8
    %v1326 = vmul.u32.u64.compose %v1325, %v1324
    %v1327 = vextract.low.u32 %v1326
    %v1328 = vextract.high.u32 %v1326
    %v1329 = vmul.u32.u64.compose %v1325, %v1320
    %v1330 = vextract.low.u32 %v1329
    %v1331 = vextract.high.u32 %v1329
    %v1332 = vmul.u32 %v1325, %v1316
    %v1333 = vadd.s32 %v1328, %v1330
    %vm1334 = vc.u32 %v1328, %v1330
    %v1335 = vadd.s32 %v1331, 1
    %v1336 = vsel %vm1334, %v1335, %v1331
    %v1337 = vadd.s32 %v1332, %v1336
    %v1338 = vadd.s32 %v1337, 536870912
    %v1339 = vshrl.u32 %v1338, 30
    %v1340 = vshll.u32 %v1339, 30
    %v1341 = vsub.s32 %v1337, %v1340
    %vm1342 = vcmp.lt.s32.totalorder %v1341, 0
    %v1343 = vsub.s32 0, %v1341
    %v1344 = vsel %vm1342, %v1343, %v1341
    %v1345 = vclz %v1344
    %v1346 = vsub.s32 %v1345, 2
    %vm1347 = vcmp.gt.s32.totalorder 0, %v1346
    %v1348 = vsel %vm1347, 0, %v1346
    %v1349 = vsub.s32 32, %v1348
    %v1350 = vshll.u32 %v1341, %v1348
    %v1351 = vshrl.u32 %v1333, %v1349
    %v1352 = vor.u32 %v1350, %v1351
    %v1353 = vsub.s32 4294967266, %v1348
    %v1354 = vadd.s32 %v1353, 127
    %v1355 = vshll.u32 %v1354, 23
    %v1356 = vor.u32 4788187, %v1355
    %v1357 = vand.u32 2147483647, %v1356
    %v1359 = vcvt.s32.f32 %v1352
    %v1360 = vmul.f32 %v1359, %v1357
    %v1361 = vxor.u32 %v1360, 2147483648
    %v1362 = vsel %vm1279, %v1361, %v1360
    %v1363 = vsub.s32 4, %v1339
    %v1364 = vsel %vm1279, %v1363, %v1339
    %v1365 = vsel %vm1278, %v318, %v1362
    %v1366 = vsel %vm1278, 0, %v1364
    %v1367 = vcosq.f32.pop %v1365
    %v1368 = vsinq.f32.pop %v1365
    %vm1369 = vweird.f32 %v318
    %v1370 = vadd.s32 %v1366, 3
    %v1371 = vand.u32 %v1370, 3
    %vm1372 = vcmp.lt.s32.totalorder %v1371, 2
    %vm1373 = vcmp.eq.s32.totalorder %v1371, 0
    %v1374 = vxor.u32 %v1368, 2147483648
    %v1375 = vsel %vm1373, %v1367, %v1374
    %vm1376 = vcmp.eq.s32.totalorder %v1371, 2
    %v1377 = vxor.u32 %v1367, 2147483648
    %v1378 = vsel %vm1376, %v1377, %v1368
    %v1379 = vsel %vm1372, %v1375, %v1378
    %v1380 = vsel %vm1369, nan, %v1379
    %v1381 = vand.u32 2147483647, %v319
    %vm1382 = vcmp.le.f32.partialorder %v1381, 0.7853982
    %vm1383 = vcmp.lt.s32.totalorder %v319, 0
    %v1384 = vand.u32 %v319, 2139095040
    %v1385 = vshrl.u32 %v1384, 23
    %v1386 = vsub.s32 %v1385, 127
    %v1387 = vand.u32 2147483647, %v319
    %v1388 = vand.u32 %v1387, 8388607
    %v1389 = vor.u32 %v1388, 8388608
    %v1390 = vsub.s32 0, %v1389
    %v1391 = vadd.s32 %v1386, 1
    %vm1392 = vcmp.gt.s32.totalorder %v1391, 0
    %v1393 = vsel %vm1392, %v1391, 0
    %v1394 = vshrl.u32 %v1393, 5
    %v1395 = vand.u32 %v1393, 31
    %v1396 = vsub.s32 32, %v1395
    %v1397 = vshrl.u32 683565275, %v1396
    %v1398 = vshll.u32 683565275, %v1395
    %v1399 = vshrl.u32 2475754826, %v1396
    %v1400 = vor.u32 %v1398, %v1399
    %v1401 = vshll.u32 2475754826, %v1395
    %v1402 = vshrl.u32 2131351028, %v1396
    %v1403 = vor.u32 %v1401, %v1402
    %v1404 = vshll.u32 2131351028, %v1395
    %v1405 = vshrl.u32 2102212464, %v1396
    %v1406 = vor.u32 %v1404, %v1405
    %v1407 = vshll.u32 2102212464, %v1395
    %v1408 = vshrl.u32 920167782, %v1396
    %v1409 = vor.u32 %v1407, %v1408
    %v1410 = vshll.u32 920167782, %v1395
    %v1411 = vshrl.u32 1326507024, %v1396
    %v1412 = vor.u32 %v1410, %v1411
    %vm1413 = vcmp.lt.s32.totalorder %v1394, 1
    %vm1414 = vcmp.lt.s32.totalorder %v1394, 2
    %vm1415 = vcmp.lt.s32.totalorder %v1394, 3
    %vm1416 = vcmp.lt.s32.totalorder %v1394, 4
    %v1417 = vsel %vm1413, %v1397, %v1400
    %v1418 = vsel %vm1416, %v1406, 2102212464
    %v1419 = vsel %vm1415, %v1403, %v1418
    %v1420 = vsel %vm1414, %v1417, %v1419
    %v1421 = vsel %vm1413, %v1400, %v1403
    %v1422 = vsel %vm1416, %v1409, 920167782
    %v1423 = vsel %vm1415, %v1406, %v1422
    %v1424 = vsel %vm1414, %v1421, %v1423
    %v1425 = vsel %vm1413, %v1403, %v1406
    %v1426 = vsel %vm1416, %v1412, 1326507024
    %v1427 = vsel %vm1415, %v1409, %v1426
    %v1428 = vsel %vm1414, %v1425, %v1427
    %v1429 = vshll.u32 %v1389, 8
    %v1430 = vmul.u32.u64.compose %v1429, %v1428
    %v1431 = vextract.low.u32 %v1430
    %v1432 = vextract.high.u32 %v1430
    %v1433 = vmul.u32.u64.compose %v1429, %v1424
    %v1434 = vextract.low.u32 %v1433
    %v1435 = vextract.high.u32 %v1433
    %v1436 = vmul.u32 %v1429, %v1420
    %v1437 = vadd.s32 %v1432, %v1434
    %vm1438 = vc.u32 %v1432, %v1434
    %v1439 = vadd.s32 %v1435, 1
    %v1440 = vsel %vm1438, %v1439, %v1435
    %v1441 = vadd.s32 %v1436, %v1440
    %v1442 = vadd.s32 %v1441, 536870912
    %v1443 = vshrl.u32 %v1442, 30
    %v1444 = vshll.u32 %v1443, 30
    %v1445 = vsub.s32 %v1441, %v1444
    %vm1446 = vcmp.lt.s32.totalorder %v1445, 0
    %v1447 = vsub.s32 0, %v1445
    %v1448 = vsel %vm1446, %v1447, %v1445
    %v1449 = vclz %v1448
    %v1450 = vsub.s32 %v1449, 2
    %vm1451 = vcmp.gt.s32.totalorder 0, %v1450
    %v1452 = vsel %vm1451, 0, %v1450
    %v1453 = vsub.s32 32, %v1452
    %v1454 = vshll.u32 %v1445, %v1452
    %v1455 = vshrl.u32 %v1437, %v1453
    %v1456 = vor.u32 %v1454, %v1455
    %v1457 = vsub.s32 4294967266, %v1452
    %v1458 = vadd.s32 %v1457, 127
    %v1459 = vshll.u32 %v1458, 23
    %v1460 = vor.u32 4788187, %v1459
    %v1461 = vand.u32 2147483647, %v1460
    %v1463 = vcvt.s32.f32 %v1456
    %v1464 = vmul.f32 %v1463, %v1461
    %v1465 = vxor.u32 %v1464, 2147483648
    %v1466 = vsel %vm1383, %v1465, %v1464
    %v1467 = vsub.s32 4, %v1443
    %v1468 = vsel %vm1383, %v1467, %v1443
    %v1469 = vsel %vm1382, %v319, %v1466
    %v1470 = vsel %vm1382, 0, %v1468
    %v1471 = vcosq.f32.pop %v1469
    %v1472 = vsinq.f32.pop %v1469
    %vm1473 = vweird.f32 %v319
    %v1474 = vadd.s32 %v1470, 3
    %v1475 = vand.u32 %v1474, 3
    %vm1476 = vcmp.lt.s32.totalorder %v1475, 2
    %vm1477 = vcmp.eq.s32.totalorder %v1475, 0
    %v1478 = vxor.u32 %v1472, 2147483648
    %v1479 = vsel %vm1477, %v1471, %v1478
    %vm1480 = vcmp.eq.s32.totalorder %v1475, 2
    %v1481 = vxor.u32 %v1471, 2147483648
    %v1482 = vsel %vm1480, %v1481, %v1472
    %v1483 = vsel %vm1476, %v1479, %v1482
    %v1484 = vsel %vm1473, nan, %v1483
    %v1485 = vand.u32 2147483647, %v320
    %vm1486 = vcmp.le.f32.partialorder %v1485, 0.7853982
    %vm1487 = vcmp.lt.s32.totalorder %v320, 0
    %v1488 = vand.u32 %v320, 2139095040
    %v1489 = vshrl.u32 %v1488, 23
    %v1490 = vsub.s32 %v1489, 127
    %v1491 = vand.u32 2147483647, %v320
    %v1492 = vand.u32 %v1491, 8388607
    %v1493 = vor.u32 %v1492, 8388608
    %v1494 = vsub.s32 0, %v1493
    %v1495 = vadd.s32 %v1490, 1
    %vm1496 = vcmp.gt.s32.totalorder %v1495, 0
    %v1497 = vsel %vm1496, %v1495, 0
    %v1498 = vshrl.u32 %v1497, 5
    %v1499 = vand.u32 %v1497, 31
    %v1500 = vsub.s32 32, %v1499
    %v1501 = vshrl.u32 683565275, %v1500
    %v1502 = vshll.u32 683565275, %v1499
    %v1503 = vshrl.u32 2475754826, %v1500
    %v1504 = vor.u32 %v1502, %v1503
    %v1505 = vshll.u32 2475754826, %v1499
    %v1506 = vshrl.u32 2131351028, %v1500
    %v1507 = vor.u32 %v1505, %v1506
    %v1508 = vshll.u32 2131351028, %v1499
    %v1509 = vshrl.u32 2102212464, %v1500
    %v1510 = vor.u32 %v1508, %v1509
    %v1511 = vshll.u32 2102212464, %v1499
    %v1512 = vshrl.u32 920167782, %v1500
    %v1513 = vor.u32 %v1511, %v1512
    %v1514 = vshll.u32 920167782, %v1499
    %v1515 = vshrl.u32 1326507024, %v1500
    %v1516 = vor.u32 %v1514, %v1515
    %vm1517 = vcmp.lt.s32.totalorder %v1498, 1
    %vm1518 = vcmp.lt.s32.totalorder %v1498, 2
    %vm1519 = vcmp.lt.s32.totalorder %v1498, 3
    %vm1520 = vcmp.lt.s32.totalorder %v1498, 4
    %v1521 = vsel %vm1517, %v1501, %v1504
    %v1522 = vsel %vm1520, %v1510, 2102212464
    %v1523 = vsel %vm1519, %v1507, %v1522
    %v1524 = vsel %vm1518, %v1521, %v1523
    %v1525 = vsel %vm1517, %v1504, %v1507
    %v1526 = vsel %vm1520, %v1513, 920167782
    %v1527 = vsel %vm1519, %v1510, %v1526
    %v1528 = vsel %vm1518, %v1525, %v1527
    %v1529 = vsel %vm1517, %v1507, %v1510
    %v1530 = vsel %vm1520, %v1516, 1326507024
    %v1531 = vsel %vm1519, %v1513, %v1530
    %v1532 = vsel %vm1518, %v1529, %v1531
    %v1533 = vshll.u32 %v1493, 8
    %v1534 = vmul.u32.u64.compose %v1533, %v1532
    %v1535 = vextract.low.u32 %v1534
    %v1536 = vextract.high.u32 %v1534
    %v1537 = vmul.u32.u64.compose %v1533, %v1528
    %v1538 = vextract.low.u32 %v1537
    %v1539 = vextract.high.u32 %v1537
    %v1540 = vmul.u32 %v1533, %v1524
    %v1541 = vadd.s32 %v1536, %v1538
    %vm1542 = vc.u32 %v1536, %v1538
    %v1543 = vadd.s32 %v1539, 1
    %v1544 = vsel %vm1542, %v1543, %v1539
    %v1545 = vadd.s32 %v1540, %v1544
    %v1546 = vadd.s32 %v1545, 536870912
    %v1547 = vshrl.u32 %v1546, 30
    %v1548 = vshll.u32 %v1547, 30
    %v1549 = vsub.s32 %v1545, %v1548
    %vm1550 = vcmp.lt.s32.totalorder %v1549, 0
    %v1551 = vsub.s32 0, %v1549
    %v1552 = vsel %vm1550, %v1551, %v1549
    %v1553 = vclz %v1552
    %v1554 = vsub.s32 %v1553, 2
    %vm1555 = vcmp.gt.s32.totalorder 0, %v1554
    %v1556 = vsel %vm1555, 0, %v1554
    %v1557 = vsub.s32 32, %v1556
    %v1558 = vshll.u32 %v1549, %v1556
    %v1559 = vshrl.u32 %v1541, %v1557
    %v1560 = vor.u32 %v1558, %v1559
    %v1561 = vsub.s32 4294967266, %v1556
    %v1562 = vadd.s32 %v1561, 127
    %v1563 = vshll.u32 %v1562, 23
    %v1564 = vor.u32 4788187, %v1563
    %v1565 = vand.u32 2147483647, %v1564
    %v1567 = vcvt.s32.f32 %v1560
    %v1568 = vmul.f32 %v1567, %v1565
    %v1569 = vxor.u32 %v1568, 2147483648
    %v1570 = vsel %vm1487, %v1569, %v1568
    %v1571 = vsub.s32 4, %v1547
    %v1572 = vsel %vm1487, %v1571, %v1547
    %v1573 = vsel %vm1486, %v320, %v1570
    %v1574 = vsel %vm1486, 0, %v1572
    %v1575 = vcosq.f32.pop %v1573
    %v1576 = vsinq.f32.pop %v1573
    %vm1577 = vweird.f32 %v320
    %v1578 = vadd.s32 %v1574, 3
    %v1579 = vand.u32 %v1578, 3
    %vm1580 = vcmp.lt.s32.totalorder %v1579, 2
    %vm1581 = vcmp.eq.s32.totalorder %v1579, 0
    %v1582 = vxor.u32 %v1576, 2147483648
    %v1583 = vsel %vm1581, %v1575, %v1582
    %vm1584 = vcmp.eq.s32.totalorder %v1579, 2
    %v1585 = vxor.u32 %v1575, 2147483648
    %v1586 = vsel %vm1584, %v1585, %v1576
    %v1587 = vsel %vm1580, %v1583, %v1586
    %v1588 = vsel %vm1577, nan, %v1587
    %v1589 = vand.u32 2147483647, %v321
    %vm1590 = vcmp.le.f32.partialorder %v1589, 0.7853982
    %vm1591 = vcmp.lt.s32.totalorder %v321, 0
    %v1592 = vand.u32 %v321, 2139095040
    %v1593 = vshrl.u32 %v1592, 23
    %v1594 = vsub.s32 %v1593, 127
    %v1595 = vand.u32 2147483647, %v321
    %v1596 = vand.u32 %v1595, 8388607
    %v1597 = vor.u32 %v1596, 8388608
    %v1598 = vsub.s32 0, %v1597
    %v1599 = vadd.s32 %v1594, 1
    %vm1600 = vcmp.gt.s32.totalorder %v1599, 0
    %v1601 = vsel %vm1600, %v1599, 0
    %v1602 = vshrl.u32 %v1601, 5
    %v1603 = vand.u32 %v1601, 31
    %v1604 = vsub.s32 32, %v1603
    %v1605 = vshrl.u32 683565275, %v1604
    %v1606 = vshll.u32 683565275, %v1603
    %v1607 = vshrl.u32 2475754826, %v1604
    %v1608 = vor.u32 %v1606, %v1607
    %v1609 = vshll.u32 2475754826, %v1603
    %v1610 = vshrl.u32 2131351028, %v1604
    %v1611 = vor.u32 %v1609, %v1610
    %v1612 = vshll.u32 2131351028, %v1603
    %v1613 = vshrl.u32 2102212464, %v1604
    %v1614 = vor.u32 %v1612, %v1613
    %v1615 = vshll.u32 2102212464, %v1603
    %v1616 = vshrl.u32 920167782, %v1604
    %v1617 = vor.u32 %v1615, %v1616
    %v1618 = vshll.u32 920167782, %v1603
    %v1619 = vshrl.u32 1326507024, %v1604
    %v1620 = vor.u32 %v1618, %v1619
    %vm1621 = vcmp.lt.s32.totalorder %v1602, 1
    %vm1622 = vcmp.lt.s32.totalorder %v1602, 2
    %vm1623 = vcmp.lt.s32.totalorder %v1602, 3
    %vm1624 = vcmp.lt.s32.totalorder %v1602, 4
    %v1625 = vsel %vm1621, %v1605, %v1608
    %v1626 = vsel %vm1624, %v1614, 2102212464
    %v1627 = vsel %vm1623, %v1611, %v1626
    %v1628 = vsel %vm1622, %v1625, %v1627
    %v1629 = vsel %vm1621, %v1608, %v1611
    %v1630 = vsel %vm1624, %v1617, 920167782
    %v1631 = vsel %vm1623, %v1614, %v1630
    %v1632 = vsel %vm1622, %v1629, %v1631
    %v1633 = vsel %vm1621, %v1611, %v1614
    %v1634 = vsel %vm1624, %v1620, 1326507024
    %v1635 = vsel %vm1623, %v1617, %v1634
    %v1636 = vsel %vm1622, %v1633, %v1635
    %v1637 = vshll.u32 %v1597, 8
    %v1638 = vmul.u32.u64.compose %v1637, %v1636
    %v1639 = vextract.low.u32 %v1638
    %v1640 = vextract.high.u32 %v1638
    %v1641 = vmul.u32.u64.compose %v1637, %v1632
    %v1642 = vextract.low.u32 %v1641
    %v1643 = vextract.high.u32 %v1641
    %v1644 = vmul.u32 %v1637, %v1628
    %v1645 = vadd.s32 %v1640, %v1642
    %vm1646 = vc.u32 %v1640, %v1642
    %v1647 = vadd.s32 %v1643, 1
    %v1648 = vsel %vm1646, %v1647, %v1643
    %v1649 = vadd.s32 %v1644, %v1648
    %v1650 = vadd.s32 %v1649, 536870912
    %v1651 = vshrl.u32 %v1650, 30
    %v1652 = vshll.u32 %v1651, 30
    %v1653 = vsub.s32 %v1649, %v1652
    %vm1654 = vcmp.lt.s32.totalorder %v1653, 0
    %v1655 = vsub.s32 0, %v1653
    %v1656 = vsel %vm1654, %v1655, %v1653
    %v1657 = vclz %v1656
    %v1658 = vsub.s32 %v1657, 2
    %vm1659 = vcmp.gt.s32.totalorder 0, %v1658
    %v1660 = vsel %vm1659, 0, %v1658
    %v1661 = vsub.s32 32, %v1660
    %v1662 = vshll.u32 %v1653, %v1660
    %v1663 = vshrl.u32 %v1645, %v1661
    %v1664 = vor.u32 %v1662, %v1663
    %v1665 = vsub.s32 4294967266, %v1660
    %v1666 = vadd.s32 %v1665, 127
    %v1667 = vshll.u32 %v1666, 23
    %v1668 = vor.u32 4788187, %v1667
    %v1669 = vand.u32 2147483647, %v1668
    %v1671 = vcvt.s32.f32 %v1664
    %v1672 = vmul.f32 %v1671, %v1669
    %v1673 = vxor.u32 %v1672, 2147483648
    %v1674 = vsel %vm1591, %v1673, %v1672
    %v1675 = vsub.s32 4, %v1651
    %v1676 = vsel %vm1591, %v1675, %v1651
    %v1677 = vsel %vm1590, %v321, %v1674
    %v1678 = vsel %vm1590, 0, %v1676
    %v1679 = vcosq.f32.pop %v1677
    %v1680 = vsinq.f32.pop %v1677
    %vm1681 = vweird.f32 %v321
    %v1682 = vadd.s32 %v1678, 3
    %v1683 = vand.u32 %v1682, 3
    %vm1684 = vcmp.lt.s32.totalorder %v1683, 2
    %vm1685 = vcmp.eq.s32.totalorder %v1683, 0
    %v1686 = vxor.u32 %v1680, 2147483648
    %v1687 = vsel %vm1685, %v1679, %v1686
    %vm1688 = vcmp.eq.s32.totalorder %v1683, 2
    %v1689 = vxor.u32 %v1679, 2147483648
    %v1690 = vsel %vm1688, %v1689, %v1680
    %v1691 = vsel %vm1684, %v1687, %v1690
    %v1692 = vsel %vm1681, nan, %v1691
    %v1693 = vand.u32 2147483647, %v322
    %vm1694 = vcmp.le.f32.partialorder %v1693, 0.7853982
    %vm1695 = vcmp.lt.s32.totalorder %v322, 0
    %v1696 = vand.u32 %v322, 2139095040
    %v1697 = vshrl.u32 %v1696, 23
    %v1698 = vsub.s32 %v1697, 127
    %v1699 = vand.u32 2147483647, %v322
    %v1700 = vand.u32 %v1699, 8388607
    %v1701 = vor.u32 %v1700, 8388608
    %v1702 = vsub.s32 0, %v1701
    %v1703 = vadd.s32 %v1698, 1
    %vm1704 = vcmp.gt.s32.totalorder %v1703, 0
    %v1705 = vsel %vm1704, %v1703, 0
    %v1706 = vshrl.u32 %v1705, 5
    %v1707 = vand.u32 %v1705, 31
    %v1708 = vsub.s32 32, %v1707
    %v1709 = vshrl.u32 683565275, %v1708
    %v1710 = vshll.u32 683565275, %v1707
    %v1711 = vshrl.u32 2475754826, %v1708
    %v1712 = vor.u32 %v1710, %v1711
    %v1713 = vshll.u32 2475754826, %v1707
    %v1714 = vshrl.u32 2131351028, %v1708
    %v1715 = vor.u32 %v1713, %v1714
    %v1716 = vshll.u32 2131351028, %v1707
    %v1717 = vshrl.u32 2102212464, %v1708
    %v1718 = vor.u32 %v1716, %v1717
    %v1719 = vshll.u32 2102212464, %v1707
    %v1720 = vshrl.u32 920167782, %v1708
    %v1721 = vor.u32 %v1719, %v1720
    %v1722 = vshll.u32 920167782, %v1707
    %v1723 = vshrl.u32 1326507024, %v1708
    %v1724 = vor.u32 %v1722, %v1723
    %vm1725 = vcmp.lt.s32.totalorder %v1706, 1
    %vm1726 = vcmp.lt.s32.totalorder %v1706, 2
    %vm1727 = vcmp.lt.s32.totalorder %v1706, 3
    %vm1728 = vcmp.lt.s32.totalorder %v1706, 4
    %v1729 = vsel %vm1725, %v1709, %v1712
    %v1730 = vsel %vm1728, %v1718, 2102212464
    %v1731 = vsel %vm1727, %v1715, %v1730
    %v1732 = vsel %vm1726, %v1729, %v1731
    %v1733 = vsel %vm1725, %v1712, %v1715
    %v1734 = vsel %vm1728, %v1721, 920167782
    %v1735 = vsel %vm1727, %v1718, %v1734
    %v1736 = vsel %vm1726, %v1733, %v1735
    %v1737 = vsel %vm1725, %v1715, %v1718
    %v1738 = vsel %vm1728, %v1724, 1326507024
    %v1739 = vsel %vm1727, %v1721, %v1738
    %v1740 = vsel %vm1726, %v1737, %v1739
    %v1741 = vshll.u32 %v1701, 8
    %v1742 = vmul.u32.u64.compose %v1741, %v1740
    %v1743 = vextract.low.u32 %v1742
    %v1744 = vextract.high.u32 %v1742
    %v1745 = vmul.u32.u64.compose %v1741, %v1736
    %v1746 = vextract.low.u32 %v1745
    %v1747 = vextract.high.u32 %v1745
    %v1748 = vmul.u32 %v1741, %v1732
    %v1749 = vadd.s32 %v1744, %v1746
    %vm1750 = vc.u32 %v1744, %v1746
    %v1751 = vadd.s32 %v1747, 1
    %v1752 = vsel %vm1750, %v1751, %v1747
    %v1753 = vadd.s32 %v1748, %v1752
    %v1754 = vadd.s32 %v1753, 536870912
    %v1755 = vshrl.u32 %v1754, 30
    %v1756 = vshll.u32 %v1755, 30
    %v1757 = vsub.s32 %v1753, %v1756
    %vm1758 = vcmp.lt.s32.totalorder %v1757, 0
    %v1759 = vsub.s32 0, %v1757
    %v1760 = vsel %vm1758, %v1759, %v1757
    %v1761 = vclz %v1760
    %v1762 = vsub.s32 %v1761, 2
    %vm1763 = vcmp.gt.s32.totalorder 0, %v1762
    %v1764 = vsel %vm1763, 0, %v1762
    %v1765 = vsub.s32 32, %v1764
    %v1766 = vshll.u32 %v1757, %v1764
    %v1767 = vshrl.u32 %v1749, %v1765
    %v1768 = vor.u32 %v1766, %v1767
    %v1769 = vsub.s32 4294967266, %v1764
    %v1770 = vadd.s32 %v1769, 127
    %v1771 = vshll.u32 %v1770, 23
    %v1772 = vor.u32 4788187, %v1771
    %v1773 = vand.u32 2147483647, %v1772
    %v1775 = vcvt.s32.f32 %v1768
    %v1776 = vmul.f32 %v1775, %v1773
    %v1777 = vxor.u32 %v1776, 2147483648
    %v1778 = vsel %vm1695, %v1777, %v1776
    %v1779 = vsub.s32 4, %v1755
    %v1780 = vsel %vm1695, %v1779, %v1755
    %v1781 = vsel %vm1694, %v322, %v1778
    %v1782 = vsel %vm1694, 0, %v1780
    %v1783 = vcosq.f32.pop %v1781
    %v1784 = vsinq.f32.pop %v1781
    %vm1785 = vweird.f32 %v322
    %v1786 = vadd.s32 %v1782, 3
    %v1787 = vand.u32 %v1786, 3
    %vm1788 = vcmp.lt.s32.totalorder %v1787, 2
    %vm1789 = vcmp.eq.s32.totalorder %v1787, 0
    %v1790 = vxor.u32 %v1784, 2147483648
    %v1791 = vsel %vm1789, %v1783, %v1790
    %vm1792 = vcmp.eq.s32.totalorder %v1787, 2
    %v1793 = vxor.u32 %v1783, 2147483648
    %v1794 = vsel %vm1792, %v1793, %v1784
    %v1795 = vsel %vm1788, %v1791, %v1794
    %v1796 = vsel %vm1785, nan, %v1795
    %v1797 = vand.u32 2147483647, %v323
    %vm1798 = vcmp.le.f32.partialorder %v1797, 0.7853982
    %vm1799 = vcmp.lt.s32.totalorder %v323, 0
    %v1800 = vand.u32 %v323, 2139095040
    %v1801 = vshrl.u32 %v1800, 23
    %v1802 = vsub.s32 %v1801, 127
    %v1803 = vand.u32 2147483647, %v323
    %v1804 = vand.u32 %v1803, 8388607
    %v1805 = vor.u32 %v1804, 8388608
    %v1806 = vsub.s32 0, %v1805
    %v1807 = vadd.s32 %v1802, 1
    %vm1808 = vcmp.gt.s32.totalorder %v1807, 0
    %v1809 = vsel %vm1808, %v1807, 0
    %v1810 = vshrl.u32 %v1809, 5
    %v1811 = vand.u32 %v1809, 31
    %v1812 = vsub.s32 32, %v1811
    %v1813 = vshrl.u32 683565275, %v1812
    %v1814 = vshll.u32 683565275, %v1811
    %v1815 = vshrl.u32 2475754826, %v1812
    %v1816 = vor.u32 %v1814, %v1815
    %v1817 = vshll.u32 2475754826, %v1811
    %v1818 = vshrl.u32 2131351028, %v1812
    %v1819 = vor.u32 %v1817, %v1818
    %v1820 = vshll.u32 2131351028, %v1811
    %v1821 = vshrl.u32 2102212464, %v1812
    %v1822 = vor.u32 %v1820, %v1821
    %v1823 = vshll.u32 2102212464, %v1811
    %v1824 = vshrl.u32 920167782, %v1812
    %v1825 = vor.u32 %v1823, %v1824
    %v1826 = vshll.u32 920167782, %v1811
    %v1827 = vshrl.u32 1326507024, %v1812
    %v1828 = vor.u32 %v1826, %v1827
    %vm1829 = vcmp.lt.s32.totalorder %v1810, 1
    %vm1830 = vcmp.lt.s32.totalorder %v1810, 2
    %vm1831 = vcmp.lt.s32.totalorder %v1810, 3
    %vm1832 = vcmp.lt.s32.totalorder %v1810, 4
    %v1833 = vsel %vm1829, %v1813, %v1816
    %v1834 = vsel %vm1832, %v1822, 2102212464
    %v1835 = vsel %vm1831, %v1819, %v1834
    %v1836 = vsel %vm1830, %v1833, %v1835
    %v1837 = vsel %vm1829, %v1816, %v1819
    %v1838 = vsel %vm1832, %v1825, 920167782
    %v1839 = vsel %vm1831, %v1822, %v1838
    %v1840 = vsel %vm1830, %v1837, %v1839
    %v1841 = vsel %vm1829, %v1819, %v1822
    %v1842 = vsel %vm1832, %v1828, 1326507024
    %v1843 = vsel %vm1831, %v1825, %v1842
    %v1844 = vsel %vm1830, %v1841, %v1843
    %v1845 = vshll.u32 %v1805, 8
    %v1846 = vmul.u32.u64.compose %v1845, %v1844
    %v1847 = vextract.low.u32 %v1846
    %v1848 = vextract.high.u32 %v1846
    %v1849 = vmul.u32.u64.compose %v1845, %v1840
    %v1850 = vextract.low.u32 %v1849
    %v1851 = vextract.high.u32 %v1849
    %v1852 = vmul.u32 %v1845, %v1836
    %v1853 = vadd.s32 %v1848, %v1850
    %vm1854 = vc.u32 %v1848, %v1850
    %v1855 = vadd.s32 %v1851, 1
    %v1856 = vsel %vm1854, %v1855, %v1851
    %v1857 = vadd.s32 %v1852, %v1856
    %v1858 = vadd.s32 %v1857, 536870912
    %v1859 = vshrl.u32 %v1858, 30
    %v1860 = vshll.u32 %v1859, 30
    %v1861 = vsub.s32 %v1857, %v1860
    %vm1862 = vcmp.lt.s32.totalorder %v1861, 0
    %v1863 = vsub.s32 0, %v1861
    %v1864 = vsel %vm1862, %v1863, %v1861
    %v1865 = vclz %v1864
    %v1866 = vsub.s32 %v1865, 2
    %vm1867 = vcmp.gt.s32.totalorder 0, %v1866
    %v1868 = vsel %vm1867, 0, %v1866
    %v1869 = vsub.s32 32, %v1868
    %v1870 = vshll.u32 %v1861, %v1868
    %v1871 = vshrl.u32 %v1853, %v1869
    %v1872 = vor.u32 %v1870, %v1871
    %v1873 = vsub.s32 4294967266, %v1868
    %v1874 = vadd.s32 %v1873, 127
    %v1875 = vshll.u32 %v1874, 23
    %v1876 = vor.u32 4788187, %v1875
    %v1877 = vand.u32 2147483647, %v1876
    %v1879 = vcvt.s32.f32 %v1872
    %v1880 = vmul.f32 %v1879, %v1877
    %v1881 = vxor.u32 %v1880, 2147483648
    %v1882 = vsel %vm1799, %v1881, %v1880
    %v1883 = vsub.s32 4, %v1859
    %v1884 = vsel %vm1799, %v1883, %v1859
    %v1885 = vsel %vm1798, %v323, %v1882
    %v1886 = vsel %vm1798, 0, %v1884
    %v1887 = vcosq.f32.pop %v1885
    %v1888 = vsinq.f32.pop %v1885
    %vm1889 = vweird.f32 %v323
    %v1890 = vadd.s32 %v1886, 3
    %v1891 = vand.u32 %v1890, 3
    %vm1892 = vcmp.lt.s32.totalorder %v1891, 2
    %vm1893 = vcmp.eq.s32.totalorder %v1891, 0
    %v1894 = vxor.u32 %v1888, 2147483648
    %v1895 = vsel %vm1893, %v1887, %v1894
    %vm1896 = vcmp.eq.s32.totalorder %v1891, 2
    %v1897 = vxor.u32 %v1887, 2147483648
    %v1898 = vsel %vm1896, %v1897, %v1888
    %v1899 = vsel %vm1892, %v1895, %v1898
    %v1900 = vsel %vm1889, nan, %v1899
    %v1901 = vand.u32 2147483647, %v324
    %vm1902 = vcmp.le.f32.partialorder %v1901, 0.7853982
    %vm1903 = vcmp.lt.s32.totalorder %v324, 0
    %v1904 = vand.u32 %v324, 2139095040
    %v1905 = vshrl.u32 %v1904, 23
    %v1906 = vsub.s32 %v1905, 127
    %v1907 = vand.u32 2147483647, %v324
    %v1908 = vand.u32 %v1907, 8388607
    %v1909 = vor.u32 %v1908, 8388608
    %v1910 = vsub.s32 0, %v1909
    %v1911 = vadd.s32 %v1906, 1
    %vm1912 = vcmp.gt.s32.totalorder %v1911, 0
    %v1913 = vsel %vm1912, %v1911, 0
    %v1914 = vshrl.u32 %v1913, 5
    %v1915 = vand.u32 %v1913, 31
    %v1916 = vsub.s32 32, %v1915
    %v1917 = vshrl.u32 683565275, %v1916
    %v1918 = vshll.u32 683565275, %v1915
    %v1919 = vshrl.u32 2475754826, %v1916
    %v1920 = vor.u32 %v1918, %v1919
    %v1921 = vshll.u32 2475754826, %v1915
    %v1922 = vshrl.u32 2131351028, %v1916
    %v1923 = vor.u32 %v1921, %v1922
    %v1924 = vshll.u32 2131351028, %v1915
    %v1925 = vshrl.u32 2102212464, %v1916
    %v1926 = vor.u32 %v1924, %v1925
    %v1927 = vshll.u32 2102212464, %v1915
    %v1928 = vshrl.u32 920167782, %v1916
    %v1929 = vor.u32 %v1927, %v1928
    %v1930 = vshll.u32 920167782, %v1915
    %v1931 = vshrl.u32 1326507024, %v1916
    %v1932 = vor.u32 %v1930, %v1931
    %vm1933 = vcmp.lt.s32.totalorder %v1914, 1
    %vm1934 = vcmp.lt.s32.totalorder %v1914, 2
    %vm1935 = vcmp.lt.s32.totalorder %v1914, 3
    %vm1936 = vcmp.lt.s32.totalorder %v1914, 4
    %v1937 = vsel %vm1933, %v1917, %v1920
    %v1938 = vsel %vm1936, %v1926, 2102212464
    %v1939 = vsel %vm1935, %v1923, %v1938
    %v1940 = vsel %vm1934, %v1937, %v1939
    %v1941 = vsel %vm1933, %v1920, %v1923
    %v1942 = vsel %vm1936, %v1929, 920167782
    %v1943 = vsel %vm1935, %v1926, %v1942
    %v1944 = vsel %vm1934, %v1941, %v1943
    %v1945 = vsel %vm1933, %v1923, %v1926
    %v1946 = vsel %vm1936, %v1932, 1326507024
    %v1947 = vsel %vm1935, %v1929, %v1946
    %v1948 = vsel %vm1934, %v1945, %v1947
    %v1949 = vshll.u32 %v1909, 8
    %v1950 = vmul.u32.u64.compose %v1949, %v1948
    %v1951 = vextract.low.u32 %v1950
    %v1952 = vextract.high.u32 %v1950
    %v1953 = vmul.u32.u64.compose %v1949, %v1944
    %v1954 = vextract.low.u32 %v1953
    %v1955 = vextract.high.u32 %v1953
    %v1956 = vmul.u32 %v1949, %v1940
    %v1957 = vadd.s32 %v1952, %v1954
    %vm1958 = vc.u32 %v1952, %v1954
    %v1959 = vadd.s32 %v1955, 1
    %v1960 = vsel %vm1958, %v1959, %v1955
    %v1961 = vadd.s32 %v1956, %v1960
    %v1962 = vadd.s32 %v1961, 536870912
    %v1963 = vshrl.u32 %v1962, 30
    %v1964 = vshll.u32 %v1963, 30
    %v1965 = vsub.s32 %v1961, %v1964
    %vm1966 = vcmp.lt.s32.totalorder %v1965, 0
    %v1967 = vsub.s32 0, %v1965
    %v1968 = vsel %vm1966, %v1967, %v1965
    %v1969 = vclz %v1968
    %v1970 = vsub.s32 %v1969, 2
    %vm1971 = vcmp.gt.s32.totalorder 0, %v1970
    %v1972 = vsel %vm1971, 0, %v1970
    %v1973 = vsub.s32 32, %v1972
    %v1974 = vshll.u32 %v1965, %v1972
    %v1975 = vshrl.u32 %v1957, %v1973
    %v1976 = vor.u32 %v1974, %v1975
    %v1977 = vsub.s32 4294967266, %v1972
    %v1978 = vadd.s32 %v1977, 127
    %v1979 = vshll.u32 %v1978, 23
    %v1980 = vor.u32 4788187, %v1979
    %v1981 = vand.u32 2147483647, %v1980
    %v1983 = vcvt.s32.f32 %v1976
    %v1984 = vmul.f32 %v1983, %v1981
    %v1985 = vxor.u32 %v1984, 2147483648
    %v1986 = vsel %vm1903, %v1985, %v1984
    %v1987 = vsub.s32 4, %v1963
    %v1988 = vsel %vm1903, %v1987, %v1963
    %v1989 = vsel %vm1902, %v324, %v1986
    %v1990 = vsel %vm1902, 0, %v1988
    %v1991 = vcosq.f32.pop %v1989
    %v1992 = vsinq.f32.pop %v1989
    %vm1993 = vweird.f32 %v324
    %v1994 = vadd.s32 %v1990, 3
    %v1995 = vand.u32 %v1994, 3
    %vm1996 = vcmp.lt.s32.totalorder %v1995, 2
    %vm1997 = vcmp.eq.s32.totalorder %v1995, 0
    %v1998 = vxor.u32 %v1992, 2147483648
    %v1999 = vsel %vm1997, %v1991, %v1998
    %vm2000 = vcmp.eq.s32.totalorder %v1995, 2
    %v2001 = vxor.u32 %v1991, 2147483648
    %v2002 = vsel %vm2000, %v2001, %v1992
    %v2003 = vsel %vm1996, %v1999, %v2002
    %v2004 = vsel %vm1993, nan, %v2003
    %v2005 = vand.u32 2147483647, %v325
    %vm2006 = vcmp.le.f32.partialorder %v2005, 0.7853982
    %vm2007 = vcmp.lt.s32.totalorder %v325, 0
    %v2008 = vand.u32 %v325, 2139095040
    %v2009 = vshrl.u32 %v2008, 23
    %v2010 = vsub.s32 %v2009, 127
    %v2011 = vand.u32 2147483647, %v325
    %v2012 = vand.u32 %v2011, 8388607
    %v2013 = vor.u32 %v2012, 8388608
    %v2014 = vsub.s32 0, %v2013
    %v2015 = vadd.s32 %v2010, 1
    %vm2016 = vcmp.gt.s32.totalorder %v2015, 0
    %v2017 = vsel %vm2016, %v2015, 0
    %v2018 = vshrl.u32 %v2017, 5
    %v2019 = vand.u32 %v2017, 31
    %v2020 = vsub.s32 32, %v2019
    %v2021 = vshrl.u32 683565275, %v2020
    %v2022 = vshll.u32 683565275, %v2019
    %v2023 = vshrl.u32 2475754826, %v2020
    %v2024 = vor.u32 %v2022, %v2023
    %v2025 = vshll.u32 2475754826, %v2019
    %v2026 = vshrl.u32 2131351028, %v2020
    %v2027 = vor.u32 %v2025, %v2026
    %v2028 = vshll.u32 2131351028, %v2019
    %v2029 = vshrl.u32 2102212464, %v2020
    %v2030 = vor.u32 %v2028, %v2029
    %v2031 = vshll.u32 2102212464, %v2019
    %v2032 = vshrl.u32 920167782, %v2020
    %v2033 = vor.u32 %v2031, %v2032
    %v2034 = vshll.u32 920167782, %v2019
    %v2035 = vshrl.u32 1326507024, %v2020
    %v2036 = vor.u32 %v2034, %v2035
    %vm2037 = vcmp.lt.s32.totalorder %v2018, 1
    %vm2038 = vcmp.lt.s32.totalorder %v2018, 2
    %vm2039 = vcmp.lt.s32.totalorder %v2018, 3
    %vm2040 = vcmp.lt.s32.totalorder %v2018, 4
    %v2041 = vsel %vm2037, %v2021, %v2024
    %v2042 = vsel %vm2040, %v2030, 2102212464
    %v2043 = vsel %vm2039, %v2027, %v2042
    %v2044 = vsel %vm2038, %v2041, %v2043
    %v2045 = vsel %vm2037, %v2024, %v2027
    %v2046 = vsel %vm2040, %v2033, 920167782
    %v2047 = vsel %vm2039, %v2030, %v2046
    %v2048 = vsel %vm2038, %v2045, %v2047
    %v2049 = vsel %vm2037, %v2027, %v2030
    %v2050 = vsel %vm2040, %v2036, 1326507024
    %v2051 = vsel %vm2039, %v2033, %v2050
    %v2052 = vsel %vm2038, %v2049, %v2051
    %v2053 = vshll.u32 %v2013, 8
    %v2054 = vmul.u32.u64.compose %v2053, %v2052
    %v2055 = vextract.low.u32 %v2054
    %v2056 = vextract.high.u32 %v2054
    %v2057 = vmul.u32.u64.compose %v2053, %v2048
    %v2058 = vextract.low.u32 %v2057
    %v2059 = vextract.high.u32 %v2057
    %v2060 = vmul.u32 %v2053, %v2044
    %v2061 = vadd.s32 %v2056, %v2058
    %vm2062 = vc.u32 %v2056, %v2058
    %v2063 = vadd.s32 %v2059, 1
    %v2064 = vsel %vm2062, %v2063, %v2059
    %v2065 = vadd.s32 %v2060, %v2064
    %v2066 = vadd.s32 %v2065, 536870912
    %v2067 = vshrl.u32 %v2066, 30
    %v2068 = vshll.u32 %v2067, 30
    %v2069 = vsub.s32 %v2065, %v2068
    %vm2070 = vcmp.lt.s32.totalorder %v2069, 0
    %v2071 = vsub.s32 0, %v2069
    %v2072 = vsel %vm2070, %v2071, %v2069
    %v2073 = vclz %v2072
    %v2074 = vsub.s32 %v2073, 2
    %vm2075 = vcmp.gt.s32.totalorder 0, %v2074
    %v2076 = vsel %vm2075, 0, %v2074
    %v2077 = vsub.s32 32, %v2076
    %v2078 = vshll.u32 %v2069, %v2076
    %v2079 = vshrl.u32 %v2061, %v2077
    %v2080 = vor.u32 %v2078, %v2079
    %v2081 = vsub.s32 4294967266, %v2076
    %v2082 = vadd.s32 %v2081, 127
    %v2083 = vshll.u32 %v2082, 23
    %v2084 = vor.u32 4788187, %v2083
    %v2085 = vand.u32 2147483647, %v2084
    %v2087 = vcvt.s32.f32 %v2080
    %v2088 = vmul.f32 %v2087, %v2085
    %v2089 = vxor.u32 %v2088, 2147483648
    %v2090 = vsel %vm2007, %v2089, %v2088
    %v2091 = vsub.s32 4, %v2067
    %v2092 = vsel %vm2007, %v2091, %v2067
    %v2093 = vsel %vm2006, %v325, %v2090
    %v2094 = vsel %vm2006, 0, %v2092
    %v2095 = vcosq.f32.pop %v2093
    %v2096 = vsinq.f32.pop %v2093
    %vm2097 = vweird.f32 %v325
    %v2098 = vadd.s32 %v2094, 3
    %v2099 = vand.u32 %v2098, 3
    %vm2100 = vcmp.lt.s32.totalorder %v2099, 2
    %vm2101 = vcmp.eq.s32.totalorder %v2099, 0
    %v2102 = vxor.u32 %v2096, 2147483648
    %v2103 = vsel %vm2101, %v2095, %v2102
    %vm2104 = vcmp.eq.s32.totalorder %v2099, 2
    %v2105 = vxor.u32 %v2095, 2147483648
    %v2106 = vsel %vm2104, %v2105, %v2096
    %v2107 = vsel %vm2100, %v2103, %v2106
    %v2108 = vsel %vm2097, nan, %v2107
    %v2109 = vand.u32 2147483647, %v326
    %vm2110 = vcmp.le.f32.partialorder %v2109, 0.7853982
    %vm2111 = vcmp.lt.s32.totalorder %v326, 0
    %v2112 = vand.u32 %v326, 2139095040
    %v2113 = vshrl.u32 %v2112, 23
    %v2114 = vsub.s32 %v2113, 127
    %v2115 = vand.u32 2147483647, %v326
    %v2116 = vand.u32 %v2115, 8388607
    %v2117 = vor.u32 %v2116, 8388608
    %v2118 = vsub.s32 0, %v2117
    %v2119 = vadd.s32 %v2114, 1
    %vm2120 = vcmp.gt.s32.totalorder %v2119, 0
    %v2121 = vsel %vm2120, %v2119, 0
    %v2122 = vshrl.u32 %v2121, 5
    %v2123 = vand.u32 %v2121, 31
    %v2124 = vsub.s32 32, %v2123
    %v2125 = vshrl.u32 683565275, %v2124
    %v2126 = vshll.u32 683565275, %v2123
    %v2127 = vshrl.u32 2475754826, %v2124
    %v2128 = vor.u32 %v2126, %v2127
    %v2129 = vshll.u32 2475754826, %v2123
    %v2130 = vshrl.u32 2131351028, %v2124
    %v2131 = vor.u32 %v2129, %v2130
    %v2132 = vshll.u32 2131351028, %v2123
    %v2133 = vshrl.u32 2102212464, %v2124
    %v2134 = vor.u32 %v2132, %v2133
    %v2135 = vshll.u32 2102212464, %v2123
    %v2136 = vshrl.u32 920167782, %v2124
    %v2137 = vor.u32 %v2135, %v2136
    %v2138 = vshll.u32 920167782, %v2123
    %v2139 = vshrl.u32 1326507024, %v2124
    %v2140 = vor.u32 %v2138, %v2139
    %vm2141 = vcmp.lt.s32.totalorder %v2122, 1
    %vm2142 = vcmp.lt.s32.totalorder %v2122, 2
    %vm2143 = vcmp.lt.s32.totalorder %v2122, 3
    %vm2144 = vcmp.lt.s32.totalorder %v2122, 4
    %v2145 = vsel %vm2141, %v2125, %v2128
    %v2146 = vsel %vm2144, %v2134, 2102212464
    %v2147 = vsel %vm2143, %v2131, %v2146
    %v2148 = vsel %vm2142, %v2145, %v2147
    %v2149 = vsel %vm2141, %v2128, %v2131
    %v2150 = vsel %vm2144, %v2137, 920167782
    %v2151 = vsel %vm2143, %v2134, %v2150
    %v2152 = vsel %vm2142, %v2149, %v2151
    %v2153 = vsel %vm2141, %v2131, %v2134
    %v2154 = vsel %vm2144, %v2140, 1326507024
    %v2155 = vsel %vm2143, %v2137, %v2154
    %v2156 = vsel %vm2142, %v2153, %v2155
    %v2157 = vshll.u32 %v2117, 8
    %v2158 = vmul.u32.u64.compose %v2157, %v2156
    %v2159 = vextract.low.u32 %v2158
    %v2160 = vextract.high.u32 %v2158
    %v2161 = vmul.u32.u64.compose %v2157, %v2152
    %v2162 = vextract.low.u32 %v2161
    %v2163 = vextract.high.u32 %v2161
    %v2164 = vmul.u32 %v2157, %v2148
    %v2165 = vadd.s32 %v2160, %v2162
    %vm2166 = vc.u32 %v2160, %v2162
    %v2167 = vadd.s32 %v2163, 1
    %v2168 = vsel %vm2166, %v2167, %v2163
    %v2169 = vadd.s32 %v2164, %v2168
    %v2170 = vadd.s32 %v2169, 536870912
    %v2171 = vshrl.u32 %v2170, 30
    %v2172 = vshll.u32 %v2171, 30
    %v2173 = vsub.s32 %v2169, %v2172
    %vm2174 = vcmp.lt.s32.totalorder %v2173, 0
    %v2175 = vsub.s32 0, %v2173
    %v2176 = vsel %vm2174, %v2175, %v2173
    %v2177 = vclz %v2176
    %v2178 = vsub.s32 %v2177, 2
    %vm2179 = vcmp.gt.s32.totalorder 0, %v2178
    %v2180 = vsel %vm2179, 0, %v2178
    %v2181 = vsub.s32 32, %v2180
    %v2182 = vshll.u32 %v2173, %v2180
    %v2183 = vshrl.u32 %v2165, %v2181
    %v2184 = vor.u32 %v2182, %v2183
    %v2185 = vsub.s32 4294967266, %v2180
    %v2186 = vadd.s32 %v2185, 127
    %v2187 = vshll.u32 %v2186, 23
    %v2188 = vor.u32 4788187, %v2187
    %v2189 = vand.u32 2147483647, %v2188
    %v2191 = vcvt.s32.f32 %v2184
    %v2192 = vmul.f32 %v2191, %v2189
    %v2193 = vxor.u32 %v2192, 2147483648
    %v2194 = vsel %vm2111, %v2193, %v2192
    %v2195 = vsub.s32 4, %v2171
    %v2196 = vsel %vm2111, %v2195, %v2171
    %v2197 = vsel %vm2110, %v326, %v2194
    %v2198 = vsel %vm2110, 0, %v2196
    %v2199 = vcosq.f32.pop %v2197
    %v2200 = vsinq.f32.pop %v2197
    %vm2201 = vweird.f32 %v326
    %v2202 = vadd.s32 %v2198, 3
    %v2203 = vand.u32 %v2202, 3
    %vm2204 = vcmp.lt.s32.totalorder %v2203, 2
    %vm2205 = vcmp.eq.s32.totalorder %v2203, 0
    %v2206 = vxor.u32 %v2200, 2147483648
    %v2207 = vsel %vm2205, %v2199, %v2206
    %vm2208 = vcmp.eq.s32.totalorder %v2203, 2
    %v2209 = vxor.u32 %v2199, 2147483648
    %v2210 = vsel %vm2208, %v2209, %v2200
    %v2211 = vsel %vm2204, %v2207, %v2210
    %v2212 = vsel %vm2201, nan, %v2211
    %v2213 = vand.u32 2147483647, %v327
    %vm2214 = vcmp.le.f32.partialorder %v2213, 0.7853982
    %vm2215 = vcmp.lt.s32.totalorder %v327, 0
    %v2216 = vand.u32 %v327, 2139095040
    %v2217 = vshrl.u32 %v2216, 23
    %v2218 = vsub.s32 %v2217, 127
    %v2219 = vand.u32 2147483647, %v327
    %v2220 = vand.u32 %v2219, 8388607
    %v2221 = vor.u32 %v2220, 8388608
    %v2222 = vsub.s32 0, %v2221
    %v2223 = vadd.s32 %v2218, 1
    %vm2224 = vcmp.gt.s32.totalorder %v2223, 0
    %v2225 = vsel %vm2224, %v2223, 0
    %v2226 = vshrl.u32 %v2225, 5
    %v2227 = vand.u32 %v2225, 31
    %v2228 = vsub.s32 32, %v2227
    %v2229 = vshrl.u32 683565275, %v2228
    %v2230 = vshll.u32 683565275, %v2227
    %v2231 = vshrl.u32 2475754826, %v2228
    %v2232 = vor.u32 %v2230, %v2231
    %v2233 = vshll.u32 2475754826, %v2227
    %v2234 = vshrl.u32 2131351028, %v2228
    %v2235 = vor.u32 %v2233, %v2234
    %v2236 = vshll.u32 2131351028, %v2227
    %v2237 = vshrl.u32 2102212464, %v2228
    %v2238 = vor.u32 %v2236, %v2237
    %v2239 = vshll.u32 2102212464, %v2227
    %v2240 = vshrl.u32 920167782, %v2228
    %v2241 = vor.u32 %v2239, %v2240
    %v2242 = vshll.u32 920167782, %v2227
    %v2243 = vshrl.u32 1326507024, %v2228
    %v2244 = vor.u32 %v2242, %v2243
    %vm2245 = vcmp.lt.s32.totalorder %v2226, 1
    %vm2246 = vcmp.lt.s32.totalorder %v2226, 2
    %vm2247 = vcmp.lt.s32.totalorder %v2226, 3
    %vm2248 = vcmp.lt.s32.totalorder %v2226, 4
    %v2249 = vsel %vm2245, %v2229, %v2232
    %v2250 = vsel %vm2248, %v2238, 2102212464
    %v2251 = vsel %vm2247, %v2235, %v2250
    %v2252 = vsel %vm2246, %v2249, %v2251
    %v2253 = vsel %vm2245, %v2232, %v2235
    %v2254 = vsel %vm2248, %v2241, 920167782
    %v2255 = vsel %vm2247, %v2238, %v2254
    %v2256 = vsel %vm2246, %v2253, %v2255
    %v2257 = vsel %vm2245, %v2235, %v2238
    %v2258 = vsel %vm2248, %v2244, 1326507024
    %v2259 = vsel %vm2247, %v2241, %v2258
    %v2260 = vsel %vm2246, %v2257, %v2259
    %v2261 = vshll.u32 %v2221, 8
    %v2262 = vmul.u32.u64.compose %v2261, %v2260
    %v2263 = vextract.low.u32 %v2262
    %v2264 = vextract.high.u32 %v2262
    %v2265 = vmul.u32.u64.compose %v2261, %v2256
    %v2266 = vextract.low.u32 %v2265
    %v2267 = vextract.high.u32 %v2265
    %v2268 = vmul.u32 %v2261, %v2252
    %v2269 = vadd.s32 %v2264, %v2266
    %vm2270 = vc.u32 %v2264, %v2266
    %v2271 = vadd.s32 %v2267, 1
    %v2272 = vsel %vm2270, %v2271, %v2267
    %v2273 = vadd.s32 %v2268, %v2272
    %v2274 = vadd.s32 %v2273, 536870912
    %v2275 = vshrl.u32 %v2274, 30
    %v2276 = vshll.u32 %v2275, 30
    %v2277 = vsub.s32 %v2273, %v2276
    %vm2278 = vcmp.lt.s32.totalorder %v2277, 0
    %v2279 = vsub.s32 0, %v2277
    %v2280 = vsel %vm2278, %v2279, %v2277
    %v2281 = vclz %v2280
    %v2282 = vsub.s32 %v2281, 2
    %vm2283 = vcmp.gt.s32.totalorder 0, %v2282
    %v2284 = vsel %vm2283, 0, %v2282
    %v2285 = vsub.s32 32, %v2284
    %v2286 = vshll.u32 %v2277, %v2284
    %v2287 = vshrl.u32 %v2269, %v2285
    %v2288 = vor.u32 %v2286, %v2287
    %v2289 = vsub.s32 4294967266, %v2284
    %v2290 = vadd.s32 %v2289, 127
    %v2291 = vshll.u32 %v2290, 23
    %v2292 = vor.u32 4788187, %v2291
    %v2293 = vand.u32 2147483647, %v2292
    %v2295 = vcvt.s32.f32 %v2288
    %v2296 = vmul.f32 %v2295, %v2293
    %v2297 = vxor.u32 %v2296, 2147483648
    %v2298 = vsel %vm2215, %v2297, %v2296
    %v2299 = vsub.s32 4, %v2275
    %v2300 = vsel %vm2215, %v2299, %v2275
    %v2301 = vsel %vm2214, %v327, %v2298
    %v2302 = vsel %vm2214, 0, %v2300
    %v2303 = vcosq.f32.pop %v2301
    %v2304 = vsinq.f32.pop %v2301
    %vm2305 = vweird.f32 %v327
    %v2306 = vadd.s32 %v2302, 3
    %v2307 = vand.u32 %v2306, 3
    %vm2308 = vcmp.lt.s32.totalorder %v2307, 2
    %vm2309 = vcmp.eq.s32.totalorder %v2307, 0
    %v2310 = vxor.u32 %v2304, 2147483648
    %v2311 = vsel %vm2309, %v2303, %v2310
    %vm2312 = vcmp.eq.s32.totalorder %v2307, 2
    %v2313 = vxor.u32 %v2303, 2147483648
    %v2314 = vsel %vm2312, %v2313, %v2304
    %v2315 = vsel %vm2308, %v2311, %v2314
    %v2316 = vsel %vm2305, nan, %v2315
    %v2317 = vand.u32 2147483647, %v328
    %vm2318 = vcmp.le.f32.partialorder %v2317, 0.7853982
    %vm2319 = vcmp.lt.s32.totalorder %v328, 0
    %v2320 = vand.u32 %v328, 2139095040
    %v2321 = vshrl.u32 %v2320, 23
    %v2322 = vsub.s32 %v2321, 127
    %v2323 = vand.u32 2147483647, %v328
    %v2324 = vand.u32 %v2323, 8388607
    %v2325 = vor.u32 %v2324, 8388608
    %v2326 = vsub.s32 0, %v2325
    %v2327 = vadd.s32 %v2322, 1
    %vm2328 = vcmp.gt.s32.totalorder %v2327, 0
    %v2329 = vsel %vm2328, %v2327, 0
    %v2330 = vshrl.u32 %v2329, 5
    %v2331 = vand.u32 %v2329, 31
    %v2332 = vsub.s32 32, %v2331
    %v2333 = vshrl.u32 683565275, %v2332
    %v2334 = vshll.u32 683565275, %v2331
    %v2335 = vshrl.u32 2475754826, %v2332
    %v2336 = vor.u32 %v2334, %v2335
    %v2337 = vshll.u32 2475754826, %v2331
    %v2338 = vshrl.u32 2131351028, %v2332
    %v2339 = vor.u32 %v2337, %v2338
    %v2340 = vshll.u32 2131351028, %v2331
    %v2341 = vshrl.u32 2102212464, %v2332
    %v2342 = vor.u32 %v2340, %v2341
    %v2343 = vshll.u32 2102212464, %v2331
    %v2344 = vshrl.u32 920167782, %v2332
    %v2345 = vor.u32 %v2343, %v2344
    %v2346 = vshll.u32 920167782, %v2331
    %v2347 = vshrl.u32 1326507024, %v2332
    %v2348 = vor.u32 %v2346, %v2347
    %vm2349 = vcmp.lt.s32.totalorder %v2330, 1
    %vm2350 = vcmp.lt.s32.totalorder %v2330, 2
    %vm2351 = vcmp.lt.s32.totalorder %v2330, 3
    %vm2352 = vcmp.lt.s32.totalorder %v2330, 4
    %v2353 = vsel %vm2349, %v2333, %v2336
    %v2354 = vsel %vm2352, %v2342, 2102212464
    %v2355 = vsel %vm2351, %v2339, %v2354
    %v2356 = vsel %vm2350, %v2353, %v2355
    %v2357 = vsel %vm2349, %v2336, %v2339
    %v2358 = vsel %vm2352, %v2345, 920167782
    %v2359 = vsel %vm2351, %v2342, %v2358
    %v2360 = vsel %vm2350, %v2357, %v2359
    %v2361 = vsel %vm2349, %v2339, %v2342
    %v2362 = vsel %vm2352, %v2348, 1326507024
    %v2363 = vsel %vm2351, %v2345, %v2362
    %v2364 = vsel %vm2350, %v2361, %v2363
    %v2365 = vshll.u32 %v2325, 8
    %v2366 = vmul.u32.u64.compose %v2365, %v2364
    %v2367 = vextract.low.u32 %v2366
    %v2368 = vextract.high.u32 %v2366
    %v2369 = vmul.u32.u64.compose %v2365, %v2360
    %v2370 = vextract.low.u32 %v2369
    %v2371 = vextract.high.u32 %v2369
    %v2372 = vmul.u32 %v2365, %v2356
    %v2373 = vadd.s32 %v2368, %v2370
    %vm2374 = vc.u32 %v2368, %v2370
    %v2375 = vadd.s32 %v2371, 1
    %v2376 = vsel %vm2374, %v2375, %v2371
    %v2377 = vadd.s32 %v2372, %v2376
    %v2378 = vadd.s32 %v2377, 536870912
    %v2379 = vshrl.u32 %v2378, 30
    %v2380 = vshll.u32 %v2379, 30
    %v2381 = vsub.s32 %v2377, %v2380
    %vm2382 = vcmp.lt.s32.totalorder %v2381, 0
    %v2383 = vsub.s32 0, %v2381
    %v2384 = vsel %vm2382, %v2383, %v2381
    %v2385 = vclz %v2384
    %v2386 = vsub.s32 %v2385, 2
    %vm2387 = vcmp.gt.s32.totalorder 0, %v2386
    %v2388 = vsel %vm2387, 0, %v2386
    %v2389 = vsub.s32 32, %v2388
    %v2390 = vshll.u32 %v2381, %v2388
    %v2391 = vshrl.u32 %v2373, %v2389
    %v2392 = vor.u32 %v2390, %v2391
    %v2393 = vsub.s32 4294967266, %v2388
    %v2394 = vadd.s32 %v2393, 127
    %v2395 = vshll.u32 %v2394, 23
    %v2396 = vor.u32 4788187, %v2395
    %v2397 = vand.u32 2147483647, %v2396
    %v2399 = vcvt.s32.f32 %v2392
    %v2400 = vmul.f32 %v2399, %v2397
    %v2401 = vxor.u32 %v2400, 2147483648
    %v2402 = vsel %vm2319, %v2401, %v2400
    %v2403 = vsub.s32 4, %v2379
    %v2404 = vsel %vm2319, %v2403, %v2379
    %v2405 = vsel %vm2318, %v328, %v2402
    %v2406 = vsel %vm2318, 0, %v2404
    %v2407 = vcosq.f32.pop %v2405
    %v2408 = vsinq.f32.pop %v2405
    %vm2409 = vweird.f32 %v328
    %v2410 = vadd.s32 %v2406, 3
    %v2411 = vand.u32 %v2410, 3
    %vm2412 = vcmp.lt.s32.totalorder %v2411, 2
    %vm2413 = vcmp.eq.s32.totalorder %v2411, 0
    %v2414 = vxor.u32 %v2408, 2147483648
    %v2415 = vsel %vm2413, %v2407, %v2414
    %vm2416 = vcmp.eq.s32.totalorder %v2411, 2
    %v2417 = vxor.u32 %v2407, 2147483648
    %v2418 = vsel %vm2416, %v2417, %v2408
    %v2419 = vsel %vm2412, %v2415, %v2418
    %v2420 = vsel %vm2409, nan, %v2419
    %v2421 = vand.u32 2147483647, %v329
    %vm2422 = vcmp.le.f32.partialorder %v2421, 0.7853982
    %vm2423 = vcmp.lt.s32.totalorder %v329, 0
    %v2424 = vand.u32 %v329, 2139095040
    %v2425 = vshrl.u32 %v2424, 23
    %v2426 = vsub.s32 %v2425, 127
    %v2427 = vand.u32 2147483647, %v329
    %v2428 = vand.u32 %v2427, 8388607
    %v2429 = vor.u32 %v2428, 8388608
    %v2430 = vsub.s32 0, %v2429
    %v2431 = vadd.s32 %v2426, 1
    %vm2432 = vcmp.gt.s32.totalorder %v2431, 0
    %v2433 = vsel %vm2432, %v2431, 0
    %v2434 = vshrl.u32 %v2433, 5
    %v2435 = vand.u32 %v2433, 31
    %v2436 = vsub.s32 32, %v2435
    %v2437 = vshrl.u32 683565275, %v2436
    %v2438 = vshll.u32 683565275, %v2435
    %v2439 = vshrl.u32 2475754826, %v2436
    %v2440 = vor.u32 %v2438, %v2439
    %v2441 = vshll.u32 2475754826, %v2435
    %v2442 = vshrl.u32 2131351028, %v2436
    %v2443 = vor.u32 %v2441, %v2442
    %v2444 = vshll.u32 2131351028, %v2435
    %v2445 = vshrl.u32 2102212464, %v2436
    %v2446 = vor.u32 %v2444, %v2445
    %v2447 = vshll.u32 2102212464, %v2435
    %v2448 = vshrl.u32 920167782, %v2436
    %v2449 = vor.u32 %v2447, %v2448
    %v2450 = vshll.u32 920167782, %v2435
    %v2451 = vshrl.u32 1326507024, %v2436
    %v2452 = vor.u32 %v2450, %v2451
    %vm2453 = vcmp.lt.s32.totalorder %v2434, 1
    %vm2454 = vcmp.lt.s32.totalorder %v2434, 2
    %vm2455 = vcmp.lt.s32.totalorder %v2434, 3
    %vm2456 = vcmp.lt.s32.totalorder %v2434, 4
    %v2457 = vsel %vm2453, %v2437, %v2440
    %v2458 = vsel %vm2456, %v2446, 2102212464
    %v2459 = vsel %vm2455, %v2443, %v2458
    %v2460 = vsel %vm2454, %v2457, %v2459
    %v2461 = vsel %vm2453, %v2440, %v2443
    %v2462 = vsel %vm2456, %v2449, 920167782
    %v2463 = vsel %vm2455, %v2446, %v2462
    %v2464 = vsel %vm2454, %v2461, %v2463
    %v2465 = vsel %vm2453, %v2443, %v2446
    %v2466 = vsel %vm2456, %v2452, 1326507024
    %v2467 = vsel %vm2455, %v2449, %v2466
    %v2468 = vsel %vm2454, %v2465, %v2467
    %v2469 = vshll.u32 %v2429, 8
    %v2470 = vmul.u32.u64.compose %v2469, %v2468
    %v2471 = vextract.low.u32 %v2470
    %v2472 = vextract.high.u32 %v2470
    %v2473 = vmul.u32.u64.compose %v2469, %v2464
    %v2474 = vextract.low.u32 %v2473
    %v2475 = vextract.high.u32 %v2473
    %v2476 = vmul.u32 %v2469, %v2460
    %v2477 = vadd.s32 %v2472, %v2474
    %vm2478 = vc.u32 %v2472, %v2474
    %v2479 = vadd.s32 %v2475, 1
    %v2480 = vsel %vm2478, %v2479, %v2475
    %v2481 = vadd.s32 %v2476, %v2480
    %v2482 = vadd.s32 %v2481, 536870912
    %v2483 = vshrl.u32 %v2482, 30
    %v2484 = vshll.u32 %v2483, 30
    %v2485 = vsub.s32 %v2481, %v2484
    %vm2486 = vcmp.lt.s32.totalorder %v2485, 0
    %v2487 = vsub.s32 0, %v2485
    %v2488 = vsel %vm2486, %v2487, %v2485
    %v2489 = vclz %v2488
    %v2490 = vsub.s32 %v2489, 2
    %vm2491 = vcmp.gt.s32.totalorder 0, %v2490
    %v2492 = vsel %vm2491, 0, %v2490
    %v2493 = vsub.s32 32, %v2492
    %v2494 = vshll.u32 %v2485, %v2492
    %v2495 = vshrl.u32 %v2477, %v2493
    %v2496 = vor.u32 %v2494, %v2495
    %v2497 = vsub.s32 4294967266, %v2492
    %v2498 = vadd.s32 %v2497, 127
    %v2499 = vshll.u32 %v2498, 23
    %v2500 = vor.u32 4788187, %v2499
    %v2501 = vand.u32 2147483647, %v2500
    %v2503 = vcvt.s32.f32 %v2496
    %v2504 = vmul.f32 %v2503, %v2501
    %v2505 = vxor.u32 %v2504, 2147483648
    %v2506 = vsel %vm2423, %v2505, %v2504
    %v2507 = vsub.s32 4, %v2483
    %v2508 = vsel %vm2423, %v2507, %v2483
    %v2509 = vsel %vm2422, %v329, %v2506
    %v2510 = vsel %vm2422, 0, %v2508
    %v2511 = vcosq.f32.pop %v2509
    %v2512 = vsinq.f32.pop %v2509
    %vm2513 = vweird.f32 %v329
    %v2514 = vadd.s32 %v2510, 3
    %v2515 = vand.u32 %v2514, 3
    %vm2516 = vcmp.lt.s32.totalorder %v2515, 2
    %vm2517 = vcmp.eq.s32.totalorder %v2515, 0
    %v2518 = vxor.u32 %v2512, 2147483648
    %v2519 = vsel %vm2517, %v2511, %v2518
    %vm2520 = vcmp.eq.s32.totalorder %v2515, 2
    %v2521 = vxor.u32 %v2511, 2147483648
    %v2522 = vsel %vm2520, %v2521, %v2512
    %v2523 = vsel %vm2516, %v2519, %v2522
    %v2524 = vsel %vm2513, nan, %v2523
    %v2525 = vand.u32 2147483647, %v330
    %vm2526 = vcmp.le.f32.partialorder %v2525, 0.7853982
    %vm2527 = vcmp.lt.s32.totalorder %v330, 0
    %v2528 = vand.u32 %v330, 2139095040
    %v2529 = vshrl.u32 %v2528, 23
    %v2530 = vsub.s32 %v2529, 127
    %v2531 = vand.u32 2147483647, %v330
    %v2532 = vand.u32 %v2531, 8388607
    %v2533 = vor.u32 %v2532, 8388608
    %v2534 = vsub.s32 0, %v2533
    %v2535 = vadd.s32 %v2530, 1
    %vm2536 = vcmp.gt.s32.totalorder %v2535, 0
    %v2537 = vsel %vm2536, %v2535, 0
    %v2538 = vshrl.u32 %v2537, 5
    %v2539 = vand.u32 %v2537, 31
    %v2540 = vsub.s32 32, %v2539
    %v2541 = vshrl.u32 683565275, %v2540
    %v2542 = vshll.u32 683565275, %v2539
    %v2543 = vshrl.u32 2475754826, %v2540
    %v2544 = vor.u32 %v2542, %v2543
    %v2545 = vshll.u32 2475754826, %v2539
    %v2546 = vshrl.u32 2131351028, %v2540
    %v2547 = vor.u32 %v2545, %v2546
    %v2548 = vshll.u32 2131351028, %v2539
    %v2549 = vshrl.u32 2102212464, %v2540
    %v2550 = vor.u32 %v2548, %v2549
    %v2551 = vshll.u32 2102212464, %v2539
    %v2552 = vshrl.u32 920167782, %v2540
    %v2553 = vor.u32 %v2551, %v2552
    %v2554 = vshll.u32 920167782, %v2539
    %v2555 = vshrl.u32 1326507024, %v2540
    %v2556 = vor.u32 %v2554, %v2555
    %vm2557 = vcmp.lt.s32.totalorder %v2538, 1
    %vm2558 = vcmp.lt.s32.totalorder %v2538, 2
    %vm2559 = vcmp.lt.s32.totalorder %v2538, 3
    %vm2560 = vcmp.lt.s32.totalorder %v2538, 4
    %v2561 = vsel %vm2557, %v2541, %v2544
    %v2562 = vsel %vm2560, %v2550, 2102212464
    %v2563 = vsel %vm2559, %v2547, %v2562
    %v2564 = vsel %vm2558, %v2561, %v2563
    %v2565 = vsel %vm2557, %v2544, %v2547
    %v2566 = vsel %vm2560, %v2553, 920167782
    %v2567 = vsel %vm2559, %v2550, %v2566
    %v2568 = vsel %vm2558, %v2565, %v2567
    %v2569 = vsel %vm2557, %v2547, %v2550
    %v2570 = vsel %vm2560, %v2556, 1326507024
    %v2571 = vsel %vm2559, %v2553, %v2570
    %v2572 = vsel %vm2558, %v2569, %v2571
    %v2573 = vshll.u32 %v2533, 8
    %v2574 = vmul.u32.u64.compose %v2573, %v2572
    %v2575 = vextract.low.u32 %v2574
    %v2576 = vextract.high.u32 %v2574
    %v2577 = vmul.u32.u64.compose %v2573, %v2568
    %v2578 = vextract.low.u32 %v2577
    %v2579 = vextract.high.u32 %v2577
    %v2580 = vmul.u32 %v2573, %v2564
    %v2581 = vadd.s32 %v2576, %v2578
    %vm2582 = vc.u32 %v2576, %v2578
    %v2583 = vadd.s32 %v2579, 1
    %v2584 = vsel %vm2582, %v2583, %v2579
    %v2585 = vadd.s32 %v2580, %v2584
    %v2586 = vadd.s32 %v2585, 536870912
    %v2587 = vshrl.u32 %v2586, 30
    %v2588 = vshll.u32 %v2587, 30
    %v2589 = vsub.s32 %v2585, %v2588
    %vm2590 = vcmp.lt.s32.totalorder %v2589, 0
    %v2591 = vsub.s32 0, %v2589
    %v2592 = vsel %vm2590, %v2591, %v2589
    %v2593 = vclz %v2592
    %v2594 = vsub.s32 %v2593, 2
    %vm2595 = vcmp.gt.s32.totalorder 0, %v2594
    %v2596 = vsel %vm2595, 0, %v2594
    %v2597 = vsub.s32 32, %v2596
    %v2598 = vshll.u32 %v2589, %v2596
    %v2599 = vshrl.u32 %v2581, %v2597
    %v2600 = vor.u32 %v2598, %v2599
    %v2601 = vsub.s32 4294967266, %v2596
    %v2602 = vadd.s32 %v2601, 127
    %v2603 = vshll.u32 %v2602, 23
    %v2604 = vor.u32 4788187, %v2603
    %v2605 = vand.u32 2147483647, %v2604
    %v2607 = vcvt.s32.f32 %v2600
    %v2608 = vmul.f32 %v2607, %v2605
    %v2609 = vxor.u32 %v2608, 2147483648
    %v2610 = vsel %vm2527, %v2609, %v2608
    %v2611 = vsub.s32 4, %v2587
    %v2612 = vsel %vm2527, %v2611, %v2587
    %v2613 = vsel %vm2526, %v330, %v2610
    %v2614 = vsel %vm2526, 0, %v2612
    %v2615 = vcosq.f32.pop %v2613
    %v2616 = vsinq.f32.pop %v2613
    %vm2617 = vweird.f32 %v330
    %v2618 = vadd.s32 %v2614, 3
    %v2619 = vand.u32 %v2618, 3
    %vm2620 = vcmp.lt.s32.totalorder %v2619, 2
    %vm2621 = vcmp.eq.s32.totalorder %v2619, 0
    %v2622 = vxor.u32 %v2616, 2147483648
    %v2623 = vsel %vm2621, %v2615, %v2622
    %vm2624 = vcmp.eq.s32.totalorder %v2619, 2
    %v2625 = vxor.u32 %v2615, 2147483648
    %v2626 = vsel %vm2624, %v2625, %v2616
    %v2627 = vsel %vm2620, %v2623, %v2626
    %v2628 = vsel %vm2617, nan, %v2627
    %v2629 = vand.u32 2147483647, %v331
    %vm2630 = vcmp.le.f32.partialorder %v2629, 0.7853982
    %vm2631 = vcmp.lt.s32.totalorder %v331, 0
    %v2632 = vand.u32 %v331, 2139095040
    %v2633 = vshrl.u32 %v2632, 23
    %v2634 = vsub.s32 %v2633, 127
    %v2635 = vand.u32 2147483647, %v331
    %v2636 = vand.u32 %v2635, 8388607
    %v2637 = vor.u32 %v2636, 8388608
    %v2638 = vsub.s32 0, %v2637
    %v2639 = vadd.s32 %v2634, 1
    %vm2640 = vcmp.gt.s32.totalorder %v2639, 0
    %v2641 = vsel %vm2640, %v2639, 0
    %v2642 = vshrl.u32 %v2641, 5
    %v2643 = vand.u32 %v2641, 31
    %v2644 = vsub.s32 32, %v2643
    %v2645 = vshrl.u32 683565275, %v2644
    %v2646 = vshll.u32 683565275, %v2643
    %v2647 = vshrl.u32 2475754826, %v2644
    %v2648 = vor.u32 %v2646, %v2647
    %v2649 = vshll.u32 2475754826, %v2643
    %v2650 = vshrl.u32 2131351028, %v2644
    %v2651 = vor.u32 %v2649, %v2650
    %v2652 = vshll.u32 2131351028, %v2643
    %v2653 = vshrl.u32 2102212464, %v2644
    %v2654 = vor.u32 %v2652, %v2653
    %v2655 = vshll.u32 2102212464, %v2643
    %v2656 = vshrl.u32 920167782, %v2644
    %v2657 = vor.u32 %v2655, %v2656
    %v2658 = vshll.u32 920167782, %v2643
    %v2659 = vshrl.u32 1326507024, %v2644
    %v2660 = vor.u32 %v2658, %v2659
    %vm2661 = vcmp.lt.s32.totalorder %v2642, 1
    %vm2662 = vcmp.lt.s32.totalorder %v2642, 2
    %vm2663 = vcmp.lt.s32.totalorder %v2642, 3
    %vm2664 = vcmp.lt.s32.totalorder %v2642, 4
    %v2665 = vsel %vm2661, %v2645, %v2648
    %v2666 = vsel %vm2664, %v2654, 2102212464
    %v2667 = vsel %vm2663, %v2651, %v2666
    %v2668 = vsel %vm2662, %v2665, %v2667
    %v2669 = vsel %vm2661, %v2648, %v2651
    %v2670 = vsel %vm2664, %v2657, 920167782
    %v2671 = vsel %vm2663, %v2654, %v2670
    %v2672 = vsel %vm2662, %v2669, %v2671
    %v2673 = vsel %vm2661, %v2651, %v2654
    %v2674 = vsel %vm2664, %v2660, 1326507024
    %v2675 = vsel %vm2663, %v2657, %v2674
    %v2676 = vsel %vm2662, %v2673, %v2675
    %v2677 = vshll.u32 %v2637, 8
    %v2678 = vmul.u32.u64.compose %v2677, %v2676
    %v2679 = vextract.low.u32 %v2678
    %v2680 = vextract.high.u32 %v2678
    %v2681 = vmul.u32.u64.compose %v2677, %v2672
    %v2682 = vextract.low.u32 %v2681
    %v2683 = vextract.high.u32 %v2681
    %v2684 = vmul.u32 %v2677, %v2668
    %v2685 = vadd.s32 %v2680, %v2682
    %vm2686 = vc.u32 %v2680, %v2682
    %v2687 = vadd.s32 %v2683, 1
    %v2688 = vsel %vm2686, %v2687, %v2683
    %v2689 = vadd.s32 %v2684, %v2688
    %v2690 = vadd.s32 %v2689, 536870912
    %v2691 = vshrl.u32 %v2690, 30
    %v2692 = vshll.u32 %v2691, 30
    %v2693 = vsub.s32 %v2689, %v2692
    %vm2694 = vcmp.lt.s32.totalorder %v2693, 0
    %v2695 = vsub.s32 0, %v2693
    %v2696 = vsel %vm2694, %v2695, %v2693
    %v2697 = vclz %v2696
    %v2698 = vsub.s32 %v2697, 2
    %vm2699 = vcmp.gt.s32.totalorder 0, %v2698
    %v2700 = vsel %vm2699, 0, %v2698
    %v2701 = vsub.s32 32, %v2700
    %v2702 = vshll.u32 %v2693, %v2700
    %v2703 = vshrl.u32 %v2685, %v2701
    %v2704 = vor.u32 %v2702, %v2703
    %v2705 = vsub.s32 4294967266, %v2700
    %v2706 = vadd.s32 %v2705, 127
    %v2707 = vshll.u32 %v2706, 23
    %v2708 = vor.u32 4788187, %v2707
    %v2709 = vand.u32 2147483647, %v2708
    %v2711 = vcvt.s32.f32 %v2704
    %v2712 = vmul.f32 %v2711, %v2709
    %v2713 = vxor.u32 %v2712, 2147483648
    %v2714 = vsel %vm2631, %v2713, %v2712
    %v2715 = vsub.s32 4, %v2691
    %v2716 = vsel %vm2631, %v2715, %v2691
    %v2717 = vsel %vm2630, %v331, %v2714
    %v2718 = vsel %vm2630, 0, %v2716
    %v2719 = vcosq.f32.pop %v2717
    %v2720 = vsinq.f32.pop %v2717
    %vm2721 = vweird.f32 %v331
    %v2722 = vadd.s32 %v2718, 3
    %v2723 = vand.u32 %v2722, 3
    %vm2724 = vcmp.lt.s32.totalorder %v2723, 2
    %vm2725 = vcmp.eq.s32.totalorder %v2723, 0
    %v2726 = vxor.u32 %v2720, 2147483648
    %v2727 = vsel %vm2725, %v2719, %v2726
    %vm2728 = vcmp.eq.s32.totalorder %v2723, 2
    %v2729 = vxor.u32 %v2719, 2147483648
    %v2730 = vsel %vm2728, %v2729, %v2720
    %v2731 = vsel %vm2724, %v2727, %v2730
    %v2732 = vsel %vm2721, nan, %v2731
    %v2733 = vand.u32 2147483647, %v332
    %vm2734 = vcmp.le.f32.partialorder %v2733, 0.7853982
    %vm2735 = vcmp.lt.s32.totalorder %v332, 0
    %v2736 = vand.u32 %v332, 2139095040
    %v2737 = vshrl.u32 %v2736, 23
    %v2738 = vsub.s32 %v2737, 127
    %v2739 = vand.u32 2147483647, %v332
    %v2740 = vand.u32 %v2739, 8388607
    %v2741 = vor.u32 %v2740, 8388608
    %v2742 = vsub.s32 0, %v2741
    %v2743 = vadd.s32 %v2738, 1
    %vm2744 = vcmp.gt.s32.totalorder %v2743, 0
    %v2745 = vsel %vm2744, %v2743, 0
    %v2746 = vshrl.u32 %v2745, 5
    %v2747 = vand.u32 %v2745, 31
    %v2748 = vsub.s32 32, %v2747
    %v2749 = vshrl.u32 683565275, %v2748
    %v2750 = vshll.u32 683565275, %v2747
    %v2751 = vshrl.u32 2475754826, %v2748
    %v2752 = vor.u32 %v2750, %v2751
    %v2753 = vshll.u32 2475754826, %v2747
    %v2754 = vshrl.u32 2131351028, %v2748
    %v2755 = vor.u32 %v2753, %v2754
    %v2756 = vshll.u32 2131351028, %v2747
    %v2757 = vshrl.u32 2102212464, %v2748
    %v2758 = vor.u32 %v2756, %v2757
    %v2759 = vshll.u32 2102212464, %v2747
    %v2760 = vshrl.u32 920167782, %v2748
    %v2761 = vor.u32 %v2759, %v2760
    %v2762 = vshll.u32 920167782, %v2747
    %v2763 = vshrl.u32 1326507024, %v2748
    %v2764 = vor.u32 %v2762, %v2763
    %vm2765 = vcmp.lt.s32.totalorder %v2746, 1
    %vm2766 = vcmp.lt.s32.totalorder %v2746, 2
    %vm2767 = vcmp.lt.s32.totalorder %v2746, 3
    %vm2768 = vcmp.lt.s32.totalorder %v2746, 4
    %v2769 = vsel %vm2765, %v2749, %v2752
    %v2770 = vsel %vm2768, %v2758, 2102212464
    %v2771 = vsel %vm2767, %v2755, %v2770
    %v2772 = vsel %vm2766, %v2769, %v2771
    %v2773 = vsel %vm2765, %v2752, %v2755
    %v2774 = vsel %vm2768, %v2761, 920167782
    %v2775 = vsel %vm2767, %v2758, %v2774
    %v2776 = vsel %vm2766, %v2773, %v2775
    %v2777 = vsel %vm2765, %v2755, %v2758
    %v2778 = vsel %vm2768, %v2764, 1326507024
    %v2779 = vsel %vm2767, %v2761, %v2778
    %v2780 = vsel %vm2766, %v2777, %v2779
    %v2781 = vshll.u32 %v2741, 8
    %v2782 = vmul.u32.u64.compose %v2781, %v2780
    %v2783 = vextract.low.u32 %v2782
    %v2784 = vextract.high.u32 %v2782
    %v2785 = vmul.u32.u64.compose %v2781, %v2776
    %v2786 = vextract.low.u32 %v2785
    %v2787 = vextract.high.u32 %v2785
    %v2788 = vmul.u32 %v2781, %v2772
    %v2789 = vadd.s32 %v2784, %v2786
    %vm2790 = vc.u32 %v2784, %v2786
    %v2791 = vadd.s32 %v2787, 1
    %v2792 = vsel %vm2790, %v2791, %v2787
    %v2793 = vadd.s32 %v2788, %v2792
    %v2794 = vadd.s32 %v2793, 536870912
    %v2795 = vshrl.u32 %v2794, 30
    %v2796 = vshll.u32 %v2795, 30
    %v2797 = vsub.s32 %v2793, %v2796
    %vm2798 = vcmp.lt.s32.totalorder %v2797, 0
    %v2799 = vsub.s32 0, %v2797
    %v2800 = vsel %vm2798, %v2799, %v2797
    %v2801 = vclz %v2800
    %v2802 = vsub.s32 %v2801, 2
    %vm2803 = vcmp.gt.s32.totalorder 0, %v2802
    %v2804 = vsel %vm2803, 0, %v2802
    %v2805 = vsub.s32 32, %v2804
    %v2806 = vshll.u32 %v2797, %v2804
    %v2807 = vshrl.u32 %v2789, %v2805
    %v2808 = vor.u32 %v2806, %v2807
    %v2809 = vsub.s32 4294967266, %v2804
    %v2810 = vadd.s32 %v2809, 127
    %v2811 = vshll.u32 %v2810, 23
    %v2812 = vor.u32 4788187, %v2811
    %v2813 = vand.u32 2147483647, %v2812
    %v2815 = vcvt.s32.f32 %v2808
    %v2816 = vmul.f32 %v2815, %v2813
    %v2817 = vxor.u32 %v2816, 2147483648
    %v2818 = vsel %vm2735, %v2817, %v2816
    %v2819 = vsub.s32 4, %v2795
    %v2820 = vsel %vm2735, %v2819, %v2795
    %v2821 = vsel %vm2734, %v332, %v2818
    %v2822 = vsel %vm2734, 0, %v2820
    %v2823 = vcosq.f32.pop %v2821
    %v2824 = vsinq.f32.pop %v2821
    %vm2825 = vweird.f32 %v332
    %v2826 = vadd.s32 %v2822, 3
    %v2827 = vand.u32 %v2826, 3
    %vm2828 = vcmp.lt.s32.totalorder %v2827, 2
    %vm2829 = vcmp.eq.s32.totalorder %v2827, 0
    %v2830 = vxor.u32 %v2824, 2147483648
    %v2831 = vsel %vm2829, %v2823, %v2830
    %vm2832 = vcmp.eq.s32.totalorder %v2827, 2
    %v2833 = vxor.u32 %v2823, 2147483648
    %v2834 = vsel %vm2832, %v2833, %v2824
    %v2835 = vsel %vm2828, %v2831, %v2834
    %v2836 = vsel %vm2825, nan, %v2835
    %v2837 = vand.u32 2147483647, %v333
    %vm2838 = vcmp.le.f32.partialorder %v2837, 0.7853982
    %vm2839 = vcmp.lt.s32.totalorder %v333, 0
    %v2840 = vand.u32 %v333, 2139095040
    %v2841 = vshrl.u32 %v2840, 23
    %v2842 = vsub.s32 %v2841, 127
    %v2843 = vand.u32 2147483647, %v333
    %v2844 = vand.u32 %v2843, 8388607
    %v2845 = vor.u32 %v2844, 8388608
    %v2846 = vsub.s32 0, %v2845
    %v2847 = vadd.s32 %v2842, 1
    %vm2848 = vcmp.gt.s32.totalorder %v2847, 0
    %v2849 = vsel %vm2848, %v2847, 0
    %v2850 = vshrl.u32 %v2849, 5
    %v2851 = vand.u32 %v2849, 31
    %v2852 = vsub.s32 32, %v2851
    %v2853 = vshrl.u32 683565275, %v2852
    %v2854 = vshll.u32 683565275, %v2851
    %v2855 = vshrl.u32 2475754826, %v2852
    %v2856 = vor.u32 %v2854, %v2855
    %v2857 = vshll.u32 2475754826, %v2851
    %v2858 = vshrl.u32 2131351028, %v2852
    %v2859 = vor.u32 %v2857, %v2858
    %v2860 = vshll.u32 2131351028, %v2851
    %v2861 = vshrl.u32 2102212464, %v2852
    %v2862 = vor.u32 %v2860, %v2861
    %v2863 = vshll.u32 2102212464, %v2851
    %v2864 = vshrl.u32 920167782, %v2852
    %v2865 = vor.u32 %v2863, %v2864
    %v2866 = vshll.u32 920167782, %v2851
    %v2867 = vshrl.u32 1326507024, %v2852
    %v2868 = vor.u32 %v2866, %v2867
    %vm2869 = vcmp.lt.s32.totalorder %v2850, 1
    %vm2870 = vcmp.lt.s32.totalorder %v2850, 2
    %vm2871 = vcmp.lt.s32.totalorder %v2850, 3
    %vm2872 = vcmp.lt.s32.totalorder %v2850, 4
    %v2873 = vsel %vm2869, %v2853, %v2856
    %v2874 = vsel %vm2872, %v2862, 2102212464
    %v2875 = vsel %vm2871, %v2859, %v2874
    %v2876 = vsel %vm2870, %v2873, %v2875
    %v2877 = vsel %vm2869, %v2856, %v2859
    %v2878 = vsel %vm2872, %v2865, 920167782
    %v2879 = vsel %vm2871, %v2862, %v2878
    %v2880 = vsel %vm2870, %v2877, %v2879
    %v2881 = vsel %vm2869, %v2859, %v2862
    %v2882 = vsel %vm2872, %v2868, 1326507024
    %v2883 = vsel %vm2871, %v2865, %v2882
    %v2884 = vsel %vm2870, %v2881, %v2883
    %v2885 = vshll.u32 %v2845, 8
    %v2886 = vmul.u32.u64.compose %v2885, %v2884
    %v2887 = vextract.low.u32 %v2886
    %v2888 = vextract.high.u32 %v2886
    %v2889 = vmul.u32.u64.compose %v2885, %v2880
    %v2890 = vextract.low.u32 %v2889
    %v2891 = vextract.high.u32 %v2889
    %v2892 = vmul.u32 %v2885, %v2876
    %v2893 = vadd.s32 %v2888, %v2890
    %vm2894 = vc.u32 %v2888, %v2890
    %v2895 = vadd.s32 %v2891, 1
    %v2896 = vsel %vm2894, %v2895, %v2891
    %v2897 = vadd.s32 %v2892, %v2896
    %v2898 = vadd.s32 %v2897, 536870912
    %v2899 = vshrl.u32 %v2898, 30
    %v2900 = vshll.u32 %v2899, 30
    %v2901 = vsub.s32 %v2897, %v2900
    %vm2902 = vcmp.lt.s32.totalorder %v2901, 0
    %v2903 = vsub.s32 0, %v2901
    %v2904 = vsel %vm2902, %v2903, %v2901
    %v2905 = vclz %v2904
    %v2906 = vsub.s32 %v2905, 2
    %vm2907 = vcmp.gt.s32.totalorder 0, %v2906
    %v2908 = vsel %vm2907, 0, %v2906
    %v2909 = vsub.s32 32, %v2908
    %v2910 = vshll.u32 %v2901, %v2908
    %v2911 = vshrl.u32 %v2893, %v2909
    %v2912 = vor.u32 %v2910, %v2911
    %v2913 = vsub.s32 4294967266, %v2908
    %v2914 = vadd.s32 %v2913, 127
    %v2915 = vshll.u32 %v2914, 23
    %v2916 = vor.u32 4788187, %v2915
    %v2917 = vand.u32 2147483647, %v2916
    %v2919 = vcvt.s32.f32 %v2912
    %v2920 = vmul.f32 %v2919, %v2917
    %v2921 = vxor.u32 %v2920, 2147483648
    %v2922 = vsel %vm2839, %v2921, %v2920
    %v2923 = vsub.s32 4, %v2899
    %v2924 = vsel %vm2839, %v2923, %v2899
    %v2925 = vsel %vm2838, %v333, %v2922
    %v2926 = vsel %vm2838, 0, %v2924
    %v2927 = vcosq.f32.pop %v2925
    %v2928 = vsinq.f32.pop %v2925
    %vm2929 = vweird.f32 %v333
    %v2930 = vadd.s32 %v2926, 3
    %v2931 = vand.u32 %v2930, 3
    %vm2932 = vcmp.lt.s32.totalorder %v2931, 2
    %vm2933 = vcmp.eq.s32.totalorder %v2931, 0
    %v2934 = vxor.u32 %v2928, 2147483648
    %v2935 = vsel %vm2933, %v2927, %v2934
    %vm2936 = vcmp.eq.s32.totalorder %v2931, 2
    %v2937 = vxor.u32 %v2927, 2147483648
    %v2938 = vsel %vm2936, %v2937, %v2928
    %v2939 = vsel %vm2932, %v2935, %v2938
    %v2940 = vsel %vm2929, nan, %v2939
    %v2941 = vand.u32 2147483647, %v334
    %vm2942 = vcmp.le.f32.partialorder %v2941, 0.7853982
    %vm2943 = vcmp.lt.s32.totalorder %v334, 0
    %v2944 = vand.u32 %v334, 2139095040
    %v2945 = vshrl.u32 %v2944, 23
    %v2946 = vsub.s32 %v2945, 127
    %v2947 = vand.u32 2147483647, %v334
    %v2948 = vand.u32 %v2947, 8388607
    %v2949 = vor.u32 %v2948, 8388608
    %v2950 = vsub.s32 0, %v2949
    %v2951 = vadd.s32 %v2946, 1
    %vm2952 = vcmp.gt.s32.totalorder %v2951, 0
    %v2953 = vsel %vm2952, %v2951, 0
    %v2954 = vshrl.u32 %v2953, 5
    %v2955 = vand.u32 %v2953, 31
    %v2956 = vsub.s32 32, %v2955
    %v2957 = vshrl.u32 683565275, %v2956
    %v2958 = vshll.u32 683565275, %v2955
    %v2959 = vshrl.u32 2475754826, %v2956
    %v2960 = vor.u32 %v2958, %v2959
    %v2961 = vshll.u32 2475754826, %v2955
    %v2962 = vshrl.u32 2131351028, %v2956
    %v2963 = vor.u32 %v2961, %v2962
    %v2964 = vshll.u32 2131351028, %v2955
    %v2965 = vshrl.u32 2102212464, %v2956
    %v2966 = vor.u32 %v2964, %v2965
    %v2967 = vshll.u32 2102212464, %v2955
    %v2968 = vshrl.u32 920167782, %v2956
    %v2969 = vor.u32 %v2967, %v2968
    %v2970 = vshll.u32 920167782, %v2955
    %v2971 = vshrl.u32 1326507024, %v2956
    %v2972 = vor.u32 %v2970, %v2971
    %vm2973 = vcmp.lt.s32.totalorder %v2954, 1
    %vm2974 = vcmp.lt.s32.totalorder %v2954, 2
    %vm2975 = vcmp.lt.s32.totalorder %v2954, 3
    %vm2976 = vcmp.lt.s32.totalorder %v2954, 4
    %v2977 = vsel %vm2973, %v2957, %v2960
    %v2978 = vsel %vm2976, %v2966, 2102212464
    %v2979 = vsel %vm2975, %v2963, %v2978
    %v2980 = vsel %vm2974, %v2977, %v2979
    %v2981 = vsel %vm2973, %v2960, %v2963
    %v2982 = vsel %vm2976, %v2969, 920167782
    %v2983 = vsel %vm2975, %v2966, %v2982
    %v2984 = vsel %vm2974, %v2981, %v2983
    %v2985 = vsel %vm2973, %v2963, %v2966
    %v2986 = vsel %vm2976, %v2972, 1326507024
    %v2987 = vsel %vm2975, %v2969, %v2986
    %v2988 = vsel %vm2974, %v2985, %v2987
    %v2989 = vshll.u32 %v2949, 8
    %v2990 = vmul.u32.u64.compose %v2989, %v2988
    %v2991 = vextract.low.u32 %v2990
    %v2992 = vextract.high.u32 %v2990
    %v2993 = vmul.u32.u64.compose %v2989, %v2984
    %v2994 = vextract.low.u32 %v2993
    %v2995 = vextract.high.u32 %v2993
    %v2996 = vmul.u32 %v2989, %v2980
    %v2997 = vadd.s32 %v2992, %v2994
    %vm2998 = vc.u32 %v2992, %v2994
    %v2999 = vadd.s32 %v2995, 1
    %v3000 = vsel %vm2998, %v2999, %v2995
    %v3001 = vadd.s32 %v2996, %v3000
    %v3002 = vadd.s32 %v3001, 536870912
    %v3003 = vshrl.u32 %v3002, 30
    %v3004 = vshll.u32 %v3003, 30
    %v3005 = vsub.s32 %v3001, %v3004
    %vm3006 = vcmp.lt.s32.totalorder %v3005, 0
    %v3007 = vsub.s32 0, %v3005
    %v3008 = vsel %vm3006, %v3007, %v3005
    %v3009 = vclz %v3008
    %v3010 = vsub.s32 %v3009, 2
    %vm3011 = vcmp.gt.s32.totalorder 0, %v3010
    %v3012 = vsel %vm3011, 0, %v3010
    %v3013 = vsub.s32 32, %v3012
    %v3014 = vshll.u32 %v3005, %v3012
    %v3015 = vshrl.u32 %v2997, %v3013
    %v3016 = vor.u32 %v3014, %v3015
    %v3017 = vsub.s32 4294967266, %v3012
    %v3018 = vadd.s32 %v3017, 127
    %v3019 = vshll.u32 %v3018, 23
    %v3020 = vor.u32 4788187, %v3019
    %v3021 = vand.u32 2147483647, %v3020
    %v3023 = vcvt.s32.f32 %v3016
    %v3024 = vmul.f32 %v3023, %v3021
    %v3025 = vxor.u32 %v3024, 2147483648
    %v3026 = vsel %vm2943, %v3025, %v3024
    %v3027 = vsub.s32 4, %v3003
    %v3028 = vsel %vm2943, %v3027, %v3003
    %v3029 = vsel %vm2942, %v334, %v3026
    %v3030 = vsel %vm2942, 0, %v3028
    %v3031 = vcosq.f32.pop %v3029
    %v3032 = vsinq.f32.pop %v3029
    %vm3033 = vweird.f32 %v334
    %v3034 = vadd.s32 %v3030, 3
    %v3035 = vand.u32 %v3034, 3
    %vm3036 = vcmp.lt.s32.totalorder %v3035, 2
    %vm3037 = vcmp.eq.s32.totalorder %v3035, 0
    %v3038 = vxor.u32 %v3032, 2147483648
    %v3039 = vsel %vm3037, %v3031, %v3038
    %vm3040 = vcmp.eq.s32.totalorder %v3035, 2
    %v3041 = vxor.u32 %v3031, 2147483648
    %v3042 = vsel %vm3040, %v3041, %v3032
    %v3043 = vsel %vm3036, %v3039, %v3042
    %v3044 = vsel %vm3033, nan, %v3043
    %v3045 = vand.u32 2147483647, %v335
    %vm3046 = vcmp.le.f32.partialorder %v3045, 0.7853982
    %vm3047 = vcmp.lt.s32.totalorder %v335, 0
    %v3048 = vand.u32 %v335, 2139095040
    %v3049 = vshrl.u32 %v3048, 23
    %v3050 = vsub.s32 %v3049, 127
    %v3051 = vand.u32 2147483647, %v335
    %v3052 = vand.u32 %v3051, 8388607
    %v3053 = vor.u32 %v3052, 8388608
    %v3054 = vsub.s32 0, %v3053
    %v3055 = vadd.s32 %v3050, 1
    %vm3056 = vcmp.gt.s32.totalorder %v3055, 0
    %v3057 = vsel %vm3056, %v3055, 0
    %v3058 = vshrl.u32 %v3057, 5
    %v3059 = vand.u32 %v3057, 31
    %v3060 = vsub.s32 32, %v3059
    %v3061 = vshrl.u32 683565275, %v3060
    %v3062 = vshll.u32 683565275, %v3059
    %v3063 = vshrl.u32 2475754826, %v3060
    %v3064 = vor.u32 %v3062, %v3063
    %v3065 = vshll.u32 2475754826, %v3059
    %v3066 = vshrl.u32 2131351028, %v3060
    %v3067 = vor.u32 %v3065, %v3066
    %v3068 = vshll.u32 2131351028, %v3059
    %v3069 = vshrl.u32 2102212464, %v3060
    %v3070 = vor.u32 %v3068, %v3069
    %v3071 = vshll.u32 2102212464, %v3059
    %v3072 = vshrl.u32 920167782, %v3060
    %v3073 = vor.u32 %v3071, %v3072
    %v3074 = vshll.u32 920167782, %v3059
    %v3075 = vshrl.u32 1326507024, %v3060
    %v3076 = vor.u32 %v3074, %v3075
    %vm3077 = vcmp.lt.s32.totalorder %v3058, 1
    %vm3078 = vcmp.lt.s32.totalorder %v3058, 2
    %vm3079 = vcmp.lt.s32.totalorder %v3058, 3
    %vm3080 = vcmp.lt.s32.totalorder %v3058, 4
    %v3081 = vsel %vm3077, %v3061, %v3064
    %v3082 = vsel %vm3080, %v3070, 2102212464
    %v3083 = vsel %vm3079, %v3067, %v3082
    %v3084 = vsel %vm3078, %v3081, %v3083
    %v3085 = vsel %vm3077, %v3064, %v3067
    %v3086 = vsel %vm3080, %v3073, 920167782
    %v3087 = vsel %vm3079, %v3070, %v3086
    %v3088 = vsel %vm3078, %v3085, %v3087
    %v3089 = vsel %vm3077, %v3067, %v3070
    %v3090 = vsel %vm3080, %v3076, 1326507024
    %v3091 = vsel %vm3079, %v3073, %v3090
    %v3092 = vsel %vm3078, %v3089, %v3091
    %v3093 = vshll.u32 %v3053, 8
    %v3094 = vmul.u32.u64.compose %v3093, %v3092
    %v3095 = vextract.low.u32 %v3094
    %v3096 = vextract.high.u32 %v3094
    %v3097 = vmul.u32.u64.compose %v3093, %v3088
    %v3098 = vextract.low.u32 %v3097
    %v3099 = vextract.high.u32 %v3097
    %v3100 = vmul.u32 %v3093, %v3084
    %v3101 = vadd.s32 %v3096, %v3098
    %vm3102 = vc.u32 %v3096, %v3098
    %v3103 = vadd.s32 %v3099, 1
    %v3104 = vsel %vm3102, %v3103, %v3099
    %v3105 = vadd.s32 %v3100, %v3104
    %v3106 = vadd.s32 %v3105, 536870912
    %v3107 = vshrl.u32 %v3106, 30
    %v3108 = vshll.u32 %v3107, 30
    %v3109 = vsub.s32 %v3105, %v3108
    %vm3110 = vcmp.lt.s32.totalorder %v3109, 0
    %v3111 = vsub.s32 0, %v3109
    %v3112 = vsel %vm3110, %v3111, %v3109
    %v3113 = vclz %v3112
    %v3114 = vsub.s32 %v3113, 2
    %vm3115 = vcmp.gt.s32.totalorder 0, %v3114
    %v3116 = vsel %vm3115, 0, %v3114
    %v3117 = vsub.s32 32, %v3116
    %v3118 = vshll.u32 %v3109, %v3116
    %v3119 = vshrl.u32 %v3101, %v3117
    %v3120 = vor.u32 %v3118, %v3119
    %v3121 = vsub.s32 4294967266, %v3116
    %v3122 = vadd.s32 %v3121, 127
    %v3123 = vshll.u32 %v3122, 23
    %v3124 = vor.u32 4788187, %v3123
    %v3125 = vand.u32 2147483647, %v3124
    %v3127 = vcvt.s32.f32 %v3120
    %v3128 = vmul.f32 %v3127, %v3125
    %v3129 = vxor.u32 %v3128, 2147483648
    %v3130 = vsel %vm3047, %v3129, %v3128
    %v3131 = vsub.s32 4, %v3107
    %v3132 = vsel %vm3047, %v3131, %v3107
    %v3133 = vsel %vm3046, %v335, %v3130
    %v3134 = vsel %vm3046, 0, %v3132
    %v3135 = vcosq.f32.pop %v3133
    %v3136 = vsinq.f32.pop %v3133
    %vm3137 = vweird.f32 %v335
    %v3138 = vadd.s32 %v3134, 3
    %v3139 = vand.u32 %v3138, 3
    %vm3140 = vcmp.lt.s32.totalorder %v3139, 2
    %vm3141 = vcmp.eq.s32.totalorder %v3139, 0
    %v3142 = vxor.u32 %v3136, 2147483648
    %v3143 = vsel %vm3141, %v3135, %v3142
    %vm3144 = vcmp.eq.s32.totalorder %v3139, 2
    %v3145 = vxor.u32 %v3135, 2147483648
    %v3146 = vsel %vm3144, %v3145, %v3136
    %v3147 = vsel %vm3140, %v3143, %v3146
    %v3148 = vsel %vm3137, nan, %v3147
    %v3149 = vand.u32 2147483647, %v336
    %vm3150 = vcmp.le.f32.partialorder %v3149, 0.7853982
    %vm3151 = vcmp.lt.s32.totalorder %v336, 0
    %v3152 = vand.u32 %v336, 2139095040
    %v3153 = vshrl.u32 %v3152, 23
    %v3154 = vsub.s32 %v3153, 127
    %v3155 = vand.u32 2147483647, %v336
    %v3156 = vand.u32 %v3155, 8388607
    %v3157 = vor.u32 %v3156, 8388608
    %v3158 = vsub.s32 0, %v3157
    %v3159 = vadd.s32 %v3154, 1
    %vm3160 = vcmp.gt.s32.totalorder %v3159, 0
    %v3161 = vsel %vm3160, %v3159, 0
    %v3162 = vshrl.u32 %v3161, 5
    %v3163 = vand.u32 %v3161, 31
    %v3164 = vsub.s32 32, %v3163
    %v3165 = vshrl.u32 683565275, %v3164
    %v3166 = vshll.u32 683565275, %v3163
    %v3167 = vshrl.u32 2475754826, %v3164
    %v3168 = vor.u32 %v3166, %v3167
    %v3169 = vshll.u32 2475754826, %v3163
    %v3170 = vshrl.u32 2131351028, %v3164
    %v3171 = vor.u32 %v3169, %v3170
    %v3172 = vshll.u32 2131351028, %v3163
    %v3173 = vshrl.u32 2102212464, %v3164
    %v3174 = vor.u32 %v3172, %v3173
    %v3175 = vshll.u32 2102212464, %v3163
    %v3176 = vshrl.u32 920167782, %v3164
    %v3177 = vor.u32 %v3175, %v3176
    %v3178 = vshll.u32 920167782, %v3163
    %v3179 = vshrl.u32 1326507024, %v3164
    %v3180 = vor.u32 %v3178, %v3179
    %vm3181 = vcmp.lt.s32.totalorder %v3162, 1
    %vm3182 = vcmp.lt.s32.totalorder %v3162, 2
    %vm3183 = vcmp.lt.s32.totalorder %v3162, 3
    %vm3184 = vcmp.lt.s32.totalorder %v3162, 4
    %v3185 = vsel %vm3181, %v3165, %v3168
    %v3186 = vsel %vm3184, %v3174, 2102212464
    %v3187 = vsel %vm3183, %v3171, %v3186
    %v3188 = vsel %vm3182, %v3185, %v3187
    %v3189 = vsel %vm3181, %v3168, %v3171
    %v3190 = vsel %vm3184, %v3177, 920167782
    %v3191 = vsel %vm3183, %v3174, %v3190
    %v3192 = vsel %vm3182, %v3189, %v3191
    %v3193 = vsel %vm3181, %v3171, %v3174
    %v3194 = vsel %vm3184, %v3180, 1326507024
    %v3195 = vsel %vm3183, %v3177, %v3194
    %v3196 = vsel %vm3182, %v3193, %v3195
    %v3197 = vshll.u32 %v3157, 8
    %v3198 = vmul.u32.u64.compose %v3197, %v3196
    %v3199 = vextract.low.u32 %v3198
    %v3200 = vextract.high.u32 %v3198
    %v3201 = vmul.u32.u64.compose %v3197, %v3192
    %v3202 = vextract.low.u32 %v3201
    %v3203 = vextract.high.u32 %v3201
    %v3204 = vmul.u32 %v3197, %v3188
    %v3205 = vadd.s32 %v3200, %v3202
    %vm3206 = vc.u32 %v3200, %v3202
    %v3207 = vadd.s32 %v3203, 1
    %v3208 = vsel %vm3206, %v3207, %v3203
    %v3209 = vadd.s32 %v3204, %v3208
    %v3210 = vadd.s32 %v3209, 536870912
    %v3211 = vshrl.u32 %v3210, 30
    %v3212 = vshll.u32 %v3211, 30
    %v3213 = vsub.s32 %v3209, %v3212
    %vm3214 = vcmp.lt.s32.totalorder %v3213, 0
    %v3215 = vsub.s32 0, %v3213
    %v3216 = vsel %vm3214, %v3215, %v3213
    %v3217 = vclz %v3216
    %v3218 = vsub.s32 %v3217, 2
    %vm3219 = vcmp.gt.s32.totalorder 0, %v3218
    %v3220 = vsel %vm3219, 0, %v3218
    %v3221 = vsub.s32 32, %v3220
    %v3222 = vshll.u32 %v3213, %v3220
    %v3223 = vshrl.u32 %v3205, %v3221
    %v3224 = vor.u32 %v3222, %v3223
    %v3225 = vsub.s32 4294967266, %v3220
    %v3226 = vadd.s32 %v3225, 127
    %v3227 = vshll.u32 %v3226, 23
    %v3228 = vor.u32 4788187, %v3227
    %v3229 = vand.u32 2147483647, %v3228
    %v3231 = vcvt.s32.f32 %v3224
    %v3232 = vmul.f32 %v3231, %v3229
    %v3233 = vxor.u32 %v3232, 2147483648
    %v3234 = vsel %vm3151, %v3233, %v3232
    %v3235 = vsub.s32 4, %v3211
    %v3236 = vsel %vm3151, %v3235, %v3211
    %v3237 = vsel %vm3150, %v336, %v3234
    %v3238 = vsel %vm3150, 0, %v3236
    %v3239 = vcosq.f32.pop %v3237
    %v3240 = vsinq.f32.pop %v3237
    %vm3241 = vweird.f32 %v336
    %v3242 = vadd.s32 %v3238, 3
    %v3243 = vand.u32 %v3242, 3
    %vm3244 = vcmp.lt.s32.totalorder %v3243, 2
    %vm3245 = vcmp.eq.s32.totalorder %v3243, 0
    %v3246 = vxor.u32 %v3240, 2147483648
    %v3247 = vsel %vm3245, %v3239, %v3246
    %vm3248 = vcmp.eq.s32.totalorder %v3243, 2
    %v3249 = vxor.u32 %v3239, 2147483648
    %v3250 = vsel %vm3248, %v3249, %v3240
    %v3251 = vsel %vm3244, %v3247, %v3250
    %v3252 = vsel %vm3241, nan, %v3251
    %v3253 = vand.u32 2147483647, %v337
    %vm3254 = vcmp.le.f32.partialorder %v3253, 0.7853982
    %vm3255 = vcmp.lt.s32.totalorder %v337, 0
    %v3256 = vand.u32 %v337, 2139095040
    %v3257 = vshrl.u32 %v3256, 23
    %v3258 = vsub.s32 %v3257, 127
    %v3259 = vand.u32 2147483647, %v337
    %v3260 = vand.u32 %v3259, 8388607
    %v3261 = vor.u32 %v3260, 8388608
    %v3262 = vsub.s32 0, %v3261
    %v3263 = vadd.s32 %v3258, 1
    %vm3264 = vcmp.gt.s32.totalorder %v3263, 0
    %v3265 = vsel %vm3264, %v3263, 0
    %v3266 = vshrl.u32 %v3265, 5
    %v3267 = vand.u32 %v3265, 31
    %v3268 = vsub.s32 32, %v3267
    %v3269 = vshrl.u32 683565275, %v3268
    %v3270 = vshll.u32 683565275, %v3267
    %v3271 = vshrl.u32 2475754826, %v3268
    %v3272 = vor.u32 %v3270, %v3271
    %v3273 = vshll.u32 2475754826, %v3267
    %v3274 = vshrl.u32 2131351028, %v3268
    %v3275 = vor.u32 %v3273, %v3274
    %v3276 = vshll.u32 2131351028, %v3267
    %v3277 = vshrl.u32 2102212464, %v3268
    %v3278 = vor.u32 %v3276, %v3277
    %v3279 = vshll.u32 2102212464, %v3267
    %v3280 = vshrl.u32 920167782, %v3268
    %v3281 = vor.u32 %v3279, %v3280
    %v3282 = vshll.u32 920167782, %v3267
    %v3283 = vshrl.u32 1326507024, %v3268
    %v3284 = vor.u32 %v3282, %v3283
    %vm3285 = vcmp.lt.s32.totalorder %v3266, 1
    %vm3286 = vcmp.lt.s32.totalorder %v3266, 2
    %vm3287 = vcmp.lt.s32.totalorder %v3266, 3
    %vm3288 = vcmp.lt.s32.totalorder %v3266, 4
    %v3289 = vsel %vm3285, %v3269, %v3272
    %v3290 = vsel %vm3288, %v3278, 2102212464
    %v3291 = vsel %vm3287, %v3275, %v3290
    %v3292 = vsel %vm3286, %v3289, %v3291
    %v3293 = vsel %vm3285, %v3272, %v3275
    %v3294 = vsel %vm3288, %v3281, 920167782
    %v3295 = vsel %vm3287, %v3278, %v3294
    %v3296 = vsel %vm3286, %v3293, %v3295
    %v3297 = vsel %vm3285, %v3275, %v3278
    %v3298 = vsel %vm3288, %v3284, 1326507024
    %v3299 = vsel %vm3287, %v3281, %v3298
    %v3300 = vsel %vm3286, %v3297, %v3299
    %v3301 = vshll.u32 %v3261, 8
    %v3302 = vmul.u32.u64.compose %v3301, %v3300
    %v3303 = vextract.low.u32 %v3302
    %v3304 = vextract.high.u32 %v3302
    %v3305 = vmul.u32.u64.compose %v3301, %v3296
    %v3306 = vextract.low.u32 %v3305
    %v3307 = vextract.high.u32 %v3305
    %v3308 = vmul.u32 %v3301, %v3292
    %v3309 = vadd.s32 %v3304, %v3306
    %vm3310 = vc.u32 %v3304, %v3306
    %v3311 = vadd.s32 %v3307, 1
    %v3312 = vsel %vm3310, %v3311, %v3307
    %v3313 = vadd.s32 %v3308, %v3312
    %v3314 = vadd.s32 %v3313, 536870912
    %v3315 = vshrl.u32 %v3314, 30
    %v3316 = vshll.u32 %v3315, 30
    %v3317 = vsub.s32 %v3313, %v3316
    %vm3318 = vcmp.lt.s32.totalorder %v3317, 0
    %v3319 = vsub.s32 0, %v3317
    %v3320 = vsel %vm3318, %v3319, %v3317
    %v3321 = vclz %v3320
    %v3322 = vsub.s32 %v3321, 2
    %vm3323 = vcmp.gt.s32.totalorder 0, %v3322
    %v3324 = vsel %vm3323, 0, %v3322
    %v3325 = vsub.s32 32, %v3324
    %v3326 = vshll.u32 %v3317, %v3324
    %v3327 = vshrl.u32 %v3309, %v3325
    %v3328 = vor.u32 %v3326, %v3327
    %v3329 = vsub.s32 4294967266, %v3324
    %v3330 = vadd.s32 %v3329, 127
    %v3331 = vshll.u32 %v3330, 23
    %v3332 = vor.u32 4788187, %v3331
    %v3333 = vand.u32 2147483647, %v3332
    %v3335 = vcvt.s32.f32 %v3328
    %v3336 = vmul.f32 %v3335, %v3333
    %v3337 = vxor.u32 %v3336, 2147483648
    %v3338 = vsel %vm3255, %v3337, %v3336
    %v3339 = vsub.s32 4, %v3315
    %v3340 = vsel %vm3255, %v3339, %v3315
    %v3341 = vsel %vm3254, %v337, %v3338
    %v3342 = vsel %vm3254, 0, %v3340
    %v3343 = vcosq.f32.pop %v3341
    %v3344 = vsinq.f32.pop %v3341
    %vm3345 = vweird.f32 %v337
    %v3346 = vadd.s32 %v3342, 3
    %v3347 = vand.u32 %v3346, 3
    %vm3348 = vcmp.lt.s32.totalorder %v3347, 2
    %vm3349 = vcmp.eq.s32.totalorder %v3347, 0
    %v3350 = vxor.u32 %v3344, 2147483648
    %v3351 = vsel %vm3349, %v3343, %v3350
    %vm3352 = vcmp.eq.s32.totalorder %v3347, 2
    %v3353 = vxor.u32 %v3343, 2147483648
    %v3354 = vsel %vm3352, %v3353, %v3344
    %v3355 = vsel %vm3348, %v3351, %v3354
    %v3356 = vsel %vm3345, nan, %v3355
    %v3357 = vand.u32 2147483647, %v338
    %vm3358 = vcmp.le.f32.partialorder %v3357, 0.7853982
    %vm3359 = vcmp.lt.s32.totalorder %v338, 0
    %v3360 = vand.u32 %v338, 2139095040
    %v3361 = vshrl.u32 %v3360, 23
    %v3362 = vsub.s32 %v3361, 127
    %v3363 = vand.u32 2147483647, %v338
    %v3364 = vand.u32 %v3363, 8388607
    %v3365 = vor.u32 %v3364, 8388608
    %v3366 = vsub.s32 0, %v3365
    %v3367 = vadd.s32 %v3362, 1
    %vm3368 = vcmp.gt.s32.totalorder %v3367, 0
    %v3369 = vsel %vm3368, %v3367, 0
    %v3370 = vshrl.u32 %v3369, 5
    %v3371 = vand.u32 %v3369, 31
    %v3372 = vsub.s32 32, %v3371
    %v3373 = vshrl.u32 683565275, %v3372
    %v3374 = vshll.u32 683565275, %v3371
    %v3375 = vshrl.u32 2475754826, %v3372
    %v3376 = vor.u32 %v3374, %v3375
    %v3377 = vshll.u32 2475754826, %v3371
    %v3378 = vshrl.u32 2131351028, %v3372
    %v3379 = vor.u32 %v3377, %v3378
    %v3380 = vshll.u32 2131351028, %v3371
    %v3381 = vshrl.u32 2102212464, %v3372
    %v3382 = vor.u32 %v3380, %v3381
    %v3383 = vshll.u32 2102212464, %v3371
    %v3384 = vshrl.u32 920167782, %v3372
    %v3385 = vor.u32 %v3383, %v3384
    %v3386 = vshll.u32 920167782, %v3371
    %v3387 = vshrl.u32 1326507024, %v3372
    %v3388 = vor.u32 %v3386, %v3387
    %vm3389 = vcmp.lt.s32.totalorder %v3370, 1
    %vm3390 = vcmp.lt.s32.totalorder %v3370, 2
    %vm3391 = vcmp.lt.s32.totalorder %v3370, 3
    %vm3392 = vcmp.lt.s32.totalorder %v3370, 4
    %v3393 = vsel %vm3389, %v3373, %v3376
    %v3394 = vsel %vm3392, %v3382, 2102212464
    %v3395 = vsel %vm3391, %v3379, %v3394
    %v3396 = vsel %vm3390, %v3393, %v3395
    %v3397 = vsel %vm3389, %v3376, %v3379
    %v3398 = vsel %vm3392, %v3385, 920167782
    %v3399 = vsel %vm3391, %v3382, %v3398
    %v3400 = vsel %vm3390, %v3397, %v3399
    %v3401 = vsel %vm3389, %v3379, %v3382
    %v3402 = vsel %vm3392, %v3388, 1326507024
    %v3403 = vsel %vm3391, %v3385, %v3402
    %v3404 = vsel %vm3390, %v3401, %v3403
    %v3405 = vshll.u32 %v3365, 8
    %v3406 = vmul.u32.u64.compose %v3405, %v3404
    %v3407 = vextract.low.u32 %v3406
    %v3408 = vextract.high.u32 %v3406
    %v3409 = vmul.u32.u64.compose %v3405, %v3400
    %v3410 = vextract.low.u32 %v3409
    %v3411 = vextract.high.u32 %v3409
    %v3412 = vmul.u32 %v3405, %v3396
    %v3413 = vadd.s32 %v3408, %v3410
    %vm3414 = vc.u32 %v3408, %v3410
    %v3415 = vadd.s32 %v3411, 1
    %v3416 = vsel %vm3414, %v3415, %v3411
    %v3417 = vadd.s32 %v3412, %v3416
    %v3418 = vadd.s32 %v3417, 536870912
    %v3419 = vshrl.u32 %v3418, 30
    %v3420 = vshll.u32 %v3419, 30
    %v3421 = vsub.s32 %v3417, %v3420
    %vm3422 = vcmp.lt.s32.totalorder %v3421, 0
    %v3423 = vsub.s32 0, %v3421
    %v3424 = vsel %vm3422, %v3423, %v3421
    %v3425 = vclz %v3424
    %v3426 = vsub.s32 %v3425, 2
    %vm3427 = vcmp.gt.s32.totalorder 0, %v3426
    %v3428 = vsel %vm3427, 0, %v3426
    %v3429 = vsub.s32 32, %v3428
    %v3430 = vshll.u32 %v3421, %v3428
    %v3431 = vshrl.u32 %v3413, %v3429
    %v3432 = vor.u32 %v3430, %v3431
    %v3433 = vsub.s32 4294967266, %v3428
    %v3434 = vadd.s32 %v3433, 127
    %v3435 = vshll.u32 %v3434, 23
    %v3436 = vor.u32 4788187, %v3435
    %v3437 = vand.u32 2147483647, %v3436
    %v3439 = vcvt.s32.f32 %v3432
    %v3440 = vmul.f32 %v3439, %v3437
    %v3441 = vxor.u32 %v3440, 2147483648
    %v3442 = vsel %vm3359, %v3441, %v3440
    %v3443 = vsub.s32 4, %v3419
    %v3444 = vsel %vm3359, %v3443, %v3419
    %v3445 = vsel %vm3358, %v338, %v3442
    %v3446 = vsel %vm3358, 0, %v3444
    %v3447 = vcosq.f32.pop %v3445
    %v3448 = vsinq.f32.pop %v3445
    %vm3449 = vweird.f32 %v338
    %v3450 = vadd.s32 %v3446, 3
    %v3451 = vand.u32 %v3450, 3
    %vm3452 = vcmp.lt.s32.totalorder %v3451, 2
    %vm3453 = vcmp.eq.s32.totalorder %v3451, 0
    %v3454 = vxor.u32 %v3448, 2147483648
    %v3455 = vsel %vm3453, %v3447, %v3454
    %vm3456 = vcmp.eq.s32.totalorder %v3451, 2
    %v3457 = vxor.u32 %v3447, 2147483648
    %v3458 = vsel %vm3456, %v3457, %v3448
    %v3459 = vsel %vm3452, %v3455, %v3458
    %v3460 = vsel %vm3449, nan, %v3459
    %v3461 = vand.u32 2147483647, %v339
    %vm3462 = vcmp.le.f32.partialorder %v3461, 0.7853982
    %vm3463 = vcmp.lt.s32.totalorder %v339, 0
    %v3464 = vand.u32 %v339, 2139095040
    %v3465 = vshrl.u32 %v3464, 23
    %v3466 = vsub.s32 %v3465, 127
    %v3467 = vand.u32 2147483647, %v339
    %v3468 = vand.u32 %v3467, 8388607
    %v3469 = vor.u32 %v3468, 8388608
    %v3470 = vsub.s32 0, %v3469
    %v3471 = vadd.s32 %v3466, 1
    %vm3472 = vcmp.gt.s32.totalorder %v3471, 0
    %v3473 = vsel %vm3472, %v3471, 0
    %v3474 = vshrl.u32 %v3473, 5
    %v3475 = vand.u32 %v3473, 31
    %v3476 = vsub.s32 32, %v3475
    %v3477 = vshrl.u32 683565275, %v3476
    %v3478 = vshll.u32 683565275, %v3475
    %v3479 = vshrl.u32 2475754826, %v3476
    %v3480 = vor.u32 %v3478, %v3479
    %v3481 = vshll.u32 2475754826, %v3475
    %v3482 = vshrl.u32 2131351028, %v3476
    %v3483 = vor.u32 %v3481, %v3482
    %v3484 = vshll.u32 2131351028, %v3475
    %v3485 = vshrl.u32 2102212464, %v3476
    %v3486 = vor.u32 %v3484, %v3485
    %v3487 = vshll.u32 2102212464, %v3475
    %v3488 = vshrl.u32 920167782, %v3476
    %v3489 = vor.u32 %v3487, %v3488
    %v3490 = vshll.u32 920167782, %v3475
    %v3491 = vshrl.u32 1326507024, %v3476
    %v3492 = vor.u32 %v3490, %v3491
    %vm3493 = vcmp.lt.s32.totalorder %v3474, 1
    %vm3494 = vcmp.lt.s32.totalorder %v3474, 2
    %vm3495 = vcmp.lt.s32.totalorder %v3474, 3
    %vm3496 = vcmp.lt.s32.totalorder %v3474, 4
    %v3497 = vsel %vm3493, %v3477, %v3480
    %v3498 = vsel %vm3496, %v3486, 2102212464
    %v3499 = vsel %vm3495, %v3483, %v3498
    %v3500 = vsel %vm3494, %v3497, %v3499
    %v3501 = vsel %vm3493, %v3480, %v3483
    %v3502 = vsel %vm3496, %v3489, 920167782
    %v3503 = vsel %vm3495, %v3486, %v3502
    %v3504 = vsel %vm3494, %v3501, %v3503
    %v3505 = vsel %vm3493, %v3483, %v3486
    %v3506 = vsel %vm3496, %v3492, 1326507024
    %v3507 = vsel %vm3495, %v3489, %v3506
    %v3508 = vsel %vm3494, %v3505, %v3507
    %v3509 = vshll.u32 %v3469, 8
    %v3510 = vmul.u32.u64.compose %v3509, %v3508
    %v3511 = vextract.low.u32 %v3510
    %v3512 = vextract.high.u32 %v3510
    %v3513 = vmul.u32.u64.compose %v3509, %v3504
    %v3514 = vextract.low.u32 %v3513
    %v3515 = vextract.high.u32 %v3513
    %v3516 = vmul.u32 %v3509, %v3500
    %v3517 = vadd.s32 %v3512, %v3514
    %vm3518 = vc.u32 %v3512, %v3514
    %v3519 = vadd.s32 %v3515, 1
    %v3520 = vsel %vm3518, %v3519, %v3515
    %v3521 = vadd.s32 %v3516, %v3520
    %v3522 = vadd.s32 %v3521, 536870912
    %v3523 = vshrl.u32 %v3522, 30
    %v3524 = vshll.u32 %v3523, 30
    %v3525 = vsub.s32 %v3521, %v3524
    %vm3526 = vcmp.lt.s32.totalorder %v3525, 0
    %v3527 = vsub.s32 0, %v3525
    %v3528 = vsel %vm3526, %v3527, %v3525
    %v3529 = vclz %v3528
    %v3530 = vsub.s32 %v3529, 2
    %vm3531 = vcmp.gt.s32.totalorder 0, %v3530
    %v3532 = vsel %vm3531, 0, %v3530
    %v3533 = vsub.s32 32, %v3532
    %v3534 = vshll.u32 %v3525, %v3532
    %v3535 = vshrl.u32 %v3517, %v3533
    %v3536 = vor.u32 %v3534, %v3535
    %v3537 = vsub.s32 4294967266, %v3532
    %v3538 = vadd.s32 %v3537, 127
    %v3539 = vshll.u32 %v3538, 23
    %v3540 = vor.u32 4788187, %v3539
    %v3541 = vand.u32 2147483647, %v3540
    %v3543 = vcvt.s32.f32 %v3536
    %v3544 = vmul.f32 %v3543, %v3541
    %v3545 = vxor.u32 %v3544, 2147483648
    %v3546 = vsel %vm3463, %v3545, %v3544
    %v3547 = vsub.s32 4, %v3523
    %v3548 = vsel %vm3463, %v3547, %v3523
    %v3549 = vsel %vm3462, %v339, %v3546
    %v3550 = vsel %vm3462, 0, %v3548
    %v3551 = vcosq.f32.pop %v3549
    %v3552 = vsinq.f32.pop %v3549
    %vm3553 = vweird.f32 %v339
    %v3554 = vadd.s32 %v3550, 3
    %v3555 = vand.u32 %v3554, 3
    %vm3556 = vcmp.lt.s32.totalorder %v3555, 2
    %vm3557 = vcmp.eq.s32.totalorder %v3555, 0
    %v3558 = vxor.u32 %v3552, 2147483648
    %v3559 = vsel %vm3557, %v3551, %v3558
    %vm3560 = vcmp.eq.s32.totalorder %v3555, 2
    %v3561 = vxor.u32 %v3551, 2147483648
    %v3562 = vsel %vm3560, %v3561, %v3552
    %v3563 = vsel %vm3556, %v3559, %v3562
    %v3564 = vsel %vm3553, nan, %v3563
    %v3565 = vand.u32 2147483647, %v340
    %vm3566 = vcmp.le.f32.partialorder %v3565, 0.7853982
    %vm3567 = vcmp.lt.s32.totalorder %v340, 0
    %v3568 = vand.u32 %v340, 2139095040
    %v3569 = vshrl.u32 %v3568, 23
    %v3570 = vsub.s32 %v3569, 127
    %v3571 = vand.u32 2147483647, %v340
    %v3572 = vand.u32 %v3571, 8388607
    %v3573 = vor.u32 %v3572, 8388608
    %v3574 = vsub.s32 0, %v3573
    %v3575 = vadd.s32 %v3570, 1
    %vm3576 = vcmp.gt.s32.totalorder %v3575, 0
    %v3577 = vsel %vm3576, %v3575, 0
    %v3578 = vshrl.u32 %v3577, 5
    %v3579 = vand.u32 %v3577, 31
    %v3580 = vsub.s32 32, %v3579
    %v3581 = vshrl.u32 683565275, %v3580
    %v3582 = vshll.u32 683565275, %v3579
    %v3583 = vshrl.u32 2475754826, %v3580
    %v3584 = vor.u32 %v3582, %v3583
    %v3585 = vshll.u32 2475754826, %v3579
    %v3586 = vshrl.u32 2131351028, %v3580
    %v3587 = vor.u32 %v3585, %v3586
    %v3588 = vshll.u32 2131351028, %v3579
    %v3589 = vshrl.u32 2102212464, %v3580
    %v3590 = vor.u32 %v3588, %v3589
    %v3591 = vshll.u32 2102212464, %v3579
    %v3592 = vshrl.u32 920167782, %v3580
    %v3593 = vor.u32 %v3591, %v3592
    %v3594 = vshll.u32 920167782, %v3579
    %v3595 = vshrl.u32 1326507024, %v3580
    %v3596 = vor.u32 %v3594, %v3595
    %vm3597 = vcmp.lt.s32.totalorder %v3578, 1
    %vm3598 = vcmp.lt.s32.totalorder %v3578, 2
    %vm3599 = vcmp.lt.s32.totalorder %v3578, 3
    %vm3600 = vcmp.lt.s32.totalorder %v3578, 4
    %v3601 = vsel %vm3597, %v3581, %v3584
    %v3602 = vsel %vm3600, %v3590, 2102212464
    %v3603 = vsel %vm3599, %v3587, %v3602
    %v3604 = vsel %vm3598, %v3601, %v3603
    %v3605 = vsel %vm3597, %v3584, %v3587
    %v3606 = vsel %vm3600, %v3593, 920167782
    %v3607 = vsel %vm3599, %v3590, %v3606
    %v3608 = vsel %vm3598, %v3605, %v3607
    %v3609 = vsel %vm3597, %v3587, %v3590
    %v3610 = vsel %vm3600, %v3596, 1326507024
    %v3611 = vsel %vm3599, %v3593, %v3610
    %v3612 = vsel %vm3598, %v3609, %v3611
    %v3613 = vshll.u32 %v3573, 8
    %v3614 = vmul.u32.u64.compose %v3613, %v3612
    %v3615 = vextract.low.u32 %v3614
    %v3616 = vextract.high.u32 %v3614
    %v3617 = vmul.u32.u64.compose %v3613, %v3608
    %v3618 = vextract.low.u32 %v3617
    %v3619 = vextract.high.u32 %v3617
    %v3620 = vmul.u32 %v3613, %v3604
    %v3621 = vadd.s32 %v3616, %v3618
    %vm3622 = vc.u32 %v3616, %v3618
    %v3623 = vadd.s32 %v3619, 1
    %v3624 = vsel %vm3622, %v3623, %v3619
    %v3625 = vadd.s32 %v3620, %v3624
    %v3626 = vadd.s32 %v3625, 536870912
    %v3627 = vshrl.u32 %v3626, 30
    %v3628 = vshll.u32 %v3627, 30
    %v3629 = vsub.s32 %v3625, %v3628
    %vm3630 = vcmp.lt.s32.totalorder %v3629, 0
    %v3631 = vsub.s32 0, %v3629
    %v3632 = vsel %vm3630, %v3631, %v3629
    %v3633 = vclz %v3632
    %v3634 = vsub.s32 %v3633, 2
    %vm3635 = vcmp.gt.s32.totalorder 0, %v3634
    %v3636 = vsel %vm3635, 0, %v3634
    %v3637 = vsub.s32 32, %v3636
    %v3638 = vshll.u32 %v3629, %v3636
    %v3639 = vshrl.u32 %v3621, %v3637
    %v3640 = vor.u32 %v3638, %v3639
    %v3641 = vsub.s32 4294967266, %v3636
    %v3642 = vadd.s32 %v3641, 127
    %v3643 = vshll.u32 %v3642, 23
    %v3644 = vor.u32 4788187, %v3643
    %v3645 = vand.u32 2147483647, %v3644
    %v3647 = vcvt.s32.f32 %v3640
    %v3648 = vmul.f32 %v3647, %v3645
    %v3649 = vxor.u32 %v3648, 2147483648
    %v3650 = vsel %vm3567, %v3649, %v3648
    %v3651 = vsub.s32 4, %v3627
    %v3652 = vsel %vm3567, %v3651, %v3627
    %v3653 = vsel %vm3566, %v340, %v3650
    %v3654 = vsel %vm3566, 0, %v3652
    %v3655 = vcosq.f32.pop %v3653
    %v3656 = vsinq.f32.pop %v3653
    %vm3657 = vweird.f32 %v340
    %v3658 = vadd.s32 %v3654, 3
    %v3659 = vand.u32 %v3658, 3
    %vm3660 = vcmp.lt.s32.totalorder %v3659, 2
    %vm3661 = vcmp.eq.s32.totalorder %v3659, 0
    %v3662 = vxor.u32 %v3656, 2147483648
    %v3663 = vsel %vm3661, %v3655, %v3662
    %vm3664 = vcmp.eq.s32.totalorder %v3659, 2
    %v3665 = vxor.u32 %v3655, 2147483648
    %v3666 = vsel %vm3664, %v3665, %v3656
    %v3667 = vsel %vm3660, %v3663, %v3666
    %v3668 = vsel %vm3657, nan, %v3667
    %3669 = vset.pattern.permute.xlu0 1
    %3670 = vperm.xlu0 %3669, %v79
    %v3671 = vpop.permute.xlu0 %3670
    %3673 = vset.pattern.permute.xlu0 1
    %3674 = vperm.xlu0 %3673, %v80
    %v3675 = vpop.permute.xlu0 %3674
    %3677 = vset.pattern.permute.xlu0 1
    %3678 = vperm.xlu0 %3677, %v81
    %v3679 = vpop.permute.xlu0 %3678
    %3681 = vset.pattern.permute.xlu0 1
    %3682 = vperm.xlu0 %3681, %v82
    %v3683 = vpop.permute.xlu0 %3682
    %3685 = vset.pattern.permute.xlu0 1
    %3686 = vperm.xlu0 %3685, %v83
    %v3687 = vpop.permute.xlu0 %3686
    %3689 = vset.pattern.permute.xlu0 1
    %3690 = vperm.xlu0 %3689, %v84
    %v3691 = vpop.permute.xlu0 %3690
    %3693 = vset.pattern.permute.xlu0 1
    %3694 = vperm.xlu0 %3693, %v85
    %v3695 = vpop.permute.xlu0 %3694
    %3697 = vset.pattern.permute.xlu0 1
    %3698 = vperm.xlu0 %3697, %v86
    %v3699 = vpop.permute.xlu0 %3698
    %3701 = vset.pattern.permute.xlu0 1
    %3702 = vperm.xlu0 %3701, %v87
    %v3703 = vpop.permute.xlu0 %3702
    %3705 = vset.pattern.permute.xlu0 1
    %3706 = vperm.xlu0 %3705, %v88
    %v3707 = vpop.permute.xlu0 %3706
    %3709 = vset.pattern.permute.xlu0 1
    %3710 = vperm.xlu0 %3709, %v89
    %v3711 = vpop.permute.xlu0 %3710
    %3713 = vset.pattern.permute.xlu0 1
    %3714 = vperm.xlu0 %3713, %v90
    %v3715 = vpop.permute.xlu0 %3714
    %3717 = vset.pattern.permute.xlu0 1
    %3718 = vperm.xlu0 %3717, %v91
    %v3719 = vpop.permute.xlu0 %3718
    %3721 = vset.pattern.permute.xlu0 1
    %3722 = vperm.xlu0 %3721, %v92
    %v3723 = vpop.permute.xlu0 %3722
    %3725 = vset.pattern.permute.xlu0 1
    %3726 = vperm.xlu0 %3725, %v93
    %v3727 = vpop.permute.xlu0 %3726
    %3729 = vset.pattern.permute.xlu0 1
    %3730 = vperm.xlu0 %3729, %v94
    %v3731 = vpop.permute.xlu0 %3730
    %3733 = vset.pattern.permute.xlu0 1
    %3734 = vperm.xlu0 %3733, %v95
    %v3735 = vpop.permute.xlu0 %3734
    %3737 = vset.pattern.permute.xlu0 1
    %3738 = vperm.xlu0 %3737, %v96
    %v3739 = vpop.permute.xlu0 %3738
    %3741 = vset.pattern.permute.xlu0 1
    %3742 = vperm.xlu0 %3741, %v97
    %v3743 = vpop.permute.xlu0 %3742
    %3745 = vset.pattern.permute.xlu0 1
    %3746 = vperm.xlu0 %3745, %v98
    %v3747 = vpop.permute.xlu0 %3746
    %3749 = vset.pattern.permute.xlu0 1
    %3750 = vperm.xlu0 %3749, %v99
    %v3751 = vpop.permute.xlu0 %3750
    %3753 = vset.pattern.permute.xlu0 1
    %3754 = vperm.xlu0 %3753, %v100
    %v3755 = vpop.permute.xlu0 %3754
    %3757 = vset.pattern.permute.xlu0 1
    %3758 = vperm.xlu0 %3757, %v101
    %v3759 = vpop.permute.xlu0 %3758
    %3761 = vset.pattern.permute.xlu0 1
    %3762 = vperm.xlu0 %3761, %v102
    %v3763 = vpop.permute.xlu0 %3762
    %3765 = vset.pattern.permute.xlu0 1
    %3766 = vperm.xlu0 %3765, %v103
    %v3767 = vpop.permute.xlu0 %3766
    %3769 = vset.pattern.permute.xlu0 1
    %3770 = vperm.xlu0 %3769, %v104
    %v3771 = vpop.permute.xlu0 %3770
    %3773 = vset.pattern.permute.xlu0 1
    %3774 = vperm.xlu0 %3773, %v105
    %v3775 = vpop.permute.xlu0 %3774
    %3777 = vset.pattern.permute.xlu0 1
    %3778 = vperm.xlu0 %3777, %v106
    %v3779 = vpop.permute.xlu0 %3778
    %3781 = vset.pattern.permute.xlu0 1
    %3782 = vperm.xlu0 %3781, %v107
    %v3783 = vpop.permute.xlu0 %3782
    %3785 = vset.pattern.permute.xlu0 1
    %3786 = vperm.xlu0 %3785, %v108
    %v3787 = vpop.permute.xlu0 %3786
    %3789 = vset.pattern.permute.xlu0 1
    %3790 = vperm.xlu0 %3789, %v109
    %v3791 = vpop.permute.xlu0 %3790
    %3793 = vset.pattern.permute.xlu0 1
    %3794 = vperm.xlu0 %3793, %v110
    %v3795 = vpop.permute.xlu0 %3794
    %v3797 = vmul.f32 %v3671, %v275
    %v3798 = vmul.f32 %v3675, %v275
    %v3799 = vmul.f32 %v3679, %v275
    %v3800 = vmul.f32 %v3683, %v275
    %v3801 = vmul.f32 %v3687, %v275
    %v3802 = vmul.f32 %v3691, %v275
    %v3803 = vmul.f32 %v3695, %v275
    %v3804 = vmul.f32 %v3699, %v275
    %v3805 = vmul.f32 %v3703, %v275
    %v3806 = vmul.f32 %v3707, %v275
    %v3807 = vmul.f32 %v3711, %v275
    %v3808 = vmul.f32 %v3715, %v275
    %v3809 = vmul.f32 %v3719, %v275
    %v3810 = vmul.f32 %v3723, %v275
    %v3811 = vmul.f32 %v3727, %v275
    %v3812 = vmul.f32 %v3731, %v275
    %v3813 = vmul.f32 %v3735, %v275
    %v3814 = vmul.f32 %v3739, %v275
    %v3815 = vmul.f32 %v3743, %v275
    %v3816 = vmul.f32 %v3747, %v275
    %v3817 = vmul.f32 %v3751, %v275
    %v3818 = vmul.f32 %v3755, %v275
    %v3819 = vmul.f32 %v3759, %v275
    %v3820 = vmul.f32 %v3763, %v275
    %v3821 = vmul.f32 %v3767, %v275
    %v3822 = vmul.f32 %v3771, %v275
    %v3823 = vmul.f32 %v3775, %v275
    %v3824 = vmul.f32 %v3779, %v275
    %v3825 = vmul.f32 %v3783, %v275
    %v3826 = vmul.f32 %v3787, %v275
    %v3827 = vmul.f32 %v3791, %v275
    %v3828 = vmul.f32 %v3795, %v275
    %v3829 = vadd.f32 %v3797, %v46
    %v3830 = vadd.f32 %v3798, %v46
    %v3831 = vadd.f32 %v3799, %v46
    %v3832 = vadd.f32 %v3800, %v46
    %v3833 = vadd.f32 %v3801, %v46
    %v3834 = vadd.f32 %v3802, %v46
    %v3835 = vadd.f32 %v3803, %v46
    %v3836 = vadd.f32 %v3804, %v46
    %v3837 = vadd.f32 %v3805, %v46
    %v3838 = vadd.f32 %v3806, %v46
    %v3839 = vadd.f32 %v3807, %v46
    %v3840 = vadd.f32 %v3808, %v46
    %v3841 = vadd.f32 %v3809, %v46
    %v3842 = vadd.f32 %v3810, %v46
    %v3843 = vadd.f32 %v3811, %v46
    %v3844 = vadd.f32 %v3812, %v46
    %v3845 = vadd.f32 %v3813, %v46
    %v3846 = vadd.f32 %v3814, %v46
    %v3847 = vadd.f32 %v3815, %v46
    %v3848 = vadd.f32 %v3816, %v46
    %v3849 = vadd.f32 %v3817, %v46
    %v3850 = vadd.f32 %v3818, %v46
    %v3851 = vadd.f32 %v3819, %v46
    %v3852 = vadd.f32 %v3820, %v46
    %v3853 = vadd.f32 %v3821, %v46
    %v3854 = vadd.f32 %v3822, %v46
    %v3855 = vadd.f32 %v3823, %v46
    %v3856 = vadd.f32 %v3824, %v46
    %v3857 = vadd.f32 %v3825, %v46
    %v3858 = vadd.f32 %v3826, %v46
    %v3859 = vadd.f32 %v3827, %v46
    %v3860 = vadd.f32 %v3828, %v46
    %v3861 = vand.u32 2147483647, %v3829
    %vm3862 = vcmp.le.f32.partialorder %v3861, 0.7853982
    %vm3863 = vcmp.lt.s32.totalorder %v3829, 0
    %v3864 = vand.u32 %v3829, 2139095040
    %v3865 = vshrl.u32 %v3864, 23
    %v3866 = vsub.s32 %v3865, 127
    %v3867 = vand.u32 2147483647, %v3829
    %v3868 = vand.u32 %v3867, 8388607
    %v3869 = vor.u32 %v3868, 8388608
    %v3870 = vsub.s32 0, %v3869
    %v3871 = vadd.s32 %v3866, 1
    %vm3872 = vcmp.gt.s32.totalorder %v3871, 0
    %v3873 = vsel %vm3872, %v3871, 0
    %v3874 = vshrl.u32 %v3873, 5
    %v3875 = vand.u32 %v3873, 31
    %v3876 = vsub.s32 32, %v3875
    %v3877 = vshrl.u32 683565275, %v3876
    %v3878 = vshll.u32 683565275, %v3875
    %v3879 = vshrl.u32 2475754826, %v3876
    %v3880 = vor.u32 %v3878, %v3879
    %v3881 = vshll.u32 2475754826, %v3875
    %v3882 = vshrl.u32 2131351028, %v3876
    %v3883 = vor.u32 %v3881, %v3882
    %v3884 = vshll.u32 2131351028, %v3875
    %v3885 = vshrl.u32 2102212464, %v3876
    %v3886 = vor.u32 %v3884, %v3885
    %v3887 = vshll.u32 2102212464, %v3875
    %v3888 = vshrl.u32 920167782, %v3876
    %v3889 = vor.u32 %v3887, %v3888
    %v3890 = vshll.u32 920167782, %v3875
    %v3891 = vshrl.u32 1326507024, %v3876
    %v3892 = vor.u32 %v3890, %v3891
    %vm3893 = vcmp.lt.s32.totalorder %v3874, 1
    %vm3894 = vcmp.lt.s32.totalorder %v3874, 2
    %vm3895 = vcmp.lt.s32.totalorder %v3874, 3
    %vm3896 = vcmp.lt.s32.totalorder %v3874, 4
    %v3897 = vsel %vm3893, %v3877, %v3880
    %v3898 = vsel %vm3896, %v3886, 2102212464
    %v3899 = vsel %vm3895, %v3883, %v3898
    %v3900 = vsel %vm3894, %v3897, %v3899
    %v3901 = vsel %vm3893, %v3880, %v3883
    %v3902 = vsel %vm3896, %v3889, 920167782
    %v3903 = vsel %vm3895, %v3886, %v3902
    %v3904 = vsel %vm3894, %v3901, %v3903
    %v3905 = vsel %vm3893, %v3883, %v3886
    %v3906 = vsel %vm3896, %v3892, 1326507024
    %v3907 = vsel %vm3895, %v3889, %v3906
    %v3908 = vsel %vm3894, %v3905, %v3907
    %v3909 = vshll.u32 %v3869, 8
    %v3910 = vmul.u32.u64.compose %v3909, %v3908
    %v3911 = vextract.low.u32 %v3910
    %v3912 = vextract.high.u32 %v3910
    %v3913 = vmul.u32.u64.compose %v3909, %v3904
    %v3914 = vextract.low.u32 %v3913
    %v3915 = vextract.high.u32 %v3913
    %v3916 = vmul.u32 %v3909, %v3900
    %v3917 = vadd.s32 %v3912, %v3914
    %vm3918 = vc.u32 %v3912, %v3914
    %v3919 = vadd.s32 %v3915, 1
    %v3920 = vsel %vm3918, %v3919, %v3915
    %v3921 = vadd.s32 %v3916, %v3920
    %v3922 = vadd.s32 %v3921, 536870912
    %v3923 = vshrl.u32 %v3922, 30
    %v3924 = vshll.u32 %v3923, 30
    %v3925 = vsub.s32 %v3921, %v3924
    %vm3926 = vcmp.lt.s32.totalorder %v3925, 0
    %v3927 = vsub.s32 0, %v3925
    %v3928 = vsel %vm3926, %v3927, %v3925
    %v3929 = vclz %v3928
    %v3930 = vsub.s32 %v3929, 2
    %vm3931 = vcmp.gt.s32.totalorder 0, %v3930
    %v3932 = vsel %vm3931, 0, %v3930
    %v3933 = vsub.s32 32, %v3932
    %v3934 = vshll.u32 %v3925, %v3932
    %v3935 = vshrl.u32 %v3917, %v3933
    %v3936 = vor.u32 %v3934, %v3935
    %v3937 = vsub.s32 4294967266, %v3932
    %v3938 = vadd.s32 %v3937, 127
    %v3939 = vshll.u32 %v3938, 23
    %v3940 = vor.u32 4788187, %v3939
    %v3941 = vand.u32 2147483647, %v3940
    %v3943 = vcvt.s32.f32 %v3936
    %v3944 = vmul.f32 %v3943, %v3941
    %v3945 = vxor.u32 %v3944, 2147483648
    %v3946 = vsel %vm3863, %v3945, %v3944
    %v3947 = vsub.s32 4, %v3923
    %v3948 = vsel %vm3863, %v3947, %v3923
    %v3949 = vsel %vm3862, %v3829, %v3946
    %v3950 = vsel %vm3862, 0, %v3948
    %v3951 = vcosq.f32.pop %v3949
    %v3952 = vsinq.f32.pop %v3949
    %vm3953 = vweird.f32 %v3829
    %v3954 = vadd.s32 %v3950, 3
    %v3955 = vand.u32 %v3954, 3
    %vm3956 = vcmp.lt.s32.totalorder %v3955, 2
    %vm3957 = vcmp.eq.s32.totalorder %v3955, 0
    %v3958 = vxor.u32 %v3952, 2147483648
    %v3959 = vsel %vm3957, %v3951, %v3958
    %vm3960 = vcmp.eq.s32.totalorder %v3955, 2
    %v3961 = vxor.u32 %v3951, 2147483648
    %v3962 = vsel %vm3960, %v3961, %v3952
    %v3963 = vsel %vm3956, %v3959, %v3962
    %v3964 = vsel %vm3953, nan, %v3963
    %v3965 = vand.u32 2147483647, %v3830
    %vm3966 = vcmp.le.f32.partialorder %v3965, 0.7853982
    %vm3967 = vcmp.lt.s32.totalorder %v3830, 0
    %v3968 = vand.u32 %v3830, 2139095040
    %v3969 = vshrl.u32 %v3968, 23
    %v3970 = vsub.s32 %v3969, 127
    %v3971 = vand.u32 2147483647, %v3830
    %v3972 = vand.u32 %v3971, 8388607
    %v3973 = vor.u32 %v3972, 8388608
    %v3974 = vsub.s32 0, %v3973
    %v3975 = vadd.s32 %v3970, 1
    %vm3976 = vcmp.gt.s32.totalorder %v3975, 0
    %v3977 = vsel %vm3976, %v3975, 0
    %v3978 = vshrl.u32 %v3977, 5
    %v3979 = vand.u32 %v3977, 31
    %v3980 = vsub.s32 32, %v3979
    %v3981 = vshrl.u32 683565275, %v3980
    %v3982 = vshll.u32 683565275, %v3979
    %v3983 = vshrl.u32 2475754826, %v3980
    %v3984 = vor.u32 %v3982, %v3983
    %v3985 = vshll.u32 2475754826, %v3979
    %v3986 = vshrl.u32 2131351028, %v3980
    %v3987 = vor.u32 %v3985, %v3986
    %v3988 = vshll.u32 2131351028, %v3979
    %v3989 = vshrl.u32 2102212464, %v3980
    %v3990 = vor.u32 %v3988, %v3989
    %v3991 = vshll.u32 2102212464, %v3979
    %v3992 = vshrl.u32 920167782, %v3980
    %v3993 = vor.u32 %v3991, %v3992
    %v3994 = vshll.u32 920167782, %v3979
    %v3995 = vshrl.u32 1326507024, %v3980
    %v3996 = vor.u32 %v3994, %v3995
    %vm3997 = vcmp.lt.s32.totalorder %v3978, 1
    %vm3998 = vcmp.lt.s32.totalorder %v3978, 2
    %vm3999 = vcmp.lt.s32.totalorder %v3978, 3
    %vm4000 = vcmp.lt.s32.totalorder %v3978, 4
    %v4001 = vsel %vm3997, %v3981, %v3984
    %v4002 = vsel %vm4000, %v3990, 2102212464
    %v4003 = vsel %vm3999, %v3987, %v4002
    %v4004 = vsel %vm3998, %v4001, %v4003
    %v4005 = vsel %vm3997, %v3984, %v3987
    %v4006 = vsel %vm4000, %v3993, 920167782
    %v4007 = vsel %vm3999, %v3990, %v4006
    %v4008 = vsel %vm3998, %v4005, %v4007
    %v4009 = vsel %vm3997, %v3987, %v3990
    %v4010 = vsel %vm4000, %v3996, 1326507024
    %v4011 = vsel %vm3999, %v3993, %v4010
    %v4012 = vsel %vm3998, %v4009, %v4011
    %v4013 = vshll.u32 %v3973, 8
    %v4014 = vmul.u32.u64.compose %v4013, %v4012
    %v4015 = vextract.low.u32 %v4014
    %v4016 = vextract.high.u32 %v4014
    %v4017 = vmul.u32.u64.compose %v4013, %v4008
    %v4018 = vextract.low.u32 %v4017
    %v4019 = vextract.high.u32 %v4017
    %v4020 = vmul.u32 %v4013, %v4004
    %v4021 = vadd.s32 %v4016, %v4018
    %vm4022 = vc.u32 %v4016, %v4018
    %v4023 = vadd.s32 %v4019, 1
    %v4024 = vsel %vm4022, %v4023, %v4019
    %v4025 = vadd.s32 %v4020, %v4024
    %v4026 = vadd.s32 %v4025, 536870912
    %v4027 = vshrl.u32 %v4026, 30
    %v4028 = vshll.u32 %v4027, 30
    %v4029 = vsub.s32 %v4025, %v4028
    %vm4030 = vcmp.lt.s32.totalorder %v4029, 0
    %v4031 = vsub.s32 0, %v4029
    %v4032 = vsel %vm4030, %v4031, %v4029
    %v4033 = vclz %v4032
    %v4034 = vsub.s32 %v4033, 2
    %vm4035 = vcmp.gt.s32.totalorder 0, %v4034
    %v4036 = vsel %vm4035, 0, %v4034
    %v4037 = vsub.s32 32, %v4036
    %v4038 = vshll.u32 %v4029, %v4036
    %v4039 = vshrl.u32 %v4021, %v4037
    %v4040 = vor.u32 %v4038, %v4039
    %v4041 = vsub.s32 4294967266, %v4036
    %v4042 = vadd.s32 %v4041, 127
    %v4043 = vshll.u32 %v4042, 23
    %v4044 = vor.u32 4788187, %v4043
    %v4045 = vand.u32 2147483647, %v4044
    %v4047 = vcvt.s32.f32 %v4040
    %v4048 = vmul.f32 %v4047, %v4045
    %v4049 = vxor.u32 %v4048, 2147483648
    %v4050 = vsel %vm3967, %v4049, %v4048
    %v4051 = vsub.s32 4, %v4027
    %v4052 = vsel %vm3967, %v4051, %v4027
    %v4053 = vsel %vm3966, %v3830, %v4050
    %v4054 = vsel %vm3966, 0, %v4052
    %v4055 = vcosq.f32.pop %v4053
    %v4056 = vsinq.f32.pop %v4053
    %vm4057 = vweird.f32 %v3830
    %v4058 = vadd.s32 %v4054, 3
    %v4059 = vand.u32 %v4058, 3
    %vm4060 = vcmp.lt.s32.totalorder %v4059, 2
    %vm4061 = vcmp.eq.s32.totalorder %v4059, 0
    %v4062 = vxor.u32 %v4056, 2147483648
    %v4063 = vsel %vm4061, %v4055, %v4062
    %vm4064 = vcmp.eq.s32.totalorder %v4059, 2
    %v4065 = vxor.u32 %v4055, 2147483648
    %v4066 = vsel %vm4064, %v4065, %v4056
    %v4067 = vsel %vm4060, %v4063, %v4066
    %v4068 = vsel %vm4057, nan, %v4067
    %v4069 = vand.u32 2147483647, %v3831
    %vm4070 = vcmp.le.f32.partialorder %v4069, 0.7853982
    %vm4071 = vcmp.lt.s32.totalorder %v3831, 0
    %v4072 = vand.u32 %v3831, 2139095040
    %v4073 = vshrl.u32 %v4072, 23
    %v4074 = vsub.s32 %v4073, 127
    %v4075 = vand.u32 2147483647, %v3831
    %v4076 = vand.u32 %v4075, 8388607
    %v4077 = vor.u32 %v4076, 8388608
    %v4078 = vsub.s32 0, %v4077
    %v4079 = vadd.s32 %v4074, 1
    %vm4080 = vcmp.gt.s32.totalorder %v4079, 0
    %v4081 = vsel %vm4080, %v4079, 0
    %v4082 = vshrl.u32 %v4081, 5
    %v4083 = vand.u32 %v4081, 31
    %v4084 = vsub.s32 32, %v4083
    %v4085 = vshrl.u32 683565275, %v4084
    %v4086 = vshll.u32 683565275, %v4083
    %v4087 = vshrl.u32 2475754826, %v4084
    %v4088 = vor.u32 %v4086, %v4087
    %v4089 = vshll.u32 2475754826, %v4083
    %v4090 = vshrl.u32 2131351028, %v4084
    %v4091 = vor.u32 %v4089, %v4090
    %v4092 = vshll.u32 2131351028, %v4083
    %v4093 = vshrl.u32 2102212464, %v4084
    %v4094 = vor.u32 %v4092, %v4093
    %v4095 = vshll.u32 2102212464, %v4083
    %v4096 = vshrl.u32 920167782, %v4084
    %v4097 = vor.u32 %v4095, %v4096
    %v4098 = vshll.u32 920167782, %v4083
    %v4099 = vshrl.u32 1326507024, %v4084
    %v4100 = vor.u32 %v4098, %v4099
    %vm4101 = vcmp.lt.s32.totalorder %v4082, 1
    %vm4102 = vcmp.lt.s32.totalorder %v4082, 2
    %vm4103 = vcmp.lt.s32.totalorder %v4082, 3
    %vm4104 = vcmp.lt.s32.totalorder %v4082, 4
    %v4105 = vsel %vm4101, %v4085, %v4088
    %v4106 = vsel %vm4104, %v4094, 2102212464
    %v4107 = vsel %vm4103, %v4091, %v4106
    %v4108 = vsel %vm4102, %v4105, %v4107
    %v4109 = vsel %vm4101, %v4088, %v4091
    %v4110 = vsel %vm4104, %v4097, 920167782
    %v4111 = vsel %vm4103, %v4094, %v4110
    %v4112 = vsel %vm4102, %v4109, %v4111
    %v4113 = vsel %vm4101, %v4091, %v4094
    %v4114 = vsel %vm4104, %v4100, 1326507024
    %v4115 = vsel %vm4103, %v4097, %v4114
    %v4116 = vsel %vm4102, %v4113, %v4115
    %v4117 = vshll.u32 %v4077, 8
    %v4118 = vmul.u32.u64.compose %v4117, %v4116
    %v4119 = vextract.low.u32 %v4118
    %v4120 = vextract.high.u32 %v4118
    %v4121 = vmul.u32.u64.compose %v4117, %v4112
    %v4122 = vextract.low.u32 %v4121
    %v4123 = vextract.high.u32 %v4121
    %v4124 = vmul.u32 %v4117, %v4108
    %v4125 = vadd.s32 %v4120, %v4122
    %vm4126 = vc.u32 %v4120, %v4122
    %v4127 = vadd.s32 %v4123, 1
    %v4128 = vsel %vm4126, %v4127, %v4123
    %v4129 = vadd.s32 %v4124, %v4128
    %v4130 = vadd.s32 %v4129, 536870912
    %v4131 = vshrl.u32 %v4130, 30
    %v4132 = vshll.u32 %v4131, 30
    %v4133 = vsub.s32 %v4129, %v4132
    %vm4134 = vcmp.lt.s32.totalorder %v4133, 0
    %v4135 = vsub.s32 0, %v4133
    %v4136 = vsel %vm4134, %v4135, %v4133
    %v4137 = vclz %v4136
    %v4138 = vsub.s32 %v4137, 2
    %vm4139 = vcmp.gt.s32.totalorder 0, %v4138
    %v4140 = vsel %vm4139, 0, %v4138
    %v4141 = vsub.s32 32, %v4140
    %v4142 = vshll.u32 %v4133, %v4140
    %v4143 = vshrl.u32 %v4125, %v4141
    %v4144 = vor.u32 %v4142, %v4143
    %v4145 = vsub.s32 4294967266, %v4140
    %v4146 = vadd.s32 %v4145, 127
    %v4147 = vshll.u32 %v4146, 23
    %v4148 = vor.u32 4788187, %v4147
    %v4149 = vand.u32 2147483647, %v4148
    %v4151 = vcvt.s32.f32 %v4144
    %v4152 = vmul.f32 %v4151, %v4149
    %v4153 = vxor.u32 %v4152, 2147483648
    %v4154 = vsel %vm4071, %v4153, %v4152
    %v4155 = vsub.s32 4, %v4131
    %v4156 = vsel %vm4071, %v4155, %v4131
    %v4157 = vsel %vm4070, %v3831, %v4154
    %v4158 = vsel %vm4070, 0, %v4156
    %v4159 = vcosq.f32.pop %v4157
    %v4160 = vsinq.f32.pop %v4157
    %vm4161 = vweird.f32 %v3831
    %v4162 = vadd.s32 %v4158, 3
    %v4163 = vand.u32 %v4162, 3
    %vm4164 = vcmp.lt.s32.totalorder %v4163, 2
    %vm4165 = vcmp.eq.s32.totalorder %v4163, 0
    %v4166 = vxor.u32 %v4160, 2147483648
    %v4167 = vsel %vm4165, %v4159, %v4166
    %vm4168 = vcmp.eq.s32.totalorder %v4163, 2
    %v4169 = vxor.u32 %v4159, 2147483648
    %v4170 = vsel %vm4168, %v4169, %v4160
    %v4171 = vsel %vm4164, %v4167, %v4170
    %v4172 = vsel %vm4161, nan, %v4171
    %v4173 = vand.u32 2147483647, %v3832
    %vm4174 = vcmp.le.f32.partialorder %v4173, 0.7853982
    %vm4175 = vcmp.lt.s32.totalorder %v3832, 0
    %v4176 = vand.u32 %v3832, 2139095040
    %v4177 = vshrl.u32 %v4176, 23
    %v4178 = vsub.s32 %v4177, 127
    %v4179 = vand.u32 2147483647, %v3832
    %v4180 = vand.u32 %v4179, 8388607
    %v4181 = vor.u32 %v4180, 8388608
    %v4182 = vsub.s32 0, %v4181
    %v4183 = vadd.s32 %v4178, 1
    %vm4184 = vcmp.gt.s32.totalorder %v4183, 0
    %v4185 = vsel %vm4184, %v4183, 0
    %v4186 = vshrl.u32 %v4185, 5
    %v4187 = vand.u32 %v4185, 31
    %v4188 = vsub.s32 32, %v4187
    %v4189 = vshrl.u32 683565275, %v4188
    %v4190 = vshll.u32 683565275, %v4187
    %v4191 = vshrl.u32 2475754826, %v4188
    %v4192 = vor.u32 %v4190, %v4191
    %v4193 = vshll.u32 2475754826, %v4187
    %v4194 = vshrl.u32 2131351028, %v4188
    %v4195 = vor.u32 %v4193, %v4194
    %v4196 = vshll.u32 2131351028, %v4187
    %v4197 = vshrl.u32 2102212464, %v4188
    %v4198 = vor.u32 %v4196, %v4197
    %v4199 = vshll.u32 2102212464, %v4187
    %v4200 = vshrl.u32 920167782, %v4188
    %v4201 = vor.u32 %v4199, %v4200
    %v4202 = vshll.u32 920167782, %v4187
    %v4203 = vshrl.u32 1326507024, %v4188
    %v4204 = vor.u32 %v4202, %v4203
    %vm4205 = vcmp.lt.s32.totalorder %v4186, 1
    %vm4206 = vcmp.lt.s32.totalorder %v4186, 2
    %vm4207 = vcmp.lt.s32.totalorder %v4186, 3
    %vm4208 = vcmp.lt.s32.totalorder %v4186, 4
    %v4209 = vsel %vm4205, %v4189, %v4192
    %v4210 = vsel %vm4208, %v4198, 2102212464
    %v4211 = vsel %vm4207, %v4195, %v4210
    %v4212 = vsel %vm4206, %v4209, %v4211
    %v4213 = vsel %vm4205, %v4192, %v4195
    %v4214 = vsel %vm4208, %v4201, 920167782
    %v4215 = vsel %vm4207, %v4198, %v4214
    %v4216 = vsel %vm4206, %v4213, %v4215
    %v4217 = vsel %vm4205, %v4195, %v4198
    %v4218 = vsel %vm4208, %v4204, 1326507024
    %v4219 = vsel %vm4207, %v4201, %v4218
    %v4220 = vsel %vm4206, %v4217, %v4219
    %v4221 = vshll.u32 %v4181, 8
    %v4222 = vmul.u32.u64.compose %v4221, %v4220
    %v4223 = vextract.low.u32 %v4222
    %v4224 = vextract.high.u32 %v4222
    %v4225 = vmul.u32.u64.compose %v4221, %v4216
    %v4226 = vextract.low.u32 %v4225
    %v4227 = vextract.high.u32 %v4225
    %v4228 = vmul.u32 %v4221, %v4212
    %v4229 = vadd.s32 %v4224, %v4226
    %vm4230 = vc.u32 %v4224, %v4226
    %v4231 = vadd.s32 %v4227, 1
    %v4232 = vsel %vm4230, %v4231, %v4227
    %v4233 = vadd.s32 %v4228, %v4232
    %v4234 = vadd.s32 %v4233, 536870912
    %v4235 = vshrl.u32 %v4234, 30
    %v4236 = vshll.u32 %v4235, 30
    %v4237 = vsub.s32 %v4233, %v4236
    %vm4238 = vcmp.lt.s32.totalorder %v4237, 0
    %v4239 = vsub.s32 0, %v4237
    %v4240 = vsel %vm4238, %v4239, %v4237
    %v4241 = vclz %v4240
    %v4242 = vsub.s32 %v4241, 2
    %vm4243 = vcmp.gt.s32.totalorder 0, %v4242
    %v4244 = vsel %vm4243, 0, %v4242
    %v4245 = vsub.s32 32, %v4244
    %v4246 = vshll.u32 %v4237, %v4244
    %v4247 = vshrl.u32 %v4229, %v4245
    %v4248 = vor.u32 %v4246, %v4247
    %v4249 = vsub.s32 4294967266, %v4244
    %v4250 = vadd.s32 %v4249, 127
    %v4251 = vshll.u32 %v4250, 23
    %v4252 = vor.u32 4788187, %v4251
    %v4253 = vand.u32 2147483647, %v4252
    %v4255 = vcvt.s32.f32 %v4248
    %v4256 = vmul.f32 %v4255, %v4253
    %v4257 = vxor.u32 %v4256, 2147483648
    %v4258 = vsel %vm4175, %v4257, %v4256
    %v4259 = vsub.s32 4, %v4235
    %v4260 = vsel %vm4175, %v4259, %v4235
    %v4261 = vsel %vm4174, %v3832, %v4258
    %v4262 = vsel %vm4174, 0, %v4260
    %v4263 = vcosq.f32.pop %v4261
    %v4264 = vsinq.f32.pop %v4261
    %vm4265 = vweird.f32 %v3832
    %v4266 = vadd.s32 %v4262, 3
    %v4267 = vand.u32 %v4266, 3
    %vm4268 = vcmp.lt.s32.totalorder %v4267, 2
    %vm4269 = vcmp.eq.s32.totalorder %v4267, 0
    %v4270 = vxor.u32 %v4264, 2147483648
    %v4271 = vsel %vm4269, %v4263, %v4270
    %vm4272 = vcmp.eq.s32.totalorder %v4267, 2
    %v4273 = vxor.u32 %v4263, 2147483648
    %v4274 = vsel %vm4272, %v4273, %v4264
    %v4275 = vsel %vm4268, %v4271, %v4274
    %v4276 = vsel %vm4265, nan, %v4275
    %v4277 = vand.u32 2147483647, %v3833
    %vm4278 = vcmp.le.f32.partialorder %v4277, 0.7853982
    %vm4279 = vcmp.lt.s32.totalorder %v3833, 0
    %v4280 = vand.u32 %v3833, 2139095040
    %v4281 = vshrl.u32 %v4280, 23
    %v4282 = vsub.s32 %v4281, 127
    %v4283 = vand.u32 2147483647, %v3833
    %v4284 = vand.u32 %v4283, 8388607
    %v4285 = vor.u32 %v4284, 8388608
    %v4286 = vsub.s32 0, %v4285
    %v4287 = vadd.s32 %v4282, 1
    %vm4288 = vcmp.gt.s32.totalorder %v4287, 0
    %v4289 = vsel %vm4288, %v4287, 0
    %v4290 = vshrl.u32 %v4289, 5
    %v4291 = vand.u32 %v4289, 31
    %v4292 = vsub.s32 32, %v4291
    %v4293 = vshrl.u32 683565275, %v4292
    %v4294 = vshll.u32 683565275, %v4291
    %v4295 = vshrl.u32 2475754826, %v4292
    %v4296 = vor.u32 %v4294, %v4295
    %v4297 = vshll.u32 2475754826, %v4291
    %v4298 = vshrl.u32 2131351028, %v4292
    %v4299 = vor.u32 %v4297, %v4298
    %v4300 = vshll.u32 2131351028, %v4291
    %v4301 = vshrl.u32 2102212464, %v4292
    %v4302 = vor.u32 %v4300, %v4301
    %v4303 = vshll.u32 2102212464, %v4291
    %v4304 = vshrl.u32 920167782, %v4292
    %v4305 = vor.u32 %v4303, %v4304
    %v4306 = vshll.u32 920167782, %v4291
    %v4307 = vshrl.u32 1326507024, %v4292
    %v4308 = vor.u32 %v4306, %v4307
    %vm4309 = vcmp.lt.s32.totalorder %v4290, 1
    %vm4310 = vcmp.lt.s32.totalorder %v4290, 2
    %vm4311 = vcmp.lt.s32.totalorder %v4290, 3
    %vm4312 = vcmp.lt.s32.totalorder %v4290, 4
    %v4313 = vsel %vm4309, %v4293, %v4296
    %v4314 = vsel %vm4312, %v4302, 2102212464
    %v4315 = vsel %vm4311, %v4299, %v4314
    %v4316 = vsel %vm4310, %v4313, %v4315
    %v4317 = vsel %vm4309, %v4296, %v4299
    %v4318 = vsel %vm4312, %v4305, 920167782
    %v4319 = vsel %vm4311, %v4302, %v4318
    %v4320 = vsel %vm4310, %v4317, %v4319
    %v4321 = vsel %vm4309, %v4299, %v4302
    %v4322 = vsel %vm4312, %v4308, 1326507024
    %v4323 = vsel %vm4311, %v4305, %v4322
    %v4324 = vsel %vm4310, %v4321, %v4323
    %v4325 = vshll.u32 %v4285, 8
    %v4326 = vmul.u32.u64.compose %v4325, %v4324
    %v4327 = vextract.low.u32 %v4326
    %v4328 = vextract.high.u32 %v4326
    %v4329 = vmul.u32.u64.compose %v4325, %v4320
    %v4330 = vextract.low.u32 %v4329
    %v4331 = vextract.high.u32 %v4329
    %v4332 = vmul.u32 %v4325, %v4316
    %v4333 = vadd.s32 %v4328, %v4330
    %vm4334 = vc.u32 %v4328, %v4330
    %v4335 = vadd.s32 %v4331, 1
    %v4336 = vsel %vm4334, %v4335, %v4331
    %v4337 = vadd.s32 %v4332, %v4336
    %v4338 = vadd.s32 %v4337, 536870912
    %v4339 = vshrl.u32 %v4338, 30
    %v4340 = vshll.u32 %v4339, 30
    %v4341 = vsub.s32 %v4337, %v4340
    %vm4342 = vcmp.lt.s32.totalorder %v4341, 0
    %v4343 = vsub.s32 0, %v4341
    %v4344 = vsel %vm4342, %v4343, %v4341
    %v4345 = vclz %v4344
    %v4346 = vsub.s32 %v4345, 2
    %vm4347 = vcmp.gt.s32.totalorder 0, %v4346
    %v4348 = vsel %vm4347, 0, %v4346
    %v4349 = vsub.s32 32, %v4348
    %v4350 = vshll.u32 %v4341, %v4348
    %v4351 = vshrl.u32 %v4333, %v4349
    %v4352 = vor.u32 %v4350, %v4351
    %v4353 = vsub.s32 4294967266, %v4348
    %v4354 = vadd.s32 %v4353, 127
    %v4355 = vshll.u32 %v4354, 23
    %v4356 = vor.u32 4788187, %v4355
    %v4357 = vand.u32 2147483647, %v4356
    %v4359 = vcvt.s32.f32 %v4352
    %v4360 = vmul.f32 %v4359, %v4357
    %v4361 = vxor.u32 %v4360, 2147483648
    %v4362 = vsel %vm4279, %v4361, %v4360
    %v4363 = vsub.s32 4, %v4339
    %v4364 = vsel %vm4279, %v4363, %v4339
    %v4365 = vsel %vm4278, %v3833, %v4362
    %v4366 = vsel %vm4278, 0, %v4364
    %v4367 = vcosq.f32.pop %v4365
    %v4368 = vsinq.f32.pop %v4365
    %vm4369 = vweird.f32 %v3833
    %v4370 = vadd.s32 %v4366, 3
    %v4371 = vand.u32 %v4370, 3
    %vm4372 = vcmp.lt.s32.totalorder %v4371, 2
    %vm4373 = vcmp.eq.s32.totalorder %v4371, 0
    %v4374 = vxor.u32 %v4368, 2147483648
    %v4375 = vsel %vm4373, %v4367, %v4374
    %vm4376 = vcmp.eq.s32.totalorder %v4371, 2
    %v4377 = vxor.u32 %v4367, 2147483648
    %v4378 = vsel %vm4376, %v4377, %v4368
    %v4379 = vsel %vm4372, %v4375, %v4378
    %v4380 = vsel %vm4369, nan, %v4379
    %v4381 = vand.u32 2147483647, %v3834
    %vm4382 = vcmp.le.f32.partialorder %v4381, 0.7853982
    %vm4383 = vcmp.lt.s32.totalorder %v3834, 0
    %v4384 = vand.u32 %v3834, 2139095040
    %v4385 = vshrl.u32 %v4384, 23
    %v4386 = vsub.s32 %v4385, 127
    %v4387 = vand.u32 2147483647, %v3834
    %v4388 = vand.u32 %v4387, 8388607
    %v4389 = vor.u32 %v4388, 8388608
    %v4390 = vsub.s32 0, %v4389
    %v4391 = vadd.s32 %v4386, 1
    %vm4392 = vcmp.gt.s32.totalorder %v4391, 0
    %v4393 = vsel %vm4392, %v4391, 0
    %v4394 = vshrl.u32 %v4393, 5
    %v4395 = vand.u32 %v4393, 31
    %v4396 = vsub.s32 32, %v4395
    %v4397 = vshrl.u32 683565275, %v4396
    %v4398 = vshll.u32 683565275, %v4395
    %v4399 = vshrl.u32 2475754826, %v4396
    %v4400 = vor.u32 %v4398, %v4399
    %v4401 = vshll.u32 2475754826, %v4395
    %v4402 = vshrl.u32 2131351028, %v4396
    %v4403 = vor.u32 %v4401, %v4402
    %v4404 = vshll.u32 2131351028, %v4395
    %v4405 = vshrl.u32 2102212464, %v4396
    %v4406 = vor.u32 %v4404, %v4405
    %v4407 = vshll.u32 2102212464, %v4395
    %v4408 = vshrl.u32 920167782, %v4396
    %v4409 = vor.u32 %v4407, %v4408
    %v4410 = vshll.u32 920167782, %v4395
    %v4411 = vshrl.u32 1326507024, %v4396
    %v4412 = vor.u32 %v4410, %v4411
    %vm4413 = vcmp.lt.s32.totalorder %v4394, 1
    %vm4414 = vcmp.lt.s32.totalorder %v4394, 2
    %vm4415 = vcmp.lt.s32.totalorder %v4394, 3
    %vm4416 = vcmp.lt.s32.totalorder %v4394, 4
    %v4417 = vsel %vm4413, %v4397, %v4400
    %v4418 = vsel %vm4416, %v4406, 2102212464
    %v4419 = vsel %vm4415, %v4403, %v4418
    %v4420 = vsel %vm4414, %v4417, %v4419
    %v4421 = vsel %vm4413, %v4400, %v4403
    %v4422 = vsel %vm4416, %v4409, 920167782
    %v4423 = vsel %vm4415, %v4406, %v4422
    %v4424 = vsel %vm4414, %v4421, %v4423
    %v4425 = vsel %vm4413, %v4403, %v4406
    %v4426 = vsel %vm4416, %v4412, 1326507024
    %v4427 = vsel %vm4415, %v4409, %v4426
    %v4428 = vsel %vm4414, %v4425, %v4427
    %v4429 = vshll.u32 %v4389, 8
    %v4430 = vmul.u32.u64.compose %v4429, %v4428
    %v4431 = vextract.low.u32 %v4430
    %v4432 = vextract.high.u32 %v4430
    %v4433 = vmul.u32.u64.compose %v4429, %v4424
    %v4434 = vextract.low.u32 %v4433
    %v4435 = vextract.high.u32 %v4433
    %v4436 = vmul.u32 %v4429, %v4420
    %v4437 = vadd.s32 %v4432, %v4434
    %vm4438 = vc.u32 %v4432, %v4434
    %v4439 = vadd.s32 %v4435, 1
    %v4440 = vsel %vm4438, %v4439, %v4435
    %v4441 = vadd.s32 %v4436, %v4440
    %v4442 = vadd.s32 %v4441, 536870912
    %v4443 = vshrl.u32 %v4442, 30
    %v4444 = vshll.u32 %v4443, 30
    %v4445 = vsub.s32 %v4441, %v4444
    %vm4446 = vcmp.lt.s32.totalorder %v4445, 0
    %v4447 = vsub.s32 0, %v4445
    %v4448 = vsel %vm4446, %v4447, %v4445
    %v4449 = vclz %v4448
    %v4450 = vsub.s32 %v4449, 2
    %vm4451 = vcmp.gt.s32.totalorder 0, %v4450
    %v4452 = vsel %vm4451, 0, %v4450
    %v4453 = vsub.s32 32, %v4452
    %v4454 = vshll.u32 %v4445, %v4452
    %v4455 = vshrl.u32 %v4437, %v4453
    %v4456 = vor.u32 %v4454, %v4455
    %v4457 = vsub.s32 4294967266, %v4452
    %v4458 = vadd.s32 %v4457, 127
    %v4459 = vshll.u32 %v4458, 23
    %v4460 = vor.u32 4788187, %v4459
    %v4461 = vand.u32 2147483647, %v4460
    %v4463 = vcvt.s32.f32 %v4456
    %v4464 = vmul.f32 %v4463, %v4461
    %v4465 = vxor.u32 %v4464, 2147483648
    %v4466 = vsel %vm4383, %v4465, %v4464
    %v4467 = vsub.s32 4, %v4443
    %v4468 = vsel %vm4383, %v4467, %v4443
    %v4469 = vsel %vm4382, %v3834, %v4466
    %v4470 = vsel %vm4382, 0, %v4468
    %v4471 = vcosq.f32.pop %v4469
    %v4472 = vsinq.f32.pop %v4469
    %vm4473 = vweird.f32 %v3834
    %v4474 = vadd.s32 %v4470, 3
    %v4475 = vand.u32 %v4474, 3
    %vm4476 = vcmp.lt.s32.totalorder %v4475, 2
    %vm4477 = vcmp.eq.s32.totalorder %v4475, 0
    %v4478 = vxor.u32 %v4472, 2147483648
    %v4479 = vsel %vm4477, %v4471, %v4478
    %vm4480 = vcmp.eq.s32.totalorder %v4475, 2
    %v4481 = vxor.u32 %v4471, 2147483648
    %v4482 = vsel %vm4480, %v4481, %v4472
    %v4483 = vsel %vm4476, %v4479, %v4482
    %v4484 = vsel %vm4473, nan, %v4483
    %v4485 = vand.u32 2147483647, %v3835
    %vm4486 = vcmp.le.f32.partialorder %v4485, 0.7853982
    %vm4487 = vcmp.lt.s32.totalorder %v3835, 0
    %v4488 = vand.u32 %v3835, 2139095040
    %v4489 = vshrl.u32 %v4488, 23
    %v4490 = vsub.s32 %v4489, 127
    %v4491 = vand.u32 2147483647, %v3835
    %v4492 = vand.u32 %v4491, 8388607
    %v4493 = vor.u32 %v4492, 8388608
    %v4494 = vsub.s32 0, %v4493
    %v4495 = vadd.s32 %v4490, 1
    %vm4496 = vcmp.gt.s32.totalorder %v4495, 0
    %v4497 = vsel %vm4496, %v4495, 0
    %v4498 = vshrl.u32 %v4497, 5
    %v4499 = vand.u32 %v4497, 31
    %v4500 = vsub.s32 32, %v4499
    %v4501 = vshrl.u32 683565275, %v4500
    %v4502 = vshll.u32 683565275, %v4499
    %v4503 = vshrl.u32 2475754826, %v4500
    %v4504 = vor.u32 %v4502, %v4503
    %v4505 = vshll.u32 2475754826, %v4499
    %v4506 = vshrl.u32 2131351028, %v4500
    %v4507 = vor.u32 %v4505, %v4506
    %v4508 = vshll.u32 2131351028, %v4499
    %v4509 = vshrl.u32 2102212464, %v4500
    %v4510 = vor.u32 %v4508, %v4509
    %v4511 = vshll.u32 2102212464, %v4499
    %v4512 = vshrl.u32 920167782, %v4500
    %v4513 = vor.u32 %v4511, %v4512
    %v4514 = vshll.u32 920167782, %v4499
    %v4515 = vshrl.u32 1326507024, %v4500
    %v4516 = vor.u32 %v4514, %v4515
    %vm4517 = vcmp.lt.s32.totalorder %v4498, 1
    %vm4518 = vcmp.lt.s32.totalorder %v4498, 2
    %vm4519 = vcmp.lt.s32.totalorder %v4498, 3
    %vm4520 = vcmp.lt.s32.totalorder %v4498, 4
    %v4521 = vsel %vm4517, %v4501, %v4504
    %v4522 = vsel %vm4520, %v4510, 2102212464
    %v4523 = vsel %vm4519, %v4507, %v4522
    %v4524 = vsel %vm4518, %v4521, %v4523
    %v4525 = vsel %vm4517, %v4504, %v4507
    %v4526 = vsel %vm4520, %v4513, 920167782
    %v4527 = vsel %vm4519, %v4510, %v4526
    %v4528 = vsel %vm4518, %v4525, %v4527
    %v4529 = vsel %vm4517, %v4507, %v4510
    %v4530 = vsel %vm4520, %v4516, 1326507024
    %v4531 = vsel %vm4519, %v4513, %v4530
    %v4532 = vsel %vm4518, %v4529, %v4531
    %v4533 = vshll.u32 %v4493, 8
    %v4534 = vmul.u32.u64.compose %v4533, %v4532
    %v4535 = vextract.low.u32 %v4534
    %v4536 = vextract.high.u32 %v4534
    %v4537 = vmul.u32.u64.compose %v4533, %v4528
    %v4538 = vextract.low.u32 %v4537
    %v4539 = vextract.high.u32 %v4537
    %v4540 = vmul.u32 %v4533, %v4524
    %v4541 = vadd.s32 %v4536, %v4538
    %vm4542 = vc.u32 %v4536, %v4538
    %v4543 = vadd.s32 %v4539, 1
    %v4544 = vsel %vm4542, %v4543, %v4539
    %v4545 = vadd.s32 %v4540, %v4544
    %v4546 = vadd.s32 %v4545, 536870912
    %v4547 = vshrl.u32 %v4546, 30
    %v4548 = vshll.u32 %v4547, 30
    %v4549 = vsub.s32 %v4545, %v4548
    %vm4550 = vcmp.lt.s32.totalorder %v4549, 0
    %v4551 = vsub.s32 0, %v4549
    %v4552 = vsel %vm4550, %v4551, %v4549
    %v4553 = vclz %v4552
    %v4554 = vsub.s32 %v4553, 2
    %vm4555 = vcmp.gt.s32.totalorder 0, %v4554
    %v4556 = vsel %vm4555, 0, %v4554
    %v4557 = vsub.s32 32, %v4556
    %v4558 = vshll.u32 %v4549, %v4556
    %v4559 = vshrl.u32 %v4541, %v4557
    %v4560 = vor.u32 %v4558, %v4559
    %v4561 = vsub.s32 4294967266, %v4556
    %v4562 = vadd.s32 %v4561, 127
    %v4563 = vshll.u32 %v4562, 23
    %v4564 = vor.u32 4788187, %v4563
    %v4565 = vand.u32 2147483647, %v4564
    %v4567 = vcvt.s32.f32 %v4560
    %v4568 = vmul.f32 %v4567, %v4565
    %v4569 = vxor.u32 %v4568, 2147483648
    %v4570 = vsel %vm4487, %v4569, %v4568
    %v4571 = vsub.s32 4, %v4547
    %v4572 = vsel %vm4487, %v4571, %v4547
    %v4573 = vsel %vm4486, %v3835, %v4570
    %v4574 = vsel %vm4486, 0, %v4572
    %v4575 = vcosq.f32.pop %v4573
    %v4576 = vsinq.f32.pop %v4573
    %vm4577 = vweird.f32 %v3835
    %v4578 = vadd.s32 %v4574, 3
    %v4579 = vand.u32 %v4578, 3
    %vm4580 = vcmp.lt.s32.totalorder %v4579, 2
    %vm4581 = vcmp.eq.s32.totalorder %v4579, 0
    %v4582 = vxor.u32 %v4576, 2147483648
    %v4583 = vsel %vm4581, %v4575, %v4582
    %vm4584 = vcmp.eq.s32.totalorder %v4579, 2
    %v4585 = vxor.u32 %v4575, 2147483648
    %v4586 = vsel %vm4584, %v4585, %v4576
    %v4587 = vsel %vm4580, %v4583, %v4586
    %v4588 = vsel %vm4577, nan, %v4587
    %v4589 = vand.u32 2147483647, %v3836
    %vm4590 = vcmp.le.f32.partialorder %v4589, 0.7853982
    %vm4591 = vcmp.lt.s32.totalorder %v3836, 0
    %v4592 = vand.u32 %v3836, 2139095040
    %v4593 = vshrl.u32 %v4592, 23
    %v4594 = vsub.s32 %v4593, 127
    %v4595 = vand.u32 2147483647, %v3836
    %v4596 = vand.u32 %v4595, 8388607
    %v4597 = vor.u32 %v4596, 8388608
    %v4598 = vsub.s32 0, %v4597
    %v4599 = vadd.s32 %v4594, 1
    %vm4600 = vcmp.gt.s32.totalorder %v4599, 0
    %v4601 = vsel %vm4600, %v4599, 0
    %v4602 = vshrl.u32 %v4601, 5
    %v4603 = vand.u32 %v4601, 31
    %v4604 = vsub.s32 32, %v4603
    %v4605 = vshrl.u32 683565275, %v4604
    %v4606 = vshll.u32 683565275, %v4603
    %v4607 = vshrl.u32 2475754826, %v4604
    %v4608 = vor.u32 %v4606, %v4607
    %v4609 = vshll.u32 2475754826, %v4603
    %v4610 = vshrl.u32 2131351028, %v4604
    %v4611 = vor.u32 %v4609, %v4610
    %v4612 = vshll.u32 2131351028, %v4603
    %v4613 = vshrl.u32 2102212464, %v4604
    %v4614 = vor.u32 %v4612, %v4613
    %v4615 = vshll.u32 2102212464, %v4603
    %v4616 = vshrl.u32 920167782, %v4604
    %v4617 = vor.u32 %v4615, %v4616
    %v4618 = vshll.u32 920167782, %v4603
    %v4619 = vshrl.u32 1326507024, %v4604
    %v4620 = vor.u32 %v4618, %v4619
    %vm4621 = vcmp.lt.s32.totalorder %v4602, 1
    %vm4622 = vcmp.lt.s32.totalorder %v4602, 2
    %vm4623 = vcmp.lt.s32.totalorder %v4602, 3
    %vm4624 = vcmp.lt.s32.totalorder %v4602, 4
    %v4625 = vsel %vm4621, %v4605, %v4608
    %v4626 = vsel %vm4624, %v4614, 2102212464
    %v4627 = vsel %vm4623, %v4611, %v4626
    %v4628 = vsel %vm4622, %v4625, %v4627
    %v4629 = vsel %vm4621, %v4608, %v4611
    %v4630 = vsel %vm4624, %v4617, 920167782
    %v4631 = vsel %vm4623, %v4614, %v4630
    %v4632 = vsel %vm4622, %v4629, %v4631
    %v4633 = vsel %vm4621, %v4611, %v4614
    %v4634 = vsel %vm4624, %v4620, 1326507024
    %v4635 = vsel %vm4623, %v4617, %v4634
    %v4636 = vsel %vm4622, %v4633, %v4635
    %v4637 = vshll.u32 %v4597, 8
    %v4638 = vmul.u32.u64.compose %v4637, %v4636
    %v4639 = vextract.low.u32 %v4638
    %v4640 = vextract.high.u32 %v4638
    %v4641 = vmul.u32.u64.compose %v4637, %v4632
    %v4642 = vextract.low.u32 %v4641
    %v4643 = vextract.high.u32 %v4641
    %v4644 = vmul.u32 %v4637, %v4628
    %v4645 = vadd.s32 %v4640, %v4642
    %vm4646 = vc.u32 %v4640, %v4642
    %v4647 = vadd.s32 %v4643, 1
    %v4648 = vsel %vm4646, %v4647, %v4643
    %v4649 = vadd.s32 %v4644, %v4648
    %v4650 = vadd.s32 %v4649, 536870912
    %v4651 = vshrl.u32 %v4650, 30
    %v4652 = vshll.u32 %v4651, 30
    %v4653 = vsub.s32 %v4649, %v4652
    %vm4654 = vcmp.lt.s32.totalorder %v4653, 0
    %v4655 = vsub.s32 0, %v4653
    %v4656 = vsel %vm4654, %v4655, %v4653
    %v4657 = vclz %v4656
    %v4658 = vsub.s32 %v4657, 2
    %vm4659 = vcmp.gt.s32.totalorder 0, %v4658
    %v4660 = vsel %vm4659, 0, %v4658
    %v4661 = vsub.s32 32, %v4660
    %v4662 = vshll.u32 %v4653, %v4660
    %v4663 = vshrl.u32 %v4645, %v4661
    %v4664 = vor.u32 %v4662, %v4663
    %v4665 = vsub.s32 4294967266, %v4660
    %v4666 = vadd.s32 %v4665, 127
    %v4667 = vshll.u32 %v4666, 23
    %v4668 = vor.u32 4788187, %v4667
    %v4669 = vand.u32 2147483647, %v4668
    %v4671 = vcvt.s32.f32 %v4664
    %v4672 = vmul.f32 %v4671, %v4669
    %v4673 = vxor.u32 %v4672, 2147483648
    %v4674 = vsel %vm4591, %v4673, %v4672
    %v4675 = vsub.s32 4, %v4651
    %v4676 = vsel %vm4591, %v4675, %v4651
    %v4677 = vsel %vm4590, %v3836, %v4674
    %v4678 = vsel %vm4590, 0, %v4676
    %v4679 = vcosq.f32.pop %v4677
    %v4680 = vsinq.f32.pop %v4677
    %vm4681 = vweird.f32 %v3836
    %v4682 = vadd.s32 %v4678, 3
    %v4683 = vand.u32 %v4682, 3
    %vm4684 = vcmp.lt.s32.totalorder %v4683, 2
    %vm4685 = vcmp.eq.s32.totalorder %v4683, 0
    %v4686 = vxor.u32 %v4680, 2147483648
    %v4687 = vsel %vm4685, %v4679, %v4686
    %vm4688 = vcmp.eq.s32.totalorder %v4683, 2
    %v4689 = vxor.u32 %v4679, 2147483648
    %v4690 = vsel %vm4688, %v4689, %v4680
    %v4691 = vsel %vm4684, %v4687, %v4690
    %v4692 = vsel %vm4681, nan, %v4691
    %v4693 = vand.u32 2147483647, %v3837
    %vm4694 = vcmp.le.f32.partialorder %v4693, 0.7853982
    %vm4695 = vcmp.lt.s32.totalorder %v3837, 0
    %v4696 = vand.u32 %v3837, 2139095040
    %v4697 = vshrl.u32 %v4696, 23
    %v4698 = vsub.s32 %v4697, 127
    %v4699 = vand.u32 2147483647, %v3837
    %v4700 = vand.u32 %v4699, 8388607
    %v4701 = vor.u32 %v4700, 8388608
    %v4702 = vsub.s32 0, %v4701
    %v4703 = vadd.s32 %v4698, 1
    %vm4704 = vcmp.gt.s32.totalorder %v4703, 0
    %v4705 = vsel %vm4704, %v4703, 0
    %v4706 = vshrl.u32 %v4705, 5
    %v4707 = vand.u32 %v4705, 31
    %v4708 = vsub.s32 32, %v4707
    %v4709 = vshrl.u32 683565275, %v4708
    %v4710 = vshll.u32 683565275, %v4707
    %v4711 = vshrl.u32 2475754826, %v4708
    %v4712 = vor.u32 %v4710, %v4711
    %v4713 = vshll.u32 2475754826, %v4707
    %v4714 = vshrl.u32 2131351028, %v4708
    %v4715 = vor.u32 %v4713, %v4714
    %v4716 = vshll.u32 2131351028, %v4707
    %v4717 = vshrl.u32 2102212464, %v4708
    %v4718 = vor.u32 %v4716, %v4717
    %v4719 = vshll.u32 2102212464, %v4707
    %v4720 = vshrl.u32 920167782, %v4708
    %v4721 = vor.u32 %v4719, %v4720
    %v4722 = vshll.u32 920167782, %v4707
    %v4723 = vshrl.u32 1326507024, %v4708
    %v4724 = vor.u32 %v4722, %v4723
    %vm4725 = vcmp.lt.s32.totalorder %v4706, 1
    %vm4726 = vcmp.lt.s32.totalorder %v4706, 2
    %vm4727 = vcmp.lt.s32.totalorder %v4706, 3
    %vm4728 = vcmp.lt.s32.totalorder %v4706, 4
    %v4729 = vsel %vm4725, %v4709, %v4712
    %v4730 = vsel %vm4728, %v4718, 2102212464
    %v4731 = vsel %vm4727, %v4715, %v4730
    %v4732 = vsel %vm4726, %v4729, %v4731
    %v4733 = vsel %vm4725, %v4712, %v4715
    %v4734 = vsel %vm4728, %v4721, 920167782
    %v4735 = vsel %vm4727, %v4718, %v4734
    %v4736 = vsel %vm4726, %v4733, %v4735
    %v4737 = vsel %vm4725, %v4715, %v4718
    %v4738 = vsel %vm4728, %v4724, 1326507024
    %v4739 = vsel %vm4727, %v4721, %v4738
    %v4740 = vsel %vm4726, %v4737, %v4739
    %v4741 = vshll.u32 %v4701, 8
    %v4742 = vmul.u32.u64.compose %v4741, %v4740
    %v4743 = vextract.low.u32 %v4742
    %v4744 = vextract.high.u32 %v4742
    %v4745 = vmul.u32.u64.compose %v4741, %v4736
    %v4746 = vextract.low.u32 %v4745
    %v4747 = vextract.high.u32 %v4745
    %v4748 = vmul.u32 %v4741, %v4732
    %v4749 = vadd.s32 %v4744, %v4746
    %vm4750 = vc.u32 %v4744, %v4746
    %v4751 = vadd.s32 %v4747, 1
    %v4752 = vsel %vm4750, %v4751, %v4747
    %v4753 = vadd.s32 %v4748, %v4752
    %v4754 = vadd.s32 %v4753, 536870912
    %v4755 = vshrl.u32 %v4754, 30
    %v4756 = vshll.u32 %v4755, 30
    %v4757 = vsub.s32 %v4753, %v4756
    %vm4758 = vcmp.lt.s32.totalorder %v4757, 0
    %v4759 = vsub.s32 0, %v4757
    %v4760 = vsel %vm4758, %v4759, %v4757
    %v4761 = vclz %v4760
    %v4762 = vsub.s32 %v4761, 2
    %vm4763 = vcmp.gt.s32.totalorder 0, %v4762
    %v4764 = vsel %vm4763, 0, %v4762
    %v4765 = vsub.s32 32, %v4764
    %v4766 = vshll.u32 %v4757, %v4764
    %v4767 = vshrl.u32 %v4749, %v4765
    %v4768 = vor.u32 %v4766, %v4767
    %v4769 = vsub.s32 4294967266, %v4764
    %v4770 = vadd.s32 %v4769, 127
    %v4771 = vshll.u32 %v4770, 23
    %v4772 = vor.u32 4788187, %v4771
    %v4773 = vand.u32 2147483647, %v4772
    %v4775 = vcvt.s32.f32 %v4768
    %v4776 = vmul.f32 %v4775, %v4773
    %v4777 = vxor.u32 %v4776, 2147483648
    %v4778 = vsel %vm4695, %v4777, %v4776
    %v4779 = vsub.s32 4, %v4755
    %v4780 = vsel %vm4695, %v4779, %v4755
    %v4781 = vsel %vm4694, %v3837, %v4778
    %v4782 = vsel %vm4694, 0, %v4780
    %v4783 = vcosq.f32.pop %v4781
    %v4784 = vsinq.f32.pop %v4781
    %vm4785 = vweird.f32 %v3837
    %v4786 = vadd.s32 %v4782, 3
    %v4787 = vand.u32 %v4786, 3
    %vm4788 = vcmp.lt.s32.totalorder %v4787, 2
    %vm4789 = vcmp.eq.s32.totalorder %v4787, 0
    %v4790 = vxor.u32 %v4784, 2147483648
    %v4791 = vsel %vm4789, %v4783, %v4790
    %vm4792 = vcmp.eq.s32.totalorder %v4787, 2
    %v4793 = vxor.u32 %v4783, 2147483648
    %v4794 = vsel %vm4792, %v4793, %v4784
    %v4795 = vsel %vm4788, %v4791, %v4794
    %v4796 = vsel %vm4785, nan, %v4795
    %v4797 = vand.u32 2147483647, %v3838
    %vm4798 = vcmp.le.f32.partialorder %v4797, 0.7853982
    %vm4799 = vcmp.lt.s32.totalorder %v3838, 0
    %v4800 = vand.u32 %v3838, 2139095040
    %v4801 = vshrl.u32 %v4800, 23
    %v4802 = vsub.s32 %v4801, 127
    %v4803 = vand.u32 2147483647, %v3838
    %v4804 = vand.u32 %v4803, 8388607
    %v4805 = vor.u32 %v4804, 8388608
    %v4806 = vsub.s32 0, %v4805
    %v4807 = vadd.s32 %v4802, 1
    %vm4808 = vcmp.gt.s32.totalorder %v4807, 0
    %v4809 = vsel %vm4808, %v4807, 0
    %v4810 = vshrl.u32 %v4809, 5
    %v4811 = vand.u32 %v4809, 31
    %v4812 = vsub.s32 32, %v4811
    %v4813 = vshrl.u32 683565275, %v4812
    %v4814 = vshll.u32 683565275, %v4811
    %v4815 = vshrl.u32 2475754826, %v4812
    %v4816 = vor.u32 %v4814, %v4815
    %v4817 = vshll.u32 2475754826, %v4811
    %v4818 = vshrl.u32 2131351028, %v4812
    %v4819 = vor.u32 %v4817, %v4818
    %v4820 = vshll.u32 2131351028, %v4811
    %v4821 = vshrl.u32 2102212464, %v4812
    %v4822 = vor.u32 %v4820, %v4821
    %v4823 = vshll.u32 2102212464, %v4811
    %v4824 = vshrl.u32 920167782, %v4812
    %v4825 = vor.u32 %v4823, %v4824
    %v4826 = vshll.u32 920167782, %v4811
    %v4827 = vshrl.u32 1326507024, %v4812
    %v4828 = vor.u32 %v4826, %v4827
    %vm4829 = vcmp.lt.s32.totalorder %v4810, 1
    %vm4830 = vcmp.lt.s32.totalorder %v4810, 2
    %vm4831 = vcmp.lt.s32.totalorder %v4810, 3
    %vm4832 = vcmp.lt.s32.totalorder %v4810, 4
    %v4833 = vsel %vm4829, %v4813, %v4816
    %v4834 = vsel %vm4832, %v4822, 2102212464
    %v4835 = vsel %vm4831, %v4819, %v4834
    %v4836 = vsel %vm4830, %v4833, %v4835
    %v4837 = vsel %vm4829, %v4816, %v4819
    %v4838 = vsel %vm4832, %v4825, 920167782
    %v4839 = vsel %vm4831, %v4822, %v4838
    %v4840 = vsel %vm4830, %v4837, %v4839
    %v4841 = vsel %vm4829, %v4819, %v4822
    %v4842 = vsel %vm4832, %v4828, 1326507024
    %v4843 = vsel %vm4831, %v4825, %v4842
    %v4844 = vsel %vm4830, %v4841, %v4843
    %v4845 = vshll.u32 %v4805, 8
    %v4846 = vmul.u32.u64.compose %v4845, %v4844
    %v4847 = vextract.low.u32 %v4846
    %v4848 = vextract.high.u32 %v4846
    %v4849 = vmul.u32.u64.compose %v4845, %v4840
    %v4850 = vextract.low.u32 %v4849
    %v4851 = vextract.high.u32 %v4849
    %v4852 = vmul.u32 %v4845, %v4836
    %v4853 = vadd.s32 %v4848, %v4850
    %vm4854 = vc.u32 %v4848, %v4850
    %v4855 = vadd.s32 %v4851, 1
    %v4856 = vsel %vm4854, %v4855, %v4851
    %v4857 = vadd.s32 %v4852, %v4856
    %v4858 = vadd.s32 %v4857, 536870912
    %v4859 = vshrl.u32 %v4858, 30
    %v4860 = vshll.u32 %v4859, 30
    %v4861 = vsub.s32 %v4857, %v4860
    %vm4862 = vcmp.lt.s32.totalorder %v4861, 0
    %v4863 = vsub.s32 0, %v4861
    %v4864 = vsel %vm4862, %v4863, %v4861
    %v4865 = vclz %v4864
    %v4866 = vsub.s32 %v4865, 2
    %vm4867 = vcmp.gt.s32.totalorder 0, %v4866
    %v4868 = vsel %vm4867, 0, %v4866
    %v4869 = vsub.s32 32, %v4868
    %v4870 = vshll.u32 %v4861, %v4868
    %v4871 = vshrl.u32 %v4853, %v4869
    %v4872 = vor.u32 %v4870, %v4871
    %v4873 = vsub.s32 4294967266, %v4868
    %v4874 = vadd.s32 %v4873, 127
    %v4875 = vshll.u32 %v4874, 23
    %v4876 = vor.u32 4788187, %v4875
    %v4877 = vand.u32 2147483647, %v4876
    %v4879 = vcvt.s32.f32 %v4872
    %v4880 = vmul.f32 %v4879, %v4877
    %v4881 = vxor.u32 %v4880, 2147483648
    %v4882 = vsel %vm4799, %v4881, %v4880
    %v4883 = vsub.s32 4, %v4859
    %v4884 = vsel %vm4799, %v4883, %v4859
    %v4885 = vsel %vm4798, %v3838, %v4882
    %v4886 = vsel %vm4798, 0, %v4884
    %v4887 = vcosq.f32.pop %v4885
    %v4888 = vsinq.f32.pop %v4885
    %vm4889 = vweird.f32 %v3838
    %v4890 = vadd.s32 %v4886, 3
    %v4891 = vand.u32 %v4890, 3
    %vm4892 = vcmp.lt.s32.totalorder %v4891, 2
    %vm4893 = vcmp.eq.s32.totalorder %v4891, 0
    %v4894 = vxor.u32 %v4888, 2147483648
    %v4895 = vsel %vm4893, %v4887, %v4894
    %vm4896 = vcmp.eq.s32.totalorder %v4891, 2
    %v4897 = vxor.u32 %v4887, 2147483648
    %v4898 = vsel %vm4896, %v4897, %v4888
    %v4899 = vsel %vm4892, %v4895, %v4898
    %v4900 = vsel %vm4889, nan, %v4899
    %v4901 = vand.u32 2147483647, %v3839
    %vm4902 = vcmp.le.f32.partialorder %v4901, 0.7853982
    %vm4903 = vcmp.lt.s32.totalorder %v3839, 0
    %v4904 = vand.u32 %v3839, 2139095040
    %v4905 = vshrl.u32 %v4904, 23
    %v4906 = vsub.s32 %v4905, 127
    %v4907 = vand.u32 2147483647, %v3839
    %v4908 = vand.u32 %v4907, 8388607
    %v4909 = vor.u32 %v4908, 8388608
    %v4910 = vsub.s32 0, %v4909
    %v4911 = vadd.s32 %v4906, 1
    %vm4912 = vcmp.gt.s32.totalorder %v4911, 0
    %v4913 = vsel %vm4912, %v4911, 0
    %v4914 = vshrl.u32 %v4913, 5
    %v4915 = vand.u32 %v4913, 31
    %v4916 = vsub.s32 32, %v4915
    %v4917 = vshrl.u32 683565275, %v4916
    %v4918 = vshll.u32 683565275, %v4915
    %v4919 = vshrl.u32 2475754826, %v4916
    %v4920 = vor.u32 %v4918, %v4919
    %v4921 = vshll.u32 2475754826, %v4915
    %v4922 = vshrl.u32 2131351028, %v4916
    %v4923 = vor.u32 %v4921, %v4922
    %v4924 = vshll.u32 2131351028, %v4915
    %v4925 = vshrl.u32 2102212464, %v4916
    %v4926 = vor.u32 %v4924, %v4925
    %v4927 = vshll.u32 2102212464, %v4915
    %v4928 = vshrl.u32 920167782, %v4916
    %v4929 = vor.u32 %v4927, %v4928
    %v4930 = vshll.u32 920167782, %v4915
    %v4931 = vshrl.u32 1326507024, %v4916
    %v4932 = vor.u32 %v4930, %v4931
    %vm4933 = vcmp.lt.s32.totalorder %v4914, 1
    %vm4934 = vcmp.lt.s32.totalorder %v4914, 2
    %vm4935 = vcmp.lt.s32.totalorder %v4914, 3
    %vm4936 = vcmp.lt.s32.totalorder %v4914, 4
    %v4937 = vsel %vm4933, %v4917, %v4920
    %v4938 = vsel %vm4936, %v4926, 2102212464
    %v4939 = vsel %vm4935, %v4923, %v4938
    %v4940 = vsel %vm4934, %v4937, %v4939
    %v4941 = vsel %vm4933, %v4920, %v4923
    %v4942 = vsel %vm4936, %v4929, 920167782
    %v4943 = vsel %vm4935, %v4926, %v4942
    %v4944 = vsel %vm4934, %v4941, %v4943
    %v4945 = vsel %vm4933, %v4923, %v4926
    %v4946 = vsel %vm4936, %v4932, 1326507024
    %v4947 = vsel %vm4935, %v4929, %v4946
    %v4948 = vsel %vm4934, %v4945, %v4947
    %v4949 = vshll.u32 %v4909, 8
    %v4950 = vmul.u32.u64.compose %v4949, %v4948
    %v4951 = vextract.low.u32 %v4950
    %v4952 = vextract.high.u32 %v4950
    %v4953 = vmul.u32.u64.compose %v4949, %v4944
    %v4954 = vextract.low.u32 %v4953
    %v4955 = vextract.high.u32 %v4953
    %v4956 = vmul.u32 %v4949, %v4940
    %v4957 = vadd.s32 %v4952, %v4954
    %vm4958 = vc.u32 %v4952, %v4954
    %v4959 = vadd.s32 %v4955, 1
    %v4960 = vsel %vm4958, %v4959, %v4955
    %v4961 = vadd.s32 %v4956, %v4960
    %v4962 = vadd.s32 %v4961, 536870912
    %v4963 = vshrl.u32 %v4962, 30
    %v4964 = vshll.u32 %v4963, 30
    %v4965 = vsub.s32 %v4961, %v4964
    %vm4966 = vcmp.lt.s32.totalorder %v4965, 0
    %v4967 = vsub.s32 0, %v4965
    %v4968 = vsel %vm4966, %v4967, %v4965
    %v4969 = vclz %v4968
    %v4970 = vsub.s32 %v4969, 2
    %vm4971 = vcmp.gt.s32.totalorder 0, %v4970
    %v4972 = vsel %vm4971, 0, %v4970
    %v4973 = vsub.s32 32, %v4972
    %v4974 = vshll.u32 %v4965, %v4972
    %v4975 = vshrl.u32 %v4957, %v4973
    %v4976 = vor.u32 %v4974, %v4975
    %v4977 = vsub.s32 4294967266, %v4972
    %v4978 = vadd.s32 %v4977, 127
    %v4979 = vshll.u32 %v4978, 23
    %v4980 = vor.u32 4788187, %v4979
    %v4981 = vand.u32 2147483647, %v4980
    %v4983 = vcvt.s32.f32 %v4976
    %v4984 = vmul.f32 %v4983, %v4981
    %v4985 = vxor.u32 %v4984, 2147483648
    %v4986 = vsel %vm4903, %v4985, %v4984
    %v4987 = vsub.s32 4, %v4963
    %v4988 = vsel %vm4903, %v4987, %v4963
    %v4989 = vsel %vm4902, %v3839, %v4986
    %v4990 = vsel %vm4902, 0, %v4988
    %v4991 = vcosq.f32.pop %v4989
    %v4992 = vsinq.f32.pop %v4989
    %vm4993 = vweird.f32 %v3839
    %v4994 = vadd.s32 %v4990, 3
    %v4995 = vand.u32 %v4994, 3
    %vm4996 = vcmp.lt.s32.totalorder %v4995, 2
    %vm4997 = vcmp.eq.s32.totalorder %v4995, 0
    %v4998 = vxor.u32 %v4992, 2147483648
    %v4999 = vsel %vm4997, %v4991, %v4998
    %vm5000 = vcmp.eq.s32.totalorder %v4995, 2
    %v5001 = vxor.u32 %v4991, 2147483648
    %v5002 = vsel %vm5000, %v5001, %v4992
    %v5003 = vsel %vm4996, %v4999, %v5002
    %v5004 = vsel %vm4993, nan, %v5003
    %v5005 = vand.u32 2147483647, %v3840
    %vm5006 = vcmp.le.f32.partialorder %v5005, 0.7853982
    %vm5007 = vcmp.lt.s32.totalorder %v3840, 0
    %v5008 = vand.u32 %v3840, 2139095040
    %v5009 = vshrl.u32 %v5008, 23
    %v5010 = vsub.s32 %v5009, 127
    %v5011 = vand.u32 2147483647, %v3840
    %v5012 = vand.u32 %v5011, 8388607
    %v5013 = vor.u32 %v5012, 8388608
    %v5014 = vsub.s32 0, %v5013
    %v5015 = vadd.s32 %v5010, 1
    %vm5016 = vcmp.gt.s32.totalorder %v5015, 0
    %v5017 = vsel %vm5016, %v5015, 0
    %v5018 = vshrl.u32 %v5017, 5
    %v5019 = vand.u32 %v5017, 31
    %v5020 = vsub.s32 32, %v5019
    %v5021 = vshrl.u32 683565275, %v5020
    %v5022 = vshll.u32 683565275, %v5019
    %v5023 = vshrl.u32 2475754826, %v5020
    %v5024 = vor.u32 %v5022, %v5023
    %v5025 = vshll.u32 2475754826, %v5019
    %v5026 = vshrl.u32 2131351028, %v5020
    %v5027 = vor.u32 %v5025, %v5026
    %v5028 = vshll.u32 2131351028, %v5019
    %v5029 = vshrl.u32 2102212464, %v5020
    %v5030 = vor.u32 %v5028, %v5029
    %v5031 = vshll.u32 2102212464, %v5019
    %v5032 = vshrl.u32 920167782, %v5020
    %v5033 = vor.u32 %v5031, %v5032
    %v5034 = vshll.u32 920167782, %v5019
    %v5035 = vshrl.u32 1326507024, %v5020
    %v5036 = vor.u32 %v5034, %v5035
    %vm5037 = vcmp.lt.s32.totalorder %v5018, 1
    %vm5038 = vcmp.lt.s32.totalorder %v5018, 2
    %vm5039 = vcmp.lt.s32.totalorder %v5018, 3
    %vm5040 = vcmp.lt.s32.totalorder %v5018, 4
    %v5041 = vsel %vm5037, %v5021, %v5024
    %v5042 = vsel %vm5040, %v5030, 2102212464
    %v5043 = vsel %vm5039, %v5027, %v5042
    %v5044 = vsel %vm5038, %v5041, %v5043
    %v5045 = vsel %vm5037, %v5024, %v5027
    %v5046 = vsel %vm5040, %v5033, 920167782
    %v5047 = vsel %vm5039, %v5030, %v5046
    %v5048 = vsel %vm5038, %v5045, %v5047
    %v5049 = vsel %vm5037, %v5027, %v5030
    %v5050 = vsel %vm5040, %v5036, 1326507024
    %v5051 = vsel %vm5039, %v5033, %v5050
    %v5052 = vsel %vm5038, %v5049, %v5051
    %v5053 = vshll.u32 %v5013, 8
    %v5054 = vmul.u32.u64.compose %v5053, %v5052
    %v5055 = vextract.low.u32 %v5054
    %v5056 = vextract.high.u32 %v5054
    %v5057 = vmul.u32.u64.compose %v5053, %v5048
    %v5058 = vextract.low.u32 %v5057
    %v5059 = vextract.high.u32 %v5057
    %v5060 = vmul.u32 %v5053, %v5044
    %v5061 = vadd.s32 %v5056, %v5058
    %vm5062 = vc.u32 %v5056, %v5058
    %v5063 = vadd.s32 %v5059, 1
    %v5064 = vsel %vm5062, %v5063, %v5059
    %v5065 = vadd.s32 %v5060, %v5064
    %v5066 = vadd.s32 %v5065, 536870912
    %v5067 = vshrl.u32 %v5066, 30
    %v5068 = vshll.u32 %v5067, 30
    %v5069 = vsub.s32 %v5065, %v5068
    %vm5070 = vcmp.lt.s32.totalorder %v5069, 0
    %v5071 = vsub.s32 0, %v5069
    %v5072 = vsel %vm5070, %v5071, %v5069
    %v5073 = vclz %v5072
    %v5074 = vsub.s32 %v5073, 2
    %vm5075 = vcmp.gt.s32.totalorder 0, %v5074
    %v5076 = vsel %vm5075, 0, %v5074
    %v5077 = vsub.s32 32, %v5076
    %v5078 = vshll.u32 %v5069, %v5076
    %v5079 = vshrl.u32 %v5061, %v5077
    %v5080 = vor.u32 %v5078, %v5079
    %v5081 = vsub.s32 4294967266, %v5076
    %v5082 = vadd.s32 %v5081, 127
    %v5083 = vshll.u32 %v5082, 23
    %v5084 = vor.u32 4788187, %v5083
    %v5085 = vand.u32 2147483647, %v5084
    %v5087 = vcvt.s32.f32 %v5080
    %v5088 = vmul.f32 %v5087, %v5085
    %v5089 = vxor.u32 %v5088, 2147483648
    %v5090 = vsel %vm5007, %v5089, %v5088
    %v5091 = vsub.s32 4, %v5067
    %v5092 = vsel %vm5007, %v5091, %v5067
    %v5093 = vsel %vm5006, %v3840, %v5090
    %v5094 = vsel %vm5006, 0, %v5092
    %v5095 = vcosq.f32.pop %v5093
    %v5096 = vsinq.f32.pop %v5093
    %vm5097 = vweird.f32 %v3840
    %v5098 = vadd.s32 %v5094, 3
    %v5099 = vand.u32 %v5098, 3
    %vm5100 = vcmp.lt.s32.totalorder %v5099, 2
    %vm5101 = vcmp.eq.s32.totalorder %v5099, 0
    %v5102 = vxor.u32 %v5096, 2147483648
    %v5103 = vsel %vm5101, %v5095, %v5102
    %vm5104 = vcmp.eq.s32.totalorder %v5099, 2
    %v5105 = vxor.u32 %v5095, 2147483648
    %v5106 = vsel %vm5104, %v5105, %v5096
    %v5107 = vsel %vm5100, %v5103, %v5106
    %v5108 = vsel %vm5097, nan, %v5107
    %v5109 = vand.u32 2147483647, %v3841
    %vm5110 = vcmp.le.f32.partialorder %v5109, 0.7853982
    %vm5111 = vcmp.lt.s32.totalorder %v3841, 0
    %v5112 = vand.u32 %v3841, 2139095040
    %v5113 = vshrl.u32 %v5112, 23
    %v5114 = vsub.s32 %v5113, 127
    %v5115 = vand.u32 2147483647, %v3841
    %v5116 = vand.u32 %v5115, 8388607
    %v5117 = vor.u32 %v5116, 8388608
    %v5118 = vsub.s32 0, %v5117
    %v5119 = vadd.s32 %v5114, 1
    %vm5120 = vcmp.gt.s32.totalorder %v5119, 0
    %v5121 = vsel %vm5120, %v5119, 0
    %v5122 = vshrl.u32 %v5121, 5
    %v5123 = vand.u32 %v5121, 31
    %v5124 = vsub.s32 32, %v5123
    %v5125 = vshrl.u32 683565275, %v5124
    %v5126 = vshll.u32 683565275, %v5123
    %v5127 = vshrl.u32 2475754826, %v5124
    %v5128 = vor.u32 %v5126, %v5127
    %v5129 = vshll.u32 2475754826, %v5123
    %v5130 = vshrl.u32 2131351028, %v5124
    %v5131 = vor.u32 %v5129, %v5130
    %v5132 = vshll.u32 2131351028, %v5123
    %v5133 = vshrl.u32 2102212464, %v5124
    %v5134 = vor.u32 %v5132, %v5133
    %v5135 = vshll.u32 2102212464, %v5123
    %v5136 = vshrl.u32 920167782, %v5124
    %v5137 = vor.u32 %v5135, %v5136
    %v5138 = vshll.u32 920167782, %v5123
    %v5139 = vshrl.u32 1326507024, %v5124
    %v5140 = vor.u32 %v5138, %v5139
    %vm5141 = vcmp.lt.s32.totalorder %v5122, 1
    %vm5142 = vcmp.lt.s32.totalorder %v5122, 2
    %vm5143 = vcmp.lt.s32.totalorder %v5122, 3
    %vm5144 = vcmp.lt.s32.totalorder %v5122, 4
    %v5145 = vsel %vm5141, %v5125, %v5128
    %v5146 = vsel %vm5144, %v5134, 2102212464
    %v5147 = vsel %vm5143, %v5131, %v5146
    %v5148 = vsel %vm5142, %v5145, %v5147
    %v5149 = vsel %vm5141, %v5128, %v5131
    %v5150 = vsel %vm5144, %v5137, 920167782
    %v5151 = vsel %vm5143, %v5134, %v5150
    %v5152 = vsel %vm5142, %v5149, %v5151
    %v5153 = vsel %vm5141, %v5131, %v5134
    %v5154 = vsel %vm5144, %v5140, 1326507024
    %v5155 = vsel %vm5143, %v5137, %v5154
    %v5156 = vsel %vm5142, %v5153, %v5155
    %v5157 = vshll.u32 %v5117, 8
    %v5158 = vmul.u32.u64.compose %v5157, %v5156
    %v5159 = vextract.low.u32 %v5158
    %v5160 = vextract.high.u32 %v5158
    %v5161 = vmul.u32.u64.compose %v5157, %v5152
    %v5162 = vextract.low.u32 %v5161
    %v5163 = vextract.high.u32 %v5161
    %v5164 = vmul.u32 %v5157, %v5148
    %v5165 = vadd.s32 %v5160, %v5162
    %vm5166 = vc.u32 %v5160, %v5162
    %v5167 = vadd.s32 %v5163, 1
    %v5168 = vsel %vm5166, %v5167, %v5163
    %v5169 = vadd.s32 %v5164, %v5168
    %v5170 = vadd.s32 %v5169, 536870912
    %v5171 = vshrl.u32 %v5170, 30
    %v5172 = vshll.u32 %v5171, 30
    %v5173 = vsub.s32 %v5169, %v5172
    %vm5174 = vcmp.lt.s32.totalorder %v5173, 0
    %v5175 = vsub.s32 0, %v5173
    %v5176 = vsel %vm5174, %v5175, %v5173
    %v5177 = vclz %v5176
    %v5178 = vsub.s32 %v5177, 2
    %vm5179 = vcmp.gt.s32.totalorder 0, %v5178
    %v5180 = vsel %vm5179, 0, %v5178
    %v5181 = vsub.s32 32, %v5180
    %v5182 = vshll.u32 %v5173, %v5180
    %v5183 = vshrl.u32 %v5165, %v5181
    %v5184 = vor.u32 %v5182, %v5183
    %v5185 = vsub.s32 4294967266, %v5180
    %v5186 = vadd.s32 %v5185, 127
    %v5187 = vshll.u32 %v5186, 23
    %v5188 = vor.u32 4788187, %v5187
    %v5189 = vand.u32 2147483647, %v5188
    %v5191 = vcvt.s32.f32 %v5184
    %v5192 = vmul.f32 %v5191, %v5189
    %v5193 = vxor.u32 %v5192, 2147483648
    %v5194 = vsel %vm5111, %v5193, %v5192
    %v5195 = vsub.s32 4, %v5171
    %v5196 = vsel %vm5111, %v5195, %v5171
    %v5197 = vsel %vm5110, %v3841, %v5194
    %v5198 = vsel %vm5110, 0, %v5196
    %v5199 = vcosq.f32.pop %v5197
    %v5200 = vsinq.f32.pop %v5197
    %vm5201 = vweird.f32 %v3841
    %v5202 = vadd.s32 %v5198, 3
    %v5203 = vand.u32 %v5202, 3
    %vm5204 = vcmp.lt.s32.totalorder %v5203, 2
    %vm5205 = vcmp.eq.s32.totalorder %v5203, 0
    %v5206 = vxor.u32 %v5200, 2147483648
    %v5207 = vsel %vm5205, %v5199, %v5206
    %vm5208 = vcmp.eq.s32.totalorder %v5203, 2
    %v5209 = vxor.u32 %v5199, 2147483648
    %v5210 = vsel %vm5208, %v5209, %v5200
    %v5211 = vsel %vm5204, %v5207, %v5210
    %v5212 = vsel %vm5201, nan, %v5211
    %v5213 = vand.u32 2147483647, %v3842
    %vm5214 = vcmp.le.f32.partialorder %v5213, 0.7853982
    %vm5215 = vcmp.lt.s32.totalorder %v3842, 0
    %v5216 = vand.u32 %v3842, 2139095040
    %v5217 = vshrl.u32 %v5216, 23
    %v5218 = vsub.s32 %v5217, 127
    %v5219 = vand.u32 2147483647, %v3842
    %v5220 = vand.u32 %v5219, 8388607
    %v5221 = vor.u32 %v5220, 8388608
    %v5222 = vsub.s32 0, %v5221
    %v5223 = vadd.s32 %v5218, 1
    %vm5224 = vcmp.gt.s32.totalorder %v5223, 0
    %v5225 = vsel %vm5224, %v5223, 0
    %v5226 = vshrl.u32 %v5225, 5
    %v5227 = vand.u32 %v5225, 31
    %v5228 = vsub.s32 32, %v5227
    %v5229 = vshrl.u32 683565275, %v5228
    %v5230 = vshll.u32 683565275, %v5227
    %v5231 = vshrl.u32 2475754826, %v5228
    %v5232 = vor.u32 %v5230, %v5231
    %v5233 = vshll.u32 2475754826, %v5227
    %v5234 = vshrl.u32 2131351028, %v5228
    %v5235 = vor.u32 %v5233, %v5234
    %v5236 = vshll.u32 2131351028, %v5227
    %v5237 = vshrl.u32 2102212464, %v5228
    %v5238 = vor.u32 %v5236, %v5237
    %v5239 = vshll.u32 2102212464, %v5227
    %v5240 = vshrl.u32 920167782, %v5228
    %v5241 = vor.u32 %v5239, %v5240
    %v5242 = vshll.u32 920167782, %v5227
    %v5243 = vshrl.u32 1326507024, %v5228
    %v5244 = vor.u32 %v5242, %v5243
    %vm5245 = vcmp.lt.s32.totalorder %v5226, 1
    %vm5246 = vcmp.lt.s32.totalorder %v5226, 2
    %vm5247 = vcmp.lt.s32.totalorder %v5226, 3
    %vm5248 = vcmp.lt.s32.totalorder %v5226, 4
    %v5249 = vsel %vm5245, %v5229, %v5232
    %v5250 = vsel %vm5248, %v5238, 2102212464
    %v5251 = vsel %vm5247, %v5235, %v5250
    %v5252 = vsel %vm5246, %v5249, %v5251
    %v5253 = vsel %vm5245, %v5232, %v5235
    %v5254 = vsel %vm5248, %v5241, 920167782
    %v5255 = vsel %vm5247, %v5238, %v5254
    %v5256 = vsel %vm5246, %v5253, %v5255
    %v5257 = vsel %vm5245, %v5235, %v5238
    %v5258 = vsel %vm5248, %v5244, 1326507024
    %v5259 = vsel %vm5247, %v5241, %v5258
    %v5260 = vsel %vm5246, %v5257, %v5259
    %v5261 = vshll.u32 %v5221, 8
    %v5262 = vmul.u32.u64.compose %v5261, %v5260
    %v5263 = vextract.low.u32 %v5262
    %v5264 = vextract.high.u32 %v5262
    %v5265 = vmul.u32.u64.compose %v5261, %v5256
    %v5266 = vextract.low.u32 %v5265
    %v5267 = vextract.high.u32 %v5265
    %v5268 = vmul.u32 %v5261, %v5252
    %v5269 = vadd.s32 %v5264, %v5266
    %vm5270 = vc.u32 %v5264, %v5266
    %v5271 = vadd.s32 %v5267, 1
    %v5272 = vsel %vm5270, %v5271, %v5267
    %v5273 = vadd.s32 %v5268, %v5272
    %v5274 = vadd.s32 %v5273, 536870912
    %v5275 = vshrl.u32 %v5274, 30
    %v5276 = vshll.u32 %v5275, 30
    %v5277 = vsub.s32 %v5273, %v5276
    %vm5278 = vcmp.lt.s32.totalorder %v5277, 0
    %v5279 = vsub.s32 0, %v5277
    %v5280 = vsel %vm5278, %v5279, %v5277
    %v5281 = vclz %v5280
    %v5282 = vsub.s32 %v5281, 2
    %vm5283 = vcmp.gt.s32.totalorder 0, %v5282
    %v5284 = vsel %vm5283, 0, %v5282
    %v5285 = vsub.s32 32, %v5284
    %v5286 = vshll.u32 %v5277, %v5284
    %v5287 = vshrl.u32 %v5269, %v5285
    %v5288 = vor.u32 %v5286, %v5287
    %v5289 = vsub.s32 4294967266, %v5284
    %v5290 = vadd.s32 %v5289, 127
    %v5291 = vshll.u32 %v5290, 23
    %v5292 = vor.u32 4788187, %v5291
    %v5293 = vand.u32 2147483647, %v5292
    %v5295 = vcvt.s32.f32 %v5288
    %v5296 = vmul.f32 %v5295, %v5293
    %v5297 = vxor.u32 %v5296, 2147483648
    %v5298 = vsel %vm5215, %v5297, %v5296
    %v5299 = vsub.s32 4, %v5275
    %v5300 = vsel %vm5215, %v5299, %v5275
    %v5301 = vsel %vm5214, %v3842, %v5298
    %v5302 = vsel %vm5214, 0, %v5300
    %v5303 = vcosq.f32.pop %v5301
    %v5304 = vsinq.f32.pop %v5301
    %vm5305 = vweird.f32 %v3842
    %v5306 = vadd.s32 %v5302, 3
    %v5307 = vand.u32 %v5306, 3
    %vm5308 = vcmp.lt.s32.totalorder %v5307, 2
    %vm5309 = vcmp.eq.s32.totalorder %v5307, 0
    %v5310 = vxor.u32 %v5304, 2147483648
    %v5311 = vsel %vm5309, %v5303, %v5310
    %vm5312 = vcmp.eq.s32.totalorder %v5307, 2
    %v5313 = vxor.u32 %v5303, 2147483648
    %v5314 = vsel %vm5312, %v5313, %v5304
    %v5315 = vsel %vm5308, %v5311, %v5314
    %v5316 = vsel %vm5305, nan, %v5315
    %v5317 = vand.u32 2147483647, %v3843
    %vm5318 = vcmp.le.f32.partialorder %v5317, 0.7853982
    %vm5319 = vcmp.lt.s32.totalorder %v3843, 0
    %v5320 = vand.u32 %v3843, 2139095040
    %v5321 = vshrl.u32 %v5320, 23
    %v5322 = vsub.s32 %v5321, 127
    %v5323 = vand.u32 2147483647, %v3843
    %v5324 = vand.u32 %v5323, 8388607
    %v5325 = vor.u32 %v5324, 8388608
    %v5326 = vsub.s32 0, %v5325
    %v5327 = vadd.s32 %v5322, 1
    %vm5328 = vcmp.gt.s32.totalorder %v5327, 0
    %v5329 = vsel %vm5328, %v5327, 0
    %v5330 = vshrl.u32 %v5329, 5
    %v5331 = vand.u32 %v5329, 31
    %v5332 = vsub.s32 32, %v5331
    %v5333 = vshrl.u32 683565275, %v5332
    %v5334 = vshll.u32 683565275, %v5331
    %v5335 = vshrl.u32 2475754826, %v5332
    %v5336 = vor.u32 %v5334, %v5335
    %v5337 = vshll.u32 2475754826, %v5331
    %v5338 = vshrl.u32 2131351028, %v5332
    %v5339 = vor.u32 %v5337, %v5338
    %v5340 = vshll.u32 2131351028, %v5331
    %v5341 = vshrl.u32 2102212464, %v5332
    %v5342 = vor.u32 %v5340, %v5341
    %v5343 = vshll.u32 2102212464, %v5331
    %v5344 = vshrl.u32 920167782, %v5332
    %v5345 = vor.u32 %v5343, %v5344
    %v5346 = vshll.u32 920167782, %v5331
    %v5347 = vshrl.u32 1326507024, %v5332
    %v5348 = vor.u32 %v5346, %v5347
    %vm5349 = vcmp.lt.s32.totalorder %v5330, 1
    %vm5350 = vcmp.lt.s32.totalorder %v5330, 2
    %vm5351 = vcmp.lt.s32.totalorder %v5330, 3
    %vm5352 = vcmp.lt.s32.totalorder %v5330, 4
    %v5353 = vsel %vm5349, %v5333, %v5336
    %v5354 = vsel %vm5352, %v5342, 2102212464
    %v5355 = vsel %vm5351, %v5339, %v5354
    %v5356 = vsel %vm5350, %v5353, %v5355
    %v5357 = vsel %vm5349, %v5336, %v5339
    %v5358 = vsel %vm5352, %v5345, 920167782
    %v5359 = vsel %vm5351, %v5342, %v5358
    %v5360 = vsel %vm5350, %v5357, %v5359
    %v5361 = vsel %vm5349, %v5339, %v5342
    %v5362 = vsel %vm5352, %v5348, 1326507024
    %v5363 = vsel %vm5351, %v5345, %v5362
    %v5364 = vsel %vm5350, %v5361, %v5363
    %v5365 = vshll.u32 %v5325, 8
    %v5366 = vmul.u32.u64.compose %v5365, %v5364
    %v5367 = vextract.low.u32 %v5366
    %v5368 = vextract.high.u32 %v5366
    %v5369 = vmul.u32.u64.compose %v5365, %v5360
    %v5370 = vextract.low.u32 %v5369
    %v5371 = vextract.high.u32 %v5369
    %v5372 = vmul.u32 %v5365, %v5356
    %v5373 = vadd.s32 %v5368, %v5370
    %vm5374 = vc.u32 %v5368, %v5370
    %v5375 = vadd.s32 %v5371, 1
    %v5376 = vsel %vm5374, %v5375, %v5371
    %v5377 = vadd.s32 %v5372, %v5376
    %v5378 = vadd.s32 %v5377, 536870912
    %v5379 = vshrl.u32 %v5378, 30
    %v5380 = vshll.u32 %v5379, 30
    %v5381 = vsub.s32 %v5377, %v5380
    %vm5382 = vcmp.lt.s32.totalorder %v5381, 0
    %v5383 = vsub.s32 0, %v5381
    %v5384 = vsel %vm5382, %v5383, %v5381
    %v5385 = vclz %v5384
    %v5386 = vsub.s32 %v5385, 2
    %vm5387 = vcmp.gt.s32.totalorder 0, %v5386
    %v5388 = vsel %vm5387, 0, %v5386
    %v5389 = vsub.s32 32, %v5388
    %v5390 = vshll.u32 %v5381, %v5388
    %v5391 = vshrl.u32 %v5373, %v5389
    %v5392 = vor.u32 %v5390, %v5391
    %v5393 = vsub.s32 4294967266, %v5388
    %v5394 = vadd.s32 %v5393, 127
    %v5395 = vshll.u32 %v5394, 23
    %v5396 = vor.u32 4788187, %v5395
    %v5397 = vand.u32 2147483647, %v5396
    %v5399 = vcvt.s32.f32 %v5392
    %v5400 = vmul.f32 %v5399, %v5397
    %v5401 = vxor.u32 %v5400, 2147483648
    %v5402 = vsel %vm5319, %v5401, %v5400
    %v5403 = vsub.s32 4, %v5379
    %v5404 = vsel %vm5319, %v5403, %v5379
    %v5405 = vsel %vm5318, %v3843, %v5402
    %v5406 = vsel %vm5318, 0, %v5404
    %v5407 = vcosq.f32.pop %v5405
    %v5408 = vsinq.f32.pop %v5405
    %vm5409 = vweird.f32 %v3843
    %v5410 = vadd.s32 %v5406, 3
    %v5411 = vand.u32 %v5410, 3
    %vm5412 = vcmp.lt.s32.totalorder %v5411, 2
    %vm5413 = vcmp.eq.s32.totalorder %v5411, 0
    %v5414 = vxor.u32 %v5408, 2147483648
    %v5415 = vsel %vm5413, %v5407, %v5414
    %vm5416 = vcmp.eq.s32.totalorder %v5411, 2
    %v5417 = vxor.u32 %v5407, 2147483648
    %v5418 = vsel %vm5416, %v5417, %v5408
    %v5419 = vsel %vm5412, %v5415, %v5418
    %v5420 = vsel %vm5409, nan, %v5419
    %v5421 = vand.u32 2147483647, %v3844
    %vm5422 = vcmp.le.f32.partialorder %v5421, 0.7853982
    %vm5423 = vcmp.lt.s32.totalorder %v3844, 0
    %v5424 = vand.u32 %v3844, 2139095040
    %v5425 = vshrl.u32 %v5424, 23
    %v5426 = vsub.s32 %v5425, 127
    %v5427 = vand.u32 2147483647, %v3844
    %v5428 = vand.u32 %v5427, 8388607
    %v5429 = vor.u32 %v5428, 8388608
    %v5430 = vsub.s32 0, %v5429
    %v5431 = vadd.s32 %v5426, 1
    %vm5432 = vcmp.gt.s32.totalorder %v5431, 0
    %v5433 = vsel %vm5432, %v5431, 0
    %v5434 = vshrl.u32 %v5433, 5
    %v5435 = vand.u32 %v5433, 31
    %v5436 = vsub.s32 32, %v5435
    %v5437 = vshrl.u32 683565275, %v5436
    %v5438 = vshll.u32 683565275, %v5435
    %v5439 = vshrl.u32 2475754826, %v5436
    %v5440 = vor.u32 %v5438, %v5439
    %v5441 = vshll.u32 2475754826, %v5435
    %v5442 = vshrl.u32 2131351028, %v5436
    %v5443 = vor.u32 %v5441, %v5442
    %v5444 = vshll.u32 2131351028, %v5435
    %v5445 = vshrl.u32 2102212464, %v5436
    %v5446 = vor.u32 %v5444, %v5445
    %v5447 = vshll.u32 2102212464, %v5435
    %v5448 = vshrl.u32 920167782, %v5436
    %v5449 = vor.u32 %v5447, %v5448
    %v5450 = vshll.u32 920167782, %v5435
    %v5451 = vshrl.u32 1326507024, %v5436
    %v5452 = vor.u32 %v5450, %v5451
    %vm5453 = vcmp.lt.s32.totalorder %v5434, 1
    %vm5454 = vcmp.lt.s32.totalorder %v5434, 2
    %vm5455 = vcmp.lt.s32.totalorder %v5434, 3
    %vm5456 = vcmp.lt.s32.totalorder %v5434, 4
    %v5457 = vsel %vm5453, %v5437, %v5440
    %v5458 = vsel %vm5456, %v5446, 2102212464
    %v5459 = vsel %vm5455, %v5443, %v5458
    %v5460 = vsel %vm5454, %v5457, %v5459
    %v5461 = vsel %vm5453, %v5440, %v5443
    %v5462 = vsel %vm5456, %v5449, 920167782
    %v5463 = vsel %vm5455, %v5446, %v5462
    %v5464 = vsel %vm5454, %v5461, %v5463
    %v5465 = vsel %vm5453, %v5443, %v5446
    %v5466 = vsel %vm5456, %v5452, 1326507024
    %v5467 = vsel %vm5455, %v5449, %v5466
    %v5468 = vsel %vm5454, %v5465, %v5467
    %v5469 = vshll.u32 %v5429, 8
    %v5470 = vmul.u32.u64.compose %v5469, %v5468
    %v5471 = vextract.low.u32 %v5470
    %v5472 = vextract.high.u32 %v5470
    %v5473 = vmul.u32.u64.compose %v5469, %v5464
    %v5474 = vextract.low.u32 %v5473
    %v5475 = vextract.high.u32 %v5473
    %v5476 = vmul.u32 %v5469, %v5460
    %v5477 = vadd.s32 %v5472, %v5474
    %vm5478 = vc.u32 %v5472, %v5474
    %v5479 = vadd.s32 %v5475, 1
    %v5480 = vsel %vm5478, %v5479, %v5475
    %v5481 = vadd.s32 %v5476, %v5480
    %v5482 = vadd.s32 %v5481, 536870912
    %v5483 = vshrl.u32 %v5482, 30
    %v5484 = vshll.u32 %v5483, 30
    %v5485 = vsub.s32 %v5481, %v5484
    %vm5486 = vcmp.lt.s32.totalorder %v5485, 0
    %v5487 = vsub.s32 0, %v5485
    %v5488 = vsel %vm5486, %v5487, %v5485
    %v5489 = vclz %v5488
    %v5490 = vsub.s32 %v5489, 2
    %vm5491 = vcmp.gt.s32.totalorder 0, %v5490
    %v5492 = vsel %vm5491, 0, %v5490
    %v5493 = vsub.s32 32, %v5492
    %v5494 = vshll.u32 %v5485, %v5492
    %v5495 = vshrl.u32 %v5477, %v5493
    %v5496 = vor.u32 %v5494, %v5495
    %v5497 = vsub.s32 4294967266, %v5492
    %v5498 = vadd.s32 %v5497, 127
    %v5499 = vshll.u32 %v5498, 23
    %v5500 = vor.u32 4788187, %v5499
    %v5501 = vand.u32 2147483647, %v5500
    %v5503 = vcvt.s32.f32 %v5496
    %v5504 = vmul.f32 %v5503, %v5501
    %v5505 = vxor.u32 %v5504, 2147483648
    %v5506 = vsel %vm5423, %v5505, %v5504
    %v5507 = vsub.s32 4, %v5483
    %v5508 = vsel %vm5423, %v5507, %v5483
    %v5509 = vsel %vm5422, %v3844, %v5506
    %v5510 = vsel %vm5422, 0, %v5508
    %v5511 = vcosq.f32.pop %v5509
    %v5512 = vsinq.f32.pop %v5509
    %vm5513 = vweird.f32 %v3844
    %v5514 = vadd.s32 %v5510, 3
    %v5515 = vand.u32 %v5514, 3
    %vm5516 = vcmp.lt.s32.totalorder %v5515, 2
    %vm5517 = vcmp.eq.s32.totalorder %v5515, 0
    %v5518 = vxor.u32 %v5512, 2147483648
    %v5519 = vsel %vm5517, %v5511, %v5518
    %vm5520 = vcmp.eq.s32.totalorder %v5515, 2
    %v5521 = vxor.u32 %v5511, 2147483648
    %v5522 = vsel %vm5520, %v5521, %v5512
    %v5523 = vsel %vm5516, %v5519, %v5522
    %v5524 = vsel %vm5513, nan, %v5523
    %v5525 = vand.u32 2147483647, %v3845
    %vm5526 = vcmp.le.f32.partialorder %v5525, 0.7853982
    %vm5527 = vcmp.lt.s32.totalorder %v3845, 0
    %v5528 = vand.u32 %v3845, 2139095040
    %v5529 = vshrl.u32 %v5528, 23
    %v5530 = vsub.s32 %v5529, 127
    %v5531 = vand.u32 2147483647, %v3845
    %v5532 = vand.u32 %v5531, 8388607
    %v5533 = vor.u32 %v5532, 8388608
    %v5534 = vsub.s32 0, %v5533
    %v5535 = vadd.s32 %v5530, 1
    %vm5536 = vcmp.gt.s32.totalorder %v5535, 0
    %v5537 = vsel %vm5536, %v5535, 0
    %v5538 = vshrl.u32 %v5537, 5
    %v5539 = vand.u32 %v5537, 31
    %v5540 = vsub.s32 32, %v5539
    %v5541 = vshrl.u32 683565275, %v5540
    %v5542 = vshll.u32 683565275, %v5539
    %v5543 = vshrl.u32 2475754826, %v5540
    %v5544 = vor.u32 %v5542, %v5543
    %v5545 = vshll.u32 2475754826, %v5539
    %v5546 = vshrl.u32 2131351028, %v5540
    %v5547 = vor.u32 %v5545, %v5546
    %v5548 = vshll.u32 2131351028, %v5539
    %v5549 = vshrl.u32 2102212464, %v5540
    %v5550 = vor.u32 %v5548, %v5549
    %v5551 = vshll.u32 2102212464, %v5539
    %v5552 = vshrl.u32 920167782, %v5540
    %v5553 = vor.u32 %v5551, %v5552
    %v5554 = vshll.u32 920167782, %v5539
    %v5555 = vshrl.u32 1326507024, %v5540
    %v5556 = vor.u32 %v5554, %v5555
    %vm5557 = vcmp.lt.s32.totalorder %v5538, 1
    %vm5558 = vcmp.lt.s32.totalorder %v5538, 2
    %vm5559 = vcmp.lt.s32.totalorder %v5538, 3
    %vm5560 = vcmp.lt.s32.totalorder %v5538, 4
    %v5561 = vsel %vm5557, %v5541, %v5544
    %v5562 = vsel %vm5560, %v5550, 2102212464
    %v5563 = vsel %vm5559, %v5547, %v5562
    %v5564 = vsel %vm5558, %v5561, %v5563
    %v5565 = vsel %vm5557, %v5544, %v5547
    %v5566 = vsel %vm5560, %v5553, 920167782
    %v5567 = vsel %vm5559, %v5550, %v5566
    %v5568 = vsel %vm5558, %v5565, %v5567
    %v5569 = vsel %vm5557, %v5547, %v5550
    %v5570 = vsel %vm5560, %v5556, 1326507024
    %v5571 = vsel %vm5559, %v5553, %v5570
    %v5572 = vsel %vm5558, %v5569, %v5571
    %v5573 = vshll.u32 %v5533, 8
    %v5574 = vmul.u32.u64.compose %v5573, %v5572
    %v5575 = vextract.low.u32 %v5574
    %v5576 = vextract.high.u32 %v5574
    %v5577 = vmul.u32.u64.compose %v5573, %v5568
    %v5578 = vextract.low.u32 %v5577
    %v5579 = vextract.high.u32 %v5577
    %v5580 = vmul.u32 %v5573, %v5564
    %v5581 = vadd.s32 %v5576, %v5578
    %vm5582 = vc.u32 %v5576, %v5578
    %v5583 = vadd.s32 %v5579, 1
    %v5584 = vsel %vm5582, %v5583, %v5579
    %v5585 = vadd.s32 %v5580, %v5584
    %v5586 = vadd.s32 %v5585, 536870912
    %v5587 = vshrl.u32 %v5586, 30
    %v5588 = vshll.u32 %v5587, 30
    %v5589 = vsub.s32 %v5585, %v5588
    %vm5590 = vcmp.lt.s32.totalorder %v5589, 0
    %v5591 = vsub.s32 0, %v5589
    %v5592 = vsel %vm5590, %v5591, %v5589
    %v5593 = vclz %v5592
    %v5594 = vsub.s32 %v5593, 2
    %vm5595 = vcmp.gt.s32.totalorder 0, %v5594
    %v5596 = vsel %vm5595, 0, %v5594
    %v5597 = vsub.s32 32, %v5596
    %v5598 = vshll.u32 %v5589, %v5596
    %v5599 = vshrl.u32 %v5581, %v5597
    %v5600 = vor.u32 %v5598, %v5599
    %v5601 = vsub.s32 4294967266, %v5596
    %v5602 = vadd.s32 %v5601, 127
    %v5603 = vshll.u32 %v5602, 23
    %v5604 = vor.u32 4788187, %v5603
    %v5605 = vand.u32 2147483647, %v5604
    %v5607 = vcvt.s32.f32 %v5600
    %v5608 = vmul.f32 %v5607, %v5605
    %v5609 = vxor.u32 %v5608, 2147483648
    %v5610 = vsel %vm5527, %v5609, %v5608
    %v5611 = vsub.s32 4, %v5587
    %v5612 = vsel %vm5527, %v5611, %v5587
    %v5613 = vsel %vm5526, %v3845, %v5610
    %v5614 = vsel %vm5526, 0, %v5612
    %v5615 = vcosq.f32.pop %v5613
    %v5616 = vsinq.f32.pop %v5613
    %vm5617 = vweird.f32 %v3845
    %v5618 = vadd.s32 %v5614, 3
    %v5619 = vand.u32 %v5618, 3
    %vm5620 = vcmp.lt.s32.totalorder %v5619, 2
    %vm5621 = vcmp.eq.s32.totalorder %v5619, 0
    %v5622 = vxor.u32 %v5616, 2147483648
    %v5623 = vsel %vm5621, %v5615, %v5622
    %vm5624 = vcmp.eq.s32.totalorder %v5619, 2
    %v5625 = vxor.u32 %v5615, 2147483648
    %v5626 = vsel %vm5624, %v5625, %v5616
    %v5627 = vsel %vm5620, %v5623, %v5626
    %v5628 = vsel %vm5617, nan, %v5627
    %v5629 = vand.u32 2147483647, %v3846
    %vm5630 = vcmp.le.f32.partialorder %v5629, 0.7853982
    %vm5631 = vcmp.lt.s32.totalorder %v3846, 0
    %v5632 = vand.u32 %v3846, 2139095040
    %v5633 = vshrl.u32 %v5632, 23
    %v5634 = vsub.s32 %v5633, 127
    %v5635 = vand.u32 2147483647, %v3846
    %v5636 = vand.u32 %v5635, 8388607
    %v5637 = vor.u32 %v5636, 8388608
    %v5638 = vsub.s32 0, %v5637
    %v5639 = vadd.s32 %v5634, 1
    %vm5640 = vcmp.gt.s32.totalorder %v5639, 0
    %v5641 = vsel %vm5640, %v5639, 0
    %v5642 = vshrl.u32 %v5641, 5
    %v5643 = vand.u32 %v5641, 31
    %v5644 = vsub.s32 32, %v5643
    %v5645 = vshrl.u32 683565275, %v5644
    %v5646 = vshll.u32 683565275, %v5643
    %v5647 = vshrl.u32 2475754826, %v5644
    %v5648 = vor.u32 %v5646, %v5647
    %v5649 = vshll.u32 2475754826, %v5643
    %v5650 = vshrl.u32 2131351028, %v5644
    %v5651 = vor.u32 %v5649, %v5650
    %v5652 = vshll.u32 2131351028, %v5643
    %v5653 = vshrl.u32 2102212464, %v5644
    %v5654 = vor.u32 %v5652, %v5653
    %v5655 = vshll.u32 2102212464, %v5643
    %v5656 = vshrl.u32 920167782, %v5644
    %v5657 = vor.u32 %v5655, %v5656
    %v5658 = vshll.u32 920167782, %v5643
    %v5659 = vshrl.u32 1326507024, %v5644
    %v5660 = vor.u32 %v5658, %v5659
    %vm5661 = vcmp.lt.s32.totalorder %v5642, 1
    %vm5662 = vcmp.lt.s32.totalorder %v5642, 2
    %vm5663 = vcmp.lt.s32.totalorder %v5642, 3
    %vm5664 = vcmp.lt.s32.totalorder %v5642, 4
    %v5665 = vsel %vm5661, %v5645, %v5648
    %v5666 = vsel %vm5664, %v5654, 2102212464
    %v5667 = vsel %vm5663, %v5651, %v5666
    %v5668 = vsel %vm5662, %v5665, %v5667
    %v5669 = vsel %vm5661, %v5648, %v5651
    %v5670 = vsel %vm5664, %v5657, 920167782
    %v5671 = vsel %vm5663, %v5654, %v5670
    %v5672 = vsel %vm5662, %v5669, %v5671
    %v5673 = vsel %vm5661, %v5651, %v5654
    %v5674 = vsel %vm5664, %v5660, 1326507024
    %v5675 = vsel %vm5663, %v5657, %v5674
    %v5676 = vsel %vm5662, %v5673, %v5675
    %v5677 = vshll.u32 %v5637, 8
    %v5678 = vmul.u32.u64.compose %v5677, %v5676
    %v5679 = vextract.low.u32 %v5678
    %v5680 = vextract.high.u32 %v5678
    %v5681 = vmul.u32.u64.compose %v5677, %v5672
    %v5682 = vextract.low.u32 %v5681
    %v5683 = vextract.high.u32 %v5681
    %v5684 = vmul.u32 %v5677, %v5668
    %v5685 = vadd.s32 %v5680, %v5682
    %vm5686 = vc.u32 %v5680, %v5682
    %v5687 = vadd.s32 %v5683, 1
    %v5688 = vsel %vm5686, %v5687, %v5683
    %v5689 = vadd.s32 %v5684, %v5688
    %v5690 = vadd.s32 %v5689, 536870912
    %v5691 = vshrl.u32 %v5690, 30
    %v5692 = vshll.u32 %v5691, 30
    %v5693 = vsub.s32 %v5689, %v5692
    %vm5694 = vcmp.lt.s32.totalorder %v5693, 0
    %v5695 = vsub.s32 0, %v5693
    %v5696 = vsel %vm5694, %v5695, %v5693
    %v5697 = vclz %v5696
    %v5698 = vsub.s32 %v5697, 2
    %vm5699 = vcmp.gt.s32.totalorder 0, %v5698
    %v5700 = vsel %vm5699, 0, %v5698
    %v5701 = vsub.s32 32, %v5700
    %v5702 = vshll.u32 %v5693, %v5700
    %v5703 = vshrl.u32 %v5685, %v5701
    %v5704 = vor.u32 %v5702, %v5703
    %v5705 = vsub.s32 4294967266, %v5700
    %v5706 = vadd.s32 %v5705, 127
    %v5707 = vshll.u32 %v5706, 23
    %v5708 = vor.u32 4788187, %v5707
    %v5709 = vand.u32 2147483647, %v5708
    %v5711 = vcvt.s32.f32 %v5704
    %v5712 = vmul.f32 %v5711, %v5709
    %v5713 = vxor.u32 %v5712, 2147483648
    %v5714 = vsel %vm5631, %v5713, %v5712
    %v5715 = vsub.s32 4, %v5691
    %v5716 = vsel %vm5631, %v5715, %v5691
    %v5717 = vsel %vm5630, %v3846, %v5714
    %v5718 = vsel %vm5630, 0, %v5716
    %v5719 = vcosq.f32.pop %v5717
    %v5720 = vsinq.f32.pop %v5717
    %vm5721 = vweird.f32 %v3846
    %v5722 = vadd.s32 %v5718, 3
    %v5723 = vand.u32 %v5722, 3
    %vm5724 = vcmp.lt.s32.totalorder %v5723, 2
    %vm5725 = vcmp.eq.s32.totalorder %v5723, 0
    %v5726 = vxor.u32 %v5720, 2147483648
    %v5727 = vsel %vm5725, %v5719, %v5726
    %vm5728 = vcmp.eq.s32.totalorder %v5723, 2
    %v5729 = vxor.u32 %v5719, 2147483648
    %v5730 = vsel %vm5728, %v5729, %v5720
    %v5731 = vsel %vm5724, %v5727, %v5730
    %v5732 = vsel %vm5721, nan, %v5731
    %v5733 = vand.u32 2147483647, %v3847
    %vm5734 = vcmp.le.f32.partialorder %v5733, 0.7853982
    %vm5735 = vcmp.lt.s32.totalorder %v3847, 0
    %v5736 = vand.u32 %v3847, 2139095040
    %v5737 = vshrl.u32 %v5736, 23
    %v5738 = vsub.s32 %v5737, 127
    %v5739 = vand.u32 2147483647, %v3847
    %v5740 = vand.u32 %v5739, 8388607
    %v5741 = vor.u32 %v5740, 8388608
    %v5742 = vsub.s32 0, %v5741
    %v5743 = vadd.s32 %v5738, 1
    %vm5744 = vcmp.gt.s32.totalorder %v5743, 0
    %v5745 = vsel %vm5744, %v5743, 0
    %v5746 = vshrl.u32 %v5745, 5
    %v5747 = vand.u32 %v5745, 31
    %v5748 = vsub.s32 32, %v5747
    %v5749 = vshrl.u32 683565275, %v5748
    %v5750 = vshll.u32 683565275, %v5747
    %v5751 = vshrl.u32 2475754826, %v5748
    %v5752 = vor.u32 %v5750, %v5751
    %v5753 = vshll.u32 2475754826, %v5747
    %v5754 = vshrl.u32 2131351028, %v5748
    %v5755 = vor.u32 %v5753, %v5754
    %v5756 = vshll.u32 2131351028, %v5747
    %v5757 = vshrl.u32 2102212464, %v5748
    %v5758 = vor.u32 %v5756, %v5757
    %v5759 = vshll.u32 2102212464, %v5747
    %v5760 = vshrl.u32 920167782, %v5748
    %v5761 = vor.u32 %v5759, %v5760
    %v5762 = vshll.u32 920167782, %v5747
    %v5763 = vshrl.u32 1326507024, %v5748
    %v5764 = vor.u32 %v5762, %v5763
    %vm5765 = vcmp.lt.s32.totalorder %v5746, 1
    %vm5766 = vcmp.lt.s32.totalorder %v5746, 2
    %vm5767 = vcmp.lt.s32.totalorder %v5746, 3
    %vm5768 = vcmp.lt.s32.totalorder %v5746, 4
    %v5769 = vsel %vm5765, %v5749, %v5752
    %v5770 = vsel %vm5768, %v5758, 2102212464
    %v5771 = vsel %vm5767, %v5755, %v5770
    %v5772 = vsel %vm5766, %v5769, %v5771
    %v5773 = vsel %vm5765, %v5752, %v5755
    %v5774 = vsel %vm5768, %v5761, 920167782
    %v5775 = vsel %vm5767, %v5758, %v5774
    %v5776 = vsel %vm5766, %v5773, %v5775
    %v5777 = vsel %vm5765, %v5755, %v5758
    %v5778 = vsel %vm5768, %v5764, 1326507024
    %v5779 = vsel %vm5767, %v5761, %v5778
    %v5780 = vsel %vm5766, %v5777, %v5779
    %v5781 = vshll.u32 %v5741, 8
    %v5782 = vmul.u32.u64.compose %v5781, %v5780
    %v5783 = vextract.low.u32 %v5782
    %v5784 = vextract.high.u32 %v5782
    %v5785 = vmul.u32.u64.compose %v5781, %v5776
    %v5786 = vextract.low.u32 %v5785
    %v5787 = vextract.high.u32 %v5785
    %v5788 = vmul.u32 %v5781, %v5772
    %v5789 = vadd.s32 %v5784, %v5786
    %vm5790 = vc.u32 %v5784, %v5786
    %v5791 = vadd.s32 %v5787, 1
    %v5792 = vsel %vm5790, %v5791, %v5787
    %v5793 = vadd.s32 %v5788, %v5792
    %v5794 = vadd.s32 %v5793, 536870912
    %v5795 = vshrl.u32 %v5794, 30
    %v5796 = vshll.u32 %v5795, 30
    %v5797 = vsub.s32 %v5793, %v5796
    %vm5798 = vcmp.lt.s32.totalorder %v5797, 0
    %v5799 = vsub.s32 0, %v5797
    %v5800 = vsel %vm5798, %v5799, %v5797
    %v5801 = vclz %v5800
    %v5802 = vsub.s32 %v5801, 2
    %vm5803 = vcmp.gt.s32.totalorder 0, %v5802
    %v5804 = vsel %vm5803, 0, %v5802
    %v5805 = vsub.s32 32, %v5804
    %v5806 = vshll.u32 %v5797, %v5804
    %v5807 = vshrl.u32 %v5789, %v5805
    %v5808 = vor.u32 %v5806, %v5807
    %v5809 = vsub.s32 4294967266, %v5804
    %v5810 = vadd.s32 %v5809, 127
    %v5811 = vshll.u32 %v5810, 23
    %v5812 = vor.u32 4788187, %v5811
    %v5813 = vand.u32 2147483647, %v5812
    %v5815 = vcvt.s32.f32 %v5808
    %v5816 = vmul.f32 %v5815, %v5813
    %v5817 = vxor.u32 %v5816, 2147483648
    %v5818 = vsel %vm5735, %v5817, %v5816
    %v5819 = vsub.s32 4, %v5795
    %v5820 = vsel %vm5735, %v5819, %v5795
    %v5821 = vsel %vm5734, %v3847, %v5818
    %v5822 = vsel %vm5734, 0, %v5820
    %v5823 = vcosq.f32.pop %v5821
    %v5824 = vsinq.f32.pop %v5821
    %vm5825 = vweird.f32 %v3847
    %v5826 = vadd.s32 %v5822, 3
    %v5827 = vand.u32 %v5826, 3
    %vm5828 = vcmp.lt.s32.totalorder %v5827, 2
    %vm5829 = vcmp.eq.s32.totalorder %v5827, 0
    %v5830 = vxor.u32 %v5824, 2147483648
    %v5831 = vsel %vm5829, %v5823, %v5830
    %vm5832 = vcmp.eq.s32.totalorder %v5827, 2
    %v5833 = vxor.u32 %v5823, 2147483648
    %v5834 = vsel %vm5832, %v5833, %v5824
    %v5835 = vsel %vm5828, %v5831, %v5834
    %v5836 = vsel %vm5825, nan, %v5835
    %v5837 = vand.u32 2147483647, %v3848
    %vm5838 = vcmp.le.f32.partialorder %v5837, 0.7853982
    %vm5839 = vcmp.lt.s32.totalorder %v3848, 0
    %v5840 = vand.u32 %v3848, 2139095040
    %v5841 = vshrl.u32 %v5840, 23
    %v5842 = vsub.s32 %v5841, 127
    %v5843 = vand.u32 2147483647, %v3848
    %v5844 = vand.u32 %v5843, 8388607
    %v5845 = vor.u32 %v5844, 8388608
    %v5846 = vsub.s32 0, %v5845
    %v5847 = vadd.s32 %v5842, 1
    %vm5848 = vcmp.gt.s32.totalorder %v5847, 0
    %v5849 = vsel %vm5848, %v5847, 0
    %v5850 = vshrl.u32 %v5849, 5
    %v5851 = vand.u32 %v5849, 31
    %v5852 = vsub.s32 32, %v5851
    %v5853 = vshrl.u32 683565275, %v5852
    %v5854 = vshll.u32 683565275, %v5851
    %v5855 = vshrl.u32 2475754826, %v5852
    %v5856 = vor.u32 %v5854, %v5855
    %v5857 = vshll.u32 2475754826, %v5851
    %v5858 = vshrl.u32 2131351028, %v5852
    %v5859 = vor.u32 %v5857, %v5858
    %v5860 = vshll.u32 2131351028, %v5851
    %v5861 = vshrl.u32 2102212464, %v5852
    %v5862 = vor.u32 %v5860, %v5861
    %v5863 = vshll.u32 2102212464, %v5851
    %v5864 = vshrl.u32 920167782, %v5852
    %v5865 = vor.u32 %v5863, %v5864
    %v5866 = vshll.u32 920167782, %v5851
    %v5867 = vshrl.u32 1326507024, %v5852
    %v5868 = vor.u32 %v5866, %v5867
    %vm5869 = vcmp.lt.s32.totalorder %v5850, 1
    %vm5870 = vcmp.lt.s32.totalorder %v5850, 2
    %vm5871 = vcmp.lt.s32.totalorder %v5850, 3
    %vm5872 = vcmp.lt.s32.totalorder %v5850, 4
    %v5873 = vsel %vm5869, %v5853, %v5856
    %v5874 = vsel %vm5872, %v5862, 2102212464
    %v5875 = vsel %vm5871, %v5859, %v5874
    %v5876 = vsel %vm5870, %v5873, %v5875
    %v5877 = vsel %vm5869, %v5856, %v5859
    %v5878 = vsel %vm5872, %v5865, 920167782
    %v5879 = vsel %vm5871, %v5862, %v5878
    %v5880 = vsel %vm5870, %v5877, %v5879
    %v5881 = vsel %vm5869, %v5859, %v5862
    %v5882 = vsel %vm5872, %v5868, 1326507024
    %v5883 = vsel %vm5871, %v5865, %v5882
    %v5884 = vsel %vm5870, %v5881, %v5883
    %v5885 = vshll.u32 %v5845, 8
    %v5886 = vmul.u32.u64.compose %v5885, %v5884
    %v5887 = vextract.low.u32 %v5886
    %v5888 = vextract.high.u32 %v5886
    %v5889 = vmul.u32.u64.compose %v5885, %v5880
    %v5890 = vextract.low.u32 %v5889
    %v5891 = vextract.high.u32 %v5889
    %v5892 = vmul.u32 %v5885, %v5876
    %v5893 = vadd.s32 %v5888, %v5890
    %vm5894 = vc.u32 %v5888, %v5890
    %v5895 = vadd.s32 %v5891, 1
    %v5896 = vsel %vm5894, %v5895, %v5891
    %v5897 = vadd.s32 %v5892, %v5896
    %v5898 = vadd.s32 %v5897, 536870912
    %v5899 = vshrl.u32 %v5898, 30
    %v5900 = vshll.u32 %v5899, 30
    %v5901 = vsub.s32 %v5897, %v5900
    %vm5902 = vcmp.lt.s32.totalorder %v5901, 0
    %v5903 = vsub.s32 0, %v5901
    %v5904 = vsel %vm5902, %v5903, %v5901
    %v5905 = vclz %v5904
    %v5906 = vsub.s32 %v5905, 2
    %vm5907 = vcmp.gt.s32.totalorder 0, %v5906
    %v5908 = vsel %vm5907, 0, %v5906
    %v5909 = vsub.s32 32, %v5908
    %v5910 = vshll.u32 %v5901, %v5908
    %v5911 = vshrl.u32 %v5893, %v5909
    %v5912 = vor.u32 %v5910, %v5911
    %v5913 = vsub.s32 4294967266, %v5908
    %v5914 = vadd.s32 %v5913, 127
    %v5915 = vshll.u32 %v5914, 23
    %v5916 = vor.u32 4788187, %v5915
    %v5917 = vand.u32 2147483647, %v5916
    %v5919 = vcvt.s32.f32 %v5912
    %v5920 = vmul.f32 %v5919, %v5917
    %v5921 = vxor.u32 %v5920, 2147483648
    %v5922 = vsel %vm5839, %v5921, %v5920
    %v5923 = vsub.s32 4, %v5899
    %v5924 = vsel %vm5839, %v5923, %v5899
    %v5925 = vsel %vm5838, %v3848, %v5922
    %v5926 = vsel %vm5838, 0, %v5924
    %v5927 = vcosq.f32.pop %v5925
    %v5928 = vsinq.f32.pop %v5925
    %vm5929 = vweird.f32 %v3848
    %v5930 = vadd.s32 %v5926, 3
    %v5931 = vand.u32 %v5930, 3
    %vm5932 = vcmp.lt.s32.totalorder %v5931, 2
    %vm5933 = vcmp.eq.s32.totalorder %v5931, 0
    %v5934 = vxor.u32 %v5928, 2147483648
    %v5935 = vsel %vm5933, %v5927, %v5934
    %vm5936 = vcmp.eq.s32.totalorder %v5931, 2
    %v5937 = vxor.u32 %v5927, 2147483648
    %v5938 = vsel %vm5936, %v5937, %v5928
    %v5939 = vsel %vm5932, %v5935, %v5938
    %v5940 = vsel %vm5929, nan, %v5939
    %v5941 = vand.u32 2147483647, %v3849
    %vm5942 = vcmp.le.f32.partialorder %v5941, 0.7853982
    %vm5943 = vcmp.lt.s32.totalorder %v3849, 0
    %v5944 = vand.u32 %v3849, 2139095040
    %v5945 = vshrl.u32 %v5944, 23
    %v5946 = vsub.s32 %v5945, 127
    %v5947 = vand.u32 2147483647, %v3849
    %v5948 = vand.u32 %v5947, 8388607
    %v5949 = vor.u32 %v5948, 8388608
    %v5950 = vsub.s32 0, %v5949
    %v5951 = vadd.s32 %v5946, 1
    %vm5952 = vcmp.gt.s32.totalorder %v5951, 0
    %v5953 = vsel %vm5952, %v5951, 0
    %v5954 = vshrl.u32 %v5953, 5
    %v5955 = vand.u32 %v5953, 31
    %v5956 = vsub.s32 32, %v5955
    %v5957 = vshrl.u32 683565275, %v5956
    %v5958 = vshll.u32 683565275, %v5955
    %v5959 = vshrl.u32 2475754826, %v5956
    %v5960 = vor.u32 %v5958, %v5959
    %v5961 = vshll.u32 2475754826, %v5955
    %v5962 = vshrl.u32 2131351028, %v5956
    %v5963 = vor.u32 %v5961, %v5962
    %v5964 = vshll.u32 2131351028, %v5955
    %v5965 = vshrl.u32 2102212464, %v5956
    %v5966 = vor.u32 %v5964, %v5965
    %v5967 = vshll.u32 2102212464, %v5955
    %v5968 = vshrl.u32 920167782, %v5956
    %v5969 = vor.u32 %v5967, %v5968
    %v5970 = vshll.u32 920167782, %v5955
    %v5971 = vshrl.u32 1326507024, %v5956
    %v5972 = vor.u32 %v5970, %v5971
    %vm5973 = vcmp.lt.s32.totalorder %v5954, 1
    %vm5974 = vcmp.lt.s32.totalorder %v5954, 2
    %vm5975 = vcmp.lt.s32.totalorder %v5954, 3
    %vm5976 = vcmp.lt.s32.totalorder %v5954, 4
    %v5977 = vsel %vm5973, %v5957, %v5960
    %v5978 = vsel %vm5976, %v5966, 2102212464
    %v5979 = vsel %vm5975, %v5963, %v5978
    %v5980 = vsel %vm5974, %v5977, %v5979
    %v5981 = vsel %vm5973, %v5960, %v5963
    %v5982 = vsel %vm5976, %v5969, 920167782
    %v5983 = vsel %vm5975, %v5966, %v5982
    %v5984 = vsel %vm5974, %v5981, %v5983
    %v5985 = vsel %vm5973, %v5963, %v5966
    %v5986 = vsel %vm5976, %v5972, 1326507024
    %v5987 = vsel %vm5975, %v5969, %v5986
    %v5988 = vsel %vm5974, %v5985, %v5987
    %v5989 = vshll.u32 %v5949, 8
    %v5990 = vmul.u32.u64.compose %v5989, %v5988
    %v5991 = vextract.low.u32 %v5990
    %v5992 = vextract.high.u32 %v5990
    %v5993 = vmul.u32.u64.compose %v5989, %v5984
    %v5994 = vextract.low.u32 %v5993
    %v5995 = vextract.high.u32 %v5993
    %v5996 = vmul.u32 %v5989, %v5980
    %v5997 = vadd.s32 %v5992, %v5994
    %vm5998 = vc.u32 %v5992, %v5994
    %v5999 = vadd.s32 %v5995, 1
    %v6000 = vsel %vm5998, %v5999, %v5995
    %v6001 = vadd.s32 %v5996, %v6000
    %v6002 = vadd.s32 %v6001, 536870912
    %v6003 = vshrl.u32 %v6002, 30
    %v6004 = vshll.u32 %v6003, 30
    %v6005 = vsub.s32 %v6001, %v6004
    %vm6006 = vcmp.lt.s32.totalorder %v6005, 0
    %v6007 = vsub.s32 0, %v6005
    %v6008 = vsel %vm6006, %v6007, %v6005
    %v6009 = vclz %v6008
    %v6010 = vsub.s32 %v6009, 2
    %vm6011 = vcmp.gt.s32.totalorder 0, %v6010
    %v6012 = vsel %vm6011, 0, %v6010
    %v6013 = vsub.s32 32, %v6012
    %v6014 = vshll.u32 %v6005, %v6012
    %v6015 = vshrl.u32 %v5997, %v6013
    %v6016 = vor.u32 %v6014, %v6015
    %v6017 = vsub.s32 4294967266, %v6012
    %v6018 = vadd.s32 %v6017, 127
    %v6019 = vshll.u32 %v6018, 23
    %v6020 = vor.u32 4788187, %v6019
    %v6021 = vand.u32 2147483647, %v6020
    %v6023 = vcvt.s32.f32 %v6016
    %v6024 = vmul.f32 %v6023, %v6021
    %v6025 = vxor.u32 %v6024, 2147483648
    %v6026 = vsel %vm5943, %v6025, %v6024
    %v6027 = vsub.s32 4, %v6003
    %v6028 = vsel %vm5943, %v6027, %v6003
    %v6029 = vsel %vm5942, %v3849, %v6026
    %v6030 = vsel %vm5942, 0, %v6028
    %v6031 = vcosq.f32.pop %v6029
    %v6032 = vsinq.f32.pop %v6029
    %vm6033 = vweird.f32 %v3849
    %v6034 = vadd.s32 %v6030, 3
    %v6035 = vand.u32 %v6034, 3
    %vm6036 = vcmp.lt.s32.totalorder %v6035, 2
    %vm6037 = vcmp.eq.s32.totalorder %v6035, 0
    %v6038 = vxor.u32 %v6032, 2147483648
    %v6039 = vsel %vm6037, %v6031, %v6038
    %vm6040 = vcmp.eq.s32.totalorder %v6035, 2
    %v6041 = vxor.u32 %v6031, 2147483648
    %v6042 = vsel %vm6040, %v6041, %v6032
    %v6043 = vsel %vm6036, %v6039, %v6042
    %v6044 = vsel %vm6033, nan, %v6043
    %v6045 = vand.u32 2147483647, %v3850
    %vm6046 = vcmp.le.f32.partialorder %v6045, 0.7853982
    %vm6047 = vcmp.lt.s32.totalorder %v3850, 0
    %v6048 = vand.u32 %v3850, 2139095040
    %v6049 = vshrl.u32 %v6048, 23
    %v6050 = vsub.s32 %v6049, 127
    %v6051 = vand.u32 2147483647, %v3850
    %v6052 = vand.u32 %v6051, 8388607
    %v6053 = vor.u32 %v6052, 8388608
    %v6054 = vsub.s32 0, %v6053
    %v6055 = vadd.s32 %v6050, 1
    %vm6056 = vcmp.gt.s32.totalorder %v6055, 0
    %v6057 = vsel %vm6056, %v6055, 0
    %v6058 = vshrl.u32 %v6057, 5
    %v6059 = vand.u32 %v6057, 31
    %v6060 = vsub.s32 32, %v6059
    %v6061 = vshrl.u32 683565275, %v6060
    %v6062 = vshll.u32 683565275, %v6059
    %v6063 = vshrl.u32 2475754826, %v6060
    %v6064 = vor.u32 %v6062, %v6063
    %v6065 = vshll.u32 2475754826, %v6059
    %v6066 = vshrl.u32 2131351028, %v6060
    %v6067 = vor.u32 %v6065, %v6066
    %v6068 = vshll.u32 2131351028, %v6059
    %v6069 = vshrl.u32 2102212464, %v6060
    %v6070 = vor.u32 %v6068, %v6069
    %v6071 = vshll.u32 2102212464, %v6059
    %v6072 = vshrl.u32 920167782, %v6060
    %v6073 = vor.u32 %v6071, %v6072
    %v6074 = vshll.u32 920167782, %v6059
    %v6075 = vshrl.u32 1326507024, %v6060
    %v6076 = vor.u32 %v6074, %v6075
    %vm6077 = vcmp.lt.s32.totalorder %v6058, 1
    %vm6078 = vcmp.lt.s32.totalorder %v6058, 2
    %vm6079 = vcmp.lt.s32.totalorder %v6058, 3
    %vm6080 = vcmp.lt.s32.totalorder %v6058, 4
    %v6081 = vsel %vm6077, %v6061, %v6064
    %v6082 = vsel %vm6080, %v6070, 2102212464
    %v6083 = vsel %vm6079, %v6067, %v6082
    %v6084 = vsel %vm6078, %v6081, %v6083
    %v6085 = vsel %vm6077, %v6064, %v6067
    %v6086 = vsel %vm6080, %v6073, 920167782
    %v6087 = vsel %vm6079, %v6070, %v6086
    %v6088 = vsel %vm6078, %v6085, %v6087
    %v6089 = vsel %vm6077, %v6067, %v6070
    %v6090 = vsel %vm6080, %v6076, 1326507024
    %v6091 = vsel %vm6079, %v6073, %v6090
    %v6092 = vsel %vm6078, %v6089, %v6091
    %v6093 = vshll.u32 %v6053, 8
    %v6094 = vmul.u32.u64.compose %v6093, %v6092
    %v6095 = vextract.low.u32 %v6094
    %v6096 = vextract.high.u32 %v6094
    %v6097 = vmul.u32.u64.compose %v6093, %v6088
    %v6098 = vextract.low.u32 %v6097
    %v6099 = vextract.high.u32 %v6097
    %v6100 = vmul.u32 %v6093, %v6084
    %v6101 = vadd.s32 %v6096, %v6098
    %vm6102 = vc.u32 %v6096, %v6098
    %v6103 = vadd.s32 %v6099, 1
    %v6104 = vsel %vm6102, %v6103, %v6099
    %v6105 = vadd.s32 %v6100, %v6104
    %v6106 = vadd.s32 %v6105, 536870912
    %v6107 = vshrl.u32 %v6106, 30
    %v6108 = vshll.u32 %v6107, 30
    %v6109 = vsub.s32 %v6105, %v6108
    %vm6110 = vcmp.lt.s32.totalorder %v6109, 0
    %v6111 = vsub.s32 0, %v6109
    %v6112 = vsel %vm6110, %v6111, %v6109
    %v6113 = vclz %v6112
    %v6114 = vsub.s32 %v6113, 2
    %vm6115 = vcmp.gt.s32.totalorder 0, %v6114
    %v6116 = vsel %vm6115, 0, %v6114
    %v6117 = vsub.s32 32, %v6116
    %v6118 = vshll.u32 %v6109, %v6116
    %v6119 = vshrl.u32 %v6101, %v6117
    %v6120 = vor.u32 %v6118, %v6119
    %v6121 = vsub.s32 4294967266, %v6116
    %v6122 = vadd.s32 %v6121, 127
    %v6123 = vshll.u32 %v6122, 23
    %v6124 = vor.u32 4788187, %v6123
    %v6125 = vand.u32 2147483647, %v6124
    %v6127 = vcvt.s32.f32 %v6120
    %v6128 = vmul.f32 %v6127, %v6125
    %v6129 = vxor.u32 %v6128, 2147483648
    %v6130 = vsel %vm6047, %v6129, %v6128
    %v6131 = vsub.s32 4, %v6107
    %v6132 = vsel %vm6047, %v6131, %v6107
    %v6133 = vsel %vm6046, %v3850, %v6130
    %v6134 = vsel %vm6046, 0, %v6132
    %v6135 = vcosq.f32.pop %v6133
    %v6136 = vsinq.f32.pop %v6133
    %vm6137 = vweird.f32 %v3850
    %v6138 = vadd.s32 %v6134, 3
    %v6139 = vand.u32 %v6138, 3
    %vm6140 = vcmp.lt.s32.totalorder %v6139, 2
    %vm6141 = vcmp.eq.s32.totalorder %v6139, 0
    %v6142 = vxor.u32 %v6136, 2147483648
    %v6143 = vsel %vm6141, %v6135, %v6142
    %vm6144 = vcmp.eq.s32.totalorder %v6139, 2
    %v6145 = vxor.u32 %v6135, 2147483648
    %v6146 = vsel %vm6144, %v6145, %v6136
    %v6147 = vsel %vm6140, %v6143, %v6146
    %v6148 = vsel %vm6137, nan, %v6147
    %v6149 = vand.u32 2147483647, %v3851
    %vm6150 = vcmp.le.f32.partialorder %v6149, 0.7853982
    %vm6151 = vcmp.lt.s32.totalorder %v3851, 0
    %v6152 = vand.u32 %v3851, 2139095040
    %v6153 = vshrl.u32 %v6152, 23
    %v6154 = vsub.s32 %v6153, 127
    %v6155 = vand.u32 2147483647, %v3851
    %v6156 = vand.u32 %v6155, 8388607
    %v6157 = vor.u32 %v6156, 8388608
    %v6158 = vsub.s32 0, %v6157
    %v6159 = vadd.s32 %v6154, 1
    %vm6160 = vcmp.gt.s32.totalorder %v6159, 0
    %v6161 = vsel %vm6160, %v6159, 0
    %v6162 = vshrl.u32 %v6161, 5
    %v6163 = vand.u32 %v6161, 31
    %v6164 = vsub.s32 32, %v6163
    %v6165 = vshrl.u32 683565275, %v6164
    %v6166 = vshll.u32 683565275, %v6163
    %v6167 = vshrl.u32 2475754826, %v6164
    %v6168 = vor.u32 %v6166, %v6167
    %v6169 = vshll.u32 2475754826, %v6163
    %v6170 = vshrl.u32 2131351028, %v6164
    %v6171 = vor.u32 %v6169, %v6170
    %v6172 = vshll.u32 2131351028, %v6163
    %v6173 = vshrl.u32 2102212464, %v6164
    %v6174 = vor.u32 %v6172, %v6173
    %v6175 = vshll.u32 2102212464, %v6163
    %v6176 = vshrl.u32 920167782, %v6164
    %v6177 = vor.u32 %v6175, %v6176
    %v6178 = vshll.u32 920167782, %v6163
    %v6179 = vshrl.u32 1326507024, %v6164
    %v6180 = vor.u32 %v6178, %v6179
    %vm6181 = vcmp.lt.s32.totalorder %v6162, 1
    %vm6182 = vcmp.lt.s32.totalorder %v6162, 2
    %vm6183 = vcmp.lt.s32.totalorder %v6162, 3
    %vm6184 = vcmp.lt.s32.totalorder %v6162, 4
    %v6185 = vsel %vm6181, %v6165, %v6168
    %v6186 = vsel %vm6184, %v6174, 2102212464
    %v6187 = vsel %vm6183, %v6171, %v6186
    %v6188 = vsel %vm6182, %v6185, %v6187
    %v6189 = vsel %vm6181, %v6168, %v6171
    %v6190 = vsel %vm6184, %v6177, 920167782
    %v6191 = vsel %vm6183, %v6174, %v6190
    %v6192 = vsel %vm6182, %v6189, %v6191
    %v6193 = vsel %vm6181, %v6171, %v6174
    %v6194 = vsel %vm6184, %v6180, 1326507024
    %v6195 = vsel %vm6183, %v6177, %v6194
    %v6196 = vsel %vm6182, %v6193, %v6195
    %v6197 = vshll.u32 %v6157, 8
    %v6198 = vmul.u32.u64.compose %v6197, %v6196
    %v6199 = vextract.low.u32 %v6198
    %v6200 = vextract.high.u32 %v6198
    %v6201 = vmul.u32.u64.compose %v6197, %v6192
    %v6202 = vextract.low.u32 %v6201
    %v6203 = vextract.high.u32 %v6201
    %v6204 = vmul.u32 %v6197, %v6188
    %v6205 = vadd.s32 %v6200, %v6202
    %vm6206 = vc.u32 %v6200, %v6202
    %v6207 = vadd.s32 %v6203, 1
    %v6208 = vsel %vm6206, %v6207, %v6203
    %v6209 = vadd.s32 %v6204, %v6208
    %v6210 = vadd.s32 %v6209, 536870912
    %v6211 = vshrl.u32 %v6210, 30
    %v6212 = vshll.u32 %v6211, 30
    %v6213 = vsub.s32 %v6209, %v6212
    %vm6214 = vcmp.lt.s32.totalorder %v6213, 0
    %v6215 = vsub.s32 0, %v6213
    %v6216 = vsel %vm6214, %v6215, %v6213
    %v6217 = vclz %v6216
    %v6218 = vsub.s32 %v6217, 2
    %vm6219 = vcmp.gt.s32.totalorder 0, %v6218
    %v6220 = vsel %vm6219, 0, %v6218
    %v6221 = vsub.s32 32, %v6220
    %v6222 = vshll.u32 %v6213, %v6220
    %v6223 = vshrl.u32 %v6205, %v6221
    %v6224 = vor.u32 %v6222, %v6223
    %v6225 = vsub.s32 4294967266, %v6220
    %v6226 = vadd.s32 %v6225, 127
    %v6227 = vshll.u32 %v6226, 23
    %v6228 = vor.u32 4788187, %v6227
    %v6229 = vand.u32 2147483647, %v6228
    %v6231 = vcvt.s32.f32 %v6224
    %v6232 = vmul.f32 %v6231, %v6229
    %v6233 = vxor.u32 %v6232, 2147483648
    %v6234 = vsel %vm6151, %v6233, %v6232
    %v6235 = vsub.s32 4, %v6211
    %v6236 = vsel %vm6151, %v6235, %v6211
    %v6237 = vsel %vm6150, %v3851, %v6234
    %v6238 = vsel %vm6150, 0, %v6236
    %v6239 = vcosq.f32.pop %v6237
    %v6240 = vsinq.f32.pop %v6237
    %vm6241 = vweird.f32 %v3851
    %v6242 = vadd.s32 %v6238, 3
    %v6243 = vand.u32 %v6242, 3
    %vm6244 = vcmp.lt.s32.totalorder %v6243, 2
    %vm6245 = vcmp.eq.s32.totalorder %v6243, 0
    %v6246 = vxor.u32 %v6240, 2147483648
    %v6247 = vsel %vm6245, %v6239, %v6246
    %vm6248 = vcmp.eq.s32.totalorder %v6243, 2
    %v6249 = vxor.u32 %v6239, 2147483648
    %v6250 = vsel %vm6248, %v6249, %v6240
    %v6251 = vsel %vm6244, %v6247, %v6250
    %v6252 = vsel %vm6241, nan, %v6251
    %v6253 = vand.u32 2147483647, %v3852
    %vm6254 = vcmp.le.f32.partialorder %v6253, 0.7853982
    %vm6255 = vcmp.lt.s32.totalorder %v3852, 0
    %v6256 = vand.u32 %v3852, 2139095040
    %v6257 = vshrl.u32 %v6256, 23
    %v6258 = vsub.s32 %v6257, 127
    %v6259 = vand.u32 2147483647, %v3852
    %v6260 = vand.u32 %v6259, 8388607
    %v6261 = vor.u32 %v6260, 8388608
    %v6262 = vsub.s32 0, %v6261
    %v6263 = vadd.s32 %v6258, 1
    %vm6264 = vcmp.gt.s32.totalorder %v6263, 0
    %v6265 = vsel %vm6264, %v6263, 0
    %v6266 = vshrl.u32 %v6265, 5
    %v6267 = vand.u32 %v6265, 31
    %v6268 = vsub.s32 32, %v6267
    %v6269 = vshrl.u32 683565275, %v6268
    %v6270 = vshll.u32 683565275, %v6267
    %v6271 = vshrl.u32 2475754826, %v6268
    %v6272 = vor.u32 %v6270, %v6271
    %v6273 = vshll.u32 2475754826, %v6267
    %v6274 = vshrl.u32 2131351028, %v6268
    %v6275 = vor.u32 %v6273, %v6274
    %v6276 = vshll.u32 2131351028, %v6267
    %v6277 = vshrl.u32 2102212464, %v6268
    %v6278 = vor.u32 %v6276, %v6277
    %v6279 = vshll.u32 2102212464, %v6267
    %v6280 = vshrl.u32 920167782, %v6268
    %v6281 = vor.u32 %v6279, %v6280
    %v6282 = vshll.u32 920167782, %v6267
    %v6283 = vshrl.u32 1326507024, %v6268
    %v6284 = vor.u32 %v6282, %v6283
    %vm6285 = vcmp.lt.s32.totalorder %v6266, 1
    %vm6286 = vcmp.lt.s32.totalorder %v6266, 2
    %vm6287 = vcmp.lt.s32.totalorder %v6266, 3
    %vm6288 = vcmp.lt.s32.totalorder %v6266, 4
    %v6289 = vsel %vm6285, %v6269, %v6272
    %v6290 = vsel %vm6288, %v6278, 2102212464
    %v6291 = vsel %vm6287, %v6275, %v6290
    %v6292 = vsel %vm6286, %v6289, %v6291
    %v6293 = vsel %vm6285, %v6272, %v6275
    %v6294 = vsel %vm6288, %v6281, 920167782
    %v6295 = vsel %vm6287, %v6278, %v6294
    %v6296 = vsel %vm6286, %v6293, %v6295
    %v6297 = vsel %vm6285, %v6275, %v6278
    %v6298 = vsel %vm6288, %v6284, 1326507024
    %v6299 = vsel %vm6287, %v6281, %v6298
    %v6300 = vsel %vm6286, %v6297, %v6299
    %v6301 = vshll.u32 %v6261, 8
    %v6302 = vmul.u32.u64.compose %v6301, %v6300
    %v6303 = vextract.low.u32 %v6302
    %v6304 = vextract.high.u32 %v6302
    %v6305 = vmul.u32.u64.compose %v6301, %v6296
    %v6306 = vextract.low.u32 %v6305
    %v6307 = vextract.high.u32 %v6305
    %v6308 = vmul.u32 %v6301, %v6292
    %v6309 = vadd.s32 %v6304, %v6306
    %vm6310 = vc.u32 %v6304, %v6306
    %v6311 = vadd.s32 %v6307, 1
    %v6312 = vsel %vm6310, %v6311, %v6307
    %v6313 = vadd.s32 %v6308, %v6312
    %v6314 = vadd.s32 %v6313, 536870912
    %v6315 = vshrl.u32 %v6314, 30
    %v6316 = vshll.u32 %v6315, 30
    %v6317 = vsub.s32 %v6313, %v6316
    %vm6318 = vcmp.lt.s32.totalorder %v6317, 0
    %v6319 = vsub.s32 0, %v6317
    %v6320 = vsel %vm6318, %v6319, %v6317
    %v6321 = vclz %v6320
    %v6322 = vsub.s32 %v6321, 2
    %vm6323 = vcmp.gt.s32.totalorder 0, %v6322
    %v6324 = vsel %vm6323, 0, %v6322
    %v6325 = vsub.s32 32, %v6324
    %v6326 = vshll.u32 %v6317, %v6324
    %v6327 = vshrl.u32 %v6309, %v6325
    %v6328 = vor.u32 %v6326, %v6327
    %v6329 = vsub.s32 4294967266, %v6324
    %v6330 = vadd.s32 %v6329, 127
    %v6331 = vshll.u32 %v6330, 23
    %v6332 = vor.u32 4788187, %v6331
    %v6333 = vand.u32 2147483647, %v6332
    %v6335 = vcvt.s32.f32 %v6328
    %v6336 = vmul.f32 %v6335, %v6333
    %v6337 = vxor.u32 %v6336, 2147483648
    %v6338 = vsel %vm6255, %v6337, %v6336
    %v6339 = vsub.s32 4, %v6315
    %v6340 = vsel %vm6255, %v6339, %v6315
    %v6341 = vsel %vm6254, %v3852, %v6338
    %v6342 = vsel %vm6254, 0, %v6340
    %v6343 = vcosq.f32.pop %v6341
    %v6344 = vsinq.f32.pop %v6341
    %vm6345 = vweird.f32 %v3852
    %v6346 = vadd.s32 %v6342, 3
    %v6347 = vand.u32 %v6346, 3
    %vm6348 = vcmp.lt.s32.totalorder %v6347, 2
    %vm6349 = vcmp.eq.s32.totalorder %v6347, 0
    %v6350 = vxor.u32 %v6344, 2147483648
    %v6351 = vsel %vm6349, %v6343, %v6350
    %vm6352 = vcmp.eq.s32.totalorder %v6347, 2
    %v6353 = vxor.u32 %v6343, 2147483648
    %v6354 = vsel %vm6352, %v6353, %v6344
    %v6355 = vsel %vm6348, %v6351, %v6354
    %v6356 = vsel %vm6345, nan, %v6355
    %v6357 = vand.u32 2147483647, %v3853
    %vm6358 = vcmp.le.f32.partialorder %v6357, 0.7853982
    %vm6359 = vcmp.lt.s32.totalorder %v3853, 0
    %v6360 = vand.u32 %v3853, 2139095040
    %v6361 = vshrl.u32 %v6360, 23
    %v6362 = vsub.s32 %v6361, 127
    %v6363 = vand.u32 2147483647, %v3853
    %v6364 = vand.u32 %v6363, 8388607
    %v6365 = vor.u32 %v6364, 8388608
    %v6366 = vsub.s32 0, %v6365
    %v6367 = vadd.s32 %v6362, 1
    %vm6368 = vcmp.gt.s32.totalorder %v6367, 0
    %v6369 = vsel %vm6368, %v6367, 0
    %v6370 = vshrl.u32 %v6369, 5
    %v6371 = vand.u32 %v6369, 31
    %v6372 = vsub.s32 32, %v6371
    %v6373 = vshrl.u32 683565275, %v6372
    %v6374 = vshll.u32 683565275, %v6371
    %v6375 = vshrl.u32 2475754826, %v6372
    %v6376 = vor.u32 %v6374, %v6375
    %v6377 = vshll.u32 2475754826, %v6371
    %v6378 = vshrl.u32 2131351028, %v6372
    %v6379 = vor.u32 %v6377, %v6378
    %v6380 = vshll.u32 2131351028, %v6371
    %v6381 = vshrl.u32 2102212464, %v6372
    %v6382 = vor.u32 %v6380, %v6381
    %v6383 = vshll.u32 2102212464, %v6371
    %v6384 = vshrl.u32 920167782, %v6372
    %v6385 = vor.u32 %v6383, %v6384
    %v6386 = vshll.u32 920167782, %v6371
    %v6387 = vshrl.u32 1326507024, %v6372
    %v6388 = vor.u32 %v6386, %v6387
    %vm6389 = vcmp.lt.s32.totalorder %v6370, 1
    %vm6390 = vcmp.lt.s32.totalorder %v6370, 2
    %vm6391 = vcmp.lt.s32.totalorder %v6370, 3
    %vm6392 = vcmp.lt.s32.totalorder %v6370, 4
    %v6393 = vsel %vm6389, %v6373, %v6376
    %v6394 = vsel %vm6392, %v6382, 2102212464
    %v6395 = vsel %vm6391, %v6379, %v6394
    %v6396 = vsel %vm6390, %v6393, %v6395
    %v6397 = vsel %vm6389, %v6376, %v6379
    %v6398 = vsel %vm6392, %v6385, 920167782
    %v6399 = vsel %vm6391, %v6382, %v6398
    %v6400 = vsel %vm6390, %v6397, %v6399
    %v6401 = vsel %vm6389, %v6379, %v6382
    %v6402 = vsel %vm6392, %v6388, 1326507024
    %v6403 = vsel %vm6391, %v6385, %v6402
    %v6404 = vsel %vm6390, %v6401, %v6403
    %v6405 = vshll.u32 %v6365, 8
    %v6406 = vmul.u32.u64.compose %v6405, %v6404
    %v6407 = vextract.low.u32 %v6406
    %v6408 = vextract.high.u32 %v6406
    %v6409 = vmul.u32.u64.compose %v6405, %v6400
    %v6410 = vextract.low.u32 %v6409
    %v6411 = vextract.high.u32 %v6409
    %v6412 = vmul.u32 %v6405, %v6396
    %v6413 = vadd.s32 %v6408, %v6410
    %vm6414 = vc.u32 %v6408, %v6410
    %v6415 = vadd.s32 %v6411, 1
    %v6416 = vsel %vm6414, %v6415, %v6411
    %v6417 = vadd.s32 %v6412, %v6416
    %v6418 = vadd.s32 %v6417, 536870912
    %v6419 = vshrl.u32 %v6418, 30
    %v6420 = vshll.u32 %v6419, 30
    %v6421 = vsub.s32 %v6417, %v6420
    %vm6422 = vcmp.lt.s32.totalorder %v6421, 0
    %v6423 = vsub.s32 0, %v6421
    %v6424 = vsel %vm6422, %v6423, %v6421
    %v6425 = vclz %v6424
    %v6426 = vsub.s32 %v6425, 2
    %vm6427 = vcmp.gt.s32.totalorder 0, %v6426
    %v6428 = vsel %vm6427, 0, %v6426
    %v6429 = vsub.s32 32, %v6428
    %v6430 = vshll.u32 %v6421, %v6428
    %v6431 = vshrl.u32 %v6413, %v6429
    %v6432 = vor.u32 %v6430, %v6431
    %v6433 = vsub.s32 4294967266, %v6428
    %v6434 = vadd.s32 %v6433, 127
    %v6435 = vshll.u32 %v6434, 23
    %v6436 = vor.u32 4788187, %v6435
    %v6437 = vand.u32 2147483647, %v6436
    %v6439 = vcvt.s32.f32 %v6432
    %v6440 = vmul.f32 %v6439, %v6437
    %v6441 = vxor.u32 %v6440, 2147483648
    %v6442 = vsel %vm6359, %v6441, %v6440
    %v6443 = vsub.s32 4, %v6419
    %v6444 = vsel %vm6359, %v6443, %v6419
    %v6445 = vsel %vm6358, %v3853, %v6442
    %v6446 = vsel %vm6358, 0, %v6444
    %v6447 = vcosq.f32.pop %v6445
    %v6448 = vsinq.f32.pop %v6445
    %vm6449 = vweird.f32 %v3853
    %v6450 = vadd.s32 %v6446, 3
    %v6451 = vand.u32 %v6450, 3
    %vm6452 = vcmp.lt.s32.totalorder %v6451, 2
    %vm6453 = vcmp.eq.s32.totalorder %v6451, 0
    %v6454 = vxor.u32 %v6448, 2147483648
    %v6455 = vsel %vm6453, %v6447, %v6454
    %vm6456 = vcmp.eq.s32.totalorder %v6451, 2
    %v6457 = vxor.u32 %v6447, 2147483648
    %v6458 = vsel %vm6456, %v6457, %v6448
    %v6459 = vsel %vm6452, %v6455, %v6458
    %v6460 = vsel %vm6449, nan, %v6459
    %v6461 = vand.u32 2147483647, %v3854
    %vm6462 = vcmp.le.f32.partialorder %v6461, 0.7853982
    %vm6463 = vcmp.lt.s32.totalorder %v3854, 0
    %v6464 = vand.u32 %v3854, 2139095040
    %v6465 = vshrl.u32 %v6464, 23
    %v6466 = vsub.s32 %v6465, 127
    %v6467 = vand.u32 2147483647, %v3854
    %v6468 = vand.u32 %v6467, 8388607
    %v6469 = vor.u32 %v6468, 8388608
    %v6470 = vsub.s32 0, %v6469
    %v6471 = vadd.s32 %v6466, 1
    %vm6472 = vcmp.gt.s32.totalorder %v6471, 0
    %v6473 = vsel %vm6472, %v6471, 0
    %v6474 = vshrl.u32 %v6473, 5
    %v6475 = vand.u32 %v6473, 31
    %v6476 = vsub.s32 32, %v6475
    %v6477 = vshrl.u32 683565275, %v6476
    %v6478 = vshll.u32 683565275, %v6475
    %v6479 = vshrl.u32 2475754826, %v6476
    %v6480 = vor.u32 %v6478, %v6479
    %v6481 = vshll.u32 2475754826, %v6475
    %v6482 = vshrl.u32 2131351028, %v6476
    %v6483 = vor.u32 %v6481, %v6482
    %v6484 = vshll.u32 2131351028, %v6475
    %v6485 = vshrl.u32 2102212464, %v6476
    %v6486 = vor.u32 %v6484, %v6485
    %v6487 = vshll.u32 2102212464, %v6475
    %v6488 = vshrl.u32 920167782, %v6476
    %v6489 = vor.u32 %v6487, %v6488
    %v6490 = vshll.u32 920167782, %v6475
    %v6491 = vshrl.u32 1326507024, %v6476
    %v6492 = vor.u32 %v6490, %v6491
    %vm6493 = vcmp.lt.s32.totalorder %v6474, 1
    %vm6494 = vcmp.lt.s32.totalorder %v6474, 2
    %vm6495 = vcmp.lt.s32.totalorder %v6474, 3
    %vm6496 = vcmp.lt.s32.totalorder %v6474, 4
    %v6497 = vsel %vm6493, %v6477, %v6480
    %v6498 = vsel %vm6496, %v6486, 2102212464
    %v6499 = vsel %vm6495, %v6483, %v6498
    %v6500 = vsel %vm6494, %v6497, %v6499
    %v6501 = vsel %vm6493, %v6480, %v6483
    %v6502 = vsel %vm6496, %v6489, 920167782
    %v6503 = vsel %vm6495, %v6486, %v6502
    %v6504 = vsel %vm6494, %v6501, %v6503
    %v6505 = vsel %vm6493, %v6483, %v6486
    %v6506 = vsel %vm6496, %v6492, 1326507024
    %v6507 = vsel %vm6495, %v6489, %v6506
    %v6508 = vsel %vm6494, %v6505, %v6507
    %v6509 = vshll.u32 %v6469, 8
    %v6510 = vmul.u32.u64.compose %v6509, %v6508
    %v6511 = vextract.low.u32 %v6510
    %v6512 = vextract.high.u32 %v6510
    %v6513 = vmul.u32.u64.compose %v6509, %v6504
    %v6514 = vextract.low.u32 %v6513
    %v6515 = vextract.high.u32 %v6513
    %v6516 = vmul.u32 %v6509, %v6500
    %v6517 = vadd.s32 %v6512, %v6514
    %vm6518 = vc.u32 %v6512, %v6514
    %v6519 = vadd.s32 %v6515, 1
    %v6520 = vsel %vm6518, %v6519, %v6515
    %v6521 = vadd.s32 %v6516, %v6520
    %v6522 = vadd.s32 %v6521, 536870912
    %v6523 = vshrl.u32 %v6522, 30
    %v6524 = vshll.u32 %v6523, 30
    %v6525 = vsub.s32 %v6521, %v6524
    %vm6526 = vcmp.lt.s32.totalorder %v6525, 0
    %v6527 = vsub.s32 0, %v6525
    %v6528 = vsel %vm6526, %v6527, %v6525
    %v6529 = vclz %v6528
    %v6530 = vsub.s32 %v6529, 2
    %vm6531 = vcmp.gt.s32.totalorder 0, %v6530
    %v6532 = vsel %vm6531, 0, %v6530
    %v6533 = vsub.s32 32, %v6532
    %v6534 = vshll.u32 %v6525, %v6532
    %v6535 = vshrl.u32 %v6517, %v6533
    %v6536 = vor.u32 %v6534, %v6535
    %v6537 = vsub.s32 4294967266, %v6532
    %v6538 = vadd.s32 %v6537, 127
    %v6539 = vshll.u32 %v6538, 23
    %v6540 = vor.u32 4788187, %v6539
    %v6541 = vand.u32 2147483647, %v6540
    %v6543 = vcvt.s32.f32 %v6536
    %v6544 = vmul.f32 %v6543, %v6541
    %v6545 = vxor.u32 %v6544, 2147483648
    %v6546 = vsel %vm6463, %v6545, %v6544
    %v6547 = vsub.s32 4, %v6523
    %v6548 = vsel %vm6463, %v6547, %v6523
    %v6549 = vsel %vm6462, %v3854, %v6546
    %v6550 = vsel %vm6462, 0, %v6548
    %v6551 = vcosq.f32.pop %v6549
    %v6552 = vsinq.f32.pop %v6549
    %vm6553 = vweird.f32 %v3854
    %v6554 = vadd.s32 %v6550, 3
    %v6555 = vand.u32 %v6554, 3
    %vm6556 = vcmp.lt.s32.totalorder %v6555, 2
    %vm6557 = vcmp.eq.s32.totalorder %v6555, 0
    %v6558 = vxor.u32 %v6552, 2147483648
    %v6559 = vsel %vm6557, %v6551, %v6558
    %vm6560 = vcmp.eq.s32.totalorder %v6555, 2
    %v6561 = vxor.u32 %v6551, 2147483648
    %v6562 = vsel %vm6560, %v6561, %v6552
    %v6563 = vsel %vm6556, %v6559, %v6562
    %v6564 = vsel %vm6553, nan, %v6563
    %v6565 = vand.u32 2147483647, %v3855
    %vm6566 = vcmp.le.f32.partialorder %v6565, 0.7853982
    %vm6567 = vcmp.lt.s32.totalorder %v3855, 0
    %v6568 = vand.u32 %v3855, 2139095040
    %v6569 = vshrl.u32 %v6568, 23
    %v6570 = vsub.s32 %v6569, 127
    %v6571 = vand.u32 2147483647, %v3855
    %v6572 = vand.u32 %v6571, 8388607
    %v6573 = vor.u32 %v6572, 8388608
    %v6574 = vsub.s32 0, %v6573
    %v6575 = vadd.s32 %v6570, 1
    %vm6576 = vcmp.gt.s32.totalorder %v6575, 0
    %v6577 = vsel %vm6576, %v6575, 0
    %v6578 = vshrl.u32 %v6577, 5
    %v6579 = vand.u32 %v6577, 31
    %v6580 = vsub.s32 32, %v6579
    %v6581 = vshrl.u32 683565275, %v6580
    %v6582 = vshll.u32 683565275, %v6579
    %v6583 = vshrl.u32 2475754826, %v6580
    %v6584 = vor.u32 %v6582, %v6583
    %v6585 = vshll.u32 2475754826, %v6579
    %v6586 = vshrl.u32 2131351028, %v6580
    %v6587 = vor.u32 %v6585, %v6586
    %v6588 = vshll.u32 2131351028, %v6579
    %v6589 = vshrl.u32 2102212464, %v6580
    %v6590 = vor.u32 %v6588, %v6589
    %v6591 = vshll.u32 2102212464, %v6579
    %v6592 = vshrl.u32 920167782, %v6580
    %v6593 = vor.u32 %v6591, %v6592
    %v6594 = vshll.u32 920167782, %v6579
    %v6595 = vshrl.u32 1326507024, %v6580
    %v6596 = vor.u32 %v6594, %v6595
    %vm6597 = vcmp.lt.s32.totalorder %v6578, 1
    %vm6598 = vcmp.lt.s32.totalorder %v6578, 2
    %vm6599 = vcmp.lt.s32.totalorder %v6578, 3
    %vm6600 = vcmp.lt.s32.totalorder %v6578, 4
    %v6601 = vsel %vm6597, %v6581, %v6584
    %v6602 = vsel %vm6600, %v6590, 2102212464
    %v6603 = vsel %vm6599, %v6587, %v6602
    %v6604 = vsel %vm6598, %v6601, %v6603
    %v6605 = vsel %vm6597, %v6584, %v6587
    %v6606 = vsel %vm6600, %v6593, 920167782
    %v6607 = vsel %vm6599, %v6590, %v6606
    %v6608 = vsel %vm6598, %v6605, %v6607
    %v6609 = vsel %vm6597, %v6587, %v6590
    %v6610 = vsel %vm6600, %v6596, 1326507024
    %v6611 = vsel %vm6599, %v6593, %v6610
    %v6612 = vsel %vm6598, %v6609, %v6611
    %v6613 = vshll.u32 %v6573, 8
    %v6614 = vmul.u32.u64.compose %v6613, %v6612
    %v6615 = vextract.low.u32 %v6614
    %v6616 = vextract.high.u32 %v6614
    %v6617 = vmul.u32.u64.compose %v6613, %v6608
    %v6618 = vextract.low.u32 %v6617
    %v6619 = vextract.high.u32 %v6617
    %v6620 = vmul.u32 %v6613, %v6604
    %v6621 = vadd.s32 %v6616, %v6618
    %vm6622 = vc.u32 %v6616, %v6618
    %v6623 = vadd.s32 %v6619, 1
    %v6624 = vsel %vm6622, %v6623, %v6619
    %v6625 = vadd.s32 %v6620, %v6624
    %v6626 = vadd.s32 %v6625, 536870912
    %v6627 = vshrl.u32 %v6626, 30
    %v6628 = vshll.u32 %v6627, 30
    %v6629 = vsub.s32 %v6625, %v6628
    %vm6630 = vcmp.lt.s32.totalorder %v6629, 0
    %v6631 = vsub.s32 0, %v6629
    %v6632 = vsel %vm6630, %v6631, %v6629
    %v6633 = vclz %v6632
    %v6634 = vsub.s32 %v6633, 2
    %vm6635 = vcmp.gt.s32.totalorder 0, %v6634
    %v6636 = vsel %vm6635, 0, %v6634
    %v6637 = vsub.s32 32, %v6636
    %v6638 = vshll.u32 %v6629, %v6636
    %v6639 = vshrl.u32 %v6621, %v6637
    %v6640 = vor.u32 %v6638, %v6639
    %v6641 = vsub.s32 4294967266, %v6636
    %v6642 = vadd.s32 %v6641, 127
    %v6643 = vshll.u32 %v6642, 23
    %v6644 = vor.u32 4788187, %v6643
    %v6645 = vand.u32 2147483647, %v6644
    %v6647 = vcvt.s32.f32 %v6640
    %v6648 = vmul.f32 %v6647, %v6645
    %v6649 = vxor.u32 %v6648, 2147483648
    %v6650 = vsel %vm6567, %v6649, %v6648
    %v6651 = vsub.s32 4, %v6627
    %v6652 = vsel %vm6567, %v6651, %v6627
    %v6653 = vsel %vm6566, %v3855, %v6650
    %v6654 = vsel %vm6566, 0, %v6652
    %v6655 = vcosq.f32.pop %v6653
    %v6656 = vsinq.f32.pop %v6653
    %vm6657 = vweird.f32 %v3855
    %v6658 = vadd.s32 %v6654, 3
    %v6659 = vand.u32 %v6658, 3
    %vm6660 = vcmp.lt.s32.totalorder %v6659, 2
    %vm6661 = vcmp.eq.s32.totalorder %v6659, 0
    %v6662 = vxor.u32 %v6656, 2147483648
    %v6663 = vsel %vm6661, %v6655, %v6662
    %vm6664 = vcmp.eq.s32.totalorder %v6659, 2
    %v6665 = vxor.u32 %v6655, 2147483648
    %v6666 = vsel %vm6664, %v6665, %v6656
    %v6667 = vsel %vm6660, %v6663, %v6666
    %v6668 = vsel %vm6657, nan, %v6667
    %v6669 = vand.u32 2147483647, %v3856
    %vm6670 = vcmp.le.f32.partialorder %v6669, 0.7853982
    %vm6671 = vcmp.lt.s32.totalorder %v3856, 0
    %v6672 = vand.u32 %v3856, 2139095040
    %v6673 = vshrl.u32 %v6672, 23
    %v6674 = vsub.s32 %v6673, 127
    %v6675 = vand.u32 2147483647, %v3856
    %v6676 = vand.u32 %v6675, 8388607
    %v6677 = vor.u32 %v6676, 8388608
    %v6678 = vsub.s32 0, %v6677
    %v6679 = vadd.s32 %v6674, 1
    %vm6680 = vcmp.gt.s32.totalorder %v6679, 0
    %v6681 = vsel %vm6680, %v6679, 0
    %v6682 = vshrl.u32 %v6681, 5
    %v6683 = vand.u32 %v6681, 31
    %v6684 = vsub.s32 32, %v6683
    %v6685 = vshrl.u32 683565275, %v6684
    %v6686 = vshll.u32 683565275, %v6683
    %v6687 = vshrl.u32 2475754826, %v6684
    %v6688 = vor.u32 %v6686, %v6687
    %v6689 = vshll.u32 2475754826, %v6683
    %v6690 = vshrl.u32 2131351028, %v6684
    %v6691 = vor.u32 %v6689, %v6690
    %v6692 = vshll.u32 2131351028, %v6683
    %v6693 = vshrl.u32 2102212464, %v6684
    %v6694 = vor.u32 %v6692, %v6693
    %v6695 = vshll.u32 2102212464, %v6683
    %v6696 = vshrl.u32 920167782, %v6684
    %v6697 = vor.u32 %v6695, %v6696
    %v6698 = vshll.u32 920167782, %v6683
    %v6699 = vshrl.u32 1326507024, %v6684
    %v6700 = vor.u32 %v6698, %v6699
    %vm6701 = vcmp.lt.s32.totalorder %v6682, 1
    %vm6702 = vcmp.lt.s32.totalorder %v6682, 2
    %vm6703 = vcmp.lt.s32.totalorder %v6682, 3
    %vm6704 = vcmp.lt.s32.totalorder %v6682, 4
    %v6705 = vsel %vm6701, %v6685, %v6688
    %v6706 = vsel %vm6704, %v6694, 2102212464
    %v6707 = vsel %vm6703, %v6691, %v6706
    %v6708 = vsel %vm6702, %v6705, %v6707
    %v6709 = vsel %vm6701, %v6688, %v6691
    %v6710 = vsel %vm6704, %v6697, 920167782
    %v6711 = vsel %vm6703, %v6694, %v6710
    %v6712 = vsel %vm6702, %v6709, %v6711
    %v6713 = vsel %vm6701, %v6691, %v6694
    %v6714 = vsel %vm6704, %v6700, 1326507024
    %v6715 = vsel %vm6703, %v6697, %v6714
    %v6716 = vsel %vm6702, %v6713, %v6715
    %v6717 = vshll.u32 %v6677, 8
    %v6718 = vmul.u32.u64.compose %v6717, %v6716
    %v6719 = vextract.low.u32 %v6718
    %v6720 = vextract.high.u32 %v6718
    %v6721 = vmul.u32.u64.compose %v6717, %v6712
    %v6722 = vextract.low.u32 %v6721
    %v6723 = vextract.high.u32 %v6721
    %v6724 = vmul.u32 %v6717, %v6708
    %v6725 = vadd.s32 %v6720, %v6722
    %vm6726 = vc.u32 %v6720, %v6722
    %v6727 = vadd.s32 %v6723, 1
    %v6728 = vsel %vm6726, %v6727, %v6723
    %v6729 = vadd.s32 %v6724, %v6728
    %v6730 = vadd.s32 %v6729, 536870912
    %v6731 = vshrl.u32 %v6730, 30
    %v6732 = vshll.u32 %v6731, 30
    %v6733 = vsub.s32 %v6729, %v6732
    %vm6734 = vcmp.lt.s32.totalorder %v6733, 0
    %v6735 = vsub.s32 0, %v6733
    %v6736 = vsel %vm6734, %v6735, %v6733
    %v6737 = vclz %v6736
    %v6738 = vsub.s32 %v6737, 2
    %vm6739 = vcmp.gt.s32.totalorder 0, %v6738
    %v6740 = vsel %vm6739, 0, %v6738
    %v6741 = vsub.s32 32, %v6740
    %v6742 = vshll.u32 %v6733, %v6740
    %v6743 = vshrl.u32 %v6725, %v6741
    %v6744 = vor.u32 %v6742, %v6743
    %v6745 = vsub.s32 4294967266, %v6740
    %v6746 = vadd.s32 %v6745, 127
    %v6747 = vshll.u32 %v6746, 23
    %v6748 = vor.u32 4788187, %v6747
    %v6749 = vand.u32 2147483647, %v6748
    %v6751 = vcvt.s32.f32 %v6744
    %v6752 = vmul.f32 %v6751, %v6749
    %v6753 = vxor.u32 %v6752, 2147483648
    %v6754 = vsel %vm6671, %v6753, %v6752
    %v6755 = vsub.s32 4, %v6731
    %v6756 = vsel %vm6671, %v6755, %v6731
    %v6757 = vsel %vm6670, %v3856, %v6754
    %v6758 = vsel %vm6670, 0, %v6756
    %v6759 = vcosq.f32.pop %v6757
    %v6760 = vsinq.f32.pop %v6757
    %vm6761 = vweird.f32 %v3856
    %v6762 = vadd.s32 %v6758, 3
    %v6763 = vand.u32 %v6762, 3
    %vm6764 = vcmp.lt.s32.totalorder %v6763, 2
    %vm6765 = vcmp.eq.s32.totalorder %v6763, 0
    %v6766 = vxor.u32 %v6760, 2147483648
    %v6767 = vsel %vm6765, %v6759, %v6766
    %vm6768 = vcmp.eq.s32.totalorder %v6763, 2
    %v6769 = vxor.u32 %v6759, 2147483648
    %v6770 = vsel %vm6768, %v6769, %v6760
    %v6771 = vsel %vm6764, %v6767, %v6770
    %v6772 = vsel %vm6761, nan, %v6771
    %v6773 = vand.u32 2147483647, %v3857
    %vm6774 = vcmp.le.f32.partialorder %v6773, 0.7853982
    %vm6775 = vcmp.lt.s32.totalorder %v3857, 0
    %v6776 = vand.u32 %v3857, 2139095040
    %v6777 = vshrl.u32 %v6776, 23
    %v6778 = vsub.s32 %v6777, 127
    %v6779 = vand.u32 2147483647, %v3857
    %v6780 = vand.u32 %v6779, 8388607
    %v6781 = vor.u32 %v6780, 8388608
    %v6782 = vsub.s32 0, %v6781
    %v6783 = vadd.s32 %v6778, 1
    %vm6784 = vcmp.gt.s32.totalorder %v6783, 0
    %v6785 = vsel %vm6784, %v6783, 0
    %v6786 = vshrl.u32 %v6785, 5
    %v6787 = vand.u32 %v6785, 31
    %v6788 = vsub.s32 32, %v6787
    %v6789 = vshrl.u32 683565275, %v6788
    %v6790 = vshll.u32 683565275, %v6787
    %v6791 = vshrl.u32 2475754826, %v6788
    %v6792 = vor.u32 %v6790, %v6791
    %v6793 = vshll.u32 2475754826, %v6787
    %v6794 = vshrl.u32 2131351028, %v6788
    %v6795 = vor.u32 %v6793, %v6794
    %v6796 = vshll.u32 2131351028, %v6787
    %v6797 = vshrl.u32 2102212464, %v6788
    %v6798 = vor.u32 %v6796, %v6797
    %v6799 = vshll.u32 2102212464, %v6787
    %v6800 = vshrl.u32 920167782, %v6788
    %v6801 = vor.u32 %v6799, %v6800
    %v6802 = vshll.u32 920167782, %v6787
    %v6803 = vshrl.u32 1326507024, %v6788
    %v6804 = vor.u32 %v6802, %v6803
    %vm6805 = vcmp.lt.s32.totalorder %v6786, 1
    %vm6806 = vcmp.lt.s32.totalorder %v6786, 2
    %vm6807 = vcmp.lt.s32.totalorder %v6786, 3
    %vm6808 = vcmp.lt.s32.totalorder %v6786, 4
    %v6809 = vsel %vm6805, %v6789, %v6792
    %v6810 = vsel %vm6808, %v6798, 2102212464
    %v6811 = vsel %vm6807, %v6795, %v6810
    %v6812 = vsel %vm6806, %v6809, %v6811
    %v6813 = vsel %vm6805, %v6792, %v6795
    %v6814 = vsel %vm6808, %v6801, 920167782
    %v6815 = vsel %vm6807, %v6798, %v6814
    %v6816 = vsel %vm6806, %v6813, %v6815
    %v6817 = vsel %vm6805, %v6795, %v6798
    %v6818 = vsel %vm6808, %v6804, 1326507024
    %v6819 = vsel %vm6807, %v6801, %v6818
    %v6820 = vsel %vm6806, %v6817, %v6819
    %v6821 = vshll.u32 %v6781, 8
    %v6822 = vmul.u32.u64.compose %v6821, %v6820
    %v6823 = vextract.low.u32 %v6822
    %v6824 = vextract.high.u32 %v6822
    %v6825 = vmul.u32.u64.compose %v6821, %v6816
    %v6826 = vextract.low.u32 %v6825
    %v6827 = vextract.high.u32 %v6825
    %v6828 = vmul.u32 %v6821, %v6812
    %v6829 = vadd.s32 %v6824, %v6826
    %vm6830 = vc.u32 %v6824, %v6826
    %v6831 = vadd.s32 %v6827, 1
    %v6832 = vsel %vm6830, %v6831, %v6827
    %v6833 = vadd.s32 %v6828, %v6832
    %v6834 = vadd.s32 %v6833, 536870912
    %v6835 = vshrl.u32 %v6834, 30
    %v6836 = vshll.u32 %v6835, 30
    %v6837 = vsub.s32 %v6833, %v6836
    %vm6838 = vcmp.lt.s32.totalorder %v6837, 0
    %v6839 = vsub.s32 0, %v6837
    %v6840 = vsel %vm6838, %v6839, %v6837
    %v6841 = vclz %v6840
    %v6842 = vsub.s32 %v6841, 2
    %vm6843 = vcmp.gt.s32.totalorder 0, %v6842
    %v6844 = vsel %vm6843, 0, %v6842
    %v6845 = vsub.s32 32, %v6844
    %v6846 = vshll.u32 %v6837, %v6844
    %v6847 = vshrl.u32 %v6829, %v6845
    %v6848 = vor.u32 %v6846, %v6847
    %v6849 = vsub.s32 4294967266, %v6844
    %v6850 = vadd.s32 %v6849, 127
    %v6851 = vshll.u32 %v6850, 23
    %v6852 = vor.u32 4788187, %v6851
    %v6853 = vand.u32 2147483647, %v6852
    %v6855 = vcvt.s32.f32 %v6848
    %v6856 = vmul.f32 %v6855, %v6853
    %v6857 = vxor.u32 %v6856, 2147483648
    %v6858 = vsel %vm6775, %v6857, %v6856
    %v6859 = vsub.s32 4, %v6835
    %v6860 = vsel %vm6775, %v6859, %v6835
    %v6861 = vsel %vm6774, %v3857, %v6858
    %v6862 = vsel %vm6774, 0, %v6860
    %v6863 = vcosq.f32.pop %v6861
    %v6864 = vsinq.f32.pop %v6861
    %vm6865 = vweird.f32 %v3857
    %v6866 = vadd.s32 %v6862, 3
    %v6867 = vand.u32 %v6866, 3
    %vm6868 = vcmp.lt.s32.totalorder %v6867, 2
    %vm6869 = vcmp.eq.s32.totalorder %v6867, 0
    %v6870 = vxor.u32 %v6864, 2147483648
    %v6871 = vsel %vm6869, %v6863, %v6870
    %vm6872 = vcmp.eq.s32.totalorder %v6867, 2
    %v6873 = vxor.u32 %v6863, 2147483648
    %v6874 = vsel %vm6872, %v6873, %v6864
    %v6875 = vsel %vm6868, %v6871, %v6874
    %v6876 = vsel %vm6865, nan, %v6875
    %v6877 = vand.u32 2147483647, %v3858
    %vm6878 = vcmp.le.f32.partialorder %v6877, 0.7853982
    %vm6879 = vcmp.lt.s32.totalorder %v3858, 0
    %v6880 = vand.u32 %v3858, 2139095040
    %v6881 = vshrl.u32 %v6880, 23
    %v6882 = vsub.s32 %v6881, 127
    %v6883 = vand.u32 2147483647, %v3858
    %v6884 = vand.u32 %v6883, 8388607
    %v6885 = vor.u32 %v6884, 8388608
    %v6886 = vsub.s32 0, %v6885
    %v6887 = vadd.s32 %v6882, 1
    %vm6888 = vcmp.gt.s32.totalorder %v6887, 0
    %v6889 = vsel %vm6888, %v6887, 0
    %v6890 = vshrl.u32 %v6889, 5
    %v6891 = vand.u32 %v6889, 31
    %v6892 = vsub.s32 32, %v6891
    %v6893 = vshrl.u32 683565275, %v6892
    %v6894 = vshll.u32 683565275, %v6891
    %v6895 = vshrl.u32 2475754826, %v6892
    %v6896 = vor.u32 %v6894, %v6895
    %v6897 = vshll.u32 2475754826, %v6891
    %v6898 = vshrl.u32 2131351028, %v6892
    %v6899 = vor.u32 %v6897, %v6898
    %v6900 = vshll.u32 2131351028, %v6891
    %v6901 = vshrl.u32 2102212464, %v6892
    %v6902 = vor.u32 %v6900, %v6901
    %v6903 = vshll.u32 2102212464, %v6891
    %v6904 = vshrl.u32 920167782, %v6892
    %v6905 = vor.u32 %v6903, %v6904
    %v6906 = vshll.u32 920167782, %v6891
    %v6907 = vshrl.u32 1326507024, %v6892
    %v6908 = vor.u32 %v6906, %v6907
    %vm6909 = vcmp.lt.s32.totalorder %v6890, 1
    %vm6910 = vcmp.lt.s32.totalorder %v6890, 2
    %vm6911 = vcmp.lt.s32.totalorder %v6890, 3
    %vm6912 = vcmp.lt.s32.totalorder %v6890, 4
    %v6913 = vsel %vm6909, %v6893, %v6896
    %v6914 = vsel %vm6912, %v6902, 2102212464
    %v6915 = vsel %vm6911, %v6899, %v6914
    %v6916 = vsel %vm6910, %v6913, %v6915
    %v6917 = vsel %vm6909, %v6896, %v6899
    %v6918 = vsel %vm6912, %v6905, 920167782
    %v6919 = vsel %vm6911, %v6902, %v6918
    %v6920 = vsel %vm6910, %v6917, %v6919
    %v6921 = vsel %vm6909, %v6899, %v6902
    %v6922 = vsel %vm6912, %v6908, 1326507024
    %v6923 = vsel %vm6911, %v6905, %v6922
    %v6924 = vsel %vm6910, %v6921, %v6923
    %v6925 = vshll.u32 %v6885, 8
    %v6926 = vmul.u32.u64.compose %v6925, %v6924
    %v6927 = vextract.low.u32 %v6926
    %v6928 = vextract.high.u32 %v6926
    %v6929 = vmul.u32.u64.compose %v6925, %v6920
    %v6930 = vextract.low.u32 %v6929
    %v6931 = vextract.high.u32 %v6929
    %v6932 = vmul.u32 %v6925, %v6916
    %v6933 = vadd.s32 %v6928, %v6930
    %vm6934 = vc.u32 %v6928, %v6930
    %v6935 = vadd.s32 %v6931, 1
    %v6936 = vsel %vm6934, %v6935, %v6931
    %v6937 = vadd.s32 %v6932, %v6936
    %v6938 = vadd.s32 %v6937, 536870912
    %v6939 = vshrl.u32 %v6938, 30
    %v6940 = vshll.u32 %v6939, 30
    %v6941 = vsub.s32 %v6937, %v6940
    %vm6942 = vcmp.lt.s32.totalorder %v6941, 0
    %v6943 = vsub.s32 0, %v6941
    %v6944 = vsel %vm6942, %v6943, %v6941
    %v6945 = vclz %v6944
    %v6946 = vsub.s32 %v6945, 2
    %vm6947 = vcmp.gt.s32.totalorder 0, %v6946
    %v6948 = vsel %vm6947, 0, %v6946
    %v6949 = vsub.s32 32, %v6948
    %v6950 = vshll.u32 %v6941, %v6948
    %v6951 = vshrl.u32 %v6933, %v6949
    %v6952 = vor.u32 %v6950, %v6951
    %v6953 = vsub.s32 4294967266, %v6948
    %v6954 = vadd.s32 %v6953, 127
    %v6955 = vshll.u32 %v6954, 23
    %v6956 = vor.u32 4788187, %v6955
    %v6957 = vand.u32 2147483647, %v6956
    %v6959 = vcvt.s32.f32 %v6952
    %v6960 = vmul.f32 %v6959, %v6957
    %v6961 = vxor.u32 %v6960, 2147483648
    %v6962 = vsel %vm6879, %v6961, %v6960
    %v6963 = vsub.s32 4, %v6939
    %v6964 = vsel %vm6879, %v6963, %v6939
    %v6965 = vsel %vm6878, %v3858, %v6962
    %v6966 = vsel %vm6878, 0, %v6964
    %v6967 = vcosq.f32.pop %v6965
    %v6968 = vsinq.f32.pop %v6965
    %vm6969 = vweird.f32 %v3858
    %v6970 = vadd.s32 %v6966, 3
    %v6971 = vand.u32 %v6970, 3
    %vm6972 = vcmp.lt.s32.totalorder %v6971, 2
    %vm6973 = vcmp.eq.s32.totalorder %v6971, 0
    %v6974 = vxor.u32 %v6968, 2147483648
    %v6975 = vsel %vm6973, %v6967, %v6974
    %vm6976 = vcmp.eq.s32.totalorder %v6971, 2
    %v6977 = vxor.u32 %v6967, 2147483648
    %v6978 = vsel %vm6976, %v6977, %v6968
    %v6979 = vsel %vm6972, %v6975, %v6978
    %v6980 = vsel %vm6969, nan, %v6979
    %v6981 = vand.u32 2147483647, %v3859
    %vm6982 = vcmp.le.f32.partialorder %v6981, 0.7853982
    %vm6983 = vcmp.lt.s32.totalorder %v3859, 0
    %v6984 = vand.u32 %v3859, 2139095040
    %v6985 = vshrl.u32 %v6984, 23
    %v6986 = vsub.s32 %v6985, 127
    %v6987 = vand.u32 2147483647, %v3859
    %v6988 = vand.u32 %v6987, 8388607
    %v6989 = vor.u32 %v6988, 8388608
    %v6990 = vsub.s32 0, %v6989
    %v6991 = vadd.s32 %v6986, 1
    %vm6992 = vcmp.gt.s32.totalorder %v6991, 0
    %v6993 = vsel %vm6992, %v6991, 0
    %v6994 = vshrl.u32 %v6993, 5
    %v6995 = vand.u32 %v6993, 31
    %v6996 = vsub.s32 32, %v6995
    %v6997 = vshrl.u32 683565275, %v6996
    %v6998 = vshll.u32 683565275, %v6995
    %v6999 = vshrl.u32 2475754826, %v6996
    %v7000 = vor.u32 %v6998, %v6999
    %v7001 = vshll.u32 2475754826, %v6995
    %v7002 = vshrl.u32 2131351028, %v6996
    %v7003 = vor.u32 %v7001, %v7002
    %v7004 = vshll.u32 2131351028, %v6995
    %v7005 = vshrl.u32 2102212464, %v6996
    %v7006 = vor.u32 %v7004, %v7005
    %v7007 = vshll.u32 2102212464, %v6995
    %v7008 = vshrl.u32 920167782, %v6996
    %v7009 = vor.u32 %v7007, %v7008
    %v7010 = vshll.u32 920167782, %v6995
    %v7011 = vshrl.u32 1326507024, %v6996
    %v7012 = vor.u32 %v7010, %v7011
    %vm7013 = vcmp.lt.s32.totalorder %v6994, 1
    %vm7014 = vcmp.lt.s32.totalorder %v6994, 2
    %vm7015 = vcmp.lt.s32.totalorder %v6994, 3
    %vm7016 = vcmp.lt.s32.totalorder %v6994, 4
    %v7017 = vsel %vm7013, %v6997, %v7000
    %v7018 = vsel %vm7016, %v7006, 2102212464
    %v7019 = vsel %vm7015, %v7003, %v7018
    %v7020 = vsel %vm7014, %v7017, %v7019
    %v7021 = vsel %vm7013, %v7000, %v7003
    %v7022 = vsel %vm7016, %v7009, 920167782
    %v7023 = vsel %vm7015, %v7006, %v7022
    %v7024 = vsel %vm7014, %v7021, %v7023
    %v7025 = vsel %vm7013, %v7003, %v7006
    %v7026 = vsel %vm7016, %v7012, 1326507024
    %v7027 = vsel %vm7015, %v7009, %v7026
    %v7028 = vsel %vm7014, %v7025, %v7027
    %v7029 = vshll.u32 %v6989, 8
    %v7030 = vmul.u32.u64.compose %v7029, %v7028
    %v7031 = vextract.low.u32 %v7030
    %v7032 = vextract.high.u32 %v7030
    %v7033 = vmul.u32.u64.compose %v7029, %v7024
    %v7034 = vextract.low.u32 %v7033
    %v7035 = vextract.high.u32 %v7033
    %v7036 = vmul.u32 %v7029, %v7020
    %v7037 = vadd.s32 %v7032, %v7034
    %vm7038 = vc.u32 %v7032, %v7034
    %v7039 = vadd.s32 %v7035, 1
    %v7040 = vsel %vm7038, %v7039, %v7035
    %v7041 = vadd.s32 %v7036, %v7040
    %v7042 = vadd.s32 %v7041, 536870912
    %v7043 = vshrl.u32 %v7042, 30
    %v7044 = vshll.u32 %v7043, 30
    %v7045 = vsub.s32 %v7041, %v7044
    %vm7046 = vcmp.lt.s32.totalorder %v7045, 0
    %v7047 = vsub.s32 0, %v7045
    %v7048 = vsel %vm7046, %v7047, %v7045
    %v7049 = vclz %v7048
    %v7050 = vsub.s32 %v7049, 2
    %vm7051 = vcmp.gt.s32.totalorder 0, %v7050
    %v7052 = vsel %vm7051, 0, %v7050
    %v7053 = vsub.s32 32, %v7052
    %v7054 = vshll.u32 %v7045, %v7052
    %v7055 = vshrl.u32 %v7037, %v7053
    %v7056 = vor.u32 %v7054, %v7055
    %v7057 = vsub.s32 4294967266, %v7052
    %v7058 = vadd.s32 %v7057, 127
    %v7059 = vshll.u32 %v7058, 23
    %v7060 = vor.u32 4788187, %v7059
    %v7061 = vand.u32 2147483647, %v7060
    %v7063 = vcvt.s32.f32 %v7056
    %v7064 = vmul.f32 %v7063, %v7061
    %v7065 = vxor.u32 %v7064, 2147483648
    %v7066 = vsel %vm6983, %v7065, %v7064
    %v7067 = vsub.s32 4, %v7043
    %v7068 = vsel %vm6983, %v7067, %v7043
    %v7069 = vsel %vm6982, %v3859, %v7066
    %v7070 = vsel %vm6982, 0, %v7068
    %v7071 = vcosq.f32.pop %v7069
    %v7072 = vsinq.f32.pop %v7069
    %vm7073 = vweird.f32 %v3859
    %v7074 = vadd.s32 %v7070, 3
    %v7075 = vand.u32 %v7074, 3
    %vm7076 = vcmp.lt.s32.totalorder %v7075, 2
    %vm7077 = vcmp.eq.s32.totalorder %v7075, 0
    %v7078 = vxor.u32 %v7072, 2147483648
    %v7079 = vsel %vm7077, %v7071, %v7078
    %vm7080 = vcmp.eq.s32.totalorder %v7075, 2
    %v7081 = vxor.u32 %v7071, 2147483648
    %v7082 = vsel %vm7080, %v7081, %v7072
    %v7083 = vsel %vm7076, %v7079, %v7082
    %v7084 = vsel %vm7073, nan, %v7083
    %v7085 = vand.u32 2147483647, %v3860
    %vm7086 = vcmp.le.f32.partialorder %v7085, 0.7853982
    %vm7087 = vcmp.lt.s32.totalorder %v3860, 0
    %v7088 = vand.u32 %v3860, 2139095040
    %v7089 = vshrl.u32 %v7088, 23
    %v7090 = vsub.s32 %v7089, 127
    %v7091 = vand.u32 2147483647, %v3860
    %v7092 = vand.u32 %v7091, 8388607
    %v7093 = vor.u32 %v7092, 8388608
    %v7094 = vsub.s32 0, %v7093
    %v7095 = vadd.s32 %v7090, 1
    %vm7096 = vcmp.gt.s32.totalorder %v7095, 0
    %v7097 = vsel %vm7096, %v7095, 0
    %v7098 = vshrl.u32 %v7097, 5
    %v7099 = vand.u32 %v7097, 31
    %v7100 = vsub.s32 32, %v7099
    %v7101 = vshrl.u32 683565275, %v7100
    %v7102 = vshll.u32 683565275, %v7099
    %v7103 = vshrl.u32 2475754826, %v7100
    %v7104 = vor.u32 %v7102, %v7103
    %v7105 = vshll.u32 2475754826, %v7099
    %v7106 = vshrl.u32 2131351028, %v7100
    %v7107 = vor.u32 %v7105, %v7106
    %v7108 = vshll.u32 2131351028, %v7099
    %v7109 = vshrl.u32 2102212464, %v7100
    %v7110 = vor.u32 %v7108, %v7109
    %v7111 = vshll.u32 2102212464, %v7099
    %v7112 = vshrl.u32 920167782, %v7100
    %v7113 = vor.u32 %v7111, %v7112
    %v7114 = vshll.u32 920167782, %v7099
    %v7115 = vshrl.u32 1326507024, %v7100
    %v7116 = vor.u32 %v7114, %v7115
    %vm7117 = vcmp.lt.s32.totalorder %v7098, 1
    %vm7118 = vcmp.lt.s32.totalorder %v7098, 2
    %vm7119 = vcmp.lt.s32.totalorder %v7098, 3
    %vm7120 = vcmp.lt.s32.totalorder %v7098, 4
    %v7121 = vsel %vm7117, %v7101, %v7104
    %v7122 = vsel %vm7120, %v7110, 2102212464
    %v7123 = vsel %vm7119, %v7107, %v7122
    %v7124 = vsel %vm7118, %v7121, %v7123
    %v7125 = vsel %vm7117, %v7104, %v7107
    %v7126 = vsel %vm7120, %v7113, 920167782
    %v7127 = vsel %vm7119, %v7110, %v7126
    %v7128 = vsel %vm7118, %v7125, %v7127
    %v7129 = vsel %vm7117, %v7107, %v7110
    %v7130 = vsel %vm7120, %v7116, 1326507024
    %v7131 = vsel %vm7119, %v7113, %v7130
    %v7132 = vsel %vm7118, %v7129, %v7131
    %v7133 = vshll.u32 %v7093, 8
    %v7134 = vmul.u32.u64.compose %v7133, %v7132
    %v7135 = vextract.low.u32 %v7134
    %v7136 = vextract.high.u32 %v7134
    %v7137 = vmul.u32.u64.compose %v7133, %v7128
    %v7138 = vextract.low.u32 %v7137
    %v7139 = vextract.high.u32 %v7137
    %v7140 = vmul.u32 %v7133, %v7124
    %v7141 = vadd.s32 %v7136, %v7138
    %vm7142 = vc.u32 %v7136, %v7138
    %v7143 = vadd.s32 %v7139, 1
    %v7144 = vsel %vm7142, %v7143, %v7139
    %v7145 = vadd.s32 %v7140, %v7144
    %v7146 = vadd.s32 %v7145, 536870912
    %v7147 = vshrl.u32 %v7146, 30
    %v7148 = vshll.u32 %v7147, 30
    %v7149 = vsub.s32 %v7145, %v7148
    %vm7150 = vcmp.lt.s32.totalorder %v7149, 0
    %v7151 = vsub.s32 0, %v7149
    %v7152 = vsel %vm7150, %v7151, %v7149
    %v7153 = vclz %v7152
    %v7154 = vsub.s32 %v7153, 2
    %vm7155 = vcmp.gt.s32.totalorder 0, %v7154
    %v7156 = vsel %vm7155, 0, %v7154
    %v7157 = vsub.s32 32, %v7156
    %v7158 = vshll.u32 %v7149, %v7156
    %v7159 = vshrl.u32 %v7141, %v7157
    %v7160 = vor.u32 %v7158, %v7159
    %v7161 = vsub.s32 4294967266, %v7156
    %v7162 = vadd.s32 %v7161, 127
    %v7163 = vshll.u32 %v7162, 23
    %v7164 = vor.u32 4788187, %v7163
    %v7165 = vand.u32 2147483647, %v7164
    %v7167 = vcvt.s32.f32 %v7160
    %v7168 = vmul.f32 %v7167, %v7165
    %v7169 = vxor.u32 %v7168, 2147483648
    %v7170 = vsel %vm7087, %v7169, %v7168
    %v7171 = vsub.s32 4, %v7147
    %v7172 = vsel %vm7087, %v7171, %v7147
    %v7173 = vsel %vm7086, %v3860, %v7170
    %v7174 = vsel %vm7086, 0, %v7172
    %v7175 = vcosq.f32.pop %v7173
    %v7176 = vsinq.f32.pop %v7173
    %vm7177 = vweird.f32 %v3860
    %v7178 = vadd.s32 %v7174, 3
    %v7179 = vand.u32 %v7178, 3
    %vm7180 = vcmp.lt.s32.totalorder %v7179, 2
    %vm7181 = vcmp.eq.s32.totalorder %v7179, 0
    %v7182 = vxor.u32 %v7176, 2147483648
    %v7183 = vsel %vm7181, %v7175, %v7182
    %vm7184 = vcmp.eq.s32.totalorder %v7179, 2
    %v7185 = vxor.u32 %v7175, 2147483648
    %v7186 = vsel %vm7184, %v7185, %v7176
    %v7187 = vsel %vm7180, %v7183, %v7186
    %v7188 = vsel %vm7177, nan, %v7187
    %7221 = vrot.lane.b32.xlu0 %v444, 32
    %v7222 = vpop.permute.xlu0 %7221
    %7223 = vrot.lane.b32.xlu0 %v548, 32
    %v7224 = vpop.permute.xlu0 %7223
    %7225 = vrot.lane.b32.xlu0 %v652, 32
    %v7226 = vpop.permute.xlu0 %7225
    %7227 = vrot.lane.b32.xlu0 %v756, 32
    %v7228 = vpop.permute.xlu0 %7227
    %7229 = vrot.lane.b32.xlu0 %v860, 32
    %v7230 = vpop.permute.xlu0 %7229
    %7231 = vrot.lane.b32.xlu0 %v964, 32
    %v7232 = vpop.permute.xlu0 %7231
    %7233 = vrot.lane.b32.xlu0 %v1068, 32
    %v7234 = vpop.permute.xlu0 %7233
    %7235 = vrot.lane.b32.xlu0 %v1172, 32
    %v7236 = vpop.permute.xlu0 %7235
    %7237 = vrot.lane.b32.xlu0 %v1276, 32
    %v7238 = vpop.permute.xlu0 %7237
    %7239 = vrot.lane.b32.xlu0 %v1380, 32
    %v7240 = vpop.permute.xlu0 %7239
    %7241 = vrot.lane.b32.xlu0 %v1484, 32
    %v7242 = vpop.permute.xlu0 %7241
    %7243 = vrot.lane.b32.xlu0 %v1588, 32
    %v7244 = vpop.permute.xlu0 %7243
    %7245 = vrot.lane.b32.xlu0 %v1692, 32
    %v7246 = vpop.permute.xlu0 %7245
    %7247 = vrot.lane.b32.xlu0 %v1796, 32
    %v7248 = vpop.permute.xlu0 %7247
    %7249 = vrot.lane.b32.xlu0 %v1900, 32
    %v7250 = vpop.permute.xlu0 %7249
    %7251 = vrot.lane.b32.xlu0 %v2004, 32
    %v7252 = vpop.permute.xlu0 %7251
    %7253 = vrot.lane.b32.xlu0 %v2108, 32
    %v7254 = vpop.permute.xlu0 %7253
    %7255 = vrot.lane.b32.xlu0 %v2212, 32
    %v7256 = vpop.permute.xlu0 %7255
    %7257 = vrot.lane.b32.xlu0 %v2316, 32
    %v7258 = vpop.permute.xlu0 %7257
    %7259 = vrot.lane.b32.xlu0 %v2420, 32
    %v7260 = vpop.permute.xlu0 %7259
    %7261 = vrot.lane.b32.xlu0 %v2524, 32
    %v7262 = vpop.permute.xlu0 %7261
    %7263 = vrot.lane.b32.xlu0 %v2628, 32
    %v7264 = vpop.permute.xlu0 %7263
    %7265 = vrot.lane.b32.xlu0 %v2732, 32
    %v7266 = vpop.permute.xlu0 %7265
    %7267 = vrot.lane.b32.xlu0 %v2836, 32
    %v7268 = vpop.permute.xlu0 %7267
    %7269 = vrot.lane.b32.xlu0 %v2940, 32
    %v7270 = vpop.permute.xlu0 %7269
    %7271 = vrot.lane.b32.xlu0 %v3044, 32
    %v7272 = vpop.permute.xlu0 %7271
    %7273 = vrot.lane.b32.xlu0 %v3148, 32
    %v7274 = vpop.permute.xlu0 %7273
    %7275 = vrot.lane.b32.xlu0 %v3252, 32
    %v7276 = vpop.permute.xlu0 %7275
    %7277 = vrot.lane.b32.xlu0 %v3356, 32
    %v7278 = vpop.permute.xlu0 %7277
    %7279 = vrot.lane.b32.xlu0 %v3460, 32
    %v7280 = vpop.permute.xlu0 %7279
    %7281 = vrot.lane.b32.xlu0 %v3564, 32
    %v7282 = vpop.permute.xlu0 %7281
    %7283 = vrot.lane.b32.xlu0 %v3668, 32
    %v7284 = vpop.permute.xlu0 %7283
    %vm7317 = vcmask 261120
    %v7318 = vsel %vm7317, %v3964, %v7222
    %v7319 = vsel %vm7317, %v4068, %v7224
    %v7320 = vsel %vm7317, %v4172, %v7226
    %v7321 = vsel %vm7317, %v4276, %v7228
    %v7322 = vsel %vm7317, %v4380, %v7230
    %v7323 = vsel %vm7317, %v4484, %v7232
    %v7324 = vsel %vm7317, %v4588, %v7234
    %v7325 = vsel %vm7317, %v4692, %v7236
    %v7326 = vsel %vm7317, %v4796, %v7238
    %v7327 = vsel %vm7317, %v4900, %v7240
    %v7328 = vsel %vm7317, %v5004, %v7242
    %v7329 = vsel %vm7317, %v5108, %v7244
    %v7330 = vsel %vm7317, %v5212, %v7246
    %v7331 = vsel %vm7317, %v5316, %v7248
    %v7332 = vsel %vm7317, %v5420, %v7250
    %v7333 = vsel %vm7317, %v5524, %v7252
    %v7334 = vsel %vm7317, %v5628, %v7254
    %v7335 = vsel %vm7317, %v5732, %v7256
    %v7336 = vsel %vm7317, %v5836, %v7258
    %v7337 = vsel %vm7317, %v5940, %v7260
    %v7338 = vsel %vm7317, %v6044, %v7262
    %v7339 = vsel %vm7317, %v6148, %v7264
    %v7340 = vsel %vm7317, %v6252, %v7266
    %v7341 = vsel %vm7317, %v6356, %v7268
    %v7342 = vsel %vm7317, %v6460, %v7270
    %v7343 = vsel %vm7317, %v6564, %v7272
    %v7344 = vsel %vm7317, %v6668, %v7274
    %v7345 = vsel %vm7317, %v6772, %v7276
    %v7346 = vsel %vm7317, %v6876, %v7278
    %v7347 = vsel %vm7317, %v6980, %v7280
    %v7348 = vsel %vm7317, %v7084, %v7282
    %v7349 = vsel %vm7317, %v7188, %v7284
    %v7350 = vld [vmem:[%s3] sm:$0xff]
    %v7351 = vld [vmem:[%s3 + $0x8] sm:$0xff]
    %v7352 = vld [vmem:[%s3 + $0x10] sm:$0xff]
    %v7353 = vld [vmem:[%s3 + $0x18] sm:$0xff]
    %v7354 = vld [vmem:[%s3 + $0x20] sm:$0xff]
    %v7355 = vld [vmem:[%s3 + $0x28] sm:$0xff]
    %v7356 = vld [vmem:[%s3 + $0x30] sm:$0xff]
    %v7357 = vld [vmem:[%s3 + $0x38] sm:$0xff]
    %v7358 = vld [vmem:[%s4] sm:$0x1]
    %v7360 = vlaneseq
    %v7361 = vshrl.u32 %v7360, 7
    %v7362 = vsub.s32 0, %v7361
    %v7363 = vrot.slane %v7358, %v7362
    %vm7365 = vcmask 523264
    %v7367 = vsel %vm7365, %v7318, 0
    %v7370 = vsel %vm7365, %v7319, 0
    %v7373 = vsel %vm7365, %v7320, 0
    %v7376 = vsel %vm7365, %v7321, 0
    %v7379 = vsel %vm7365, %v7322, 0
    %v7382 = vsel %vm7365, %v7323, 0
    %v7385 = vsel %vm7365, %v7324, 0
    %v7388 = vsel %vm7365, %v7325, 0
    %v7391 = vsel %vm7365, %v7326, 0
    %v7394 = vsel %vm7365, %v7327, 0
    %v7397 = vsel %vm7365, %v7328, 0
    %v7400 = vsel %vm7365, %v7329, 0
    %v7403 = vsel %vm7365, %v7330, 0
    %v7406 = vsel %vm7365, %v7331, 0
    %v7409 = vsel %vm7365, %v7332, 0
    %v7412 = vsel %vm7365, %v7333, 0
    %v7415 = vsel %vm7365, %v7334, 0
    %v7418 = vsel %vm7365, %v7335, 0
    %v7421 = vsel %vm7365, %v7336, 0
    %v7424 = vsel %vm7365, %v7337, 0
    %v7427 = vsel %vm7365, %v7338, 0
    %v7430 = vsel %vm7365, %v7339, 0
    %v7433 = vsel %vm7365, %v7340, 0
    %v7436 = vsel %vm7365, %v7341, 0
    %v7439 = vsel %vm7365, %v7342, 0
    %v7442 = vsel %vm7365, %v7343, 0
    %v7445 = vsel %vm7365, %v7344, 0
    %v7448 = vsel %vm7365, %v7345, 0
    %v7451 = vsel %vm7365, %v7346, 0
    %v7454 = vsel %vm7365, %v7347, 0
    %v7457 = vsel %vm7365, %v7348, 0
    %v7460 = vsel %vm7365, %v7349, 0
    %7462 = vmatprep.subr.mxu0 0.0
    %7463 = vmatpush1.msra.mxu0 0.0
    %7464 = vmatprep.subr.mxu0 0.0
    %7465 = vmatpush1.msra.mxu0 0.0
    %7466 = vmatprep.subr.mxu0 0.0
    %7467 = vmatpush1.msra.mxu0 0.0
    %7468 = vmatprep.subr.mxu0 0.0
    %7469 = vmatpush1.msra.mxu0 0.0
    %7470 = vmatprep.subr.mxu0 0.0
    %7471 = vmatpush1.msra.mxu0 0.0
    %7472 = vmatprep.subr.mxu0 0.0
    %7473 = vmatpush1.msra.mxu0 0.0
    %7474 = vmatprep.subr.mxu0 0.0
    %7475 = vmatpush1.msra.mxu0 0.0
    %7476 = vmatprep.subr.mxu0 0.0
    %7477 = vmatpush1.msra.mxu0 0.0
    %7478 = vmatprep.subr.mxu0 0.0
    %7479 = vmatpush1.msra.mxu0 %v7357
    %7480 = vmatprep.subr.mxu0 0.0
    %7481 = vmatpush1.msra.mxu0 %v7356
    %7482 = vmatprep.subr.mxu0 0.0
    %7483 = vmatpush1.msra.mxu0 %v7355
    %7484 = vmatprep.subr.mxu0 0.0
    %7485 = vmatpush1.msra.mxu0 %v7354
    %7486 = vmatprep.subr.mxu0 0.0
    %7487 = vmatpush1.msra.mxu0 %v7353
    %7488 = vmatprep.subr.mxu0 0.0
    %7489 = vmatpush1.msra.mxu0 %v7352
    %7490 = vmatprep.subr.mxu0 0.0
    %7491 = vmatpush1.msra.mxu0 %v7351
    %7492 = vmatprep.subr.mxu0 0.0
    %7493 = vmatpush1.msra.mxu0 %v7350
    %7494 = vmatprep.subr.mxu0 0.0
    %7495 = vmatpush2.msra.mxu0 0.0
    %7496 = vmatprep.subr.mxu0 0.0
    %7497 = vmatpush2.msra.mxu0 0.0
    %7498 = vmatprep.subr.mxu0 0.0
    %7499 = vmatpush2.msra.mxu0 0.0
    %7500 = vmatprep.subr.mxu0 0.0
    %7501 = vmatpush2.msra.mxu0 0.0
    %7502 = vmatprep.subr.mxu0 0.0
    %7503 = vmatpush2.msra.mxu0 0.0
    %7504 = vmatprep.subr.mxu0 0.0
    %7505 = vmatpush2.msra.mxu0 0.0
    %7506 = vmatprep.subr.mxu0 0.0
    %7507 = vmatpush2.msra.mxu0 0.0
    %7508 = vmatprep.subr.mxu0 0.0
    %7509 = vmatpush2.msra.mxu0 0.0
    %7510 = vmatprep.subr.mxu0 0.0
    %7511 = vmatpush2.msra.mxu0 0.0
    %7512 = vmatprep.subr.mxu0 0.0
    %7513 = vmatpush2.msra.mxu0 0.0
    %7514 = vmatprep.subr.mxu0 0.0
    %7515 = vmatpush2.msra.mxu0 0.0
    %7516 = vmatprep.subr.mxu0 0.0
    %7517 = vmatpush2.msra.mxu0 0.0
    %7518 = vmatprep.subr.mxu0 0.0
    %7519 = vmatpush2.msra.mxu0 0.0
    %7520 = vmatprep.subr.mxu0 0.0
    %7521 = vmatpush2.msra.mxu0 0.0
    %7522 = vmatprep.subr.mxu0 0.0
    %7523 = vmatpush2.msra.mxu0 0.0
    %7524 = vmatprep.subr.mxu0 0.0
    %7525 = vmatpush2.msra.mxu0 0.0
    %7526 = vmatprep.mubr.f32.mxu0 0.0
    %7527 = vmatmul.mubr.f32.gmra.mxu0 %v7367
    %v7528 = vpop.f32.mrf.mxu0
    %v7529 = vadd.f32 %v7363, %v7528
    %v7530 = vpop.f32.mrf.mxu0
    %7531 = vmatprep.mubr.f32.mxu0 0.0
    %7532 = vmatmul.mubr.f32.gmra.mxu0 %v7370
    %v7533 = vpop.f32.mrf.mxu0
    %v7534 = vadd.f32 %v7363, %v7533
    %v7535 = vpop.f32.mrf.mxu0
    %7536 = vmatprep.mubr.f32.mxu0 0.0
    %7537 = vmatmul.mubr.f32.gmra.mxu0 %v7373
    %v7538 = vpop.f32.mrf.mxu0
    %v7539 = vadd.f32 %v7363, %v7538
    %v7540 = vpop.f32.mrf.mxu0
    %7541 = vmatprep.mubr.f32.mxu0 0.0
    %7542 = vmatmul.mubr.f32.gmra.mxu0 %v7376
    %v7543 = vpop.f32.mrf.mxu0
    %v7544 = vadd.f32 %v7363, %v7543
    %v7545 = vpop.f32.mrf.mxu0
    %7546 = vmatprep.mubr.f32.mxu0 0.0
    %7547 = vmatmul.mubr.f32.gmra.mxu0 %v7379
    %v7548 = vpop.f32.mrf.mxu0
    %v7549 = vadd.f32 %v7363, %v7548
    %v7550 = vpop.f32.mrf.mxu0
    %7551 = vmatprep.mubr.f32.mxu0 0.0
    %7552 = vmatmul.mubr.f32.gmra.mxu0 %v7382
    %v7553 = vpop.f32.mrf.mxu0
    %v7554 = vadd.f32 %v7363, %v7553
    %v7555 = vpop.f32.mrf.mxu0
    %7556 = vmatprep.mubr.f32.mxu0 0.0
    %7557 = vmatmul.mubr.f32.gmra.mxu0 %v7385
    %v7558 = vpop.f32.mrf.mxu0
    %v7559 = vadd.f32 %v7363, %v7558
    %v7560 = vpop.f32.mrf.mxu0
    %7561 = vmatprep.mubr.f32.mxu0 0.0
    %7562 = vmatmul.mubr.f32.gmra.mxu0 %v7388
    %v7563 = vpop.f32.mrf.mxu0
    %v7564 = vadd.f32 %v7363, %v7563
    %v7565 = vpop.f32.mrf.mxu0
    %7566 = vmatprep.mubr.f32.mxu0 0.0
    %7567 = vmatmul.mubr.f32.gmra.mxu0 %v7391
    %v7568 = vpop.f32.mrf.mxu0
    %v7569 = vadd.f32 %v7363, %v7568
    %v7570 = vpop.f32.mrf.mxu0
    %7571 = vmatprep.mubr.f32.mxu0 0.0
    %7572 = vmatmul.mubr.f32.gmra.mxu0 %v7394
    %v7573 = vpop.f32.mrf.mxu0
    %v7574 = vadd.f32 %v7363, %v7573
    %v7575 = vpop.f32.mrf.mxu0
    %7576 = vmatprep.mubr.f32.mxu0 0.0
    %7577 = vmatmul.mubr.f32.gmra.mxu0 %v7397
    %v7578 = vpop.f32.mrf.mxu0
    %v7579 = vadd.f32 %v7363, %v7578
    %v7580 = vpop.f32.mrf.mxu0
    %7581 = vmatprep.mubr.f32.mxu0 0.0
    %7582 = vmatmul.mubr.f32.gmra.mxu0 %v7400
    %v7583 = vpop.f32.mrf.mxu0
    %v7584 = vadd.f32 %v7363, %v7583
    %v7585 = vpop.f32.mrf.mxu0
    %7586 = vmatprep.mubr.f32.mxu0 0.0
    %7587 = vmatmul.mubr.f32.gmra.mxu0 %v7403
    %v7588 = vpop.f32.mrf.mxu0
    %v7589 = vadd.f32 %v7363, %v7588
    %v7590 = vpop.f32.mrf.mxu0
    %7591 = vmatprep.mubr.f32.mxu0 0.0
    %7592 = vmatmul.mubr.f32.gmra.mxu0 %v7406
    %v7593 = vpop.f32.mrf.mxu0
    %v7594 = vadd.f32 %v7363, %v7593
    %v7595 = vpop.f32.mrf.mxu0
    %7596 = vmatprep.mubr.f32.mxu0 0.0
    %7597 = vmatmul.mubr.f32.gmra.mxu0 %v7409
    %v7598 = vpop.f32.mrf.mxu0
    %v7599 = vadd.f32 %v7363, %v7598
    %v7600 = vpop.f32.mrf.mxu0
    %7601 = vmatprep.mubr.f32.mxu0 0.0
    %7602 = vmatmul.mubr.f32.gmra.mxu0 %v7412
    %v7603 = vpop.f32.mrf.mxu0
    %v7604 = vadd.f32 %v7363, %v7603
    %v7605 = vpop.f32.mrf.mxu0
    %7606 = vmatprep.mubr.f32.mxu0 0.0
    %7607 = vmatmul.mubr.f32.gmra.mxu0 %v7415
    %v7608 = vpop.f32.mrf.mxu0
    %v7609 = vadd.f32 %v7363, %v7608
    %v7610 = vpop.f32.mrf.mxu0
    %7611 = vmatprep.mubr.f32.mxu0 0.0
    %7612 = vmatmul.mubr.f32.gmra.mxu0 %v7418
    %v7613 = vpop.f32.mrf.mxu0
    %v7614 = vadd.f32 %v7363, %v7613
    %v7615 = vpop.f32.mrf.mxu0
    %7616 = vmatprep.mubr.f32.mxu0 0.0
    %7617 = vmatmul.mubr.f32.gmra.mxu0 %v7421
    %v7618 = vpop.f32.mrf.mxu0
    %v7619 = vadd.f32 %v7363, %v7618
    %v7620 = vpop.f32.mrf.mxu0
    %7621 = vmatprep.mubr.f32.mxu0 0.0
    %7622 = vmatmul.mubr.f32.gmra.mxu0 %v7424
    %v7623 = vpop.f32.mrf.mxu0
    %v7624 = vadd.f32 %v7363, %v7623
    %v7625 = vpop.f32.mrf.mxu0
    %7626 = vmatprep.mubr.f32.mxu0 0.0
    %7627 = vmatmul.mubr.f32.gmra.mxu0 %v7427
    %v7628 = vpop.f32.mrf.mxu0
    %v7629 = vadd.f32 %v7363, %v7628
    %v7630 = vpop.f32.mrf.mxu0
    %7631 = vmatprep.mubr.f32.mxu0 0.0
    %7632 = vmatmul.mubr.f32.gmra.mxu0 %v7430
    %v7633 = vpop.f32.mrf.mxu0
    %v7634 = vadd.f32 %v7363, %v7633
    %v7635 = vpop.f32.mrf.mxu0
    %7636 = vmatprep.mubr.f32.mxu0 0.0
    %7637 = vmatmul.mubr.f32.gmra.mxu0 %v7433
    %v7638 = vpop.f32.mrf.mxu0
    %v7639 = vadd.f32 %v7363, %v7638
    %v7640 = vpop.f32.mrf.mxu0
    %7641 = vmatprep.mubr.f32.mxu0 0.0
    %7642 = vmatmul.mubr.f32.gmra.mxu0 %v7436
    %v7643 = vpop.f32.mrf.mxu0
    %v7644 = vadd.f32 %v7363, %v7643
    %v7645 = vpop.f32.mrf.mxu0
    %7646 = vmatprep.mubr.f32.mxu0 0.0
    %7647 = vmatmul.mubr.f32.gmra.mxu0 %v7439
    %v7648 = vpop.f32.mrf.mxu0
    %v7649 = vadd.f32 %v7363, %v7648
    %v7650 = vpop.f32.mrf.mxu0
    %7651 = vmatprep.mubr.f32.mxu0 0.0
    %7652 = vmatmul.mubr.f32.gmra.mxu0 %v7442
    %v7653 = vpop.f32.mrf.mxu0
    %v7654 = vadd.f32 %v7363, %v7653
    %v7655 = vpop.f32.mrf.mxu0
    %7656 = vmatprep.mubr.f32.mxu0 0.0
    %7657 = vmatmul.mubr.f32.gmra.mxu0 %v7445
    %v7658 = vpop.f32.mrf.mxu0
    %v7659 = vadd.f32 %v7363, %v7658
    %v7660 = vpop.f32.mrf.mxu0
    %7661 = vmatprep.mubr.f32.mxu0 0.0
    %7662 = vmatmul.mubr.f32.gmra.mxu0 %v7448
    %v7663 = vpop.f32.mrf.mxu0
    %v7664 = vadd.f32 %v7363, %v7663
    %v7665 = vpop.f32.mrf.mxu0
    %7666 = vmatprep.mubr.f32.mxu0 0.0
    %7667 = vmatmul.mubr.f32.gmra.mxu0 %v7451
    %v7668 = vpop.f32.mrf.mxu0
    %v7669 = vadd.f32 %v7363, %v7668
    %v7670 = vpop.f32.mrf.mxu0
    %7671 = vmatprep.mubr.f32.mxu0 0.0
    %7672 = vmatmul.mubr.f32.gmra.mxu0 %v7454
    %v7673 = vpop.f32.mrf.mxu0
    %v7674 = vadd.f32 %v7363, %v7673
    %v7675 = vpop.f32.mrf.mxu0
    %7676 = vmatprep.mubr.f32.mxu0 0.0
    %7677 = vmatmul.mubr.f32.gmra.mxu0 %v7457
    %v7678 = vpop.f32.mrf.mxu0
    %v7679 = vadd.f32 %v7363, %v7678
    %v7680 = vpop.f32.mrf.mxu0
    %7681 = vmatprep.mubr.f32.mxu0 0.0
    %7682 = vmatmul.mubr.f32.gmra.mxu0 %v7460
    %v7683 = vpop.f32.mrf.mxu0
    %v7684 = vadd.f32 %v7363, %v7683
    %v7685 = vpop.f32.mrf.mxu0
    %7686 = vdwg.mxu0
    %v7687 = vld [vmem:[%s5] sm:$0x1]
    %v7688 = vld [vmem:[%s6] sm:$0x1]
    %v7689 = vsel %vm7317, %v7529, 0.0
    %7690 = vadd.xlane.f32.xlu0 %v7689
    %v7691 = vpop.xlane.xlu0 %7690
    %v7692 = vsel %vm7317, %v7534, 0.0
    %7693 = vadd.xlane.f32.xlu0 %v7692
    %v7694 = vpop.xlane.xlu0 %7693
    %v7695 = vsel %vm7317, %v7539, 0.0
    %7696 = vadd.xlane.f32.xlu0 %v7695
    %v7697 = vpop.xlane.xlu0 %7696
    %v7698 = vsel %vm7317, %v7544, 0.0
    %7699 = vadd.xlane.f32.xlu0 %v7698
    %v7700 = vpop.xlane.xlu0 %7699
    %v7701 = vsel %vm7317, %v7549, 0.0
    %7702 = vadd.xlane.f32.xlu0 %v7701
    %v7703 = vpop.xlane.xlu0 %7702
    %v7704 = vsel %vm7317, %v7554, 0.0
    %7705 = vadd.xlane.f32.xlu0 %v7704
    %v7706 = vpop.xlane.xlu0 %7705
    %v7707 = vsel %vm7317, %v7559, 0.0
    %7708 = vadd.xlane.f32.xlu0 %v7707
    %v7709 = vpop.xlane.xlu0 %7708
    %v7710 = vsel %vm7317, %v7564, 0.0
    %7711 = vadd.xlane.f32.xlu0 %v7710
    %v7712 = vpop.xlane.xlu0 %7711
    %v7713 = vsel %vm7317, %v7569, 0.0
    %7714 = vadd.xlane.f32.xlu0 %v7713
    %v7715 = vpop.xlane.xlu0 %7714
    %v7716 = vsel %vm7317, %v7574, 0.0
    %7717 = vadd.xlane.f32.xlu0 %v7716
    %v7718 = vpop.xlane.xlu0 %7717
    %v7719 = vsel %vm7317, %v7579, 0.0
    %7720 = vadd.xlane.f32.xlu0 %v7719
    %v7721 = vpop.xlane.xlu0 %7720
    %v7722 = vsel %vm7317, %v7584, 0.0
    %7723 = vadd.xlane.f32.xlu0 %v7722
    %v7724 = vpop.xlane.xlu0 %7723
    %v7725 = vsel %vm7317, %v7589, 0.0
    %7726 = vadd.xlane.f32.xlu0 %v7725
    %v7727 = vpop.xlane.xlu0 %7726
    %v7728 = vsel %vm7317, %v7594, 0.0
    %7729 = vadd.xlane.f32.xlu0 %v7728
    %v7730 = vpop.xlane.xlu0 %7729
    %v7731 = vsel %vm7317, %v7599, 0.0
    %7732 = vadd.xlane.f32.xlu0 %v7731
    %v7733 = vpop.xlane.xlu0 %7732
    %v7734 = vsel %vm7317, %v7604, 0.0
    %7735 = vadd.xlane.f32.xlu0 %v7734
    %v7736 = vpop.xlane.xlu0 %7735
    %v7737 = vsel %vm7317, %v7609, 0.0
    %7738 = vadd.xlane.f32.xlu0 %v7737
    %v7739 = vpop.xlane.xlu0 %7738
    %v7740 = vsel %vm7317, %v7614, 0.0
    %7741 = vadd.xlane.f32.xlu0 %v7740
    %v7742 = vpop.xlane.xlu0 %7741
    %v7743 = vsel %vm7317, %v7619, 0.0
    %7744 = vadd.xlane.f32.xlu0 %v7743
    %v7745 = vpop.xlane.xlu0 %7744
    %v7746 = vsel %vm7317, %v7624, 0.0
    %7747 = vadd.xlane.f32.xlu0 %v7746
    %v7748 = vpop.xlane.xlu0 %7747
    %v7749 = vsel %vm7317, %v7629, 0.0
    %7750 = vadd.xlane.f32.xlu0 %v7749
    %v7751 = vpop.xlane.xlu0 %7750
    %v7752 = vsel %vm7317, %v7634, 0.0
    %7753 = vadd.xlane.f32.xlu0 %v7752
    %v7754 = vpop.xlane.xlu0 %7753
    %v7755 = vsel %vm7317, %v7639, 0.0
    %7756 = vadd.xlane.f32.xlu0 %v7755
    %v7757 = vpop.xlane.xlu0 %7756
    %v7758 = vsel %vm7317, %v7644, 0.0
    %7759 = vadd.xlane.f32.xlu0 %v7758
    %v7760 = vpop.xlane.xlu0 %7759
    %v7761 = vsel %vm7317, %v7649, 0.0
    %7762 = vadd.xlane.f32.xlu0 %v7761
    %v7763 = vpop.xlane.xlu0 %7762
    %v7764 = vsel %vm7317, %v7654, 0.0
    %7765 = vadd.xlane.f32.xlu0 %v7764
    %v7766 = vpop.xlane.xlu0 %7765
    %v7767 = vsel %vm7317, %v7659, 0.0
    %7768 = vadd.xlane.f32.xlu0 %v7767
    %v7769 = vpop.xlane.xlu0 %7768
    %v7770 = vsel %vm7317, %v7664, 0.0
    %7771 = vadd.xlane.f32.xlu0 %v7770
    %v7772 = vpop.xlane.xlu0 %7771
    %v7773 = vsel %vm7317, %v7669, 0.0
    %7774 = vadd.xlane.f32.xlu0 %v7773
    %v7775 = vpop.xlane.xlu0 %7774
    %v7776 = vsel %vm7317, %v7674, 0.0
    %7777 = vadd.xlane.f32.xlu0 %v7776
    %v7778 = vpop.xlane.xlu0 %7777
    %v7779 = vsel %vm7317, %v7679, 0.0
    %7780 = vadd.xlane.f32.xlu0 %v7779
    %v7781 = vpop.xlane.xlu0 %7780
    %v7782 = vsel %vm7317, %v7684, 0.0
    %7783 = vadd.xlane.f32.xlu0 %v7782
    %v7784 = vpop.xlane.xlu0 %7783
    %v7785 = vrcp.pop 32.0
    %v7786 = vmul.f32 %v7691, %v7785
    %v7787 = vmul.f32 %v7694, %v7785
    %v7788 = vmul.f32 %v7697, %v7785
    %v7789 = vmul.f32 %v7700, %v7785
    %v7790 = vmul.f32 %v7703, %v7785
    %v7791 = vmul.f32 %v7706, %v7785
    %v7792 = vmul.f32 %v7709, %v7785
    %v7793 = vmul.f32 %v7712, %v7785
    %v7794 = vmul.f32 %v7715, %v7785
    %v7795 = vmul.f32 %v7718, %v7785
    %v7796 = vmul.f32 %v7721, %v7785
    %v7797 = vmul.f32 %v7724, %v7785
    %v7798 = vmul.f32 %v7727, %v7785
    %v7799 = vmul.f32 %v7730, %v7785
    %v7800 = vmul.f32 %v7733, %v7785
    %v7801 = vmul.f32 %v7736, %v7785
    %v7802 = vmul.f32 %v7739, %v7785
    %v7803 = vmul.f32 %v7742, %v7785
    %v7804 = vmul.f32 %v7745, %v7785
    %v7805 = vmul.f32 %v7748, %v7785
    %v7806 = vmul.f32 %v7751, %v7785
    %v7807 = vmul.f32 %v7754, %v7785
    %v7808 = vmul.f32 %v7757, %v7785
    %v7809 = vmul.f32 %v7760, %v7785
    %v7810 = vmul.f32 %v7763, %v7785
    %v7811 = vmul.f32 %v7766, %v7785
    %v7812 = vmul.f32 %v7769, %v7785
    %v7813 = vmul.f32 %v7772, %v7785
    %v7814 = vmul.f32 %v7775, %v7785
    %v7815 = vmul.f32 %v7778, %v7785
    %v7816 = vmul.f32 %v7781, %v7785
    %v7817 = vmul.f32 %v7784, %v7785
    %v7818 = vsub.f32 %v7529, %v7786
    %v7819 = vsub.f32 %v7534, %v7787
    %v7820 = vsub.f32 %v7539, %v7788
    %v7821 = vsub.f32 %v7544, %v7789
    %v7822 = vsub.f32 %v7549, %v7790
    %v7823 = vsub.f32 %v7554, %v7791
    %v7824 = vsub.f32 %v7559, %v7792
    %v7825 = vsub.f32 %v7564, %v7793
    %v7826 = vsub.f32 %v7569, %v7794
    %v7827 = vsub.f32 %v7574, %v7795
    %v7828 = vsub.f32 %v7579, %v7796
    %v7829 = vsub.f32 %v7584, %v7797
    %v7830 = vsub.f32 %v7589, %v7798
    %v7831 = vsub.f32 %v7594, %v7799
    %v7832 = vsub.f32 %v7599, %v7800
    %v7833 = vsub.f32 %v7604, %v7801
    %v7834 = vsub.f32 %v7609, %v7802
    %v7835 = vsub.f32 %v7614, %v7803
    %v7836 = vsub.f32 %v7619, %v7804
    %v7837 = vsub.f32 %v7624, %v7805
    %v7838 = vsub.f32 %v7629, %v7806
    %v7839 = vsub.f32 %v7634, %v7807
    %v7840 = vsub.f32 %v7639, %v7808
    %v7841 = vsub.f32 %v7644, %v7809
    %v7842 = vsub.f32 %v7649, %v7810
    %v7843 = vsub.f32 %v7654, %v7811
    %v7844 = vsub.f32 %v7659, %v7812
    %v7845 = vsub.f32 %v7664, %v7813
    %v7846 = vsub.f32 %v7669, %v7814
    %v7847 = vsub.f32 %v7674, %v7815
    %v7848 = vsub.f32 %v7679, %v7816
    %v7849 = vsub.f32 %v7684, %v7817
    %v7850 = vmul.f32 %v7818, %v7818
    %v7851 = vmul.f32 %v7819, %v7819
    %v7852 = vmul.f32 %v7820, %v7820
    %v7853 = vmul.f32 %v7821, %v7821
    %v7854 = vmul.f32 %v7822, %v7822
    %v7855 = vmul.f32 %v7823, %v7823
    %v7856 = vmul.f32 %v7824, %v7824
    %v7857 = vmul.f32 %v7825, %v7825
    %v7858 = vmul.f32 %v7826, %v7826
    %v7859 = vmul.f32 %v7827, %v7827
    %v7860 = vmul.f32 %v7828, %v7828
    %v7861 = vmul.f32 %v7829, %v7829
    %v7862 = vmul.f32 %v7830, %v7830
    %v7863 = vmul.f32 %v7831, %v7831
    %v7864 = vmul.f32 %v7832, %v7832
    %v7865 = vmul.f32 %v7833, %v7833
    %v7866 = vmul.f32 %v7834, %v7834
    %v7867 = vmul.f32 %v7835, %v7835
    %v7868 = vmul.f32 %v7836, %v7836
    %v7869 = vmul.f32 %v7837, %v7837
    %v7870 = vmul.f32 %v7838, %v7838
    %v7871 = vmul.f32 %v7839, %v7839
    %v7872 = vmul.f32 %v7840, %v7840
    %v7873 = vmul.f32 %v7841, %v7841
    %v7874 = vmul.f32 %v7842, %v7842
    %v7875 = vmul.f32 %v7843, %v7843
    %v7876 = vmul.f32 %v7844, %v7844
    %v7877 = vmul.f32 %v7845, %v7845
    %v7878 = vmul.f32 %v7846, %v7846
    %v7879 = vmul.f32 %v7847, %v7847
    %v7880 = vmul.f32 %v7848, %v7848
    %v7881 = vmul.f32 %v7849, %v7849
    %v7882 = vsel %vm7317, %v7850, 0.0
    %7883 = vadd.xlane.f32.xlu0 %v7882
    %v7884 = vpop.xlane.xlu0 %7883
    %v7885 = vsel %vm7317, %v7851, 0.0
    %7886 = vadd.xlane.f32.xlu0 %v7885
    %v7887 = vpop.xlane.xlu0 %7886
    %v7888 = vsel %vm7317, %v7852, 0.0
    %7889 = vadd.xlane.f32.xlu0 %v7888
    %v7890 = vpop.xlane.xlu0 %7889
    %v7891 = vsel %vm7317, %v7853, 0.0
    %7892 = vadd.xlane.f32.xlu0 %v7891
    %v7893 = vpop.xlane.xlu0 %7892
    %v7894 = vsel %vm7317, %v7854, 0.0
    %7895 = vadd.xlane.f32.xlu0 %v7894
    %v7896 = vpop.xlane.xlu0 %7895
    %v7897 = vsel %vm7317, %v7855, 0.0
    %7898 = vadd.xlane.f32.xlu0 %v7897
    %v7899 = vpop.xlane.xlu0 %7898
    %v7900 = vsel %vm7317, %v7856, 0.0
    %7901 = vadd.xlane.f32.xlu0 %v7900
    %v7902 = vpop.xlane.xlu0 %7901
    %v7903 = vsel %vm7317, %v7857, 0.0
    %7904 = vadd.xlane.f32.xlu0 %v7903
    %v7905 = vpop.xlane.xlu0 %7904
    %v7906 = vsel %vm7317, %v7858, 0.0
    %7907 = vadd.xlane.f32.xlu0 %v7906
    %v7908 = vpop.xlane.xlu0 %7907
    %v7909 = vsel %vm7317, %v7859, 0.0
    %7910 = vadd.xlane.f32.xlu0 %v7909
    %v7911 = vpop.xlane.xlu0 %7910
    %v7912 = vsel %vm7317, %v7860, 0.0
    %7913 = vadd.xlane.f32.xlu0 %v7912
    %v7914 = vpop.xlane.xlu0 %7913
    %v7915 = vsel %vm7317, %v7861, 0.0
    %7916 = vadd.xlane.f32.xlu0 %v7915
    %v7917 = vpop.xlane.xlu0 %7916
    %v7918 = vsel %vm7317, %v7862, 0.0
    %7919 = vadd.xlane.f32.xlu0 %v7918
    %v7920 = vpop.xlane.xlu0 %7919
    %v7921 = vsel %vm7317, %v7863, 0.0
    %7922 = vadd.xlane.f32.xlu0 %v7921
    %v7923 = vpop.xlane.xlu0 %7922
    %v7924 = vsel %vm7317, %v7864, 0.0
    %7925 = vadd.xlane.f32.xlu0 %v7924
    %v7926 = vpop.xlane.xlu0 %7925
    %v7927 = vsel %vm7317, %v7865, 0.0
    %7928 = vadd.xlane.f32.xlu0 %v7927
    %v7929 = vpop.xlane.xlu0 %7928
    %v7930 = vsel %vm7317, %v7866, 0.0
    %7931 = vadd.xlane.f32.xlu0 %v7930
    %v7932 = vpop.xlane.xlu0 %7931
    %v7933 = vsel %vm7317, %v7867, 0.0
    %7934 = vadd.xlane.f32.xlu0 %v7933
    %v7935 = vpop.xlane.xlu0 %7934
    %v7936 = vsel %vm7317, %v7868, 0.0
    %7937 = vadd.xlane.f32.xlu0 %v7936
    %v7938 = vpop.xlane.xlu0 %7937
    %v7939 = vsel %vm7317, %v7869, 0.0
    %7940 = vadd.xlane.f32.xlu0 %v7939
    %v7941 = vpop.xlane.xlu0 %7940
    %v7942 = vsel %vm7317, %v7870, 0.0
    %7943 = vadd.xlane.f32.xlu0 %v7942
    %v7944 = vpop.xlane.xlu0 %7943
    %v7945 = vsel %vm7317, %v7871, 0.0
    %7946 = vadd.xlane.f32.xlu0 %v7945
    %v7947 = vpop.xlane.xlu0 %7946
    %v7948 = vsel %vm7317, %v7872, 0.0
    %7949 = vadd.xlane.f32.xlu0 %v7948
    %v7950 = vpop.xlane.xlu0 %7949
    %v7951 = vsel %vm7317, %v7873, 0.0
    %7952 = vadd.xlane.f32.xlu0 %v7951
    %v7953 = vpop.xlane.xlu0 %7952
    %v7954 = vsel %vm7317, %v7874, 0.0
    %7955 = vadd.xlane.f32.xlu0 %v7954
    %v7956 = vpop.xlane.xlu0 %7955
    %v7957 = vsel %vm7317, %v7875, 0.0
    %7958 = vadd.xlane.f32.xlu0 %v7957
    %v7959 = vpop.xlane.xlu0 %7958
    %v7960 = vsel %vm7317, %v7876, 0.0
    %7961 = vadd.xlane.f32.xlu0 %v7960
    %v7962 = vpop.xlane.xlu0 %7961
    %v7963 = vsel %vm7317, %v7877, 0.0
    %7964 = vadd.xlane.f32.xlu0 %v7963
    %v7965 = vpop.xlane.xlu0 %7964
    %v7966 = vsel %vm7317, %v7878, 0.0
    %7967 = vadd.xlane.f32.xlu0 %v7966
    %v7968 = vpop.xlane.xlu0 %7967
    %v7969 = vsel %vm7317, %v7879, 0.0
    %7970 = vadd.xlane.f32.xlu0 %v7969
    %v7971 = vpop.xlane.xlu0 %7970
    %v7972 = vsel %vm7317, %v7880, 0.0
    %7973 = vadd.xlane.f32.xlu0 %v7972
    %v7974 = vpop.xlane.xlu0 %7973
    %v7975 = vsel %vm7317, %v7881, 0.0
    %7976 = vadd.xlane.f32.xlu0 %v7975
    %v7977 = vpop.xlane.xlu0 %7976
    %v7978 = vmul.f32 %v7884, %v7785
    %v7979 = vmul.f32 %v7887, %v7785
    %v7980 = vmul.f32 %v7890, %v7785
    %v7981 = vmul.f32 %v7893, %v7785
    %v7982 = vmul.f32 %v7896, %v7785
    %v7983 = vmul.f32 %v7899, %v7785
    %v7984 = vmul.f32 %v7902, %v7785
    %v7985 = vmul.f32 %v7905, %v7785
    %v7986 = vmul.f32 %v7908, %v7785
    %v7987 = vmul.f32 %v7911, %v7785
    %v7988 = vmul.f32 %v7914, %v7785
    %v7989 = vmul.f32 %v7917, %v7785
    %v7990 = vmul.f32 %v7920, %v7785
    %v7991 = vmul.f32 %v7923, %v7785
    %v7992 = vmul.f32 %v7926, %v7785
    %v7993 = vmul.f32 %v7929, %v7785
    %v7994 = vmul.f32 %v7932, %v7785
    %v7995 = vmul.f32 %v7935, %v7785
    %v7996 = vmul.f32 %v7938, %v7785
    %v7997 = vmul.f32 %v7941, %v7785
    %v7998 = vmul.f32 %v7944, %v7785
    %v7999 = vmul.f32 %v7947, %v7785
    %v8000 = vmul.f32 %v7950, %v7785
    %v8001 = vmul.f32 %v7953, %v7785
    %v8002 = vmul.f32 %v7956, %v7785
    %v8003 = vmul.f32 %v7959, %v7785
    %v8004 = vmul.f32 %v7962, %v7785
    %v8005 = vmul.f32 %v7965, %v7785
    %v8006 = vmul.f32 %v7968, %v7785
    %v8007 = vmul.f32 %v7971, %v7785
    %v8008 = vmul.f32 %v7974, %v7785
    %v8009 = vmul.f32 %v7977, %v7785
    %v8010 = vadd.f32 %v7978, 1e-05
    %v8011 = vadd.f32 %v7979, 1e-05
    %v8012 = vadd.f32 %v7980, 1e-05
    %v8013 = vadd.f32 %v7981, 1e-05
    %v8014 = vadd.f32 %v7982, 1e-05
    %v8015 = vadd.f32 %v7983, 1e-05
    %v8016 = vadd.f32 %v7984, 1e-05
    %v8017 = vadd.f32 %v7985, 1e-05
    %v8018 = vadd.f32 %v7986, 1e-05
    %v8019 = vadd.f32 %v7987, 1e-05
    %v8020 = vadd.f32 %v7988, 1e-05
    %v8021 = vadd.f32 %v7989, 1e-05
    %v8022 = vadd.f32 %v7990, 1e-05
    %v8023 = vadd.f32 %v7991, 1e-05
    %v8024 = vadd.f32 %v7992, 1e-05
    %v8025 = vadd.f32 %v7993, 1e-05
    %v8026 = vadd.f32 %v7994, 1e-05
    %v8027 = vadd.f32 %v7995, 1e-05
    %v8028 = vadd.f32 %v7996, 1e-05
    %v8029 = vadd.f32 %v7997, 1e-05
    %v8030 = vadd.f32 %v7998, 1e-05
    %v8031 = vadd.f32 %v7999, 1e-05
    %v8032 = vadd.f32 %v8000, 1e-05
    %v8033 = vadd.f32 %v8001, 1e-05
    %v8034 = vadd.f32 %v8002, 1e-05
    %v8035 = vadd.f32 %v8003, 1e-05
    %v8036 = vadd.f32 %v8004, 1e-05
    %v8037 = vadd.f32 %v8005, 1e-05
    %v8038 = vadd.f32 %v8006, 1e-05
    %v8039 = vadd.f32 %v8007, 1e-05
    %v8040 = vadd.f32 %v8008, 1e-05
    %v8041 = vadd.f32 %v8009, 1e-05
    %v8042 = vrsqrt.pop %v8010
    %v8043 = vrsqrt.pop %v8011
    %v8044 = vrsqrt.pop %v8012
    %v8045 = vrsqrt.pop %v8013
    %v8046 = vrsqrt.pop %v8014
    %v8047 = vrsqrt.pop %v8015
    %v8048 = vrsqrt.pop %v8016
    %v8049 = vrsqrt.pop %v8017
    %v8050 = vrsqrt.pop %v8018
    %v8051 = vrsqrt.pop %v8019
    %v8052 = vrsqrt.pop %v8020
    %v8053 = vrsqrt.pop %v8021
    %v8054 = vrsqrt.pop %v8022
    %v8055 = vrsqrt.pop %v8023
    %v8056 = vrsqrt.pop %v8024
    %v8057 = vrsqrt.pop %v8025
    %v8058 = vrsqrt.pop %v8026
    %v8059 = vrsqrt.pop %v8027
    %v8060 = vrsqrt.pop %v8028
    %v8061 = vrsqrt.pop %v8029
    %v8062 = vrsqrt.pop %v8030
    %v8063 = vrsqrt.pop %v8031
    %v8064 = vrsqrt.pop %v8032
    %v8065 = vrsqrt.pop %v8033
    %v8066 = vrsqrt.pop %v8034
    %v8067 = vrsqrt.pop %v8035
    %v8068 = vrsqrt.pop %v8036
    %v8069 = vrsqrt.pop %v8037
    %v8070 = vrsqrt.pop %v8038
    %v8071 = vrsqrt.pop %v8039
    %v8072 = vrsqrt.pop %v8040
    %v8073 = vrsqrt.pop %v8041
    %v8074 = vmul.f32 %v7818, %v8042
    %v8075 = vmul.f32 %v7819, %v8043
    %v8076 = vmul.f32 %v7820, %v8044
    %v8077 = vmul.f32 %v7821, %v8045
    %v8078 = vmul.f32 %v7822, %v8046
    %v8079 = vmul.f32 %v7823, %v8047
    %v8080 = vmul.f32 %v7824, %v8048
    %v8081 = vmul.f32 %v7825, %v8049
    %v8082 = vmul.f32 %v7826, %v8050
    %v8083 = vmul.f32 %v7827, %v8051
    %v8084 = vmul.f32 %v7828, %v8052
    %v8085 = vmul.f32 %v7829, %v8053
    %v8086 = vmul.f32 %v7830, %v8054
    %v8087 = vmul.f32 %v7831, %v8055
    %v8088 = vmul.f32 %v7832, %v8056
    %v8089 = vmul.f32 %v7833, %v8057
    %v8090 = vmul.f32 %v7834, %v8058
    %v8091 = vmul.f32 %v7835, %v8059
    %v8092 = vmul.f32 %v7836, %v8060
    %v8093 = vmul.f32 %v7837, %v8061
    %v8094 = vmul.f32 %v7838, %v8062
    %v8095 = vmul.f32 %v7839, %v8063
    %v8096 = vmul.f32 %v7840, %v8064
    %v8097 = vmul.f32 %v7841, %v8065
    %v8098 = vmul.f32 %v7842, %v8066
    %v8099 = vmul.f32 %v7843, %v8067
    %v8100 = vmul.f32 %v7844, %v8068
    %v8101 = vmul.f32 %v7845, %v8069
    %v8102 = vmul.f32 %v7846, %v8070
    %v8103 = vmul.f32 %v7847, %v8071
    %v8104 = vmul.f32 %v7848, %v8072
    %v8105 = vmul.f32 %v7849, %v8073
    %v8107 = vlaneseq
    %v8108 = vshrl.u32 %v8107, 7
    %v8109 = vsub.s32 0, %v8108
    %v8110 = vrot.slane %v7687, %v8109
    %v8112 = vmul.f32 %v8074, %v8110
    %v8113 = vmul.f32 %v8075, %v8110
    %v8114 = vmul.f32 %v8076, %v8110
    %v8115 = vmul.f32 %v8077, %v8110
    %v8116 = vmul.f32 %v8078, %v8110
    %v8117 = vmul.f32 %v8079, %v8110
    %v8118 = vmul.f32 %v8080, %v8110
    %v8119 = vmul.f32 %v8081, %v8110
    %v8120 = vmul.f32 %v8082, %v8110
    %v8121 = vmul.f32 %v8083, %v8110
    %v8122 = vmul.f32 %v8084, %v8110
    %v8123 = vmul.f32 %v8085, %v8110
    %v8124 = vmul.f32 %v8086, %v8110
    %v8125 = vmul.f32 %v8087, %v8110
    %v8126 = vmul.f32 %v8088, %v8110
    %v8127 = vmul.f32 %v8089, %v8110
    %v8128 = vmul.f32 %v8090, %v8110
    %v8129 = vmul.f32 %v8091, %v8110
    %v8130 = vmul.f32 %v8092, %v8110
    %v8131 = vmul.f32 %v8093, %v8110
    %v8132 = vmul.f32 %v8094, %v8110
    %v8133 = vmul.f32 %v8095, %v8110
    %v8134 = vmul.f32 %v8096, %v8110
    %v8135 = vmul.f32 %v8097, %v8110
    %v8136 = vmul.f32 %v8098, %v8110
    %v8137 = vmul.f32 %v8099, %v8110
    %v8138 = vmul.f32 %v8100, %v8110
    %v8139 = vmul.f32 %v8101, %v8110
    %v8140 = vmul.f32 %v8102, %v8110
    %v8141 = vmul.f32 %v8103, %v8110
    %v8142 = vmul.f32 %v8104, %v8110
    %v8143 = vmul.f32 %v8105, %v8110
    %v8145 = vlaneseq
    %v8146 = vshrl.u32 %v8145, 7
    %v8147 = vsub.s32 0, %v8146
    %v8148 = vrot.slane %v7688, %v8147
    %v8150 = vadd.f32 %v8112, %v8148
    %v8151 = vadd.f32 %v8113, %v8148
    %v8152 = vadd.f32 %v8114, %v8148
    %v8153 = vadd.f32 %v8115, %v8148
    %v8154 = vadd.f32 %v8116, %v8148
    %v8155 = vadd.f32 %v8117, %v8148
    %v8156 = vadd.f32 %v8118, %v8148
    %v8157 = vadd.f32 %v8119, %v8148
    %v8158 = vadd.f32 %v8120, %v8148
    %v8159 = vadd.f32 %v8121, %v8148
    %v8160 = vadd.f32 %v8122, %v8148
    %v8161 = vadd.f32 %v8123, %v8148
    %v8162 = vadd.f32 %v8124, %v8148
    %v8163 = vadd.f32 %v8125, %v8148
    %v8164 = vadd.f32 %v8126, %v8148
    %v8165 = vadd.f32 %v8127, %v8148
    %v8166 = vadd.f32 %v8128, %v8148
    %v8167 = vadd.f32 %v8129, %v8148
    %v8168 = vadd.f32 %v8130, %v8148
    %v8169 = vadd.f32 %v8131, %v8148
    %v8170 = vadd.f32 %v8132, %v8148
    %v8171 = vadd.f32 %v8133, %v8148
    %v8172 = vadd.f32 %v8134, %v8148
    %v8173 = vadd.f32 %v8135, %v8148
    %v8174 = vadd.f32 %v8136, %v8148
    %v8175 = vadd.f32 %v8137, %v8148
    %v8176 = vadd.f32 %v8138, %v8148
    %v8177 = vadd.f32 %v8139, %v8148
    %v8178 = vadd.f32 %v8140, %v8148
    %v8179 = vadd.f32 %v8141, %v8148
    %v8180 = vadd.f32 %v8142, %v8148
    %v8181 = vadd.f32 %v8143, %v8148
    %8182 = vst.msk [vmem:[%s11] sm:$0xff] %vm7317, %v8150
    %8183 = vst.msk [vmem:[%s11 + $0x8] sm:$0xff] %vm7317, %v8151
    %8184 = vst.msk [vmem:[%s11 + $0x10] sm:$0xff] %vm7317, %v8152
    %8185 = vst.msk [vmem:[%s11 + $0x18] sm:$0xff] %vm7317, %v8153
    %8186 = vst.msk [vmem:[%s11 + $0x20] sm:$0xff] %vm7317, %v8154
    %8187 = vst.msk [vmem:[%s11 + $0x28] sm:$0xff] %vm7317, %v8155
    %8188 = vst.msk [vmem:[%s11 + $0x30] sm:$0xff] %vm7317, %v8156
    %8189 = vst.msk [vmem:[%s11 + $0x38] sm:$0xff] %vm7317, %v8157
    %8190 = vst.msk [vmem:[%s11 + $0x40] sm:$0xff] %vm7317, %v8158
    %8191 = vst.msk [vmem:[%s11 + $0x48] sm:$0xff] %vm7317, %v8159
    %8192 = vst.msk [vmem:[%s11 + $0x50] sm:$0xff] %vm7317, %v8160
    %8193 = vst.msk [vmem:[%s11 + $0x58] sm:$0xff] %vm7317, %v8161
    %8194 = vst.msk [vmem:[%s11 + $0x60] sm:$0xff] %vm7317, %v8162
    %8195 = vst.msk [vmem:[%s11 + $0x68] sm:$0xff] %vm7317, %v8163
    %8196 = vst.msk [vmem:[%s11 + $0x70] sm:$0xff] %vm7317, %v8164
    %8197 = vst.msk [vmem:[%s11 + $0x78] sm:$0xff] %vm7317, %v8165
    %8198 = vst.msk [vmem:[%s11 + $0x80] sm:$0xff] %vm7317, %v8166
    %8199 = vst.msk [vmem:[%s11 + $0x88] sm:$0xff] %vm7317, %v8167
    %8200 = vst.msk [vmem:[%s11 + $0x90] sm:$0xff] %vm7317, %v8168
    %8201 = vst.msk [vmem:[%s11 + $0x98] sm:$0xff] %vm7317, %v8169
    %8202 = vst.msk [vmem:[%s11 + $0xa0] sm:$0xff] %vm7317, %v8170
    %8203 = vst.msk [vmem:[%s11 + $0xa8] sm:$0xff] %vm7317, %v8171
    %8204 = vst.msk [vmem:[%s11 + $0xb0] sm:$0xff] %vm7317, %v8172
    %8205 = vst.msk [vmem:[%s11 + $0xb8] sm:$0xff] %vm7317, %v8173
    %8206 = vst.msk [vmem:[%s11 + $0xc0] sm:$0xff] %vm7317, %v8174
    %8207 = vst.msk [vmem:[%s11 + $0xc8] sm:$0xff] %vm7317, %v8175
    %8208 = vst.msk [vmem:[%s11 + $0xd0] sm:$0xff] %vm7317, %v8176
    %8209 = vst.msk [vmem:[%s11 + $0xd8] sm:$0xff] %vm7317, %v8177
    %8210 = vst.msk [vmem:[%s11 + $0xe0] sm:$0xff] %vm7317, %v8178
    %8211 = vst.msk [vmem:[%s11 + $0xe8] sm:$0xff] %vm7317, %v8179
    %8212 = vst.msk [vmem:[%s11 + $0xf0] sm:$0xff] %vm7317, %v8180
    %8213 = vst.msk [vmem:[%s11 + $0xf8] sm:$0xff] %vm7317, %v8181
    %v8214 = vld [vmem:[%s1] sm:$0xff]
    %v8215 = vmul.f32 %v8214, 6.2831855
    %8217 = vset.pattern.permute.xlu0 0
    %8218 = vperm.xlu0 %8217, %v8215
    %v8219 = vpop.permute.xlu0 %8218
    %v8221 = vmul.f32 %v8219, %v275
    %v8222 = vadd.f32 %v8221, %v46
    %v8223 = vand.u32 2147483647, %v8222
    %vm8224 = vcmp.le.f32.partialorder %v8223, 0.7853982
    %vm8225 = vcmp.lt.s32.totalorder %v8222, 0
    %v8226 = vand.u32 %v8222, 2139095040
    %v8227 = vshrl.u32 %v8226, 23
    %v8228 = vsub.s32 %v8227, 127
    %v8229 = vand.u32 2147483647, %v8222
    %v8230 = vand.u32 %v8229, 8388607
    %v8231 = vor.u32 %v8230, 8388608
    %v8232 = vsub.s32 0, %v8231
    %v8233 = vadd.s32 %v8228, 1
    %vm8234 = vcmp.gt.s32.totalorder %v8233, 0
    %v8235 = vsel %vm8234, %v8233, 0
    %v8236 = vshrl.u32 %v8235, 5
    %v8237 = vand.u32 %v8235, 31
    %v8238 = vsub.s32 32, %v8237
    %v8239 = vshrl.u32 683565275, %v8238
    %v8240 = vshll.u32 683565275, %v8237
    %v8241 = vshrl.u32 2475754826, %v8238
    %v8242 = vor.u32 %v8240, %v8241
    %v8243 = vshll.u32 2475754826, %v8237
    %v8244 = vshrl.u32 2131351028, %v8238
    %v8245 = vor.u32 %v8243, %v8244
    %v8246 = vshll.u32 2131351028, %v8237
    %v8247 = vshrl.u32 2102212464, %v8238
    %v8248 = vor.u32 %v8246, %v8247
    %v8249 = vshll.u32 2102212464, %v8237
    %v8250 = vshrl.u32 920167782, %v8238
    %v8251 = vor.u32 %v8249, %v8250
    %v8252 = vshll.u32 920167782, %v8237
    %v8253 = vshrl.u32 1326507024, %v8238
    %v8254 = vor.u32 %v8252, %v8253
    %vm8255 = vcmp.lt.s32.totalorder %v8236, 1
    %vm8256 = vcmp.lt.s32.totalorder %v8236, 2
    %vm8257 = vcmp.lt.s32.totalorder %v8236, 3
    %vm8258 = vcmp.lt.s32.totalorder %v8236, 4
    %v8259 = vsel %vm8255, %v8239, %v8242
    %v8260 = vsel %vm8258, %v8248, 2102212464
    %v8261 = vsel %vm8257, %v8245, %v8260
    %v8262 = vsel %vm8256, %v8259, %v8261
    %v8263 = vsel %vm8255, %v8242, %v8245
    %v8264 = vsel %vm8258, %v8251, 920167782
    %v8265 = vsel %vm8257, %v8248, %v8264
    %v8266 = vsel %vm8256, %v8263, %v8265
    %v8267 = vsel %vm8255, %v8245, %v8248
    %v8268 = vsel %vm8258, %v8254, 1326507024
    %v8269 = vsel %vm8257, %v8251, %v8268
    %v8270 = vsel %vm8256, %v8267, %v8269
    %v8271 = vshll.u32 %v8231, 8
    %v8272 = vmul.u32.u64.compose %v8271, %v8270
    %v8273 = vextract.low.u32 %v8272
    %v8274 = vextract.high.u32 %v8272
    %v8275 = vmul.u32.u64.compose %v8271, %v8266
    %v8276 = vextract.low.u32 %v8275
    %v8277 = vextract.high.u32 %v8275
    %v8278 = vmul.u32 %v8271, %v8262
    %v8279 = vadd.s32 %v8274, %v8276
    %vm8280 = vc.u32 %v8274, %v8276
    %v8281 = vadd.s32 %v8277, 1
    %v8282 = vsel %vm8280, %v8281, %v8277
    %v8283 = vadd.s32 %v8278, %v8282
    %v8284 = vadd.s32 %v8283, 536870912
    %v8285 = vshrl.u32 %v8284, 30
    %v8286 = vshll.u32 %v8285, 30
    %v8287 = vsub.s32 %v8283, %v8286
    %vm8288 = vcmp.lt.s32.totalorder %v8287, 0
    %v8289 = vsub.s32 0, %v8287
    %v8290 = vsel %vm8288, %v8289, %v8287
    %v8291 = vclz %v8290
    %v8292 = vsub.s32 %v8291, 2
    %vm8293 = vcmp.gt.s32.totalorder 0, %v8292
    %v8294 = vsel %vm8293, 0, %v8292
    %v8295 = vsub.s32 32, %v8294
    %v8296 = vshll.u32 %v8287, %v8294
    %v8297 = vshrl.u32 %v8279, %v8295
    %v8298 = vor.u32 %v8296, %v8297
    %v8299 = vsub.s32 4294967266, %v8294
    %v8300 = vadd.s32 %v8299, 127
    %v8301 = vshll.u32 %v8300, 23
    %v8302 = vor.u32 4788187, %v8301
    %v8303 = vand.u32 2147483647, %v8302
    %v8305 = vcvt.s32.f32 %v8298
    %v8306 = vmul.f32 %v8305, %v8303
    %v8307 = vxor.u32 %v8306, 2147483648
    %v8308 = vsel %vm8225, %v8307, %v8306
    %v8309 = vsub.s32 4, %v8285
    %v8310 = vsel %vm8225, %v8309, %v8285
    %v8311 = vsel %vm8224, %v8222, %v8308
    %v8312 = vsel %vm8224, 0, %v8310
    %v8313 = vcosq.f32.pop %v8311
    %v8314 = vsinq.f32.pop %v8311
    %vm8315 = vweird.f32 %v8222
    %v8316 = vadd.s32 %v8312, 3
    %v8317 = vand.u32 %v8316, 3
    %vm8318 = vcmp.lt.s32.totalorder %v8317, 2
    %vm8319 = vcmp.eq.s32.totalorder %v8317, 0
    %v8320 = vxor.u32 %v8314, 2147483648
    %v8321 = vsel %vm8319, %v8313, %v8320
    %vm8322 = vcmp.eq.s32.totalorder %v8317, 2
    %v8323 = vxor.u32 %v8313, 2147483648
    %v8324 = vsel %vm8322, %v8323, %v8314
    %v8325 = vsel %vm8318, %v8321, %v8324
    %v8326 = vsel %vm8315, nan, %v8325
    %v8327 = vld [vmem:[%s7] sm:$0xff]
    %v8328 = vld [vmem:[%s7 + $0x8] sm:$0xff]
    %v8329 = vld [vmem:[%s7 + $0x10] sm:$0xff]
    %v8330 = vld [vmem:[%s7 + $0x18] sm:$0xff]
    %v8331 = vld [vmem:[%s8] sm:$0x1]
    %v8333 = vlaneseq
    %v8334 = vshrl.u32 %v8333, 7
    %v8335 = vsub.s32 0, %v8334
    %v8336 = vrot.slane %v8331, %v8335
    %v8339 = vsel %vm7317, %v8326, 0
    %8341 = vmatprep.subr.mxu0 0.0
    %8342 = vmatpush1.msra.mxu0 0.0
    %8343 = vmatprep.subr.mxu0 0.0
    %8344 = vmatpush1.msra.mxu0 0.0
    %8345 = vmatprep.subr.mxu0 0.0
    %8346 = vmatpush1.msra.mxu0 0.0
    %8347 = vmatprep.subr.mxu0 0.0
    %8348 = vmatpush1.msra.mxu0 0.0
    %8349 = vmatprep.subr.mxu0 0.0
    %8350 = vmatpush1.msra.mxu0 0.0
    %8351 = vmatprep.subr.mxu0 0.0
    %8352 = vmatpush1.msra.mxu0 0.0
    %8353 = vmatprep.subr.mxu0 0.0
    %8354 = vmatpush1.msra.mxu0 0.0
    %8355 = vmatprep.subr.mxu0 0.0
    %8356 = vmatpush1.msra.mxu0 0.0
    %8357 = vmatprep.subr.mxu0 0.0
    %8358 = vmatpush1.msra.mxu0 0.0
    %8359 = vmatprep.subr.mxu0 0.0
    %8360 = vmatpush1.msra.mxu0 0.0
    %8361 = vmatprep.subr.mxu0 0.0
    %8362 = vmatpush1.msra.mxu0 0.0
    %8363 = vmatprep.subr.mxu0 0.0
    %8364 = vmatpush1.msra.mxu0 0.0
    %8365 = vmatprep.subr.mxu0 0.0
    %8366 = vmatpush1.msra.mxu0 %v8330
    %8367 = vmatprep.subr.mxu0 0.0
    %8368 = vmatpush1.msra.mxu0 %v8329
    %8369 = vmatprep.subr.mxu0 0.0
    %8370 = vmatpush1.msra.mxu0 %v8328
    %8371 = vmatprep.subr.mxu0 0.0
    %8372 = vmatpush1.msra.mxu0 %v8327
    %8373 = vmatprep.subr.mxu0 0.0
    %8374 = vmatpush2.msra.mxu0 0.0
    %8375 = vmatprep.subr.mxu0 0.0
    %8376 = vmatpush2.msra.mxu0 0.0
    %8377 = vmatprep.subr.mxu0 0.0
    %8378 = vmatpush2.msra.mxu0 0.0
    %8379 = vmatprep.subr.mxu0 0.0
    %8380 = vmatpush2.msra.mxu0 0.0
    %8381 = vmatprep.subr.mxu0 0.0
    %8382 = vmatpush2.msra.mxu0 0.0
    %8383 = vmatprep.subr.mxu0 0.0
    %8384 = vmatpush2.msra.mxu0 0.0
    %8385 = vmatprep.subr.mxu0 0.0
    %8386 = vmatpush2.msra.mxu0 0.0
    %8387 = vmatprep.subr.mxu0 0.0
    %8388 = vmatpush2.msra.mxu0 0.0
    %8389 = vmatprep.subr.mxu0 0.0
    %8390 = vmatpush2.msra.mxu0 0.0
    %8391 = vmatprep.subr.mxu0 0.0
    %8392 = vmatpush2.msra.mxu0 0.0
    %8393 = vmatprep.subr.mxu0 0.0
    %8394 = vmatpush2.msra.mxu0 0.0
    %8395 = vmatprep.subr.mxu0 0.0
    %8396 = vmatpush2.msra.mxu0 0.0
    %8397 = vmatprep.subr.mxu0 0.0
    %8398 = vmatpush2.msra.mxu0 0.0
    %8399 = vmatprep.subr.mxu0 0.0
    %8400 = vmatpush2.msra.mxu0 0.0
    %8401 = vmatprep.subr.mxu0 0.0
    %8402 = vmatpush2.msra.mxu0 0.0
    %8403 = vmatprep.subr.mxu0 0.0
    %8404 = vmatpush2.msra.mxu0 0.0
    %8405 = vmatprep.mubr.f32.mxu0 0.0
    %8406 = vmatmul.mubr.f32.gmra.mxu0 %v8339
    %v8407 = vpop.f32.mrf.mxu0
    %v8408 = vadd.f32 %v8336, %v8407
    %v8409 = vpop.f32.mrf.mxu0
    %8410 = vdwg.mxu0
    %v8411 = vld [vmem:[%s9] sm:$0x1]
    %v8412 = vld [vmem:[%s10] sm:$0x1]
    %v8413 = vsel %vm7317, %v8408, 0.0
    %8414 = vadd.xlane.f32.xlu0 %v8413
    %v8415 = vpop.xlane.xlu0 %8414
    %v8416 = vmul.f32 %v8415, %v7785
    %v8417 = vsub.f32 %v8408, %v8416
    %v8418 = vmul.f32 %v8417, %v8417
    %v8419 = vsel %vm7317, %v8418, 0.0
    %8420 = vadd.xlane.f32.xlu0 %v8419
    %v8421 = vpop.xlane.xlu0 %8420
    %v8422 = vmul.f32 %v8421, %v7785
    %v8423 = vadd.f32 %v8422, 1e-05
    %v8424 = vrsqrt.pop %v8423
    %v8425 = vmul.f32 %v8417, %v8424
    %v8427 = vlaneseq
    %v8428 = vshrl.u32 %v8427, 7
    %v8429 = vsub.s32 0, %v8428
    %v8430 = vrot.slane %v8411, %v8429
    %v8432 = vmul.f32 %v8425, %v8430
    %v8434 = vlaneseq
    %v8435 = vshrl.u32 %v8434, 7
    %v8436 = vsub.s32 0, %v8435
    %v8437 = vrot.slane %v8412, %v8436
    %v8439 = vadd.f32 %v8432, %v8437
    %8440 = vst.msk [vmem:[#allocation2] sm:$0xff] %vm7317, %v8439
    // Predicated region
    $region46: #{tpu_custom_call.1} parent=1 // pred_check
      _
    $region47: #{tpu_custom_call.1} parent=1 // pred_check_branch
      %8442 = sbr.rel (0) target = $region49
    $region48: #{tpu_custom_call.1} parent=1 // pred_region
      _
    $region49: #{tpu_custom_call.1} parent=1 // pred_fallthru
      _
    // Predicated region
    $region50: #{tpu_custom_call.1} parent=1 // pred_check
      _
    $region51: #{tpu_custom_call.1} parent=1 // pred_check_branch
      %8444 = sbr.rel (0) target = $region53
    $region52: #{tpu_custom_call.1} parent=1 // pred_region
      %s8446 = ssub.s32 128, 128
      %8447 = vsyncadd [#allocation3], %s8446
      %s8449 = sshll.u32 [#allocation2], 4
      %s8450 = int_to_ptr.vmem [resolvable:$true] %s8449
      %8452 = dma.vmem_to_hbm [thread:$0]  %s8450, 128, %s12, [#allocation3]
    $region53: #{tpu_custom_call.1} parent=1 // pred_fallthru
      _
    // Predicated region
    $region54: #{tpu_custom_call.1} parent=1 // pred_check
      _
    $region55: #{tpu_custom_call.1} parent=1 // pred_check_branch
      %8454 = sbr.rel (0) target = $region57
    $region56: #{tpu_custom_call.1} parent=1 // pred_region
      _
    $region57: #{tpu_custom_call.1} parent=1 // pred_fallthru
      _
    // Predicated region
    $region58: #{tpu_custom_call.1} parent=1 // pred_check
      _
    $region59: #{tpu_custom_call.1} parent=1 // pred_check_branch
      %8456 = sbr.rel (0) target = $region61
    $region60: #{tpu_custom_call.1} parent=1 // pred_region
      %8457 = dma.done [#allocation3], 128
    $region61: #{tpu_custom_call.1} parent=1 // pred_fallthru
      _
    %8458 = vsyncpa [#allocation3], 1

</llo_original>
